<compile_context>
chip_gen: v6e
topology: v6e:2x2x1
jax: 0.10.0
libtpu: 0.0.40
codegen_flags: <defaults>
</compile_context>

<pallas_src>
import functools

import jax
import jax.numpy as jnp
from jax.experimental import pallas as pl
from jax.experimental.pallas import tpu as pltpu


def _stn_kernel(x_ref, w1, b1, w2, b2, w3, b3,
                wf1, bf1, wf2, bf2, wf3, bf3,
                o_ref, acc_ref, *, bt, tn, rem):
    n = pl.program_id(1)
    n_last = pl.num_programs(1) - 1

    # ---- running-max accumulator init (once per batch group) ---------------
    @pl.when(n == 0)
    def _init():
        # All pooled values are post-ReLU (>= 0), so 0 is a neutral init.
        acc_ref[...] = jnp.zeros(acc_ref.shape, acc_ref.dtype)

    # Mask for out-of-range points on the (only) partial tile, if any.
    if rem:
        valid = jnp.where(n == n_last, rem, tn)
        point_idx = jax.lax.broadcasted_iota(jnp.int32, (tn, 1), 0)
        keep = point_idx < valid

    # ---- per-point MLP, one batch sample of the group at a time ------------
    # Plain 2-D matmuls per sample: avoids the lane-axis concatenate of x and
    # any (bt*tn, C) reshape/relayout; MXU FLOPs are unchanged.
    tile_maxes = []
    for bi in range(bt):
        xb = x_ref[bi].astype(jnp.bfloat16)                               # (k, tn)
        h = jax.lax.dot_general(                                          # (tn, 64)
            xb, w1[...],
            dimension_numbers=(((0,), (0,)), ((), ())),
            preferred_element_type=jnp.float32)
        h = jnp.maximum(h + b1[...], 0.0).astype(jnp.bfloat16)
        h = jnp.dot(h, w2[...], preferred_element_type=jnp.float32)       # (tn, 128)
        h = jnp.maximum(h + b2[...], 0.0).astype(jnp.bfloat16)
        h = jnp.dot(h, w3[...], preferred_element_type=jnp.float32)       # (tn, 1024)
        h = jnp.maximum(h + b3[...], 0.0).astype(jnp.bfloat16)            # bf16 before max
        if rem:
            h = jnp.where(keep, h, jnp.zeros_like(h))
        tile_maxes.append(jnp.max(h, axis=0, keepdims=True))              # (1, 1024) bf16

    tile_max = tile_maxes[0] if bt == 1 else jnp.concatenate(tile_maxes, axis=0)
    acc_ref[...] = jnp.maximum(acc_ref[...], tile_max)                    # (bt, 1024) bf16

    # ---- FC head (identity already folded into bf3), once per batch group --
    @pl.when(n == n_last)
    def _finalize():
        g = acc_ref[...]                                                  # (bt, 1024) bf16
        f = jnp.dot(g, wf1[...], preferred_element_type=jnp.float32)
        f = jnp.maximum(f + bf1[...], 0.0).astype(jnp.bfloat16)
        f = jnp.dot(f, wf2[...], preferred_element_type=jnp.float32)
        f = jnp.maximum(f + bf2[...], 0.0).astype(jnp.bfloat16)
        out = jnp.dot(f, wf3[...], preferred_element_type=jnp.float32) + bf3[...]
        o_ref[0] = out                                                    # (bt, k*k) f32


def stnkd_forward(x_bkn, params, *, k, bt=4, tn=512,
                  vmem_limit_bytes=40 * 1024 * 1024):
    """x_bkn: (B, k, N) float32 (PyTorch NCW layout). Returns (B, k, k)."""
    B, k_in, N = x_bkn.shape
    assert k_in == k
    kk = k * k
    (w1, b1, w2, b2, w3, b3, wf1, bf1, wf2, bf2, wf3, bf3) = params

    # Fold the flattened identity into fc3's bias (done once, outside the kernel).
    eye_flat = jnp.eye(k, dtype=jnp.float32).reshape(1, kk)
    bf3 = bf3 + eye_flat

    # Batch grouping: bt samples per grid step.  Cap bt at ceil(B/2) so the
    # "parallel" batch-group grid axis has extent >= 2 (keeps both v7x
    # TensorCores busy); v5e/v6e (1 TC) are unaffected.
    bt = max(1, min(bt, B))
    if B >= 2:
        bt = min(bt, -(-B // 2))
    G = -(-B // bt)
    Bp = G * bt
    if Bp != B:                       # zero-pad batches (sliced off afterwards)
        x_bkn = jnp.pad(x_bkn, ((0, Bp - B), (0, 0), (0, 0)))

    # Point tiling: no wrapper-side padding of N.  If N > tn the last tile may
    # be partial; its out-of-range columns are masked inside the kernel.
    if N <= tn:
        tn_eff = N
    else:
        assert tn % 128 == 0, "tn must be a multiple of 128 when N > tn"
        tn_eff = tn
    Nt = -(-N // tn_eff)
    rem = N % tn_eff                  # 0 => all point tiles are full

    const = lambda a: pl.BlockSpec(a.shape, lambda b, n: (0, 0))
    grid = (G, Nt)

    out = pl.pallas_call(
        functools.partial(_stn_kernel, bt=bt, tn=tn_eff, rem=rem),
        out_shape=jax.ShapeDtypeStruct((G, bt, kk), jnp.float32),
        grid_spec=pltpu.PrefetchScalarGridSpec(
            num_scalar_prefetch=0,
            grid=grid,
            in_specs=[
                pl.BlockSpec((bt, k, tn_eff), lambda b, n: (b, 0, n)),
                const(w1), const(b1),
                const(w2), const(b2),
                const(w3), const(b3),
                const(wf1), const(bf1),
                const(wf2), const(bf2),
                const(wf3), const(bf3),
            ],
            # 3-D output: last two block dims equal the full array dims, so any
            # bt (even < 8) and any k*k stay legal block shapes.
            out_specs=pl.BlockSpec((1, bt, kk), lambda b, n: (b, 0, 0)),
            scratch_shapes=[pltpu.VMEM((bt, 1024), jnp.bfloat16)],
        ),
        compiler_params=pltpu.CompilerParams(
            dimension_semantics=("parallel", "arbitrary"),
            vmem_limit_bytes=vmem_limit_bytes,   # 40 MiB fits v7x's 64 MiB VMEM
        ),
    )(x_bkn, w1, b1, w2, b2, w3, b3, wf1, bf1, wf2, bf2, wf3, bf3)

    return out.reshape(Bp, kk)[:B].reshape(B, k, k)


def _fold_bn(w, b, gamma, beta, mean, var, eps=1e-5):
    """Fold eval-mode BatchNorm into a linear layer.  w: (Cin, Cout)."""
    s = gamma / jnp.sqrt(var + eps)          # (Cout,)
    w_f = w * s[None, :]
    b_f = (b - mean) * s + beta
    return w_f.astype(jnp.float32), b_f.reshape(1, -1).astype(jnp.float32)


def make_params(key, k):
    """Deterministic synthetic parameters (shapes from STNkd.__init__).

    BN (eval mode, running mean=0 / var=1) is folded into the weights.  All
    weights are stored bf16 (matmul operands); biases stay f32 (bias-add/ReLU
    run in f32 on the VPU).
    """
    dims = [(k, 64), (64, 128), (128, 1024), (1024, 512), (512, 256), (256, k * k)]
    keys = jax.random.split(key, len(dims) * 4)
    params = []
    ki = 0
    for li, (cin, cout) in enumerate(dims):
        w = jax.random.normal(keys[ki], (cin, cout), jnp.float32) * 0.05; ki += 1
        b = jax.random.normal(keys[ki], (cout,), jnp.float32) * 0.05;    ki += 1
        if li < 5:  # layers followed by BatchNorm (bn1..bn5)
            gamma = 1.0 + 0.1 * jax.random.normal(keys[ki], (cout,), jnp.float32); ki += 1
            beta = 0.1 * jax.random.normal(keys[ki], (cout,), jnp.float32);        ki += 1
            w_f, b_f = _fold_bn(w, b, gamma, beta,
                                jnp.zeros((cout,), jnp.float32),
                                jnp.ones((cout,), jnp.float32))
        else:       # fc3 has no BN
            ki += 2
            w_f, b_f = w, b.reshape(1, -1).astype(jnp.float32)
        params.extend([w_f.astype(jnp.bfloat16), b_f])
    return tuple(params)


def reference_forward(x_bkn, params, *, k):
    """Pure-JAX reference mirroring the kernel's dtype strategy (bf16 matmul
    operands, f32 accumulation, bf16 point-max) and the PyTorch forward
    (eval-mode BN)."""
    (w1, b1, w2, b2, w3, b3, wf1, bf1, wf2, bf2, wf3, bf3) = params
    B, _, N = x_bkn.shape
    x = jnp.transpose(x_bkn, (0, 2, 1)).reshape(B * N, k).astype(jnp.bfloat16)
    h = jax.nn.relu(jnp.dot(x, w1, preferred_element_type=jnp.float32) + b1)
    h = h.astype(jnp.bfloat16)
    h = jax.nn.relu(jnp.dot(h, w2, preferred_element_type=jnp.float32) + b2)
    h = h.astype(jnp.bfloat16)
    h = jax.nn.relu(jnp.dot(h, w3, preferred_element_type=jnp.float32) + b3)
    h = h.astype(jnp.bfloat16)                              # bf16 point-max, like the kernel
    g = jnp.max(h.reshape(B, N, -1), axis=1)                # (B, 1024) bf16
    f = jax.nn.relu(jnp.dot(g, wf1, preferred_element_type=jnp.float32) + bf1)
    f = f.astype(jnp.bfloat16)
    f = jax.nn.relu(jnp.dot(f, wf2, preferred_element_type=jnp.float32) + bf2)
    f = f.astype(jnp.bfloat16)
    out = jnp.dot(f, wf3, preferred_element_type=jnp.float32) + bf3   # (B, k*k)
    out = out + jnp.eye(k, dtype=out.dtype).reshape(1, k * k)
    return out.reshape(-1, k, k)


if __name__ == "__main__":
    K = 16    # feature-transform dimension (k in STNkd; small for the demo)
    B = 8     # batch: bt=4 -> 2 batch groups (both v7x TensorCores get work)
    N = 200   # points; not a multiple of tn=128 -> exercises in-kernel masking

    key = jax.random.PRNGKey(0)
    k_x, k_p = jax.random.split(key)
    x = jax.random.normal(k_x, (B, K, N), jnp.float32)   # PyTorch NCW layout
    params = make_params(k_p, K)

    out = stnkd_forward(x, params, k=K, bt=4, tn=128)
    out = jax.block_until_ready(out)

    ref = reference_forward(x, params, k=K)
    assert out.shape == (B, K, K)
    assert jnp.allclose(out, ref, atol=2e-2, rtol=2e-2), "mismatch vs JAX reference"

    print("KERNEL_OK")
</pallas_src>

<mosaic_0001>
module attributes {stable_mosaic.version = 11 : i64} {
  func.func @_stn_kernel(%arg0: i32, %arg1: i32, %arg2: memref<4x16x128xf32, #tpu.memory_space<vmem>>, %arg3: memref<16x64xbf16, #tpu.memory_space<vmem>>, %arg4: memref<1x64xf32, #tpu.memory_space<vmem>>, %arg5: memref<64x128xbf16, #tpu.memory_space<vmem>>, %arg6: memref<1x128xf32, #tpu.memory_space<vmem>>, %arg7: memref<128x1024xbf16, #tpu.memory_space<vmem>>, %arg8: memref<1x1024xf32, #tpu.memory_space<vmem>>, %arg9: memref<1024x512xbf16, #tpu.memory_space<vmem>>, %arg10: memref<1x512xf32, #tpu.memory_space<vmem>>, %arg11: memref<512x256xbf16, #tpu.memory_space<vmem>>, %arg12: memref<1x256xf32, #tpu.memory_space<vmem>>, %arg13: memref<256x256xbf16, #tpu.memory_space<vmem>>, %arg14: memref<1x256xf32, #tpu.memory_space<vmem>>, %arg15: memref<1x4x256xf32, #tpu.memory_space<vmem>>, %arg16: memref<4x1024xbf16, #tpu.memory_space<vmem>>) attributes {dimension_semantics = [#tpu.dimension_semantics<parallel>, #tpu.dimension_semantics<arbitrary>], iteration_bounds = array<i64: 2, 2>, scalar_prefetch = 0 : i64, scratch_operands = 1 : i64, tpu.core_type = #tpu.core_type<tc>, window_params = [{transform_indices = @transform_0, window_bounds = array<i64: 4, 16, 128>}, {pipeline_mode = #tpu.pipeline_mode<synchronous>, transform_indices = @transform_1, window_bounds = array<i64: 16, 64>}, {pipeline_mode = #tpu.pipeline_mode<synchronous>, transform_indices = @transform_2, window_bounds = array<i64: 1, 64>}, {pipeline_mode = #tpu.pipeline_mode<synchronous>, transform_indices = @transform_3, window_bounds = array<i64: 64, 128>}, {pipeline_mode = #tpu.pipeline_mode<synchronous>, transform_indices = @transform_4, window_bounds = array<i64: 1, 128>}, {pipeline_mode = #tpu.pipeline_mode<synchronous>, transform_indices = @transform_5, window_bounds = array<i64: 128, 1024>}, {pipeline_mode = #tpu.pipeline_mode<synchronous>, transform_indices = @transform_6, window_bounds = array<i64: 1, 1024>}, {pipeline_mode = #tpu.pipeline_mode<synchronous>, transform_indices = @transform_7, window_bounds = array<i64: 1024, 512>}, {pipeline_mode = #tpu.pipeline_mode<synchronous>, transform_indices = @transform_8, window_bounds = array<i64: 1, 512>}, {pipeline_mode = #tpu.pipeline_mode<synchronous>, transform_indices = @transform_9, window_bounds = array<i64: 512, 256>}, {pipeline_mode = #tpu.pipeline_mode<synchronous>, transform_indices = @transform_10, window_bounds = array<i64: 1, 256>}, {pipeline_mode = #tpu.pipeline_mode<synchronous>, transform_indices = @transform_11, window_bounds = array<i64: 256, 256>}, {pipeline_mode = #tpu.pipeline_mode<synchronous>, transform_indices = @transform_12, window_bounds = array<i64: 1, 256>}, {transform_indices = @transform_13, window_bounds = array<i64: 1, 4, 256>}]} {
    %c0_i32 = arith.constant 0 : i32
    %0 = arith.cmpi eq, %arg1, %c0_i32 : i32
    %1 = arith.extui %0 : i1 to i32
    %c0_i32_0 = arith.constant 0 : i32
    %2 = arith.cmpi ne, %1, %c0_i32_0 : i32
    scf.if %2 {
      %cst_94 = arith.constant 0.000000e+00 : bf16
      %147 = vector.broadcast %cst_94 : bf16 to vector<4x1024xbf16>
      %c0_95 = arith.constant 0 : index
      %c0_96 = arith.constant 0 : index
      %148 = vector.load %arg16[%c0_95, %c0_96] : memref<4x1024xbf16, #tpu.memory_space<vmem>>, vector<4x1024xbf16>
      tpu.vector_store %arg16[%c0_95, %c0_96], %147 {strides = array<i32>} : memref<4x1024xbf16, #tpu.memory_space<vmem>>, vector<4x1024xbf16>,
    } else {
    }
    %c1_i32 = arith.constant 1 : i32
    %3 = arith.cmpi eq, %arg1, %c1_i32 : i32
    %c72_i32 = arith.constant 72 : i32
    %c128_i32 = arith.constant 128 : i32
    %4 = arith.select %3, %c72_i32, %c128_i32 : i32
    %5 = tpu.iota {dimensions = array<i32: 0>} : vector<128x1xi32>
    %6 = vector.broadcast %4 : i32 to vector<128x1xi32>
    %7 = arith.cmpi slt, %5, %6 : vector<128x1xi32>
    %c0 = arith.constant 0 : index
    %c0_1 = arith.constant 0 : index
    %c0_2 = arith.constant 0 : index
    %8 = vector.load %arg2[%c0, %c0_1, %c0_2] : memref<4x16x128xf32, #tpu.memory_space<vmem>>, vector<1x16x128xf32>
    %9 = vector.shape_cast %8 : vector<1x16x128xf32> to vector<16x128xf32>
    %10 = arith.truncf %9 : vector<16x128xf32> to vector<16x128xbf16>
    %c0_3 = arith.constant 0 : index
    %c0_4 = arith.constant 0 : index
    %11 = vector.load %arg3[%c0_3, %c0_4] : memref<16x64xbf16, #tpu.memory_space<vmem>>, vector<16x64xbf16>
    %cst = arith.constant dense<0.000000e+00> : vector<128x64xf32>
    %12 = tpu.matmul %10, %11, %cst {dimension_numbers = #tpu.dot_dimension_numbers<[0], [0], [1], [1], [0, 1, 1, 1], [], []>} : vector<16x128xbf16>, vector<16x64xbf16>, vector<128x64xf32> -> vector<128x64xf32>
    %c0_5 = arith.constant 0 : index
    %c0_6 = arith.constant 0 : index
    %13 = vector.load %arg4[%c0_5, %c0_6] : memref<1x64xf32, #tpu.memory_space<vmem>>, vector<1x64xf32>
    %14 = vector.broadcast %13 : vector<1x64xf32> to vector<128x64xf32>
    %15 = arith.addf %12, %14 : vector<128x64xf32>
    %cst_7 = arith.constant 0.000000e+00 : f32
    %16 = vector.broadcast %cst_7 : f32 to vector<128x64xf32>
    %17 = arith.maximumf %15, %16 : vector<128x64xf32>
    %18 = arith.truncf %17 : vector<128x64xf32> to vector<128x64xbf16>
    %c0_8 = arith.constant 0 : index
    %c0_9 = arith.constant 0 : index
    %19 = vector.load %arg5[%c0_8, %c0_9] : memref<64x128xbf16, #tpu.memory_space<vmem>>, vector<64x128xbf16>
    %cst_10 = arith.constant dense<0.000000e+00> : vector<128x128xf32>
    %20 = tpu.matmul %18, %19, %cst_10 {dimension_numbers = #tpu.dot_dimension_numbers<[1], [0], [0], [1], [0, 0, 1, 1], [], []>} : vector<128x64xbf16>, vector<64x128xbf16>, vector<128x128xf32> -> vector<128x128xf32>
    %c0_11 = arith.constant 0 : index
    %c0_12 = arith.constant 0 : index
    %21 = vector.load %arg6[%c0_11, %c0_12] : memref<1x128xf32, #tpu.memory_space<vmem>>, vector<1x128xf32>
    %22 = vector.broadcast %21 : vector<1x128xf32> to vector<128x128xf32>
    %23 = arith.addf %20, %22 : vector<128x128xf32>
    %cst_13 = arith.constant 0.000000e+00 : f32
    %24 = vector.broadcast %cst_13 : f32 to vector<128x128xf32>
    %25 = arith.maximumf %23, %24 : vector<128x128xf32>
    %26 = arith.truncf %25 : vector<128x128xf32> to vector<128x128xbf16>
    %c0_14 = arith.constant 0 : index
    %c0_15 = arith.constant 0 : index
    %27 = vector.load %arg7[%c0_14, %c0_15] : memref<128x1024xbf16, #tpu.memory_space<vmem>>, vector<128x1024xbf16>
    %cst_16 = arith.constant dense<0.000000e+00> : vector<128x1024xf32>
    %28 = tpu.matmul %26, %27, %cst_16 {dimension_numbers = #tpu.dot_dimension_numbers<[1], [0], [0], [1], [0, 0, 1, 1], [], []>} : vector<128x128xbf16>, vector<128x1024xbf16>, vector<128x1024xf32> -> vector<128x1024xf32>
    %c0_17 = arith.constant 0 : index
    %c0_18 = arith.constant 0 : index
    %29 = vector.load %arg8[%c0_17, %c0_18] : memref<1x1024xf32, #tpu.memory_space<vmem>>, vector<1x1024xf32>
    %30 = vector.broadcast %29 : vector<1x1024xf32> to vector<128x1024xf32>
    %31 = arith.addf %28, %30 : vector<128x1024xf32>
    %cst_19 = arith.constant 0.000000e+00 : f32
    %32 = vector.broadcast %cst_19 : f32 to vector<128x1024xf32>
    %33 = arith.maximumf %31, %32 : vector<128x1024xf32>
    %34 = arith.truncf %33 : vector<128x1024xf32> to vector<128x1024xbf16>
    %cst_20 = arith.constant 0.000000e+00 : bf16
    %35 = vector.broadcast %cst_20 : bf16 to vector<128x1024xbf16>
    %36 = vector.shape_cast %7 : vector<128x1xi1> to vector<128x1xi1>
    %37 = vector.broadcast %36 : vector<128x1xi1> to vector<128x1024xi1>
    %38 = arith.select %37, %34, %35 : vector<128x1024xi1>, vector<128x1024xbf16>
    %cst_21 = arith.constant dense<0xFF80> : vector<1024xbf16>
    %39 = vector.multi_reduction <maximumf>, %38, %cst_21 [0] : vector<128x1024xbf16> to vector<1024xbf16>
    %40 = vector.shape_cast %39 : vector<1024xbf16> to vector<1x1024xbf16>
    %c1 = arith.constant 1 : index
    %c0_22 = arith.constant 0 : index
    %c0_23 = arith.constant 0 : index
    %41 = vector.load %arg2[%c1, %c0_22, %c0_23] : memref<4x16x128xf32, #tpu.memory_space<vmem>>, vector<1x16x128xf32>
    %42 = vector.shape_cast %41 : vector<1x16x128xf32> to vector<16x128xf32>
    %43 = arith.truncf %42 : vector<16x128xf32> to vector<16x128xbf16>
    %c0_24 = arith.constant 0 : index
    %c0_25 = arith.constant 0 : index
    %44 = vector.load %arg3[%c0_24, %c0_25] : memref<16x64xbf16, #tpu.memory_space<vmem>>, vector<16x64xbf16>
    %cst_26 = arith.constant dense<0.000000e+00> : vector<128x64xf32>
    %45 = tpu.matmul %43, %44, %cst_26 {dimension_numbers = #tpu.dot_dimension_numbers<[0], [0], [1], [1], [0, 1, 1, 1], [], []>} : vector<16x128xbf16>, vector<16x64xbf16>, vector<128x64xf32> -> vector<128x64xf32>
    %c0_27 = arith.constant 0 : index
    %c0_28 = arith.constant 0 : index
    %46 = vector.load %arg4[%c0_27, %c0_28] : memref<1x64xf32, #tpu.memory_space<vmem>>, vector<1x64xf32>
    %47 = vector.broadcast %46 : vector<1x64xf32> to vector<128x64xf32>
    %48 = arith.addf %45, %47 : vector<128x64xf32>
    %cst_29 = arith.constant 0.000000e+00 : f32
    %49 = vector.broadcast %cst_29 : f32 to vector<128x64xf32>
    %50 = arith.maximumf %48, %49 : vector<128x64xf32>
    %51 = arith.truncf %50 : vector<128x64xf32> to vector<128x64xbf16>
    %c0_30 = arith.constant 0 : index
    %c0_31 = arith.constant 0 : index
    %52 = vector.load %arg5[%c0_30, %c0_31] : memref<64x128xbf16, #tpu.memory_space<vmem>>, vector<64x128xbf16>
    %cst_32 = arith.constant dense<0.000000e+00> : vector<128x128xf32>
    %53 = tpu.matmul %51, %52, %cst_32 {dimension_numbers = #tpu.dot_dimension_numbers<[1], [0], [0], [1], [0, 0, 1, 1], [], []>} : vector<128x64xbf16>, vector<64x128xbf16>, vector<128x128xf32> -> vector<128x128xf32>
    %c0_33 = arith.constant 0 : index
    %c0_34 = arith.constant 0 : index
    %54 = vector.load %arg6[%c0_33, %c0_34] : memref<1x128xf32, #tpu.memory_space<vmem>>, vector<1x128xf32>
    %55 = vector.broadcast %54 : vector<1x128xf32> to vector<128x128xf32>
    %56 = arith.addf %53, %55 : vector<128x128xf32>
    %cst_35 = arith.constant 0.000000e+00 : f32
    %57 = vector.broadcast %cst_35 : f32 to vector<128x128xf32>
    %58 = arith.maximumf %56, %57 : vector<128x128xf32>
    %59 = arith.truncf %58 : vector<128x128xf32> to vector<128x128xbf16>
    %c0_36 = arith.constant 0 : index
    %c0_37 = arith.constant 0 : index
    %60 = vector.load %arg7[%c0_36, %c0_37] : memref<128x1024xbf16, #tpu.memory_space<vmem>>, vector<128x1024xbf16>
    %cst_38 = arith.constant dense<0.000000e+00> : vector<128x1024xf32>
    %61 = tpu.matmul %59, %60, %cst_38 {dimension_numbers = #tpu.dot_dimension_numbers<[1], [0], [0], [1], [0, 0, 1, 1], [], []>} : vector<128x128xbf16>, vector<128x1024xbf16>, vector<128x1024xf32> -> vector<128x1024xf32>
    %c0_39 = arith.constant 0 : index
    %c0_40 = arith.constant 0 : index
    %62 = vector.load %arg8[%c0_39, %c0_40] : memref<1x1024xf32, #tpu.memory_space<vmem>>, vector<1x1024xf32>
    %63 = vector.broadcast %62 : vector<1x1024xf32> to vector<128x1024xf32>
    %64 = arith.addf %61, %63 : vector<128x1024xf32>
    %cst_41 = arith.constant 0.000000e+00 : f32
    %65 = vector.broadcast %cst_41 : f32 to vector<128x1024xf32>
    %66 = arith.maximumf %64, %65 : vector<128x1024xf32>
    %67 = arith.truncf %66 : vector<128x1024xf32> to vector<128x1024xbf16>
    %cst_42 = arith.constant 0.000000e+00 : bf16
    %68 = vector.broadcast %cst_42 : bf16 to vector<128x1024xbf16>
    %69 = vector.shape_cast %7 : vector<128x1xi1> to vector<128x1xi1>
    %70 = vector.broadcast %69 : vector<128x1xi1> to vector<128x1024xi1>
    %71 = arith.select %70, %67, %68 : vector<128x1024xi1>, vector<128x1024xbf16>
    %cst_43 = arith.constant dense<0xFF80> : vector<1024xbf16>
    %72 = vector.multi_reduction <maximumf>, %71, %cst_43 [0] : vector<128x1024xbf16> to vector<1024xbf16>
    %73 = vector.shape_cast %72 : vector<1024xbf16> to vector<1x1024xbf16>
    %c2 = arith.constant 2 : index
    %c0_44 = arith.constant 0 : index
    %c0_45 = arith.constant 0 : index
    %74 = vector.load %arg2[%c2, %c0_44, %c0_45] : memref<4x16x128xf32, #tpu.memory_space<vmem>>, vector<1x16x128xf32>
    %75 = vector.shape_cast %74 : vector<1x16x128xf32> to vector<16x128xf32>
    %76 = arith.truncf %75 : vector<16x128xf32> to vector<16x128xbf16>
    %c0_46 = arith.constant 0 : index
    %c0_47 = arith.constant 0 : index
    %77 = vector.load %arg3[%c0_46, %c0_47] : memref<16x64xbf16, #tpu.memory_space<vmem>>, vector<16x64xbf16>
    %cst_48 = arith.constant dense<0.000000e+00> : vector<128x64xf32>
    %78 = tpu.matmul %76, %77, %cst_48 {dimension_numbers = #tpu.dot_dimension_numbers<[0], [0], [1], [1], [0, 1, 1, 1], [], []>} : vector<16x128xbf16>, vector<16x64xbf16>, vector<128x64xf32> -> vector<128x64xf32>
    %c0_49 = arith.constant 0 : index
    %c0_50 = arith.constant 0 : index
    %79 = vector.load %arg4[%c0_49, %c0_50] : memref<1x64xf32, #tpu.memory_space<vmem>>, vector<1x64xf32>
    %80 = vector.broadcast %79 : vector<1x64xf32> to vector<128x64xf32>
    %81 = arith.addf %78, %80 : vector<128x64xf32>
    %cst_51 = arith.constant 0.000000e+00 : f32
    %82 = vector.broadcast %cst_51 : f32 to vector<128x64xf32>
    %83 = arith.maximumf %81, %82 : vector<128x64xf32>
    %84 = arith.truncf %83 : vector<128x64xf32> to vector<128x64xbf16>
    %c0_52 = arith.constant 0 : index
    %c0_53 = arith.constant 0 : index
    %85 = vector.load %arg5[%c0_52, %c0_53] : memref<64x128xbf16, #tpu.memory_space<vmem>>, vector<64x128xbf16>
    %cst_54 = arith.constant dense<0.000000e+00> : vector<128x128xf32>
    %86 = tpu.matmul %84, %85, %cst_54 {dimension_numbers = #tpu.dot_dimension_numbers<[1], [0], [0], [1], [0, 0, 1, 1], [], []>} : vector<128x64xbf16>, vector<64x128xbf16>, vector<128x128xf32> -> vector<128x128xf32>
    %c0_55 = arith.constant 0 : index
    %c0_56 = arith.constant 0 : index
    %87 = vector.load %arg6[%c0_55, %c0_56] : memref<1x128xf32, #tpu.memory_space<vmem>>, vector<1x128xf32>
    %88 = vector.broadcast %87 : vector<1x128xf32> to vector<128x128xf32>
    %89 = arith.addf %86, %88 : vector<128x128xf32>
    %cst_57 = arith.constant 0.000000e+00 : f32
    %90 = vector.broadcast %cst_57 : f32 to vector<128x128xf32>
    %91 = arith.maximumf %89, %90 : vector<128x128xf32>
    %92 = arith.truncf %91 : vector<128x128xf32> to vector<128x128xbf16>
    %c0_58 = arith.constant 0 : index
    %c0_59 = arith.constant 0 : index
    %93 = vector.load %arg7[%c0_58, %c0_59] : memref<128x1024xbf16, #tpu.memory_space<vmem>>, vector<128x1024xbf16>
    %cst_60 = arith.constant dense<0.000000e+00> : vector<128x1024xf32>
    %94 = tpu.matmul %92, %93, %cst_60 {dimension_numbers = #tpu.dot_dimension_numbers<[1], [0], [0], [1], [0, 0, 1, 1], [], []>} : vector<128x128xbf16>, vector<128x1024xbf16>, vector<128x1024xf32> -> vector<128x1024xf32>
    %c0_61 = arith.constant 0 : index
    %c0_62 = arith.constant 0 : index
    %95 = vector.load %arg8[%c0_61, %c0_62] : memref<1x1024xf32, #tpu.memory_space<vmem>>, vector<1x1024xf32>
    %96 = vector.broadcast %95 : vector<1x1024xf32> to vector<128x1024xf32>
    %97 = arith.addf %94, %96 : vector<128x1024xf32>
    %cst_63 = arith.constant 0.000000e+00 : f32
    %98 = vector.broadcast %cst_63 : f32 to vector<128x1024xf32>
    %99 = arith.maximumf %97, %98 : vector<128x1024xf32>
    %100 = arith.truncf %99 : vector<128x1024xf32> to vector<128x1024xbf16>
    %cst_64 = arith.constant 0.000000e+00 : bf16
    %101 = vector.broadcast %cst_64 : bf16 to vector<128x1024xbf16>
    %102 = vector.shape_cast %7 : vector<128x1xi1> to vector<128x1xi1>
    %103 = vector.broadcast %102 : vector<128x1xi1> to vector<128x1024xi1>
    %104 = arith.select %103, %100, %101 : vector<128x1024xi1>, vector<128x1024xbf16>
    %cst_65 = arith.constant dense<0xFF80> : vector<1024xbf16>
    %105 = vector.multi_reduction <maximumf>, %104, %cst_65 [0] : vector<128x1024xbf16> to vector<1024xbf16>
    %106 = vector.shape_cast %105 : vector<1024xbf16> to vector<1x1024xbf16>
    %c3 = arith.constant 3 : index
    %c0_66 = arith.constant 0 : index
    %c0_67 = arith.constant 0 : index
    %107 = vector.load %arg2[%c3, %c0_66, %c0_67] : memref<4x16x128xf32, #tpu.memory_space<vmem>>, vector<1x16x128xf32>
    %108 = vector.shape_cast %107 : vector<1x16x128xf32> to vector<16x128xf32>
    %109 = arith.truncf %108 : vector<16x128xf32> to vector<16x128xbf16>
    %c0_68 = arith.constant 0 : index
    %c0_69 = arith.constant 0 : index
    %110 = vector.load %arg3[%c0_68, %c0_69] : memref<16x64xbf16, #tpu.memory_space<vmem>>, vector<16x64xbf16>
    %cst_70 = arith.constant dense<0.000000e+00> : vector<128x64xf32>
    %111 = tpu.matmul %109, %110, %cst_70 {dimension_numbers = #tpu.dot_dimension_numbers<[0], [0], [1], [1], [0, 1, 1, 1], [], []>} : vector<16x128xbf16>, vector<16x64xbf16>, vector<128x64xf32> -> vector<128x64xf32>
    %c0_71 = arith.constant 0 : index
    %c0_72 = arith.constant 0 : index
    %112 = vector.load %arg4[%c0_71, %c0_72] : memref<1x64xf32, #tpu.memory_space<vmem>>, vector<1x64xf32>
    %113 = vector.broadcast %112 : vector<1x64xf32> to vector<128x64xf32>
    %114 = arith.addf %111, %113 : vector<128x64xf32>
    %cst_73 = arith.constant 0.000000e+00 : f32
    %115 = vector.broadcast %cst_73 : f32 to vector<128x64xf32>
    %116 = arith.maximumf %114, %115 : vector<128x64xf32>
    %117 = arith.truncf %116 : vector<128x64xf32> to vector<128x64xbf16>
    %c0_74 = arith.constant 0 : index
    %c0_75 = arith.constant 0 : index
    %118 = vector.load %arg5[%c0_74, %c0_75] : memref<64x128xbf16, #tpu.memory_space<vmem>>, vector<64x128xbf16>
    %cst_76 = arith.constant dense<0.000000e+00> : vector<128x128xf32>
    %119 = tpu.matmul %117, %118, %cst_76 {dimension_numbers = #tpu.dot_dimension_numbers<[1], [0], [0], [1], [0, 0, 1, 1], [], []>} : vector<128x64xbf16>, vector<64x128xbf16>, vector<128x128xf32> -> vector<128x128xf32>
    %c0_77 = arith.constant 0 : index
    %c0_78 = arith.constant 0 : index
    %120 = vector.load %arg6[%c0_77, %c0_78] : memref<1x128xf32, #tpu.memory_space<vmem>>, vector<1x128xf32>
    %121 = vector.broadcast %120 : vector<1x128xf32> to vector<128x128xf32>
    %122 = arith.addf %119, %121 : vector<128x128xf32>
    %cst_79 = arith.constant 0.000000e+00 : f32
    %123 = vector.broadcast %cst_79 : f32 to vector<128x128xf32>
    %124 = arith.maximumf %122, %123 : vector<128x128xf32>
    %125 = arith.truncf %124 : vector<128x128xf32> to vector<128x128xbf16>
    %c0_80 = arith.constant 0 : index
    %c0_81 = arith.constant 0 : index
    %126 = vector.load %arg7[%c0_80, %c0_81] : memref<128x1024xbf16, #tpu.memory_space<vmem>>, vector<128x1024xbf16>
    %cst_82 = arith.constant dense<0.000000e+00> : vector<128x1024xf32>
    %127 = tpu.matmul %125, %126, %cst_82 {dimension_numbers = #tpu.dot_dimension_numbers<[1], [0], [0], [1], [0, 0, 1, 1], [], []>} : vector<128x128xbf16>, vector<128x1024xbf16>, vector<128x1024xf32> -> vector<128x1024xf32>
    %c0_83 = arith.constant 0 : index
    %c0_84 = arith.constant 0 : index
    %128 = vector.load %arg8[%c0_83, %c0_84] : memref<1x1024xf32, #tpu.memory_space<vmem>>, vector<1x1024xf32>
    %129 = vector.broadcast %128 : vector<1x1024xf32> to vector<128x1024xf32>
    %130 = arith.addf %127, %129 : vector<128x1024xf32>
    %cst_85 = arith.constant 0.000000e+00 : f32
    %131 = vector.broadcast %cst_85 : f32 to vector<128x1024xf32>
    %132 = arith.maximumf %130, %131 : vector<128x1024xf32>
    %133 = arith.truncf %132 : vector<128x1024xf32> to vector<128x1024xbf16>
    %cst_86 = arith.constant 0.000000e+00 : bf16
    %134 = vector.broadcast %cst_86 : bf16 to vector<128x1024xbf16>
    %135 = vector.shape_cast %7 : vector<128x1xi1> to vector<128x1xi1>
    %136 = vector.broadcast %135 : vector<128x1xi1> to vector<128x1024xi1>
    %137 = arith.select %136, %133, %134 : vector<128x1024xi1>, vector<128x1024xbf16>
    %cst_87 = arith.constant dense<0xFF80> : vector<1024xbf16>
    %138 = vector.multi_reduction <maximumf>, %137, %cst_87 [0] : vector<128x1024xbf16> to vector<1024xbf16>
    %139 = vector.shape_cast %138 : vector<1024xbf16> to vector<1x1024xbf16>
    %140 = tpu.concatenate %40, %73, %106, %139 in 0 : vector<1x1024xbf16>, vector<1x1024xbf16>, vector<1x1024xbf16>, vector<1x1024xbf16> -> vector<4x1024xbf16>
    %c0_88 = arith.constant 0 : index
    %c0_89 = arith.constant 0 : index
    %141 = vector.load %arg16[%c0_88, %c0_89] : memref<4x1024xbf16, #tpu.memory_space<vmem>>, vector<4x1024xbf16>
    %142 = arith.maximumf %141, %140 : vector<4x1024xbf16>
    %c0_90 = arith.constant 0 : index
    %c0_91 = arith.constant 0 : index
    %143 = vector.load %arg16[%c0_90, %c0_91] : memref<4x1024xbf16, #tpu.memory_space<vmem>>, vector<4x1024xbf16>
    tpu.vector_store %arg16[%c0_90, %c0_91], %142 {strides = array<i32>} : memref<4x1024xbf16, #tpu.memory_space<vmem>>, vector<4x1024xbf16>,
    %c1_i32_92 = arith.constant 1 : i32
    %144 = arith.cmpi eq, %arg1, %c1_i32_92 : i32
    %145 = arith.extui %144 : i1 to i32
    %c0_i32_93 = arith.constant 0 : i32
    %146 = arith.cmpi ne, %145, %c0_i32_93 : i32
    scf.if %146 {
      %c0_94 = arith.constant 0 : index
      %c0_95 = arith.constant 0 : index
      %147 = vector.load %arg16[%c0_94, %c0_95] : memref<4x1024xbf16, #tpu.memory_space<vmem>>, vector<4x1024xbf16>
      %c0_96 = arith.constant 0 : index
      %c0_97 = arith.constant 0 : index
      %148 = vector.load %arg9[%c0_96, %c0_97] : memref<1024x512xbf16, #tpu.memory_space<vmem>>, vector<1024x512xbf16>
      %cst_98 = arith.constant dense<0.000000e+00> : vector<4x512xf32>
      %149 = tpu.matmul %147, %148, %cst_98 {dimension_numbers = #tpu.dot_dimension_numbers<[1], [0], [0], [1], [0, 0, 1, 1], [], []>} : vector<4x1024xbf16>, vector<1024x512xbf16>, vector<4x512xf32> -> vector<4x512xf32>
      %c0_99 = arith.constant 0 : index
      %c0_100 = arith.constant 0 : index
      %150 = vector.load %arg10[%c0_99, %c0_100] : memref<1x512xf32, #tpu.memory_space<vmem>>, vector<1x512xf32>
      %151 = vector.broadcast %150 : vector<1x512xf32> to vector<4x512xf32>
      %152 = arith.addf %149, %151 : vector<4x512xf32>
      %cst_101 = arith.constant 0.000000e+00 : f32
      %153 = vector.broadcast %cst_101 : f32 to vector<4x512xf32>
      %154 = arith.maximumf %152, %153 : vector<4x512xf32>
      %155 = arith.truncf %154 : vector<4x512xf32> to vector<4x512xbf16>
      %c0_102 = arith.constant 0 : index
      %c0_103 = arith.constant 0 : index
      %156 = vector.load %arg11[%c0_102, %c0_103] : memref<512x256xbf16, #tpu.memory_space<vmem>>, vector<512x256xbf16>
      %cst_104 = arith.constant dense<0.000000e+00> : vector<4x256xf32>
      %157 = tpu.matmul %155, %156, %cst_104 {dimension_numbers = #tpu.dot_dimension_numbers<[1], [0], [0], [1], [0, 0, 1, 1], [], []>} : vector<4x512xbf16>, vector<512x256xbf16>, vector<4x256xf32> -> vector<4x256xf32>
      %c0_105 = arith.constant 0 : index
      %c0_106 = arith.constant 0 : index
      %158 = vector.load %arg12[%c0_105, %c0_106] : memref<1x256xf32, #tpu.memory_space<vmem>>, vector<1x256xf32>
      %159 = vector.broadcast %158 : vector<1x256xf32> to vector<4x256xf32>
      %160 = arith.addf %157, %159 : vector<4x256xf32>
      %cst_107 = arith.constant 0.000000e+00 : f32
      %161 = vector.broadcast %cst_107 : f32 to vector<4x256xf32>
      %162 = arith.maximumf %160, %161 : vector<4x256xf32>
      %163 = arith.truncf %162 : vector<4x256xf32> to vector<4x256xbf16>
      %c0_108 = arith.constant 0 : index
      %c0_109 = arith.constant 0 : index
      %164 = vector.load %arg13[%c0_108, %c0_109] : memref<256x256xbf16, #tpu.memory_space<vmem>>, vector<256x256xbf16>
      %cst_110 = arith.constant dense<0.000000e+00> : vector<4x256xf32>
      %165 = tpu.matmul %163, %164, %cst_110 {dimension_numbers = #tpu.dot_dimension_numbers<[1], [0], [0], [1], [0, 0, 1, 1], [], []>} : vector<4x256xbf16>, vector<256x256xbf16>, vector<4x256xf32> -> vector<4x256xf32>
      %c0_111 = arith.constant 0 : index
      %c0_112 = arith.constant 0 : index
      %166 = vector.load %arg14[%c0_111, %c0_112] : memref<1x256xf32, #tpu.memory_space<vmem>>, vector<1x256xf32>
      %167 = vector.broadcast %166 : vector<1x256xf32> to vector<4x256xf32>
      %168 = arith.addf %165, %167 : vector<4x256xf32>
      %c0_113 = arith.constant 0 : index
      %c0_114 = arith.constant 0 : index
      %c0_115 = arith.constant 0 : index
      %169 = vector.load %arg15[%c0_113, %c0_114, %c0_115] : memref<1x4x256xf32, #tpu.memory_space<vmem>>, vector<1x4x256xf32>
      %170 = vector.shape_cast %169 : vector<1x4x256xf32> to vector<4x256xf32>
      %171 = vector.shape_cast %168 : vector<4x256xf32> to vector<1x4x256xf32>
      tpu.vector_store %arg15[%c0_113, %c0_114, %c0_115], %171 {strides = array<i32>} : memref<1x4x256xf32, #tpu.memory_space<vmem>>, vector<1x4x256xf32>,
    } else {
    }
    return
  }
  func.func @transform_0(%arg0: i32, %arg1: i32) -> (i32, i32, i32) {
    %c0_i32 = arith.constant 0 : i32
    %c0_i32_0 = arith.constant 0 : i32
    return %arg0, %c0_i32, %arg1 : i32, i32, i32
  }
  func.func @transform_1(%arg0: i32, %arg1: i32) -> (i32, i32) {
    %c0_i32 = arith.constant 0 : i32
    %c0_i32_0 = arith.constant 0 : i32
    %c0_i32_1 = arith.constant 0 : i32
    return %c0_i32, %c0_i32_0 : i32, i32
  }
  func.func @transform_2(%arg0: i32, %arg1: i32) -> (i32, i32) {
    %c0_i32 = arith.constant 0 : i32
    %c0_i32_0 = arith.constant 0 : i32
    %c0_i32_1 = arith.constant 0 : i32
    return %c0_i32, %c0_i32_0 : i32, i32
  }
  func.func @transform_3(%arg0: i32, %arg1: i32) -> (i32, i32) {
    %c0_i32 = arith.constant 0 : i32
    %c0_i32_0 = arith.constant 0 : i32
    %c0_i32_1 = arith.constant 0 : i32
    return %c0_i32, %c0_i32_0 : i32, i32
  }
  func.func @transform_4(%arg0: i32, %arg1: i32) -> (i32, i32) {
    %c0_i32 = arith.constant 0 : i32
    %c0_i32_0 = arith.constant 0 : i32
    %c0_i32_1 = arith.constant 0 : i32
    return %c0_i32, %c0_i32_0 : i32, i32
  }
  func.func @transform_5(%arg0: i32, %arg1: i32) -> (i32, i32) {
    %c0_i32 = arith.constant 0 : i32
    %c0_i32_0 = arith.constant 0 : i32
    %c0_i32_1 = arith.constant 0 : i32
    return %c0_i32, %c0_i32_0 : i32, i32
  }
  func.func @transform_6(%arg0: i32, %arg1: i32) -> (i32, i32) {
    %c0_i32 = arith.constant 0 : i32
    %c0_i32_0 = arith.constant 0 : i32
    %c0_i32_1 = arith.constant 0 : i32
    return %c0_i32, %c0_i32_0 : i32, i32
  }
  func.func @transform_7(%arg0: i32, %arg1: i32) -> (i32, i32) {
    %c0_i32 = arith.constant 0 : i32
    %c0_i32_0 = arith.constant 0 : i32
    %c0_i32_1 = arith.constant 0 : i32
    return %c0_i32, %c0_i32_0 : i32, i32
  }
  func.func @transform_8(%arg0: i32, %arg1: i32) -> (i32, i32) {
    %c0_i32 = arith.constant 0 : i32
    %c0_i32_0 = arith.constant 0 : i32
    %c0_i32_1 = arith.constant 0 : i32
    return %c0_i32, %c0_i32_0 : i32, i32
  }
  func.func @transform_9(%arg0: i32, %arg1: i32) -> (i32, i32) {
    %c0_i32 = arith.constant 0 : i32
    %c0_i32_0 = arith.constant 0 : i32
    %c0_i32_1 = arith.constant 0 : i32
    return %c0_i32, %c0_i32_0 : i32, i32
  }
  func.func @transform_10(%arg0: i32, %arg1: i32) -> (i32, i32) {
    %c0_i32 = arith.constant 0 : i32
    %c0_i32_0 = arith.constant 0 : i32
    %c0_i32_1 = arith.constant 0 : i32
    return %c0_i32, %c0_i32_0 : i32, i32
  }
  func.func @transform_11(%arg0: i32, %arg1: i32) -> (i32, i32) {
    %c0_i32 = arith.constant 0 : i32
    %c0_i32_0 = arith.constant 0 : i32
    %c0_i32_1 = arith.constant 0 : i32
    return %c0_i32, %c0_i32_0 : i32, i32
  }
  func.func @transform_12(%arg0: i32, %arg1: i32) -> (i32, i32) {
    %c0_i32 = arith.constant 0 : i32
    %c0_i32_0 = arith.constant 0 : i32
    %c0_i32_1 = arith.constant 0 : i32
    return %c0_i32, %c0_i32_0 : i32, i32
  }
  func.func @transform_13(%arg0: i32, %arg1: i32) -> (i32, i32, i32) {
    %c0_i32 = arith.constant 0 : i32
    %c0_i32_0 = arith.constant 0 : i32
    %c0_i32_1 = arith.constant 0 : i32
    return %arg0, %c0_i32, %c0_i32_0 : i32, i32, i32
  }
}

</mosaic_0001>

<llo_original>
// kernel: tpu_custom_call.1
$region0: #{tpu_custom_call.1}
  #allocation0 [shape = 'u32[]', space=smem, size = 0x4, offset = 0x4, fixed_abs, tag = 'smem constant byte address 0x4 - core index']
  #allocation1 [shape = 'u32[144,128]{1,0:T(1,128)}', space=vmem, size = 0x12000, scoped, tag = 'internal scratch']
  #allocation2 [shape = 'bf16[4,1024]{1,0:T(4,128)(2,1)}', space=vmem, size = 0x2000, scoped, tag = 'scratch operand']
  %s0 = inlined_call_operand.hbm [shape: f32[8,16,200], index: 0, kind: input, shape index: {}]
  %s1 = inlined_call_operand.hbm [shape: bf16[16,64], index: 1, kind: input, shape index: {}]
  %s2 = inlined_call_operand.hbm [shape: f32[1,64], index: 2, kind: input, shape index: {}]
  %s3 = inlined_call_operand.hbm [shape: bf16[64,128], index: 3, kind: input, shape index: {}]
  %s4 = inlined_call_operand.hbm [shape: f32[1,128], index: 4, kind: input, shape index: {}]
  %s5 = inlined_call_operand.hbm [shape: bf16[128,1024], index: 5, kind: input, shape index: {}]
  %s6 = inlined_call_operand.vmem [shape: f32[1,1024], index: 6, kind: input, shape index: {}]
  %s7 = inlined_call_operand.hbm [shape: bf16[1024,512], index: 7, kind: input, shape index: {}]
  %s8 = inlined_call_operand.vmem [shape: f32[1,512], index: 8, kind: input, shape index: {}]
  %s9 = inlined_call_operand.hbm [shape: bf16[512,256], index: 9, kind: input, shape index: {}]
  %s10 = inlined_call_operand.vmem [shape: f32[1,256], index: 10, kind: input, shape index: {}]
  %s11 = inlined_call_operand.hbm [shape: bf16[256,256], index: 11, kind: input, shape index: {}]
  %s12 = inlined_call_operand.vmem [shape: f32[1,256], index: 12, kind: input, shape index: {}]
  %s13 = inlined_call_operand.hbm [shape: f32[2,4,256], index: 13, kind: output, shape index: {}]
  %s14 = sld [smem:[#allocation0]]
  $region129: #{tpu_custom_call.1} parent=0
    _
  %s16 = ssub.s32 1, %s14
  %s17 = scalar_select 0, %s16, %s14
  $region1: #{tpu_custom_call.1} parent=0
    #allocation3 [shape = 'u8[65536]{0}', space=vmem, size = 0x10000, scoped, tag = 'input window, operand 0']
    #allocation4 [shape = 's32[2]{0}', space=sflag, size = 0x8, scoped, tag = 'scoped memory for tpu_custom_call.1']
    #allocation5 [shape = 's32[2]{0}', space=sflag, size = 0x8, scoped, tag = 'scoped memory for tpu_custom_call.1']
    #allocation6 [shape = 'u8[4096]{0}', space=vmem, size = 0x1000, scoped, tag = 'input window, operand 1, single buffered']
    #allocation7 [shape = 's32[1]{0}', space=sflag, size = 0x4, scoped, tag = 'scoped memory for tpu_custom_call.1']
    #allocation8 [shape = 'u8[512]{0}', space=vmem, size = 0x400, scoped, tag = 'input window, operand 2, single buffered']
    #allocation9 [shape = 'u8[16384]{0}', space=vmem, size = 0x4000, scoped, tag = 'input window, operand 3, single buffered']
    #allocation10 [shape = 's32[1]{0}', space=sflag, size = 0x4, scoped, tag = 'scoped memory for tpu_custom_call.1']
    #allocation11 [shape = 'u8[512]{0}', space=vmem, size = 0x400, scoped, tag = 'input window, operand 4, single buffered']
    #allocation12 [shape = 'u8[262144]{0}', space=vmem, size = 0x40000, scoped, tag = 'input window, operand 5, single buffered']
    #allocation13 [shape = 's32[1]{0}', space=sflag, size = 0x4, scoped, tag = 'scoped memory for tpu_custom_call.1']
    #allocation14 [shape = 'u8[1048576]{0}', space=vmem, size = 0x100000, scoped, tag = 'input window, operand 7, single buffered']
    #allocation15 [shape = 'u8[262144]{0}', space=vmem, size = 0x40000, scoped, tag = 'input window, operand 9, single buffered']
    #allocation16 [shape = 's32[1]{0}', space=sflag, size = 0x4, scoped, tag = 'scoped memory for tpu_custom_call.1']
    #allocation17 [shape = 'u8[131072]{0}', space=vmem, size = 0x20000, scoped, tag = 'input window, operand 11, single buffered']
    #allocation18 [shape = 'u8[8192]{0}', space=vmem, size = 0x2000, scoped, tag = 'output window, operand 0']
    %18 = vsyncpa [#allocation4], 0
    %s19 = scalar_lea.sflag [#allocation4], 1
    %20 = vsyncpa %s19, 0
    %21 = vsyncpa [#allocation7], 0
    %22 = vsyncpa [#allocation10], 0
    %23 = vsyncpa [#allocation13], 0
    %24 = vsyncpa [#allocation16], 0
    %25 = vsyncpa [#allocation5], 0
    %s26 = scalar_lea.sflag [#allocation5], 1
    %27 = vsyncpa %s26, 0
    loop: start=0, step=1, limit=6
    $region2: #{tpu_custom_call.1} parent=1 // loop_pre_header
      _
    $region3: #{tpu_custom_call.1} parent=1 // loop_header
      %s29 = sphi 0, %s33
      %p30 = scmp.ge.s32.totalorder %s29, 6
      %s36 = sphi 0, %s48
      %s37 = sphi 0, %s44
      %s38 = sphi 0, %s36
      %s39 = sphi 0, %s37
      %s40 = sphi 0, %s38
      %s41 = sphi 0, %s39
      %s53 = sphi 0, %s55
      %s56 = sphi 0, %s53
      %s57 = sphi 0, %s56
      %s73 = sphi 0, %s57
      %s77 = sphi 0, %s77
      %s79 = sphi 0, %s77
      %s80 = sphi 0, %s79
      %s94 = sphi 0, %s80
      %s98 = sphi 0, %s98
      %s100 = sphi 0, %s98
      %s101 = sphi 0, %s100
      %s115 = sphi 0, %s101
      %s119 = sphi 0, %s119
      %s121 = sphi 0, %s119
      %s122 = sphi 0, %s121
      %s136 = sphi 0, %s122
      %s140 = sphi 0, %s140
      %s142 = sphi 0, %s140
      %s143 = sphi 0, %s142
      %s157 = sphi 0, %s143
      %s161 = sphi 0, %s161
      %s163 = sphi 0, %s161
      %s164 = sphi 0, %s163
      %s178 = sphi 0, %s164
      %s182 = sphi 0, %s182
      %s184 = sphi 0, %s182
      %s185 = sphi 0, %s184
      %s199 = sphi 0, %s185
      %s203 = sphi 0, %s203
      %s205 = sphi 0, %s203
      %s206 = sphi 0, %s205
      %s220 = sphi 0, %s206
      %s224 = sphi 0, %s224
      %s226 = sphi 0, %s224
      %s227 = sphi 0, %s226
      %s241 = sphi 0, %s227
      %s245 = sphi 0, %s245
      %s247 = sphi 0, %s245
      %s248 = sphi 0, %s247
      %s262 = sphi 0, %s248
      %s266 = sphi 0, %s266
      %s268 = sphi 0, %s266
      %s269 = sphi 0, %s268
      %s283 = sphi 0, %s269
      %s287 = sphi 0, %s287
      %s289 = sphi 0, %s287
      %s290 = sphi 0, %s289
      %s304 = sphi 0, %s290
      %s308 = sphi 0, %s308
      %s310 = sphi 0, %s308
      %s311 = sphi 0, %s310
      %s325 = sphi 0, %s311
      %s331 = sphi 0, %s333
      %s334 = sphi 0, %s331
      %s335 = sphi 0, %s334
      %s351 = sphi 0, %s335
    $region4: #{tpu_custom_call.1} parent=1 // loop_header_branch
      %32 = sbr.rel (%p30) target = $region8
    $region5: #{tpu_custom_call.1} parent=1 // loop_body
      %s34 = ssub.s32 %s29, 1
      %s35 = ssub.s32 %s29, 2
      %s42 = sadd.s32 1, %s37
      %p43 = scmp.ge.s32.totalorder %s42, 2
      %s44 = scalar_select %p43, 0, %s42
      %s45 = sadd.s32 1, %s36
      %s46 = scalar_select %p43, %s45, %s36
      %p47 = scmp.ge.s32.totalorder %s46, 2
      %s48 = scalar_select %p47, 0, %s46
      %s49 = ssub.s32 %s36, %s48
      %s50 = ssub.s32 %s37, %s44
      %s51 = sor.u32 %s49, %s50
      %p52 = scmp.eq.s32.totalorder %s51, 0
      %s54 = sadd.s32 %s53, 1
      %s55 = scalar_select %p52, %s53, %s54
      %p58 = pneg %p52
      %p59 = scmp.eq.s32.totalorder %s29, 3
      %p60 = por %p58, %p59
      %p61 = scmp.ne.s32.totalorder %s53, %s56
      %p62 = scmp.eq.s32.totalorder %s29, 0
      %p63 = por %p61, %p62
      %p64 = scmp.ne.s32.totalorder %s53, %s56
      %p65 = scmp.eq.s32.totalorder %s34, 3
      %p66 = por %p64, %p65
      %p67 = scmp.ne.s32.totalorder %s56, %s57
      %p68 = scmp.eq.s32.totalorder %s34, 0
      %p69 = por %p67, %p68
      %p70 = scmp.ne.s32.totalorder %s56, %s57
      %p71 = scmp.eq.s32.totalorder %s35, 3
      %p72 = por %p70, %p71
      %p74 = scmp.ne.s32.totalorder %s57, %s73
      %p75 = scmp.eq.s32.totalorder %s35, 0
      %p76 = por %p74, %p75
      %s78 = sadd.s32 %s77, 1
      %p81 = scmp.eq.s32.totalorder %s29, 3
      %p82 = scmp.ne.s32.totalorder %s77, %s79
      %p83 = scmp.eq.s32.totalorder %s29, 0
      %p84 = por %p82, %p83
      %p85 = scmp.ne.s32.totalorder %s77, %s79
      %p86 = scmp.eq.s32.totalorder %s34, 3
      %p87 = por %p85, %p86
      %p88 = scmp.ne.s32.totalorder %s79, %s80
      %p89 = scmp.eq.s32.totalorder %s34, 0
      %p90 = por %p88, %p89
      %p91 = scmp.ne.s32.totalorder %s79, %s80
      %p92 = scmp.eq.s32.totalorder %s35, 3
      %p93 = por %p91, %p92
      %p95 = scmp.ne.s32.totalorder %s80, %s94
      %p96 = scmp.eq.s32.totalorder %s35, 0
      %p97 = por %p95, %p96
      %s99 = sadd.s32 %s98, 1
      %p102 = scmp.eq.s32.totalorder %s29, 3
      %p103 = scmp.ne.s32.totalorder %s98, %s100
      %p104 = scmp.eq.s32.totalorder %s29, 0
      %p105 = por %p103, %p104
      %p106 = scmp.ne.s32.totalorder %s98, %s100
      %p107 = scmp.eq.s32.totalorder %s34, 3
      %p108 = por %p106, %p107
      %p109 = scmp.ne.s32.totalorder %s100, %s101
      %p110 = scmp.eq.s32.totalorder %s34, 0
      %p111 = por %p109, %p110
      %p112 = scmp.ne.s32.totalorder %s100, %s101
      %p113 = scmp.eq.s32.totalorder %s35, 3
      %p114 = por %p112, %p113
      %p116 = scmp.ne.s32.totalorder %s101, %s115
      %p117 = scmp.eq.s32.totalorder %s35, 0
      %p118 = por %p116, %p117
      %s120 = sadd.s32 %s119, 1
      %p123 = scmp.eq.s32.totalorder %s29, 3
      %p124 = scmp.ne.s32.totalorder %s119, %s121
      %p125 = scmp.eq.s32.totalorder %s29, 0
      %p126 = por %p124, %p125
      %p127 = scmp.ne.s32.totalorder %s119, %s121
      %p128 = scmp.eq.s32.totalorder %s34, 3
      %p129 = por %p127, %p128
      %p130 = scmp.ne.s32.totalorder %s121, %s122
      %p131 = scmp.eq.s32.totalorder %s34, 0
      %p132 = por %p130, %p131
      %p133 = scmp.ne.s32.totalorder %s121, %s122
      %p134 = scmp.eq.s32.totalorder %s35, 3
      %p135 = por %p133, %p134
      %p137 = scmp.ne.s32.totalorder %s122, %s136
      %p138 = scmp.eq.s32.totalorder %s35, 0
      %p139 = por %p137, %p138
      %s141 = sadd.s32 %s140, 1
      %p144 = scmp.eq.s32.totalorder %s29, 3
      %p145 = scmp.ne.s32.totalorder %s140, %s142
      %p146 = scmp.eq.s32.totalorder %s29, 0
      %p147 = por %p145, %p146
      %p148 = scmp.ne.s32.totalorder %s140, %s142
      %p149 = scmp.eq.s32.totalorder %s34, 3
      %p150 = por %p148, %p149
      %p151 = scmp.ne.s32.totalorder %s142, %s143
      %p152 = scmp.eq.s32.totalorder %s34, 0
      %p153 = por %p151, %p152
      %p154 = scmp.ne.s32.totalorder %s142, %s143
      %p155 = scmp.eq.s32.totalorder %s35, 3
      %p156 = por %p154, %p155
      %p158 = scmp.ne.s32.totalorder %s143, %s157
      %p159 = scmp.eq.s32.totalorder %s35, 0
      %p160 = por %p158, %p159
      %s162 = sadd.s32 %s161, 1
      %p165 = scmp.eq.s32.totalorder %s29, 3
      %p166 = scmp.ne.s32.totalorder %s161, %s163
      %p167 = scmp.eq.s32.totalorder %s29, 0
      %p168 = por %p166, %p167
      %p169 = scmp.ne.s32.totalorder %s161, %s163
      %p170 = scmp.eq.s32.totalorder %s34, 3
      %p171 = por %p169, %p170
      %p172 = scmp.ne.s32.totalorder %s163, %s164
      %p173 = scmp.eq.s32.totalorder %s34, 0
      %p174 = por %p172, %p173
      %p175 = scmp.ne.s32.totalorder %s163, %s164
      %p176 = scmp.eq.s32.totalorder %s35, 3
      %p177 = por %p175, %p176
      %p179 = scmp.ne.s32.totalorder %s164, %s178
      %p180 = scmp.eq.s32.totalorder %s35, 0
      %p181 = por %p179, %p180
      %s183 = sadd.s32 %s182, 1
      %p186 = scmp.eq.s32.totalorder %s29, 3
      %p187 = scmp.ne.s32.totalorder %s182, %s184
      %p188 = scmp.eq.s32.totalorder %s29, 0
      %p189 = por %p187, %p188
      %p190 = scmp.ne.s32.totalorder %s182, %s184
      %p191 = scmp.eq.s32.totalorder %s34, 3
      %p192 = por %p190, %p191
      %p193 = scmp.ne.s32.totalorder %s184, %s185
      %p194 = scmp.eq.s32.totalorder %s34, 0
      %p195 = por %p193, %p194
      %p196 = scmp.ne.s32.totalorder %s184, %s185
      %p197 = scmp.eq.s32.totalorder %s35, 3
      %p198 = por %p196, %p197
      %p200 = scmp.ne.s32.totalorder %s185, %s199
      %p201 = scmp.eq.s32.totalorder %s35, 0
      %p202 = por %p200, %p201
      %s204 = sadd.s32 %s203, 1
      %p207 = scmp.eq.s32.totalorder %s29, 3
      %p208 = scmp.ne.s32.totalorder %s203, %s205
      %p209 = scmp.eq.s32.totalorder %s29, 0
      %p210 = por %p208, %p209
      %p211 = scmp.ne.s32.totalorder %s203, %s205
      %p212 = scmp.eq.s32.totalorder %s34, 3
      %p213 = por %p211, %p212
      %p214 = scmp.ne.s32.totalorder %s205, %s206
      %p215 = scmp.eq.s32.totalorder %s34, 0
      %p216 = por %p214, %p215
      %p217 = scmp.ne.s32.totalorder %s205, %s206
      %p218 = scmp.eq.s32.totalorder %s35, 3
      %p219 = por %p217, %p218
      %p221 = scmp.ne.s32.totalorder %s206, %s220
      %p222 = scmp.eq.s32.totalorder %s35, 0
      %p223 = por %p221, %p222
      %s225 = sadd.s32 %s224, 1
      %p228 = scmp.eq.s32.totalorder %s29, 3
      %p229 = scmp.ne.s32.totalorder %s224, %s226
      %p230 = scmp.eq.s32.totalorder %s29, 0
      %p231 = por %p229, %p230
      %p232 = scmp.ne.s32.totalorder %s224, %s226
      %p233 = scmp.eq.s32.totalorder %s34, 3
      %p234 = por %p232, %p233
      %p235 = scmp.ne.s32.totalorder %s226, %s227
      %p236 = scmp.eq.s32.totalorder %s34, 0
      %p237 = por %p235, %p236
      %p238 = scmp.ne.s32.totalorder %s226, %s227
      %p239 = scmp.eq.s32.totalorder %s35, 3
      %p240 = por %p238, %p239
      %p242 = scmp.ne.s32.totalorder %s227, %s241
      %p243 = scmp.eq.s32.totalorder %s35, 0
      %p244 = por %p242, %p243
      %s246 = sadd.s32 %s245, 1
      %p249 = scmp.eq.s32.totalorder %s29, 3
      %p250 = scmp.ne.s32.totalorder %s245, %s247
      %p251 = scmp.eq.s32.totalorder %s29, 0
      %p252 = por %p250, %p251
      %p253 = scmp.ne.s32.totalorder %s245, %s247
      %p254 = scmp.eq.s32.totalorder %s34, 3
      %p255 = por %p253, %p254
      %p256 = scmp.ne.s32.totalorder %s247, %s248
      %p257 = scmp.eq.s32.totalorder %s34, 0
      %p258 = por %p256, %p257
      %p259 = scmp.ne.s32.totalorder %s247, %s248
      %p260 = scmp.eq.s32.totalorder %s35, 3
      %p261 = por %p259, %p260
      %p263 = scmp.ne.s32.totalorder %s248, %s262
      %p264 = scmp.eq.s32.totalorder %s35, 0
      %p265 = por %p263, %p264
      %s267 = sadd.s32 %s266, 1
      %p270 = scmp.eq.s32.totalorder %s29, 3
      %p271 = scmp.ne.s32.totalorder %s266, %s268
      %p272 = scmp.eq.s32.totalorder %s29, 0
      %p273 = por %p271, %p272
      %p274 = scmp.ne.s32.totalorder %s266, %s268
      %p275 = scmp.eq.s32.totalorder %s34, 3
      %p276 = por %p274, %p275
      %p277 = scmp.ne.s32.totalorder %s268, %s269
      %p278 = scmp.eq.s32.totalorder %s34, 0
      %p279 = por %p277, %p278
      %p280 = scmp.ne.s32.totalorder %s268, %s269
      %p281 = scmp.eq.s32.totalorder %s35, 3
      %p282 = por %p280, %p281
      %p284 = scmp.ne.s32.totalorder %s269, %s283
      %p285 = scmp.eq.s32.totalorder %s35, 0
      %p286 = por %p284, %p285
      %s288 = sadd.s32 %s287, 1
      %p291 = scmp.eq.s32.totalorder %s29, 3
      %p292 = scmp.ne.s32.totalorder %s287, %s289
      %p293 = scmp.eq.s32.totalorder %s29, 0
      %p294 = por %p292, %p293
      %p295 = scmp.ne.s32.totalorder %s287, %s289
      %p296 = scmp.eq.s32.totalorder %s34, 3
      %p297 = por %p295, %p296
      %p298 = scmp.ne.s32.totalorder %s289, %s290
      %p299 = scmp.eq.s32.totalorder %s34, 0
      %p300 = por %p298, %p299
      %p301 = scmp.ne.s32.totalorder %s289, %s290
      %p302 = scmp.eq.s32.totalorder %s35, 3
      %p303 = por %p301, %p302
      %p305 = scmp.ne.s32.totalorder %s290, %s304
      %p306 = scmp.eq.s32.totalorder %s35, 0
      %p307 = por %p305, %p306
      %s309 = sadd.s32 %s308, 1
      %p312 = scmp.eq.s32.totalorder %s29, 3
      %p313 = scmp.ne.s32.totalorder %s308, %s310
      %p314 = scmp.eq.s32.totalorder %s29, 0
      %p315 = por %p313, %p314
      %p316 = scmp.ne.s32.totalorder %s308, %s310
      %p317 = scmp.eq.s32.totalorder %s34, 3
      %p318 = por %p316, %p317
      %p319 = scmp.ne.s32.totalorder %s310, %s311
      %p320 = scmp.eq.s32.totalorder %s34, 0
      %p321 = por %p319, %p320
      %p322 = scmp.ne.s32.totalorder %s310, %s311
      %p323 = scmp.eq.s32.totalorder %s35, 3
      %p324 = por %p322, %p323
      %p326 = scmp.ne.s32.totalorder %s311, %s325
      %p327 = scmp.eq.s32.totalorder %s35, 0
      %p328 = por %p326, %p327
      %s329 = ssub.s32 %s36, %s48
      %p330 = scmp.eq.s32.totalorder %s329, 0
      %s332 = sadd.s32 %s331, 1
      %s333 = scalar_select %p330, %s331, %s332
      %p336 = pneg %p330
      %p337 = scmp.eq.s32.totalorder %s29, 3
      %p338 = por %p336, %p337
      %p339 = scmp.ne.s32.totalorder %s331, %s334
      %p340 = scmp.eq.s32.totalorder %s29, 0
      %p341 = por %p339, %p340
      %p342 = scmp.ne.s32.totalorder %s331, %s334
      %p343 = scmp.eq.s32.totalorder %s34, 3
      %p344 = por %p342, %p343
      %p345 = scmp.ne.s32.totalorder %s334, %s335
      %p346 = scmp.eq.s32.totalorder %s34, 0
      %p347 = por %p345, %p346
      %p348 = scmp.ne.s32.totalorder %s334, %s335
      %p349 = scmp.eq.s32.totalorder %s35, 3
      %p350 = por %p348, %p349
      %p352 = scmp.ne.s32.totalorder %s335, %s351
      %p353 = scmp.eq.s32.totalorder %s35, 0
      %p354 = por %p352, %p353
      %p355 = scmp.le.s32.totalorder 1, %s29
      %p356 = scmp.lt.s32.totalorder %s29, 5
      %p357 = pnand %p355, %p356
      %p358 = pneg %p357
      // Predicated region
      $region9: #{tpu_custom_call.1} parent=5 // pred_check
        _
      $region10: #{tpu_custom_call.1} parent=5 // pred_check_branch
        %360 = sbr.rel (%p357) target = $region12
      $region11: #{tpu_custom_call.1} parent=5 // pred_region
        %s361 = ssub.s32 %s29, 1
        // Predicated region
        $region13: #{tpu_custom_call.1} parent=11 // pred_check
          %p362 = pneg %p90
        $region14: #{tpu_custom_call.1} parent=11 // pred_check_branch
          %364 = sbr.rel (%p362) target = $region16
        $region15: #{tpu_custom_call.1} parent=11 // pred_region
          %s366 = ssub.s32 128, 128
          %367 = vsyncadd [#allocation7], %s366
          %s368 = sshll.u32 [#allocation6], 4
          %s369 = int_to_ptr.vmem [resolvable:$true] %s368
          %374 = dma.hbm_to_vmem [thread:$0]  %s1, 128, %s369, [#allocation7], 64, 64, 4
        $region16: #{tpu_custom_call.1} parent=11 // pred_fallthru
          _
        // Predicated region
        $region17: #{tpu_custom_call.1} parent=11 // pred_check
          %p375 = pneg %p111
        $region18: #{tpu_custom_call.1} parent=11 // pred_check_branch
          %377 = sbr.rel (%p375) target = $region20
        $region19: #{tpu_custom_call.1} parent=11 // pred_region
          %s379 = ssub.s32 16, 16
          %380 = vsyncadd [#allocation7], %s379
          %s382 = sshll.u32 [#allocation8], 4
          %s383 = int_to_ptr.vmem [resolvable:$true] %s382
          %385 = dma.hbm_to_vmem [thread:$0]  %s2, 16, %s383, [#allocation7]
        $region20: #{tpu_custom_call.1} parent=11 // pred_fallthru
          _
        // Predicated region
        $region21: #{tpu_custom_call.1} parent=11 // pred_check
          %p386 = pneg %p132
        $region22: #{tpu_custom_call.1} parent=11 // pred_check_branch
          %388 = sbr.rel (%p386) target = $region24
        $region23: #{tpu_custom_call.1} parent=11 // pred_region
          %s390 = ssub.s32 512, 512
          %391 = vsyncadd [#allocation10], %s390
          %s392 = sshll.u32 [#allocation9], 4
          %s393 = int_to_ptr.vmem [resolvable:$true] %s392
          %398 = dma.hbm_to_vmem [thread:$0]  %s3, 512, %s393, [#allocation10], 64, 64, 4
        $region24: #{tpu_custom_call.1} parent=11 // pred_fallthru
          _
        // Predicated region
        $region25: #{tpu_custom_call.1} parent=11 // pred_check
          %p399 = pneg %p153
        $region26: #{tpu_custom_call.1} parent=11 // pred_check_branch
          %401 = sbr.rel (%p399) target = $region28
        $region27: #{tpu_custom_call.1} parent=11 // pred_region
          %s403 = ssub.s32 16, 16
          %404 = vsyncadd [#allocation10], %s403
          %s406 = sshll.u32 [#allocation11], 4
          %s407 = int_to_ptr.vmem [resolvable:$true] %s406
          %409 = dma.hbm_to_vmem [thread:$0]  %s4, 16, %s407, [#allocation10]
        $region28: #{tpu_custom_call.1} parent=11 // pred_fallthru
          _
        // Predicated region
        $region29: #{tpu_custom_call.1} parent=11 // pred_check
          %p410 = pneg %p174
        $region30: #{tpu_custom_call.1} parent=11 // pred_check_branch
          %412 = sbr.rel (%p410) target = $region32
        $region31: #{tpu_custom_call.1} parent=11 // pred_region
          %s414 = ssub.s32 8192, 8192
          %415 = vsyncadd [#allocation13], %s414
          %s416 = sshll.u32 [#allocation12], 4
          %s417 = int_to_ptr.vmem [resolvable:$true] %s416
          %422 = dma.hbm_to_vmem [thread:$0]  %s5, 8192, %s417, [#allocation13], 512, 512, 32
        $region32: #{tpu_custom_call.1} parent=11 // pred_fallthru
          _
        // Predicated region
        $region33: #{tpu_custom_call.1} parent=11 // pred_check
          %p423 = pneg %p195
        $region34: #{tpu_custom_call.1} parent=11 // pred_check_branch
          %425 = sbr.rel (%p423) target = $region36
        $region35: #{tpu_custom_call.1} parent=11 // pred_region
          _
        $region36: #{tpu_custom_call.1} parent=11 // pred_fallthru
          _
        // Predicated region
        $region37: #{tpu_custom_call.1} parent=11 // pred_check
          %p426 = pneg %p216
        $region38: #{tpu_custom_call.1} parent=11 // pred_check_branch
          %428 = sbr.rel (%p426) target = $region40
        $region39: #{tpu_custom_call.1} parent=11 // pred_region
          %s430 = ssub.s32 32768, 32768
          %431 = vsyncadd [#allocation13], %s430
          %s432 = sshll.u32 [#allocation14], 4
          %s433 = int_to_ptr.vmem [resolvable:$true] %s432
          %438 = dma.hbm_to_vmem [thread:$0]  %s7, 32768, %s433, [#allocation13], 256, 256, 16
        $region40: #{tpu_custom_call.1} parent=11 // pred_fallthru
          _
        // Predicated region
        $region41: #{tpu_custom_call.1} parent=11 // pred_check
          %p439 = pneg %p237
        $region42: #{tpu_custom_call.1} parent=11 // pred_check_branch
          %441 = sbr.rel (%p439) target = $region44
        $region43: #{tpu_custom_call.1} parent=11 // pred_region
          _
        $region44: #{tpu_custom_call.1} parent=11 // pred_fallthru
          _
        // Predicated region
        $region45: #{tpu_custom_call.1} parent=11 // pred_check
          %p442 = pneg %p258
        $region46: #{tpu_custom_call.1} parent=11 // pred_check_branch
          %444 = sbr.rel (%p442) target = $region48
        $region47: #{tpu_custom_call.1} parent=11 // pred_region
          %s446 = ssub.s32 8192, 8192
          %447 = vsyncadd [#allocation16], %s446
          %s448 = sshll.u32 [#allocation15], 4
          %s449 = int_to_ptr.vmem [resolvable:$true] %s448
          %454 = dma.hbm_to_vmem [thread:$0]  %s9, 8192, %s449, [#allocation16], 128, 128, 8
        $region48: #{tpu_custom_call.1} parent=11 // pred_fallthru
          _
        // Predicated region
        $region49: #{tpu_custom_call.1} parent=11 // pred_check
          %p455 = pneg %p279
        $region50: #{tpu_custom_call.1} parent=11 // pred_check_branch
          %457 = sbr.rel (%p455) target = $region52
        $region51: #{tpu_custom_call.1} parent=11 // pred_region
          _
        $region52: #{tpu_custom_call.1} parent=11 // pred_fallthru
          _
        // Predicated region
        $region53: #{tpu_custom_call.1} parent=11 // pred_check
          %p458 = pneg %p300
        $region54: #{tpu_custom_call.1} parent=11 // pred_check_branch
          %460 = sbr.rel (%p458) target = $region56
        $region55: #{tpu_custom_call.1} parent=11 // pred_region
          %s462 = ssub.s32 4096, 4096
          %463 = vsyncadd [#allocation16], %s462
          %s464 = sshll.u32 [#allocation17], 4
          %s465 = int_to_ptr.vmem [resolvable:$true] %s464
          %470 = dma.hbm_to_vmem [thread:$0]  %s11, 4096, %s465, [#allocation16], 128, 128, 8
        $region56: #{tpu_custom_call.1} parent=11 // pred_fallthru
          _
        // Predicated region
        $region57: #{tpu_custom_call.1} parent=11 // pred_check
          %p471 = pneg %p321
        $region58: #{tpu_custom_call.1} parent=11 // pred_check_branch
          %473 = sbr.rel (%p471) target = $region60
        $region59: #{tpu_custom_call.1} parent=11 // pred_region
          _
        $region60: #{tpu_custom_call.1} parent=11 // pred_fallthru
          _
      $region12: #{tpu_custom_call.1} parent=5 // pred_fallthru
        _
      %p474 = scmp.lt.s32.totalorder %s29, 4
      // Predicated region
      $region61: #{tpu_custom_call.1} parent=5 // pred_check
        %p475 = pneg %p474
      $region62: #{tpu_custom_call.1} parent=5 // pred_check_branch
        %477 = sbr.rel (%p475) target = $region64
      $region63: #{tpu_custom_call.1} parent=5 // pred_region
        // Predicated region
        $region65: #{tpu_custom_call.1} parent=63 // pred_check
          %p478 = pneg %p63
        $region66: #{tpu_custom_call.1} parent=63 // pred_check_branch
          %480 = sbr.rel (%p478) target = $region68
        $region67: #{tpu_custom_call.1} parent=63 // pred_region
          %s481 = sand.u32 %s53, 1
          %s482 = scalar_lea.sflag [#allocation4], %s481
          %s483 = sand.u32 %s53, 1
          %s484 = smul.addr %s483, 64
          %s485 = scalar_lea.vmem [#allocation3], %s484
          %s486 = smul.u32 4, %s36
          %s488 = ssub.s32 1024, 1024
          %489 = vsyncadd %s482, %s488
          %s490 = smul.addr %s486, 4
          %s491 = sadd.s32 %s37, %s490
          %s492 = smul.addr %s491, 128
          %s493 = scalar_lea.hbm %s0, %s492
          %s494 = sshll.u32 %s485, 4
          %s495 = int_to_ptr.vmem [resolvable:$true] %s494
          %500 = dma.hbm_to_vmem [thread:$0]  %s493, 1024, %s495, %s482, 256, 128, 8
        $region68: #{tpu_custom_call.1} parent=63 // pred_fallthru
          _
      $region64: #{tpu_custom_call.1} parent=5 // pred_fallthru
        _
      %p501 = scmp.le.s32.totalorder 1, %s29
      %p502 = scmp.lt.s32.totalorder %s29, 5
      %p503 = pnand %p501, %p502
      %p504 = pneg %p503
      // Predicated region
      $region69: #{tpu_custom_call.1} parent=5 // pred_check
        _
      $region70: #{tpu_custom_call.1} parent=5 // pred_check_branch
        %506 = sbr.rel (%p503) target = $region72
      $region71: #{tpu_custom_call.1} parent=5 // pred_region
        %s507 = ssub.s32 %s29, 1
        %s508 = sand.u32 %s56, 1
        %s509 = scalar_lea.sflag [#allocation4], %s508
        %s510 = sand.u32 %s56, 1
        %s511 = smul.addr %s510, 64
        %s512 = scalar_lea.vmem [#allocation3], %s511
        // Predicated region
        $region73: #{tpu_custom_call.1} parent=71 // pred_check
          %p513 = pneg %p69
        $region74: #{tpu_custom_call.1} parent=71 // pred_check_branch
          %515 = sbr.rel (%p513) target = $region76
        $region75: #{tpu_custom_call.1} parent=71 // pred_region
          %516 = dma.done %s509, 1024
        $region76: #{tpu_custom_call.1} parent=71 // pred_fallthru
          _
        // Predicated region
        $region77: #{tpu_custom_call.1} parent=71 // pred_check
          %p517 = pneg %p90
        $region78: #{tpu_custom_call.1} parent=71 // pred_check_branch
          %519 = sbr.rel (%p517) target = $region80
        $region79: #{tpu_custom_call.1} parent=71 // pred_region
          %520 = dma.done [#allocation7], 128
        $region80: #{tpu_custom_call.1} parent=71 // pred_fallthru
          _
        // Predicated region
        $region81: #{tpu_custom_call.1} parent=71 // pred_check
          %p521 = pneg %p111
        $region82: #{tpu_custom_call.1} parent=71 // pred_check_branch
          %523 = sbr.rel (%p521) target = $region84
        $region83: #{tpu_custom_call.1} parent=71 // pred_region
          %524 = dma.done [#allocation7], 16
        $region84: #{tpu_custom_call.1} parent=71 // pred_fallthru
          _
        // Predicated region
        $region85: #{tpu_custom_call.1} parent=71 // pred_check
          %p525 = pneg %p132
        $region86: #{tpu_custom_call.1} parent=71 // pred_check_branch
          %527 = sbr.rel (%p525) target = $region88
        $region87: #{tpu_custom_call.1} parent=71 // pred_region
          %528 = dma.done [#allocation10], 512
        $region88: #{tpu_custom_call.1} parent=71 // pred_fallthru
          _
        // Predicated region
        $region89: #{tpu_custom_call.1} parent=71 // pred_check
          %p529 = pneg %p153
        $region90: #{tpu_custom_call.1} parent=71 // pred_check_branch
          %531 = sbr.rel (%p529) target = $region92
        $region91: #{tpu_custom_call.1} parent=71 // pred_region
          %532 = dma.done [#allocation10], 16
        $region92: #{tpu_custom_call.1} parent=71 // pred_fallthru
          _
        // Predicated region
        $region93: #{tpu_custom_call.1} parent=71 // pred_check
          %p533 = pneg %p174
        $region94: #{tpu_custom_call.1} parent=71 // pred_check_branch
          %535 = sbr.rel (%p533) target = $region96
        $region95: #{tpu_custom_call.1} parent=71 // pred_region
          %536 = dma.done [#allocation13], 8192
        $region96: #{tpu_custom_call.1} parent=71 // pred_fallthru
          _
        // Predicated region
        $region97: #{tpu_custom_call.1} parent=71 // pred_check
          %p537 = pneg %p216
        $region98: #{tpu_custom_call.1} parent=71 // pred_check_branch
          %539 = sbr.rel (%p537) target = $region100
        $region99: #{tpu_custom_call.1} parent=71 // pred_region
          %540 = dma.done [#allocation13], 32768
        $region100: #{tpu_custom_call.1} parent=71 // pred_fallthru
          _
        // Predicated region
        $region101: #{tpu_custom_call.1} parent=71 // pred_check
          %p541 = pneg %p258
        $region102: #{tpu_custom_call.1} parent=71 // pred_check_branch
          %543 = sbr.rel (%p541) target = $region104
        $region103: #{tpu_custom_call.1} parent=71 // pred_region
          %544 = dma.done [#allocation16], 8192
        $region104: #{tpu_custom_call.1} parent=71 // pred_fallthru
          _
        // Predicated region
        $region105: #{tpu_custom_call.1} parent=71 // pred_check
          %p545 = pneg %p300
        $region106: #{tpu_custom_call.1} parent=71 // pred_check_branch
          %547 = sbr.rel (%p545) target = $region108
        $region107: #{tpu_custom_call.1} parent=71 // pred_region
          %548 = dma.done [#allocation16], 4096
        $region108: #{tpu_custom_call.1} parent=71 // pred_fallthru
          _
        %s549 = sand.u32 %s56, 1
        %s550 = scalar_lea.sflag [#allocation4], %s549
        %s551 = sand.u32 %s56, 1
        %s552 = smul.addr %s551, 64
        %s553 = scalar_lea.vmem [#allocation3], %s552
        %p554 = pneg %p69
        %p555 = pneg %p66
        %p556 = pneg %p90
        %p557 = pneg %p87
        %p558 = pneg %p111
        %p559 = pneg %p108
        %p560 = pneg %p132
        %p561 = pneg %p129
        %p562 = pneg %p153
        %p563 = pneg %p150
        %p564 = pneg %p174
        %p565 = pneg %p171
        %p566 = pneg %p195
        %p567 = pneg %p192
        %p568 = pneg %p216
        %p569 = pneg %p213
        %p570 = pneg %p237
        %p571 = pneg %p234
        %p572 = pneg %p258
        %p573 = pneg %p255
        %p574 = pneg %p279
        %p575 = pneg %p276
        %p576 = pneg %p300
        %p577 = pneg %p297
        %p578 = pneg %p321
        %p579 = pneg %p318
        %p580 = pneg %p347
        %p581 = pneg %p344
        %s582 = sand.u32 %s334, 1
        %s583 = scalar_lea.sflag [#allocation5], %s582
        %s584 = sand.u32 %s334, 1
        %s585 = smul.addr %s584, 8
        %s586 = scalar_lea.vmem [#allocation18], %s585
        %s587 = smul.u32 4, %s38
        %p591 = scmp.eq.s32.totalorder %s39, 0
        // Predicated region
        $region109: #{tpu_custom_call.1} parent=71 // pred_check
          %p592 = pneg %p591
        $region110: #{tpu_custom_call.1} parent=71 // pred_check_branch
          %594 = sbr.rel (%p592) target = $region112
        $region111: #{tpu_custom_call.1} parent=71 // pred_region
          %595 = vst [vmem:[#allocation2] sm:$0xff] 0
          %596 = vst [vmem:[#allocation2 + $0x8] sm:$0xff] 0
        $region112: #{tpu_custom_call.1} parent=71 // pred_fallthru
          _
        %p597 = scmp.eq.s32.totalorder %s39, 1
        %s598 = scalar_select %p597, 72, 128
        %v599 = vlaneseq
        %v600 = vshrl.u32 %v599, 7
        %v601 = vadd.s32 %v600, 8
        %v602 = vadd.s32 %v600, 16
        %v603 = vadd.s32 %v600, 24
        %v604 = vadd.s32 %v600, 32
        %v605 = vadd.s32 %v600, 40
        %v606 = vadd.s32 %v600, 48
        %v607 = vadd.s32 %v600, 56
        %v608 = vadd.s32 %v600, 64
        %v609 = vadd.s32 %v600, 72
        %v610 = vadd.s32 %v600, 80
        %v611 = vadd.s32 %v600, 88
        %v612 = vadd.s32 %v600, 96
        %v613 = vadd.s32 %v600, 104
        %v614 = vadd.s32 %v600, 112
        %v615 = vadd.s32 %v600, 120
        %v616 = vstv %s598
        %vm617 = vcmp.lt.s32.totalorder %v600, %v616
        %vm618 = vcmp.lt.s32.totalorder %v601, %v616
        %vm619 = vcmp.lt.s32.totalorder %v602, %v616
        %vm620 = vcmp.lt.s32.totalorder %v603, %v616
        %vm621 = vcmp.lt.s32.totalorder %v604, %v616
        %vm622 = vcmp.lt.s32.totalorder %v605, %v616
        %vm623 = vcmp.lt.s32.totalorder %v606, %v616
        %vm624 = vcmp.lt.s32.totalorder %v607, %v616
        %vm625 = vcmp.lt.s32.totalorder %v608, %v616
        %vm626 = vcmp.lt.s32.totalorder %v609, %v616
        %vm627 = vcmp.lt.s32.totalorder %v610, %v616
        %vm628 = vcmp.lt.s32.totalorder %v611, %v616
        %vm629 = vcmp.lt.s32.totalorder %v612, %v616
        %vm630 = vcmp.lt.s32.totalorder %v613, %v616
        %vm631 = vcmp.lt.s32.totalorder %v614, %v616
        %vm632 = vcmp.lt.s32.totalorder %v615, %v616
        %v633 = vld [vmem:[%s512] sm:$0xff]
        %v634 = vld [vmem:[%s512 + $0x8] sm:$0xff]
        %v635 = vpack.c.bf16 %v634, %v633
        %v636 = vld [vmem:[#allocation6] sm:$0xf]
        %v637 = vld [vmem:[#allocation6 + $0x4] sm:$0xf]
        %v638 = vld [vmem:[#allocation8] sm:$0x1]
        %v640 = vlaneseq
        %v641 = vshrl.u32 %v640, 7
        %v642 = vsub.s32 0, %v641
        %v643 = vrot.slane %v638, %v642
        %645 = vxpose.xlu0.c.b16.start [1/8] %v635, 128
        %646 = vxpose.xlu0.c.b16.cont [2/8] 0, 128
        %647 = vxpose.xlu0.c.b16.cont [3/8] 0, 128
        %648 = vxpose.xlu0.c.b16.cont [4/8] 0, 128
        %649 = vxpose.xlu0.c.b16.cont [5/8] 0, 128
        %650 = vxpose.xlu0.c.b16.cont [6/8] 0, 128
        %651 = vxpose.xlu0.c.b16.cont [7/8] 0, 128
        %652 = vxpose.xlu0.c.b16.end [8/8] 0, 128
        %v653 = vpop.trf.xlu0
        %v654 = vpop.trf.xlu0
        %v655 = vpop.trf.xlu0
        %v656 = vpop.trf.xlu0
        %v657 = vpop.trf.xlu0
        %v658 = vpop.trf.xlu0
        %v659 = vpop.trf.xlu0
        %v660 = vpop.trf.xlu0
        %v663 = vunpack.c.l.b16 %v636
        %v664 = vunpack.c.l.b16 %v637
        %v665 = vpack.c.b16 %v664, %v663
        %vm667 = vcmask 130048
        %v669 = vsel %vm667, %v653, 0
        %v672 = vsel %vm667, %v654, 0
        %v675 = vsel %vm667, %v655, 0
        %v678 = vsel %vm667, %v656, 0
        %v681 = vsel %vm667, %v657, 0
        %v684 = vsel %vm667, %v658, 0
        %v687 = vsel %vm667, %v659, 0
        %v690 = vsel %vm667, %v660, 0
        %692 = vmatprep.subr.bf16.mxu0 0
        %693 = vmatpush1.bf16.msra.mxu0 0
        %694 = vmatprep.subr.bf16.mxu0 0
        %695 = vmatpush1.bf16.msra.mxu0 0
        %696 = vmatprep.subr.bf16.mxu0 0
        %697 = vmatpush1.bf16.msra.mxu0 0
        %698 = vmatprep.subr.bf16.mxu0 0
        %699 = vmatpush1.bf16.msra.mxu0 0
        %700 = vmatprep.subr.bf16.mxu0 0
        %701 = vmatpush1.bf16.msra.mxu0 0
        %702 = vmatprep.subr.bf16.mxu0 0
        %703 = vmatpush1.bf16.msra.mxu0 0
        %704 = vmatprep.subr.bf16.mxu0 0
        %705 = vmatpush1.bf16.msra.mxu0 0
        %706 = vmatprep.subr.bf16.mxu0 0
        %707 = vmatpush1.bf16.msra.mxu0 %v665
        %708 = vmatprep.subr.bf16.mxu0 0
        %709 = vmatpush2.bf16.msra.mxu0 0
        %710 = vmatprep.subr.bf16.mxu0 0
        %711 = vmatpush2.bf16.msra.mxu0 0
        %712 = vmatprep.subr.bf16.mxu0 0
        %713 = vmatpush2.bf16.msra.mxu0 0
        %714 = vmatprep.subr.bf16.mxu0 0
        %715 = vmatpush2.bf16.msra.mxu0 0
        %716 = vmatprep.subr.bf16.mxu0 0
        %717 = vmatpush2.bf16.msra.mxu0 0
        %718 = vmatprep.subr.bf16.mxu0 0
        %719 = vmatpush2.bf16.msra.mxu0 0
        %720 = vmatprep.subr.bf16.mxu0 0
        %721 = vmatpush2.bf16.msra.mxu0 0
        %722 = vmatprep.subr.bf16.mxu0 0
        %723 = vmatpush2.bf16.msra.mxu0 0
        %724 = vmatprep.mubr.bf16.mxu0 0
        %725 = vmatmul.mubr.bf16.gmra.mxu0 %v669
        %v726 = vpop.f32.mrf.mxu0
        %v727 = vadd.f32 %v643, %v726
        %v728 = vpop.f32.mrf.mxu0
        %v729 = vpop.f32.mrf.mxu0
        %v730 = vadd.f32 %v643, %v729
        %v731 = vpop.f32.mrf.mxu0
        %732 = vmatprep.mubr.bf16.mxu0 0
        %733 = vmatmul.mubr.bf16.gmra.mxu0 %v672
        %v734 = vpop.f32.mrf.mxu0
        %v735 = vadd.f32 %v643, %v734
        %v736 = vpop.f32.mrf.mxu0
        %v737 = vpop.f32.mrf.mxu0
        %v738 = vadd.f32 %v643, %v737
        %v739 = vpop.f32.mrf.mxu0
        %740 = vmatprep.mubr.bf16.mxu0 0
        %741 = vmatmul.mubr.bf16.gmra.mxu0 %v675
        %v742 = vpop.f32.mrf.mxu0
        %v743 = vadd.f32 %v643, %v742
        %v744 = vpop.f32.mrf.mxu0
        %v745 = vpop.f32.mrf.mxu0
        %v746 = vadd.f32 %v643, %v745
        %v747 = vpop.f32.mrf.mxu0
        %748 = vmatprep.mubr.bf16.mxu0 0
        %749 = vmatmul.mubr.bf16.gmra.mxu0 %v678
        %v750 = vpop.f32.mrf.mxu0
        %v751 = vadd.f32 %v643, %v750
        %v752 = vpop.f32.mrf.mxu0
        %v753 = vpop.f32.mrf.mxu0
        %v754 = vadd.f32 %v643, %v753
        %v755 = vpop.f32.mrf.mxu0
        %756 = vmatprep.mubr.bf16.mxu0 0
        %757 = vmatmul.mubr.bf16.gmra.mxu0 %v681
        %v758 = vpop.f32.mrf.mxu0
        %v759 = vadd.f32 %v643, %v758
        %v760 = vpop.f32.mrf.mxu0
        %v761 = vpop.f32.mrf.mxu0
        %v762 = vadd.f32 %v643, %v761
        %v763 = vpop.f32.mrf.mxu0
        %764 = vmatprep.mubr.bf16.mxu0 0
        %765 = vmatmul.mubr.bf16.gmra.mxu0 %v684
        %v766 = vpop.f32.mrf.mxu0
        %v767 = vadd.f32 %v643, %v766
        %v768 = vpop.f32.mrf.mxu0
        %v769 = vpop.f32.mrf.mxu0
        %v770 = vadd.f32 %v643, %v769
        %v771 = vpop.f32.mrf.mxu0
        %772 = vmatprep.mubr.bf16.mxu0 0
        %773 = vmatmul.mubr.bf16.gmra.mxu0 %v687
        %v774 = vpop.f32.mrf.mxu0
        %v775 = vadd.f32 %v643, %v774
        %v776 = vpop.f32.mrf.mxu0
        %v777 = vpop.f32.mrf.mxu0
        %v778 = vadd.f32 %v643, %v777
        %v779 = vpop.f32.mrf.mxu0
        %780 = vmatprep.mubr.bf16.mxu0 0
        %781 = vmatmul.mubr.bf16.gmra.mxu0 %v690
        %v782 = vpop.f32.mrf.mxu0
        %v783 = vadd.f32 %v643, %v782
        %v784 = vpop.f32.mrf.mxu0
        %v785 = vpop.f32.mrf.mxu0
        %v786 = vadd.f32 %v643, %v785
        %v787 = vpop.f32.mrf.mxu0
        %788 = vdwg.mxu0
        %v789 = vmax.f32 %v727, 0.0
        %v790 = vmax.f32 %v730, 0.0
        %v791 = vmax.f32 %v735, 0.0
        %v792 = vmax.f32 %v738, 0.0
        %v793 = vmax.f32 %v743, 0.0
        %v794 = vmax.f32 %v746, 0.0
        %v795 = vmax.f32 %v751, 0.0
        %v796 = vmax.f32 %v754, 0.0
        %v797 = vmax.f32 %v759, 0.0
        %v798 = vmax.f32 %v762, 0.0
        %v799 = vmax.f32 %v767, 0.0
        %v800 = vmax.f32 %v770, 0.0
        %v801 = vmax.f32 %v775, 0.0
        %v802 = vmax.f32 %v778, 0.0
        %v803 = vmax.f32 %v783, 0.0
        %v804 = vmax.f32 %v786, 0.0
        %v805 = vpack.c.bf16 %v790, %v789
        %v806 = vpack.c.bf16 %v792, %v791
        %v807 = vpack.c.bf16 %v794, %v793
        %v808 = vpack.c.bf16 %v796, %v795
        %v809 = vpack.c.bf16 %v798, %v797
        %v810 = vpack.c.bf16 %v800, %v799
        %v811 = vpack.c.bf16 %v802, %v801
        %v812 = vpack.c.bf16 %v804, %v803
        %v813 = vld [vmem:[#allocation9] sm:$0xf]
        %v814 = vld [vmem:[#allocation9 + $0x4] sm:$0xf]
        %v815 = vld [vmem:[#allocation9 + $0x8] sm:$0xf]
        %v816 = vld [vmem:[#allocation9 + $0xc] sm:$0xf]
        %v817 = vld [vmem:[#allocation9 + $0x10] sm:$0xf]
        %v818 = vld [vmem:[#allocation9 + $0x14] sm:$0xf]
        %v819 = vld [vmem:[#allocation9 + $0x18] sm:$0xf]
        %v820 = vld [vmem:[#allocation9 + $0x1c] sm:$0xf]
        %v821 = vld [vmem:[#allocation11] sm:$0x1]
        %v823 = vlaneseq
        %v824 = vshrl.u32 %v823, 7
        %v825 = vsub.s32 0, %v824
        %v826 = vrot.slane %v821, %v825
        %v836 = vunpack.c.l.b16 %v813
        %v837 = vunpack.c.l.b16 %v814
        %v838 = vunpack.c.l.b16 %v815
        %v839 = vunpack.c.l.b16 %v816
        %v840 = vunpack.c.l.b16 %v817
        %v841 = vunpack.c.l.b16 %v818
        %v842 = vunpack.c.l.b16 %v819
        %v843 = vunpack.c.l.b16 %v820
        %v844 = vpack.c.b16 %v837, %v836
        %v845 = vpack.c.b16 %v839, %v838
        %v846 = vpack.c.b16 %v841, %v840
        %v847 = vpack.c.b16 %v843, %v842
        %vm852 = vcmask 523264
        %v854 = vsel %vm852, %v805, 0
        %v857 = vsel %vm852, %v806, 0
        %v860 = vsel %vm852, %v807, 0
        %v863 = vsel %vm852, %v808, 0
        %v866 = vsel %vm852, %v809, 0
        %v869 = vsel %vm852, %v810, 0
        %v872 = vsel %vm852, %v811, 0
        %v875 = vsel %vm852, %v812, 0
        %877 = vmatprep.subr.bf16.mxu0 0
        %878 = vmatpush1.bf16.msra.mxu0 0
        %879 = vmatprep.subr.bf16.mxu0 0
        %880 = vmatpush1.bf16.msra.mxu0 0
        %881 = vmatprep.subr.bf16.mxu0 0
        %882 = vmatpush1.bf16.msra.mxu0 0
        %883 = vmatprep.subr.bf16.mxu0 0
        %884 = vmatpush1.bf16.msra.mxu0 0
        %885 = vmatprep.subr.bf16.mxu0 0
        %886 = vmatpush1.bf16.msra.mxu0 %v847
        %887 = vmatprep.subr.bf16.mxu0 0
        %888 = vmatpush1.bf16.msra.mxu0 %v846
        %889 = vmatprep.subr.bf16.mxu0 0
        %890 = vmatpush1.bf16.msra.mxu0 %v845
        %891 = vmatprep.subr.bf16.mxu0 0
        %892 = vmatpush1.bf16.msra.mxu0 %v844
        %893 = vmatprep.subr.bf16.mxu0 0
        %894 = vmatpush2.bf16.msra.mxu0 0
        %895 = vmatprep.subr.bf16.mxu0 0
        %896 = vmatpush2.bf16.msra.mxu0 0
        %897 = vmatprep.subr.bf16.mxu0 0
        %898 = vmatpush2.bf16.msra.mxu0 0
        %899 = vmatprep.subr.bf16.mxu0 0
        %900 = vmatpush2.bf16.msra.mxu0 0
        %901 = vmatprep.subr.bf16.mxu0 0
        %902 = vmatpush2.bf16.msra.mxu0 0
        %903 = vmatprep.subr.bf16.mxu0 0
        %904 = vmatpush2.bf16.msra.mxu0 0
        %905 = vmatprep.subr.bf16.mxu0 0
        %906 = vmatpush2.bf16.msra.mxu0 0
        %907 = vmatprep.subr.bf16.mxu0 0
        %908 = vmatpush2.bf16.msra.mxu0 0
        %909 = vmatprep.mubr.bf16.mxu0 0
        %910 = vmatmul.mubr.bf16.gmra.mxu0 %v854
        %v911 = vpop.f32.mrf.mxu0
        %v912 = vadd.f32 %v826, %v911
        %v913 = vpop.f32.mrf.mxu0
        %v914 = vpop.f32.mrf.mxu0
        %v915 = vadd.f32 %v826, %v914
        %v916 = vpop.f32.mrf.mxu0
        %917 = vmatprep.mubr.bf16.mxu0 0
        %918 = vmatmul.mubr.bf16.gmra.mxu0 %v857
        %v919 = vpop.f32.mrf.mxu0
        %v920 = vadd.f32 %v826, %v919
        %v921 = vpop.f32.mrf.mxu0
        %v922 = vpop.f32.mrf.mxu0
        %v923 = vadd.f32 %v826, %v922
        %v924 = vpop.f32.mrf.mxu0
        %925 = vmatprep.mubr.bf16.mxu0 0
        %926 = vmatmul.mubr.bf16.gmra.mxu0 %v860
        %v927 = vpop.f32.mrf.mxu0
        %v928 = vadd.f32 %v826, %v927
        %v929 = vpop.f32.mrf.mxu0
        %v930 = vpop.f32.mrf.mxu0
        %v931 = vadd.f32 %v826, %v930
        %v932 = vpop.f32.mrf.mxu0
        %933 = vmatprep.mubr.bf16.mxu0 0
        %934 = vmatmul.mubr.bf16.gmra.mxu0 %v863
        %v935 = vpop.f32.mrf.mxu0
        %v936 = vadd.f32 %v826, %v935
        %v937 = vpop.f32.mrf.mxu0
        %v938 = vpop.f32.mrf.mxu0
        %v939 = vadd.f32 %v826, %v938
        %v940 = vpop.f32.mrf.mxu0
        %941 = vmatprep.mubr.bf16.mxu0 0
        %942 = vmatmul.mubr.bf16.gmra.mxu0 %v866
        %v943 = vpop.f32.mrf.mxu0
        %v944 = vadd.f32 %v826, %v943
        %v945 = vpop.f32.mrf.mxu0
        %v946 = vpop.f32.mrf.mxu0
        %v947 = vadd.f32 %v826, %v946
        %v948 = vpop.f32.mrf.mxu0
        %949 = vmatprep.mubr.bf16.mxu0 0
        %950 = vmatmul.mubr.bf16.gmra.mxu0 %v869
        %v951 = vpop.f32.mrf.mxu0
        %v952 = vadd.f32 %v826, %v951
        %v953 = vpop.f32.mrf.mxu0
        %v954 = vpop.f32.mrf.mxu0
        %v955 = vadd.f32 %v826, %v954
        %v956 = vpop.f32.mrf.mxu0
        %957 = vmatprep.mubr.bf16.mxu0 0
        %958 = vmatmul.mubr.bf16.gmra.mxu0 %v872
        %v959 = vpop.f32.mrf.mxu0
        %v960 = vadd.f32 %v826, %v959
        %v961 = vpop.f32.mrf.mxu0
        %v962 = vpop.f32.mrf.mxu0
        %v963 = vadd.f32 %v826, %v962
        %v964 = vpop.f32.mrf.mxu0
        %965 = vmatprep.mubr.bf16.mxu0 0
        %966 = vmatmul.mubr.bf16.gmra.mxu0 %v875
        %v967 = vpop.f32.mrf.mxu0
        %v968 = vadd.f32 %v826, %v967
        %v969 = vpop.f32.mrf.mxu0
        %v970 = vpop.f32.mrf.mxu0
        %v971 = vadd.f32 %v826, %v970
        %v972 = vpop.f32.mrf.mxu0
        %973 = vdwg.mxu0
        %v974 = vmax.f32 %v912, 0.0
        %v975 = vmax.f32 %v915, 0.0
        %v976 = vmax.f32 %v920, 0.0
        %v977 = vmax.f32 %v923, 0.0
        %v978 = vmax.f32 %v928, 0.0
        %v979 = vmax.f32 %v931, 0.0
        %v980 = vmax.f32 %v936, 0.0
        %v981 = vmax.f32 %v939, 0.0
        %v982 = vmax.f32 %v944, 0.0
        %v983 = vmax.f32 %v947, 0.0
        %v984 = vmax.f32 %v952, 0.0
        %v985 = vmax.f32 %v955, 0.0
        %v986 = vmax.f32 %v960, 0.0
        %v987 = vmax.f32 %v963, 0.0
        %v988 = vmax.f32 %v968, 0.0
        %v989 = vmax.f32 %v971, 0.0
        %v990 = vpack.c.bf16 %v975, %v974
        %v991 = vpack.c.bf16 %v977, %v976
        %v992 = vpack.c.bf16 %v979, %v978
        %v993 = vpack.c.bf16 %v981, %v980
        %v994 = vpack.c.bf16 %v983, %v982
        %v995 = vpack.c.bf16 %v985, %v984
        %v996 = vpack.c.bf16 %v987, %v986
        %v997 = vpack.c.bf16 %v989, %v988
        %v998 = vld [vmem:[#allocation12] sm:$0xff]
        %v999 = vld [vmem:[#allocation12 + $0x8] sm:$0xff]
        %v1000 = vld [vmem:[#allocation12 + $0x10] sm:$0xff]
        %v1001 = vld [vmem:[#allocation12 + $0x18] sm:$0xff]
        %v1002 = vld [vmem:[#allocation12 + $0x20] sm:$0xff]
        %v1003 = vld [vmem:[#allocation12 + $0x28] sm:$0xff]
        %v1004 = vld [vmem:[#allocation12 + $0x30] sm:$0xff]
        %v1005 = vld [vmem:[#allocation12 + $0x38] sm:$0xff]
        %v1006 = vld [vmem:[#allocation12 + $0x40] sm:$0xff]
        %v1007 = vld [vmem:[#allocation12 + $0x48] sm:$0xff]
        %v1008 = vld [vmem:[#allocation12 + $0x50] sm:$0xff]
        %v1009 = vld [vmem:[#allocation12 + $0x58] sm:$0xff]
        %v1010 = vld [vmem:[#allocation12 + $0x60] sm:$0xff]
        %v1011 = vld [vmem:[#allocation12 + $0x68] sm:$0xff]
        %v1012 = vld [vmem:[#allocation12 + $0x70] sm:$0xff]
        %v1013 = vld [vmem:[#allocation12 + $0x78] sm:$0xff]
        %v1014 = vld [vmem:[#allocation12 + $0x80] sm:$0xff]
        %v1015 = vld [vmem:[#allocation12 + $0x88] sm:$0xff]
        %v1016 = vld [vmem:[#allocation12 + $0x90] sm:$0xff]
        %v1017 = vld [vmem:[#allocation12 + $0x98] sm:$0xff]
        %v1018 = vld [vmem:[#allocation12 + $0xa0] sm:$0xff]
        %v1019 = vld [vmem:[#allocation12 + $0xa8] sm:$0xff]
        %v1020 = vld [vmem:[#allocation12 + $0xb0] sm:$0xff]
        %v1021 = vld [vmem:[#allocation12 + $0xb8] sm:$0xff]
        %v1022 = vld [vmem:[#allocation12 + $0xc0] sm:$0xff]
        %v1023 = vld [vmem:[#allocation12 + $0xc8] sm:$0xff]
        %v1024 = vld [vmem:[#allocation12 + $0xd0] sm:$0xff]
        %v1025 = vld [vmem:[#allocation12 + $0xd8] sm:$0xff]
        %v1026 = vld [vmem:[#allocation12 + $0xe0] sm:$0xff]
        %v1027 = vld [vmem:[#allocation12 + $0xe8] sm:$0xff]
        %v1028 = vld [vmem:[#allocation12 + $0xf0] sm:$0xff]
        %v1029 = vld [vmem:[#allocation12 + $0xf8] sm:$0xff]
        %v1030 = vld [vmem:[#allocation12 + $0x100] sm:$0xff]
        %v1031 = vld [vmem:[#allocation12 + $0x108] sm:$0xff]
        %v1032 = vld [vmem:[#allocation12 + $0x110] sm:$0xff]
        %v1033 = vld [vmem:[#allocation12 + $0x118] sm:$0xff]
        %v1034 = vld [vmem:[#allocation12 + $0x120] sm:$0xff]
        %v1035 = vld [vmem:[#allocation12 + $0x128] sm:$0xff]
        %v1036 = vld [vmem:[#allocation12 + $0x130] sm:$0xff]
        %v1037 = vld [vmem:[#allocation12 + $0x138] sm:$0xff]
        %v1038 = vld [vmem:[#allocation12 + $0x140] sm:$0xff]
        %v1039 = vld [vmem:[#allocation12 + $0x148] sm:$0xff]
        %v1040 = vld [vmem:[#allocation12 + $0x150] sm:$0xff]
        %v1041 = vld [vmem:[#allocation12 + $0x158] sm:$0xff]
        %v1042 = vld [vmem:[#allocation12 + $0x160] sm:$0xff]
        %v1043 = vld [vmem:[#allocation12 + $0x168] sm:$0xff]
        %v1044 = vld [vmem:[#allocation12 + $0x170] sm:$0xff]
        %v1045 = vld [vmem:[#allocation12 + $0x178] sm:$0xff]
        %v1046 = vld [vmem:[#allocation12 + $0x180] sm:$0xff]
        %v1047 = vld [vmem:[#allocation12 + $0x188] sm:$0xff]
        %v1048 = vld [vmem:[#allocation12 + $0x190] sm:$0xff]
        %v1049 = vld [vmem:[#allocation12 + $0x198] sm:$0xff]
        %v1050 = vld [vmem:[#allocation12 + $0x1a0] sm:$0xff]
        %v1051 = vld [vmem:[#allocation12 + $0x1a8] sm:$0xff]
        %v1052 = vld [vmem:[#allocation12 + $0x1b0] sm:$0xff]
        %v1053 = vld [vmem:[#allocation12 + $0x1b8] sm:$0xff]
        %v1054 = vld [vmem:[#allocation12 + $0x1c0] sm:$0xff]
        %v1055 = vld [vmem:[#allocation12 + $0x1c8] sm:$0xff]
        %v1056 = vld [vmem:[#allocation12 + $0x1d0] sm:$0xff]
        %v1057 = vld [vmem:[#allocation12 + $0x1d8] sm:$0xff]
        %v1058 = vld [vmem:[#allocation12 + $0x1e0] sm:$0xff]
        %v1059 = vld [vmem:[#allocation12 + $0x1e8] sm:$0xff]
        %v1060 = vld [vmem:[#allocation12 + $0x1f0] sm:$0xff]
        %v1061 = vld [vmem:[#allocation12 + $0x1f8] sm:$0xff]
        %v1062 = vld [vmem:[%s6] sm:$0xff]
        %v1064 = vlaneseq
        %v1065 = vshrl.u32 %v1064, 7
        %v1066 = vsub.s32 0, %v1065
        %v1067 = vrot.slane %v1062, %v1066
        %v1068 = vlaneseq
        %v1069 = vshrl.u32 %v1068, 7
        %v1070 = vsub.s32 1, %v1069
        %v1071 = vrot.slane %v1062, %v1070
        %v1072 = vlaneseq
        %v1073 = vshrl.u32 %v1072, 7
        %v1074 = vsub.s32 2, %v1073
        %v1075 = vrot.slane %v1062, %v1074
        %v1076 = vlaneseq
        %v1077 = vshrl.u32 %v1076, 7
        %v1078 = vsub.s32 3, %v1077
        %v1079 = vrot.slane %v1062, %v1078
        %v1080 = vlaneseq
        %v1081 = vshrl.u32 %v1080, 7
        %v1082 = vsub.s32 4, %v1081
        %v1083 = vrot.slane %v1062, %v1082
        %v1084 = vlaneseq
        %v1085 = vshrl.u32 %v1084, 7
        %v1086 = vsub.s32 5, %v1085
        %v1087 = vrot.slane %v1062, %v1086
        %v1088 = vlaneseq
        %v1089 = vshrl.u32 %v1088, 7
        %v1090 = vsub.s32 6, %v1089
        %v1091 = vrot.slane %v1062, %v1090
        %v1092 = vlaneseq
        %v1093 = vshrl.u32 %v1092, 7
        %v1094 = vsub.s32 7, %v1093
        %v1095 = vrot.slane %v1062, %v1094
        %v1168 = vunpack.c.l.b16 %v998
        %v1169 = vunpack.c.h.b16 %v998
        %v1170 = vunpack.c.l.b16 %v999
        %v1171 = vunpack.c.h.b16 %v999
        %v1172 = vunpack.c.l.b16 %v1000
        %v1173 = vunpack.c.h.b16 %v1000
        %v1174 = vunpack.c.l.b16 %v1001
        %v1175 = vunpack.c.h.b16 %v1001
        %v1176 = vunpack.c.l.b16 %v1002
        %v1177 = vunpack.c.h.b16 %v1002
        %v1178 = vunpack.c.l.b16 %v1003
        %v1179 = vunpack.c.h.b16 %v1003
        %v1180 = vunpack.c.l.b16 %v1004
        %v1181 = vunpack.c.h.b16 %v1004
        %v1182 = vunpack.c.l.b16 %v1005
        %v1183 = vunpack.c.h.b16 %v1005
        %v1184 = vunpack.c.l.b16 %v1006
        %v1185 = vunpack.c.h.b16 %v1006
        %v1186 = vunpack.c.l.b16 %v1007
        %v1187 = vunpack.c.h.b16 %v1007
        %v1188 = vunpack.c.l.b16 %v1008
        %v1189 = vunpack.c.h.b16 %v1008
        %v1190 = vunpack.c.l.b16 %v1009
        %v1191 = vunpack.c.h.b16 %v1009
        %v1192 = vunpack.c.l.b16 %v1010
        %v1193 = vunpack.c.h.b16 %v1010
        %v1194 = vunpack.c.l.b16 %v1011
        %v1195 = vunpack.c.h.b16 %v1011
        %v1196 = vunpack.c.l.b16 %v1012
        %v1197 = vunpack.c.h.b16 %v1012
        %v1198 = vunpack.c.l.b16 %v1013
        %v1199 = vunpack.c.h.b16 %v1013
        %v1200 = vunpack.c.l.b16 %v1014
        %v1201 = vunpack.c.h.b16 %v1014
        %v1202 = vunpack.c.l.b16 %v1015
        %v1203 = vunpack.c.h.b16 %v1015
        %v1204 = vunpack.c.l.b16 %v1016
        %v1205 = vunpack.c.h.b16 %v1016
        %v1206 = vunpack.c.l.b16 %v1017
        %v1207 = vunpack.c.h.b16 %v1017
        %v1208 = vunpack.c.l.b16 %v1018
        %v1209 = vunpack.c.h.b16 %v1018
        %v1210 = vunpack.c.l.b16 %v1019
        %v1211 = vunpack.c.h.b16 %v1019
        %v1212 = vunpack.c.l.b16 %v1020
        %v1213 = vunpack.c.h.b16 %v1020
        %v1214 = vunpack.c.l.b16 %v1021
        %v1215 = vunpack.c.h.b16 %v1021
        %v1216 = vunpack.c.l.b16 %v1022
        %v1217 = vunpack.c.h.b16 %v1022
        %v1218 = vunpack.c.l.b16 %v1023
        %v1219 = vunpack.c.h.b16 %v1023
        %v1220 = vunpack.c.l.b16 %v1024
        %v1221 = vunpack.c.h.b16 %v1024
        %v1222 = vunpack.c.l.b16 %v1025
        %v1223 = vunpack.c.h.b16 %v1025
        %v1224 = vunpack.c.l.b16 %v1026
        %v1225 = vunpack.c.h.b16 %v1026
        %v1226 = vunpack.c.l.b16 %v1027
        %v1227 = vunpack.c.h.b16 %v1027
        %v1228 = vunpack.c.l.b16 %v1028
        %v1229 = vunpack.c.h.b16 %v1028
        %v1230 = vunpack.c.l.b16 %v1029
        %v1231 = vunpack.c.h.b16 %v1029
        %v1232 = vunpack.c.l.b16 %v1030
        %v1233 = vunpack.c.h.b16 %v1030
        %v1234 = vunpack.c.l.b16 %v1031
        %v1235 = vunpack.c.h.b16 %v1031
        %v1236 = vunpack.c.l.b16 %v1032
        %v1237 = vunpack.c.h.b16 %v1032
        %v1238 = vunpack.c.l.b16 %v1033
        %v1239 = vunpack.c.h.b16 %v1033
        %v1240 = vunpack.c.l.b16 %v1034
        %v1241 = vunpack.c.h.b16 %v1034
        %v1242 = vunpack.c.l.b16 %v1035
        %v1243 = vunpack.c.h.b16 %v1035
        %v1244 = vunpack.c.l.b16 %v1036
        %v1245 = vunpack.c.h.b16 %v1036
        %v1246 = vunpack.c.l.b16 %v1037
        %v1247 = vunpack.c.h.b16 %v1037
        %v1248 = vunpack.c.l.b16 %v1038
        %v1249 = vunpack.c.h.b16 %v1038
        %v1250 = vunpack.c.l.b16 %v1039
        %v1251 = vunpack.c.h.b16 %v1039
        %v1252 = vunpack.c.l.b16 %v1040
        %v1253 = vunpack.c.h.b16 %v1040
        %v1254 = vunpack.c.l.b16 %v1041
        %v1255 = vunpack.c.h.b16 %v1041
        %v1256 = vunpack.c.l.b16 %v1042
        %v1257 = vunpack.c.h.b16 %v1042
        %v1258 = vunpack.c.l.b16 %v1043
        %v1259 = vunpack.c.h.b16 %v1043
        %v1260 = vunpack.c.l.b16 %v1044
        %v1261 = vunpack.c.h.b16 %v1044
        %v1262 = vunpack.c.l.b16 %v1045
        %v1263 = vunpack.c.h.b16 %v1045
        %v1264 = vunpack.c.l.b16 %v1046
        %v1265 = vunpack.c.h.b16 %v1046
        %v1266 = vunpack.c.l.b16 %v1047
        %v1267 = vunpack.c.h.b16 %v1047
        %v1268 = vunpack.c.l.b16 %v1048
        %v1269 = vunpack.c.h.b16 %v1048
        %v1270 = vunpack.c.l.b16 %v1049
        %v1271 = vunpack.c.h.b16 %v1049
        %v1272 = vunpack.c.l.b16 %v1050
        %v1273 = vunpack.c.h.b16 %v1050
        %v1274 = vunpack.c.l.b16 %v1051
        %v1275 = vunpack.c.h.b16 %v1051
        %v1276 = vunpack.c.l.b16 %v1052
        %v1277 = vunpack.c.h.b16 %v1052
        %v1278 = vunpack.c.l.b16 %v1053
        %v1279 = vunpack.c.h.b16 %v1053
        %v1280 = vunpack.c.l.b16 %v1054
        %v1281 = vunpack.c.h.b16 %v1054
        %v1282 = vunpack.c.l.b16 %v1055
        %v1283 = vunpack.c.h.b16 %v1055
        %v1284 = vunpack.c.l.b16 %v1056
        %v1285 = vunpack.c.h.b16 %v1056
        %v1286 = vunpack.c.l.b16 %v1057
        %v1287 = vunpack.c.h.b16 %v1057
        %v1288 = vunpack.c.l.b16 %v1058
        %v1289 = vunpack.c.h.b16 %v1058
        %v1290 = vunpack.c.l.b16 %v1059
        %v1291 = vunpack.c.h.b16 %v1059
        %v1292 = vunpack.c.l.b16 %v1060
        %v1293 = vunpack.c.h.b16 %v1060
        %v1294 = vunpack.c.l.b16 %v1061
        %v1295 = vunpack.c.h.b16 %v1061
        %v1296 = vpack.c.b16 %v1176, %v1168
        %v1297 = vpack.c.b16 %v1177, %v1169
        %v1298 = vpack.c.b16 %v1178, %v1170
        %v1299 = vpack.c.b16 %v1179, %v1171
        %v1300 = vpack.c.b16 %v1180, %v1172
        %v1301 = vpack.c.b16 %v1181, %v1173
        %v1302 = vpack.c.b16 %v1182, %v1174
        %v1303 = vpack.c.b16 %v1183, %v1175
        %v1304 = vpack.c.b16 %v1192, %v1184
        %v1305 = vpack.c.b16 %v1193, %v1185
        %v1306 = vpack.c.b16 %v1194, %v1186
        %v1307 = vpack.c.b16 %v1195, %v1187
        %v1308 = vpack.c.b16 %v1196, %v1188
        %v1309 = vpack.c.b16 %v1197, %v1189
        %v1310 = vpack.c.b16 %v1198, %v1190
        %v1311 = vpack.c.b16 %v1199, %v1191
        %v1312 = vpack.c.b16 %v1208, %v1200
        %v1313 = vpack.c.b16 %v1209, %v1201
        %v1314 = vpack.c.b16 %v1210, %v1202
        %v1315 = vpack.c.b16 %v1211, %v1203
        %v1316 = vpack.c.b16 %v1212, %v1204
        %v1317 = vpack.c.b16 %v1213, %v1205
        %v1318 = vpack.c.b16 %v1214, %v1206
        %v1319 = vpack.c.b16 %v1215, %v1207
        %v1320 = vpack.c.b16 %v1224, %v1216
        %v1321 = vpack.c.b16 %v1225, %v1217
        %v1322 = vpack.c.b16 %v1226, %v1218
        %v1323 = vpack.c.b16 %v1227, %v1219
        %v1324 = vpack.c.b16 %v1228, %v1220
        %v1325 = vpack.c.b16 %v1229, %v1221
        %v1326 = vpack.c.b16 %v1230, %v1222
        %v1327 = vpack.c.b16 %v1231, %v1223
        %v1328 = vpack.c.b16 %v1240, %v1232
        %v1329 = vpack.c.b16 %v1241, %v1233
        %v1330 = vpack.c.b16 %v1242, %v1234
        %v1331 = vpack.c.b16 %v1243, %v1235
        %v1332 = vpack.c.b16 %v1244, %v1236
        %v1333 = vpack.c.b16 %v1245, %v1237
        %v1334 = vpack.c.b16 %v1246, %v1238
        %v1335 = vpack.c.b16 %v1247, %v1239
        %v1336 = vpack.c.b16 %v1256, %v1248
        %v1337 = vpack.c.b16 %v1257, %v1249
        %v1338 = vpack.c.b16 %v1258, %v1250
        %v1339 = vpack.c.b16 %v1259, %v1251
        %v1340 = vpack.c.b16 %v1260, %v1252
        %v1341 = vpack.c.b16 %v1261, %v1253
        %v1342 = vpack.c.b16 %v1262, %v1254
        %v1343 = vpack.c.b16 %v1263, %v1255
        %v1344 = vpack.c.b16 %v1272, %v1264
        %v1345 = vpack.c.b16 %v1273, %v1265
        %v1346 = vpack.c.b16 %v1274, %v1266
        %v1347 = vpack.c.b16 %v1275, %v1267
        %v1348 = vpack.c.b16 %v1276, %v1268
        %v1349 = vpack.c.b16 %v1277, %v1269
        %v1350 = vpack.c.b16 %v1278, %v1270
        %v1351 = vpack.c.b16 %v1279, %v1271
        %v1352 = vpack.c.b16 %v1288, %v1280
        %v1353 = vpack.c.b16 %v1289, %v1281
        %v1354 = vpack.c.b16 %v1290, %v1282
        %v1355 = vpack.c.b16 %v1291, %v1283
        %v1356 = vpack.c.b16 %v1292, %v1284
        %v1357 = vpack.c.b16 %v1293, %v1285
        %v1358 = vpack.c.b16 %v1294, %v1286
        %v1359 = vpack.c.b16 %v1295, %v1287
        %1424 = vmatprep.subr.bf16.mxu0 %v1353
        %1425 = vmatpush1.bf16.msra.mxu0 %v1352
        %1426 = vmatprep.subr.bf16.mxu0 %v1345
        %1427 = vmatpush1.bf16.msra.mxu0 %v1344
        %1428 = vmatprep.subr.bf16.mxu0 %v1337
        %1429 = vmatpush1.bf16.msra.mxu0 %v1336
        %1430 = vmatprep.subr.bf16.mxu0 %v1329
        %1431 = vmatpush1.bf16.msra.mxu0 %v1328
        %1432 = vmatprep.subr.bf16.mxu0 %v1321
        %1433 = vmatpush1.bf16.msra.mxu0 %v1320
        %1434 = vmatprep.subr.bf16.mxu0 %v1313
        %1435 = vmatpush1.bf16.msra.mxu0 %v1312
        %1436 = vmatprep.subr.bf16.mxu0 %v1305
        %1437 = vmatpush1.bf16.msra.mxu0 %v1304
        %1438 = vmatprep.subr.bf16.mxu0 %v1297
        %1439 = vmatpush1.bf16.msra.mxu0 %v1296
        %1440 = vmatprep.subr.bf16.mxu0 0
        %1441 = vmatpush2.bf16.msra.mxu0 0
        %1442 = vmatprep.subr.bf16.mxu0 0
        %1443 = vmatpush2.bf16.msra.mxu0 0
        %1444 = vmatprep.subr.bf16.mxu0 0
        %1445 = vmatpush2.bf16.msra.mxu0 0
        %1446 = vmatprep.subr.bf16.mxu0 0
        %1447 = vmatpush2.bf16.msra.mxu0 0
        %1448 = vmatprep.subr.bf16.mxu0 0
        %1449 = vmatpush2.bf16.msra.mxu0 0
        %1450 = vmatprep.subr.bf16.mxu0 0
        %1451 = vmatpush2.bf16.msra.mxu0 0
        %1452 = vmatprep.subr.bf16.mxu0 0
        %1453 = vmatpush2.bf16.msra.mxu0 0
        %1454 = vmatprep.subr.bf16.mxu0 0
        %1455 = vmatpush2.bf16.msra.mxu0 0
        %1456 = vmatprep.mubr.bf16.mxu0 0
        %1457 = vmatmul.mubr.bf16.gmra.mxu0 %v990
        %v1458 = vpop.f32.mrf.mxu0
        %v1459 = vadd.f32 %v1067, %v1458
        %v1460 = vpop.f32.mrf.mxu0
        %v1461 = vadd.f32 %v1071, %v1460
        %v1462 = vpop.f32.mrf.mxu0
        %v1463 = vadd.f32 %v1067, %v1462
        %v1464 = vpop.f32.mrf.mxu0
        %v1465 = vadd.f32 %v1071, %v1464
        %1466 = vmatprep.mubr.bf16.mxu0 0
        %1467 = vmatmul.mubr.bf16.gmra.mxu0 %v991
        %v1468 = vpop.f32.mrf.mxu0
        %v1469 = vadd.f32 %v1067, %v1468
        %v1470 = vpop.f32.mrf.mxu0
        %v1471 = vadd.f32 %v1071, %v1470
        %v1472 = vpop.f32.mrf.mxu0
        %v1473 = vadd.f32 %v1067, %v1472
        %v1474 = vpop.f32.mrf.mxu0
        %v1475 = vadd.f32 %v1071, %v1474
        %1476 = vmatprep.mubr.bf16.mxu0 0
        %1477 = vmatmul.mubr.bf16.gmra.mxu0 %v992
        %v1478 = vpop.f32.mrf.mxu0
        %v1479 = vadd.f32 %v1067, %v1478
        %v1480 = vpop.f32.mrf.mxu0
        %v1481 = vadd.f32 %v1071, %v1480
        %v1482 = vpop.f32.mrf.mxu0
        %v1483 = vadd.f32 %v1067, %v1482
        %v1484 = vpop.f32.mrf.mxu0
        %v1485 = vadd.f32 %v1071, %v1484
        %1486 = vmatprep.mubr.bf16.mxu0 0
        %1487 = vmatmul.mubr.bf16.gmra.mxu0 %v993
        %v1488 = vpop.f32.mrf.mxu0
        %v1489 = vadd.f32 %v1067, %v1488
        %v1490 = vpop.f32.mrf.mxu0
        %v1491 = vadd.f32 %v1071, %v1490
        %v1492 = vpop.f32.mrf.mxu0
        %v1493 = vadd.f32 %v1067, %v1492
        %v1494 = vpop.f32.mrf.mxu0
        %v1495 = vadd.f32 %v1071, %v1494
        %1496 = vmatprep.mubr.bf16.mxu0 0
        %1497 = vmatmul.mubr.bf16.gmra.mxu0 %v994
        %v1498 = vpop.f32.mrf.mxu0
        %v1499 = vadd.f32 %v1067, %v1498
        %v1500 = vpop.f32.mrf.mxu0
        %v1501 = vadd.f32 %v1071, %v1500
        %v1502 = vpop.f32.mrf.mxu0
        %v1503 = vadd.f32 %v1067, %v1502
        %v1504 = vpop.f32.mrf.mxu0
        %v1505 = vadd.f32 %v1071, %v1504
        %1506 = vmatprep.mubr.bf16.mxu0 0
        %1507 = vmatmul.mubr.bf16.gmra.mxu0 %v995
        %v1508 = vpop.f32.mrf.mxu0
        %v1509 = vadd.f32 %v1067, %v1508
        %v1510 = vpop.f32.mrf.mxu0
        %v1511 = vadd.f32 %v1071, %v1510
        %v1512 = vpop.f32.mrf.mxu0
        %v1513 = vadd.f32 %v1067, %v1512
        %v1514 = vpop.f32.mrf.mxu0
        %v1515 = vadd.f32 %v1071, %v1514
        %1516 = vmatprep.mubr.bf16.mxu0 0
        %1517 = vmatmul.mubr.bf16.gmra.mxu0 %v996
        %v1518 = vpop.f32.mrf.mxu0
        %v1519 = vadd.f32 %v1067, %v1518
        %v1520 = vpop.f32.mrf.mxu0
        %v1521 = vadd.f32 %v1071, %v1520
        %v1522 = vpop.f32.mrf.mxu0
        %v1523 = vadd.f32 %v1067, %v1522
        %v1524 = vpop.f32.mrf.mxu0
        %v1525 = vadd.f32 %v1071, %v1524
        %1526 = vmatprep.mubr.bf16.mxu0 0
        %1527 = vmatmul.mubr.bf16.gmra.mxu0 %v997
        %v1528 = vpop.f32.mrf.mxu0
        %v1529 = vadd.f32 %v1067, %v1528
        %v1530 = vpop.f32.mrf.mxu0
        %v1531 = vadd.f32 %v1071, %v1530
        %v1532 = vpop.f32.mrf.mxu0
        %v1533 = vadd.f32 %v1067, %v1532
        %v1534 = vpop.f32.mrf.mxu0
        %v1535 = vadd.f32 %v1071, %v1534
        %1536 = vdwg.mxu0
        %1537 = vmatprep.subr.bf16.mxu0 %v1355
        %1538 = vmatpush1.bf16.msra.mxu0 %v1354
        %1539 = vmatprep.subr.bf16.mxu0 %v1347
        %1540 = vmatpush1.bf16.msra.mxu0 %v1346
        %1541 = vmatprep.subr.bf16.mxu0 %v1339
        %1542 = vmatpush1.bf16.msra.mxu0 %v1338
        %1543 = vmatprep.subr.bf16.mxu0 %v1331
        %1544 = vmatpush1.bf16.msra.mxu0 %v1330
        %1545 = vmatprep.subr.bf16.mxu0 %v1323
        %1546 = vmatpush1.bf16.msra.mxu0 %v1322
        %1547 = vmatprep.subr.bf16.mxu0 %v1315
        %1548 = vmatpush1.bf16.msra.mxu0 %v1314
        %1549 = vmatprep.subr.bf16.mxu0 %v1307
        %1550 = vmatpush1.bf16.msra.mxu0 %v1306
        %1551 = vmatprep.subr.bf16.mxu0 %v1299
        %1552 = vmatpush1.bf16.msra.mxu0 %v1298
        %1553 = vmatprep.subr.bf16.mxu0 0
        %1554 = vmatpush2.bf16.msra.mxu0 0
        %1555 = vmatprep.subr.bf16.mxu0 0
        %1556 = vmatpush2.bf16.msra.mxu0 0
        %1557 = vmatprep.subr.bf16.mxu0 0
        %1558 = vmatpush2.bf16.msra.mxu0 0
        %1559 = vmatprep.subr.bf16.mxu0 0
        %1560 = vmatpush2.bf16.msra.mxu0 0
        %1561 = vmatprep.subr.bf16.mxu0 0
        %1562 = vmatpush2.bf16.msra.mxu0 0
        %1563 = vmatprep.subr.bf16.mxu0 0
        %1564 = vmatpush2.bf16.msra.mxu0 0
        %1565 = vmatprep.subr.bf16.mxu0 0
        %1566 = vmatpush2.bf16.msra.mxu0 0
        %1567 = vmatprep.subr.bf16.mxu0 0
        %1568 = vmatpush2.bf16.msra.mxu0 0
        %1569 = vmatprep.mubr.bf16.mxu0 0
        %1570 = vmatmul.mubr.bf16.gmra.mxu0 %v990
        %v1571 = vpop.f32.mrf.mxu0
        %v1572 = vadd.f32 %v1075, %v1571
        %v1573 = vpop.f32.mrf.mxu0
        %v1574 = vadd.f32 %v1079, %v1573
        %v1575 = vpop.f32.mrf.mxu0
        %v1576 = vadd.f32 %v1075, %v1575
        %v1577 = vpop.f32.mrf.mxu0
        %v1578 = vadd.f32 %v1079, %v1577
        %1579 = vmatprep.mubr.bf16.mxu0 0
        %1580 = vmatmul.mubr.bf16.gmra.mxu0 %v991
        %v1581 = vpop.f32.mrf.mxu0
        %v1582 = vadd.f32 %v1075, %v1581
        %v1583 = vpop.f32.mrf.mxu0
        %v1584 = vadd.f32 %v1079, %v1583
        %v1585 = vpop.f32.mrf.mxu0
        %v1586 = vadd.f32 %v1075, %v1585
        %v1587 = vpop.f32.mrf.mxu0
        %v1588 = vadd.f32 %v1079, %v1587
        %1589 = vmatprep.mubr.bf16.mxu0 0
        %1590 = vmatmul.mubr.bf16.gmra.mxu0 %v992
        %v1591 = vpop.f32.mrf.mxu0
        %v1592 = vadd.f32 %v1075, %v1591
        %v1593 = vpop.f32.mrf.mxu0
        %v1594 = vadd.f32 %v1079, %v1593
        %v1595 = vpop.f32.mrf.mxu0
        %v1596 = vadd.f32 %v1075, %v1595
        %v1597 = vpop.f32.mrf.mxu0
        %v1598 = vadd.f32 %v1079, %v1597
        %1599 = vmatprep.mubr.bf16.mxu0 0
        %1600 = vmatmul.mubr.bf16.gmra.mxu0 %v993
        %v1601 = vpop.f32.mrf.mxu0
        %v1602 = vadd.f32 %v1075, %v1601
        %v1603 = vpop.f32.mrf.mxu0
        %v1604 = vadd.f32 %v1079, %v1603
        %v1605 = vpop.f32.mrf.mxu0
        %v1606 = vadd.f32 %v1075, %v1605
        %v1607 = vpop.f32.mrf.mxu0
        %v1608 = vadd.f32 %v1079, %v1607
        %1609 = vmatprep.mubr.bf16.mxu0 0
        %1610 = vmatmul.mubr.bf16.gmra.mxu0 %v994
        %v1611 = vpop.f32.mrf.mxu0
        %v1612 = vadd.f32 %v1075, %v1611
        %v1613 = vpop.f32.mrf.mxu0
        %v1614 = vadd.f32 %v1079, %v1613
        %v1615 = vpop.f32.mrf.mxu0
        %v1616 = vadd.f32 %v1075, %v1615
        %v1617 = vpop.f32.mrf.mxu0
        %v1618 = vadd.f32 %v1079, %v1617
        %1619 = vmatprep.mubr.bf16.mxu0 0
        %1620 = vmatmul.mubr.bf16.gmra.mxu0 %v995
        %v1621 = vpop.f32.mrf.mxu0
        %v1622 = vadd.f32 %v1075, %v1621
        %v1623 = vpop.f32.mrf.mxu0
        %v1624 = vadd.f32 %v1079, %v1623
        %v1625 = vpop.f32.mrf.mxu0
        %v1626 = vadd.f32 %v1075, %v1625
        %v1627 = vpop.f32.mrf.mxu0
        %v1628 = vadd.f32 %v1079, %v1627
        %1629 = vmatprep.mubr.bf16.mxu0 0
        %1630 = vmatmul.mubr.bf16.gmra.mxu0 %v996
        %v1631 = vpop.f32.mrf.mxu0
        %v1632 = vadd.f32 %v1075, %v1631
        %v1633 = vpop.f32.mrf.mxu0
        %v1634 = vadd.f32 %v1079, %v1633
        %v1635 = vpop.f32.mrf.mxu0
        %v1636 = vadd.f32 %v1075, %v1635
        %v1637 = vpop.f32.mrf.mxu0
        %v1638 = vadd.f32 %v1079, %v1637
        %1639 = vmatprep.mubr.bf16.mxu0 0
        %1640 = vmatmul.mubr.bf16.gmra.mxu0 %v997
        %v1641 = vpop.f32.mrf.mxu0
        %v1642 = vadd.f32 %v1075, %v1641
        %v1643 = vpop.f32.mrf.mxu0
        %v1644 = vadd.f32 %v1079, %v1643
        %v1645 = vpop.f32.mrf.mxu0
        %v1646 = vadd.f32 %v1075, %v1645
        %v1647 = vpop.f32.mrf.mxu0
        %v1648 = vadd.f32 %v1079, %v1647
        %1649 = vdwg.mxu0
        %1650 = vmatprep.subr.bf16.mxu0 %v1357
        %1651 = vmatpush1.bf16.msra.mxu0 %v1356
        %1652 = vmatprep.subr.bf16.mxu0 %v1349
        %1653 = vmatpush1.bf16.msra.mxu0 %v1348
        %1654 = vmatprep.subr.bf16.mxu0 %v1341
        %1655 = vmatpush1.bf16.msra.mxu0 %v1340
        %1656 = vmatprep.subr.bf16.mxu0 %v1333
        %1657 = vmatpush1.bf16.msra.mxu0 %v1332
        %1658 = vmatprep.subr.bf16.mxu0 %v1325
        %1659 = vmatpush1.bf16.msra.mxu0 %v1324
        %1660 = vmatprep.subr.bf16.mxu0 %v1317
        %1661 = vmatpush1.bf16.msra.mxu0 %v1316
        %1662 = vmatprep.subr.bf16.mxu0 %v1309
        %1663 = vmatpush1.bf16.msra.mxu0 %v1308
        %1664 = vmatprep.subr.bf16.mxu0 %v1301
        %1665 = vmatpush1.bf16.msra.mxu0 %v1300
        %1666 = vmatprep.subr.bf16.mxu0 0
        %1667 = vmatpush2.bf16.msra.mxu0 0
        %1668 = vmatprep.subr.bf16.mxu0 0
        %1669 = vmatpush2.bf16.msra.mxu0 0
        %1670 = vmatprep.subr.bf16.mxu0 0
        %1671 = vmatpush2.bf16.msra.mxu0 0
        %1672 = vmatprep.subr.bf16.mxu0 0
        %1673 = vmatpush2.bf16.msra.mxu0 0
        %1674 = vmatprep.subr.bf16.mxu0 0
        %1675 = vmatpush2.bf16.msra.mxu0 0
        %1676 = vmatprep.subr.bf16.mxu0 0
        %1677 = vmatpush2.bf16.msra.mxu0 0
        %1678 = vmatprep.subr.bf16.mxu0 0
        %1679 = vmatpush2.bf16.msra.mxu0 0
        %1680 = vmatprep.subr.bf16.mxu0 0
        %1681 = vmatpush2.bf16.msra.mxu0 0
        %1682 = vmatprep.mubr.bf16.mxu0 0
        %1683 = vmatmul.mubr.bf16.gmra.mxu0 %v990
        %v1684 = vpop.f32.mrf.mxu0
        %v1685 = vadd.f32 %v1083, %v1684
        %v1686 = vpop.f32.mrf.mxu0
        %v1687 = vadd.f32 %v1087, %v1686
        %v1688 = vpop.f32.mrf.mxu0
        %v1689 = vadd.f32 %v1083, %v1688
        %v1690 = vpop.f32.mrf.mxu0
        %v1691 = vadd.f32 %v1087, %v1690
        %1692 = vmatprep.mubr.bf16.mxu0 0
        %1693 = vmatmul.mubr.bf16.gmra.mxu0 %v991
        %v1694 = vpop.f32.mrf.mxu0
        %v1695 = vadd.f32 %v1083, %v1694
        %v1696 = vpop.f32.mrf.mxu0
        %v1697 = vadd.f32 %v1087, %v1696
        %v1698 = vpop.f32.mrf.mxu0
        %v1699 = vadd.f32 %v1083, %v1698
        %v1700 = vpop.f32.mrf.mxu0
        %v1701 = vadd.f32 %v1087, %v1700
        %1702 = vmatprep.mubr.bf16.mxu0 0
        %1703 = vmatmul.mubr.bf16.gmra.mxu0 %v992
        %v1704 = vpop.f32.mrf.mxu0
        %v1705 = vadd.f32 %v1083, %v1704
        %v1706 = vpop.f32.mrf.mxu0
        %v1707 = vadd.f32 %v1087, %v1706
        %v1708 = vpop.f32.mrf.mxu0
        %v1709 = vadd.f32 %v1083, %v1708
        %v1710 = vpop.f32.mrf.mxu0
        %v1711 = vadd.f32 %v1087, %v1710
        %1712 = vmatprep.mubr.bf16.mxu0 0
        %1713 = vmatmul.mubr.bf16.gmra.mxu0 %v993
        %v1714 = vpop.f32.mrf.mxu0
        %v1715 = vadd.f32 %v1083, %v1714
        %v1716 = vpop.f32.mrf.mxu0
        %v1717 = vadd.f32 %v1087, %v1716
        %v1718 = vpop.f32.mrf.mxu0
        %v1719 = vadd.f32 %v1083, %v1718
        %v1720 = vpop.f32.mrf.mxu0
        %v1721 = vadd.f32 %v1087, %v1720
        %1722 = vmatprep.mubr.bf16.mxu0 0
        %1723 = vmatmul.mubr.bf16.gmra.mxu0 %v994
        %v1724 = vpop.f32.mrf.mxu0
        %v1725 = vadd.f32 %v1083, %v1724
        %v1726 = vpop.f32.mrf.mxu0
        %v1727 = vadd.f32 %v1087, %v1726
        %v1728 = vpop.f32.mrf.mxu0
        %v1729 = vadd.f32 %v1083, %v1728
        %v1730 = vpop.f32.mrf.mxu0
        %v1731 = vadd.f32 %v1087, %v1730
        %1732 = vmatprep.mubr.bf16.mxu0 0
        %1733 = vmatmul.mubr.bf16.gmra.mxu0 %v995
        %v1734 = vpop.f32.mrf.mxu0
        %v1735 = vadd.f32 %v1083, %v1734
        %v1736 = vpop.f32.mrf.mxu0
        %v1737 = vadd.f32 %v1087, %v1736
        %v1738 = vpop.f32.mrf.mxu0
        %v1739 = vadd.f32 %v1083, %v1738
        %v1740 = vpop.f32.mrf.mxu0
        %v1741 = vadd.f32 %v1087, %v1740
        %1742 = vmatprep.mubr.bf16.mxu0 0
        %1743 = vmatmul.mubr.bf16.gmra.mxu0 %v996
        %v1744 = vpop.f32.mrf.mxu0
        %v1745 = vadd.f32 %v1083, %v1744
        %v1746 = vpop.f32.mrf.mxu0
        %v1747 = vadd.f32 %v1087, %v1746
        %v1748 = vpop.f32.mrf.mxu0
        %v1749 = vadd.f32 %v1083, %v1748
        %v1750 = vpop.f32.mrf.mxu0
        %v1751 = vadd.f32 %v1087, %v1750
        %1752 = vmatprep.mubr.bf16.mxu0 0
        %1753 = vmatmul.mubr.bf16.gmra.mxu0 %v997
        %v1754 = vpop.f32.mrf.mxu0
        %v1755 = vadd.f32 %v1083, %v1754
        %v1756 = vpop.f32.mrf.mxu0
        %v1757 = vadd.f32 %v1087, %v1756
        %v1758 = vpop.f32.mrf.mxu0
        %v1759 = vadd.f32 %v1083, %v1758
        %v1760 = vpop.f32.mrf.mxu0
        %v1761 = vadd.f32 %v1087, %v1760
        %1762 = vdwg.mxu0
        %1763 = vmatprep.subr.bf16.mxu0 %v1359
        %1764 = vmatpush1.bf16.msra.mxu0 %v1358
        %1765 = vmatprep.subr.bf16.mxu0 %v1351
        %1766 = vmatpush1.bf16.msra.mxu0 %v1350
        %1767 = vmatprep.subr.bf16.mxu0 %v1343
        %1768 = vmatpush1.bf16.msra.mxu0 %v1342
        %1769 = vmatprep.subr.bf16.mxu0 %v1335
        %1770 = vmatpush1.bf16.msra.mxu0 %v1334
        %1771 = vmatprep.subr.bf16.mxu0 %v1327
        %1772 = vmatpush1.bf16.msra.mxu0 %v1326
        %1773 = vmatprep.subr.bf16.mxu0 %v1319
        %1774 = vmatpush1.bf16.msra.mxu0 %v1318
        %1775 = vmatprep.subr.bf16.mxu0 %v1311
        %1776 = vmatpush1.bf16.msra.mxu0 %v1310
        %1777 = vmatprep.subr.bf16.mxu0 %v1303
        %1778 = vmatpush1.bf16.msra.mxu0 %v1302
        %1779 = vmatprep.subr.bf16.mxu0 0
        %1780 = vmatpush2.bf16.msra.mxu0 0
        %1781 = vmatprep.subr.bf16.mxu0 0
        %1782 = vmatpush2.bf16.msra.mxu0 0
        %1783 = vmatprep.subr.bf16.mxu0 0
        %1784 = vmatpush2.bf16.msra.mxu0 0
        %1785 = vmatprep.subr.bf16.mxu0 0
        %1786 = vmatpush2.bf16.msra.mxu0 0
        %1787 = vmatprep.subr.bf16.mxu0 0
        %1788 = vmatpush2.bf16.msra.mxu0 0
        %1789 = vmatprep.subr.bf16.mxu0 0
        %1790 = vmatpush2.bf16.msra.mxu0 0
        %1791 = vmatprep.subr.bf16.mxu0 0
        %1792 = vmatpush2.bf16.msra.mxu0 0
        %1793 = vmatprep.subr.bf16.mxu0 0
        %1794 = vmatpush2.bf16.msra.mxu0 0
        %1795 = vmatprep.mubr.bf16.mxu0 0
        %1796 = vmatmul.mubr.bf16.gmra.mxu0 %v990
        %v1797 = vpop.f32.mrf.mxu0
        %v1798 = vadd.f32 %v1091, %v1797
        %v1799 = vpop.f32.mrf.mxu0
        %v1800 = vadd.f32 %v1095, %v1799
        %v1801 = vpop.f32.mrf.mxu0
        %v1802 = vadd.f32 %v1091, %v1801
        %v1803 = vpop.f32.mrf.mxu0
        %v1804 = vadd.f32 %v1095, %v1803
        %1805 = vmatprep.mubr.bf16.mxu0 0
        %1806 = vmatmul.mubr.bf16.gmra.mxu0 %v991
        %v1807 = vpop.f32.mrf.mxu0
        %v1808 = vadd.f32 %v1091, %v1807
        %v1809 = vpop.f32.mrf.mxu0
        %v1810 = vadd.f32 %v1095, %v1809
        %v1811 = vpop.f32.mrf.mxu0
        %v1812 = vadd.f32 %v1091, %v1811
        %v1813 = vpop.f32.mrf.mxu0
        %v1814 = vadd.f32 %v1095, %v1813
        %1815 = vmatprep.mubr.bf16.mxu0 0
        %1816 = vmatmul.mubr.bf16.gmra.mxu0 %v992
        %v1817 = vpop.f32.mrf.mxu0
        %v1818 = vadd.f32 %v1091, %v1817
        %v1819 = vpop.f32.mrf.mxu0
        %v1820 = vadd.f32 %v1095, %v1819
        %v1821 = vpop.f32.mrf.mxu0
        %v1822 = vadd.f32 %v1091, %v1821
        %v1823 = vpop.f32.mrf.mxu0
        %v1824 = vadd.f32 %v1095, %v1823
        %1825 = vmatprep.mubr.bf16.mxu0 0
        %1826 = vmatmul.mubr.bf16.gmra.mxu0 %v993
        %v1827 = vpop.f32.mrf.mxu0
        %v1828 = vadd.f32 %v1091, %v1827
        %v1829 = vpop.f32.mrf.mxu0
        %v1830 = vadd.f32 %v1095, %v1829
        %v1831 = vpop.f32.mrf.mxu0
        %v1832 = vadd.f32 %v1091, %v1831
        %v1833 = vpop.f32.mrf.mxu0
        %v1834 = vadd.f32 %v1095, %v1833
        %1835 = vmatprep.mubr.bf16.mxu0 0
        %1836 = vmatmul.mubr.bf16.gmra.mxu0 %v994
        %v1837 = vpop.f32.mrf.mxu0
        %v1838 = vadd.f32 %v1091, %v1837
        %v1839 = vpop.f32.mrf.mxu0
        %v1840 = vadd.f32 %v1095, %v1839
        %v1841 = vpop.f32.mrf.mxu0
        %v1842 = vadd.f32 %v1091, %v1841
        %v1843 = vpop.f32.mrf.mxu0
        %v1844 = vadd.f32 %v1095, %v1843
        %1845 = vmatprep.mubr.bf16.mxu0 0
        %1846 = vmatmul.mubr.bf16.gmra.mxu0 %v995
        %v1847 = vpop.f32.mrf.mxu0
        %v1848 = vadd.f32 %v1091, %v1847
        %v1849 = vpop.f32.mrf.mxu0
        %v1850 = vadd.f32 %v1095, %v1849
        %v1851 = vpop.f32.mrf.mxu0
        %v1852 = vadd.f32 %v1091, %v1851
        %v1853 = vpop.f32.mrf.mxu0
        %v1854 = vadd.f32 %v1095, %v1853
        %1855 = vmatprep.mubr.bf16.mxu0 0
        %1856 = vmatmul.mubr.bf16.gmra.mxu0 %v996
        %v1857 = vpop.f32.mrf.mxu0
        %v1858 = vadd.f32 %v1091, %v1857
        %v1859 = vpop.f32.mrf.mxu0
        %v1860 = vadd.f32 %v1095, %v1859
        %v1861 = vpop.f32.mrf.mxu0
        %v1862 = vadd.f32 %v1091, %v1861
        %v1863 = vpop.f32.mrf.mxu0
        %v1864 = vadd.f32 %v1095, %v1863
        %1865 = vmatprep.mubr.bf16.mxu0 0
        %1866 = vmatmul.mubr.bf16.gmra.mxu0 %v997
        %v1867 = vpop.f32.mrf.mxu0
        %v1868 = vadd.f32 %v1091, %v1867
        %v1869 = vpop.f32.mrf.mxu0
        %v1870 = vadd.f32 %v1095, %v1869
        %v1871 = vpop.f32.mrf.mxu0
        %v1872 = vadd.f32 %v1091, %v1871
        %v1873 = vpop.f32.mrf.mxu0
        %v1874 = vadd.f32 %v1095, %v1873
        %1875 = vdwg.mxu0
        %v1876 = vmax.f32 %v1459, 0.0
        %v1877 = vmax.f32 %v1461, 0.0
        %v1878 = vmax.f32 %v1572, 0.0
        %v1879 = vmax.f32 %v1574, 0.0
        %v1880 = vmax.f32 %v1685, 0.0
        %v1881 = vmax.f32 %v1687, 0.0
        %v1882 = vmax.f32 %v1798, 0.0
        %v1883 = vmax.f32 %v1800, 0.0
        %v1884 = vmax.f32 %v1463, 0.0
        %v1885 = vmax.f32 %v1465, 0.0
        %v1886 = vmax.f32 %v1576, 0.0
        %v1887 = vmax.f32 %v1578, 0.0
        %v1888 = vmax.f32 %v1689, 0.0
        %v1889 = vmax.f32 %v1691, 0.0
        %v1890 = vmax.f32 %v1802, 0.0
        %v1891 = vmax.f32 %v1804, 0.0
        %v1892 = vmax.f32 %v1469, 0.0
        %v1893 = vmax.f32 %v1471, 0.0
        %v1894 = vmax.f32 %v1582, 0.0
        %v1895 = vmax.f32 %v1584, 0.0
        %v1896 = vmax.f32 %v1695, 0.0
        %v1897 = vmax.f32 %v1697, 0.0
        %v1898 = vmax.f32 %v1808, 0.0
        %v1899 = vmax.f32 %v1810, 0.0
        %v1900 = vmax.f32 %v1473, 0.0
        %v1901 = vmax.f32 %v1475, 0.0
        %v1902 = vmax.f32 %v1586, 0.0
        %v1903 = vmax.f32 %v1588, 0.0
        %v1904 = vmax.f32 %v1699, 0.0
        %v1905 = vmax.f32 %v1701, 0.0
        %v1906 = vmax.f32 %v1812, 0.0
        %v1907 = vmax.f32 %v1814, 0.0
        %v1908 = vmax.f32 %v1479, 0.0
        %v1909 = vmax.f32 %v1481, 0.0
        %v1910 = vmax.f32 %v1592, 0.0
        %v1911 = vmax.f32 %v1594, 0.0
        %v1912 = vmax.f32 %v1705, 0.0
        %v1913 = vmax.f32 %v1707, 0.0
        %v1914 = vmax.f32 %v1818, 0.0
        %v1915 = vmax.f32 %v1820, 0.0
        %v1916 = vmax.f32 %v1483, 0.0
        %v1917 = vmax.f32 %v1485, 0.0
        %v1918 = vmax.f32 %v1596, 0.0
        %v1919 = vmax.f32 %v1598, 0.0
        %v1920 = vmax.f32 %v1709, 0.0
        %v1921 = vmax.f32 %v1711, 0.0
        %v1922 = vmax.f32 %v1822, 0.0
        %v1923 = vmax.f32 %v1824, 0.0
        %v1924 = vmax.f32 %v1489, 0.0
        %v1925 = vmax.f32 %v1491, 0.0
        %v1926 = vmax.f32 %v1602, 0.0
        %v1927 = vmax.f32 %v1604, 0.0
        %v1928 = vmax.f32 %v1715, 0.0
        %v1929 = vmax.f32 %v1717, 0.0
        %v1930 = vmax.f32 %v1828, 0.0
        %v1931 = vmax.f32 %v1830, 0.0
        %v1932 = vmax.f32 %v1493, 0.0
        %v1933 = vmax.f32 %v1495, 0.0
        %v1934 = vmax.f32 %v1606, 0.0
        %v1935 = vmax.f32 %v1608, 0.0
        %v1936 = vmax.f32 %v1719, 0.0
        %v1937 = vmax.f32 %v1721, 0.0
        %v1938 = vmax.f32 %v1832, 0.0
        %v1939 = vmax.f32 %v1834, 0.0
        %v1940 = vmax.f32 %v1499, 0.0
        %v1941 = vmax.f32 %v1501, 0.0
        %v1942 = vmax.f32 %v1612, 0.0
        %v1943 = vmax.f32 %v1614, 0.0
        %v1944 = vmax.f32 %v1725, 0.0
        %v1945 = vmax.f32 %v1727, 0.0
        %v1946 = vmax.f32 %v1838, 0.0
        %v1947 = vmax.f32 %v1840, 0.0
        %v1948 = vmax.f32 %v1503, 0.0
        %v1949 = vmax.f32 %v1505, 0.0
        %v1950 = vmax.f32 %v1616, 0.0
        %v1951 = vmax.f32 %v1618, 0.0
        %v1952 = vmax.f32 %v1729, 0.0
        %v1953 = vmax.f32 %v1731, 0.0
        %v1954 = vmax.f32 %v1842, 0.0
        %v1955 = vmax.f32 %v1844, 0.0
        %v1956 = vmax.f32 %v1509, 0.0
        %v1957 = vmax.f32 %v1511, 0.0
        %v1958 = vmax.f32 %v1622, 0.0
        %v1959 = vmax.f32 %v1624, 0.0
        %v1960 = vmax.f32 %v1735, 0.0
        %v1961 = vmax.f32 %v1737, 0.0
        %v1962 = vmax.f32 %v1848, 0.0
        %v1963 = vmax.f32 %v1850, 0.0
        %v1964 = vmax.f32 %v1513, 0.0
        %v1965 = vmax.f32 %v1515, 0.0
        %v1966 = vmax.f32 %v1626, 0.0
        %v1967 = vmax.f32 %v1628, 0.0
        %v1968 = vmax.f32 %v1739, 0.0
        %v1969 = vmax.f32 %v1741, 0.0
        %v1970 = vmax.f32 %v1852, 0.0
        %v1971 = vmax.f32 %v1854, 0.0
        %v1972 = vmax.f32 %v1519, 0.0
        %v1973 = vmax.f32 %v1521, 0.0
        %v1974 = vmax.f32 %v1632, 0.0
        %v1975 = vmax.f32 %v1634, 0.0
        %v1976 = vmax.f32 %v1745, 0.0
        %v1977 = vmax.f32 %v1747, 0.0
        %v1978 = vmax.f32 %v1858, 0.0
        %v1979 = vmax.f32 %v1860, 0.0
        %v1980 = vmax.f32 %v1523, 0.0
        %v1981 = vmax.f32 %v1525, 0.0
        %v1982 = vmax.f32 %v1636, 0.0
        %v1983 = vmax.f32 %v1638, 0.0
        %v1984 = vmax.f32 %v1749, 0.0
        %v1985 = vmax.f32 %v1751, 0.0
        %v1986 = vmax.f32 %v1862, 0.0
        %v1987 = vmax.f32 %v1864, 0.0
        %v1988 = vmax.f32 %v1529, 0.0
        %v1989 = vmax.f32 %v1531, 0.0
        %v1990 = vmax.f32 %v1642, 0.0
        %v1991 = vmax.f32 %v1644, 0.0
        %v1992 = vmax.f32 %v1755, 0.0
        %v1993 = vmax.f32 %v1757, 0.0
        %v1994 = vmax.f32 %v1868, 0.0
        %v1995 = vmax.f32 %v1870, 0.0
        %v1996 = vmax.f32 %v1533, 0.0
        %v1997 = vmax.f32 %v1535, 0.0
        %v1998 = vmax.f32 %v1646, 0.0
        %v1999 = vmax.f32 %v1648, 0.0
        %v2000 = vmax.f32 %v1759, 0.0
        %v2001 = vmax.f32 %v1761, 0.0
        %v2002 = vmax.f32 %v1872, 0.0
        %v2003 = vmax.f32 %v1874, 0.0
        %v2004 = vpack.c.bf16 %v1884, %v1876
        %v2005 = vpack.c.bf16 %v1885, %v1877
        %v2006 = vpack.c.bf16 %v1886, %v1878
        %v2007 = vpack.c.bf16 %v1887, %v1879
        %v2008 = vpack.c.bf16 %v1888, %v1880
        %v2009 = vpack.c.bf16 %v1889, %v1881
        %v2010 = vpack.c.bf16 %v1890, %v1882
        %v2011 = vpack.c.bf16 %v1891, %v1883
        %v2012 = vpack.c.bf16 %v1900, %v1892
        %v2013 = vpack.c.bf16 %v1901, %v1893
        %v2014 = vpack.c.bf16 %v1902, %v1894
        %v2015 = vpack.c.bf16 %v1903, %v1895
        %v2016 = vpack.c.bf16 %v1904, %v1896
        %v2017 = vpack.c.bf16 %v1905, %v1897
        %v2018 = vpack.c.bf16 %v1906, %v1898
        %v2019 = vpack.c.bf16 %v1907, %v1899
        %v2020 = vpack.c.bf16 %v1916, %v1908
        %v2021 = vpack.c.bf16 %v1917, %v1909
        %v2022 = vpack.c.bf16 %v1918, %v1910
        %v2023 = vpack.c.bf16 %v1919, %v1911
        %v2024 = vpack.c.bf16 %v1920, %v1912
        %v2025 = vpack.c.bf16 %v1921, %v1913
        %v2026 = vpack.c.bf16 %v1922, %v1914
        %v2027 = vpack.c.bf16 %v1923, %v1915
        %v2028 = vpack.c.bf16 %v1932, %v1924
        %v2029 = vpack.c.bf16 %v1933, %v1925
        %v2030 = vpack.c.bf16 %v1934, %v1926
        %v2031 = vpack.c.bf16 %v1935, %v1927
        %v2032 = vpack.c.bf16 %v1936, %v1928
        %v2033 = vpack.c.bf16 %v1937, %v1929
        %v2034 = vpack.c.bf16 %v1938, %v1930
        %v2035 = vpack.c.bf16 %v1939, %v1931
        %v2036 = vpack.c.bf16 %v1948, %v1940
        %v2037 = vpack.c.bf16 %v1949, %v1941
        %v2038 = vpack.c.bf16 %v1950, %v1942
        %v2039 = vpack.c.bf16 %v1951, %v1943
        %v2040 = vpack.c.bf16 %v1952, %v1944
        %v2041 = vpack.c.bf16 %v1953, %v1945
        %v2042 = vpack.c.bf16 %v1954, %v1946
        %v2043 = vpack.c.bf16 %v1955, %v1947
        %v2044 = vpack.c.bf16 %v1964, %v1956
        %v2045 = vpack.c.bf16 %v1965, %v1957
        %v2046 = vpack.c.bf16 %v1966, %v1958
        %v2047 = vpack.c.bf16 %v1967, %v1959
        %v2048 = vpack.c.bf16 %v1968, %v1960
        %v2049 = vpack.c.bf16 %v1969, %v1961
        %v2050 = vpack.c.bf16 %v1970, %v1962
        %v2051 = vpack.c.bf16 %v1971, %v1963
        %v2052 = vpack.c.bf16 %v1980, %v1972
        %v2053 = vpack.c.bf16 %v1981, %v1973
        %v2054 = vpack.c.bf16 %v1982, %v1974
        %v2055 = vpack.c.bf16 %v1983, %v1975
        %v2056 = vpack.c.bf16 %v1984, %v1976
        %v2057 = vpack.c.bf16 %v1985, %v1977
        %v2058 = vpack.c.bf16 %v1986, %v1978
        %v2059 = vpack.c.bf16 %v1987, %v1979
        %v2060 = vpack.c.bf16 %v1996, %v1988
        %v2061 = vpack.c.bf16 %v1997, %v1989
        %v2062 = vpack.c.bf16 %v1998, %v1990
        %v2063 = vpack.c.bf16 %v1999, %v1991
        %v2064 = vpack.c.bf16 %v2000, %v1992
        %v2065 = vpack.c.bf16 %v2001, %v1993
        %v2066 = vpack.c.bf16 %v2002, %v1994
        %v2067 = vpack.c.bf16 %v2003, %v1995
        %v2068 = vsel %vm617, 1, 0
        %v2069 = vsel %vm618, 1, 0
        %v2070 = vsel %vm619, 1, 0
        %v2071 = vsel %vm620, 1, 0
        %v2072 = vsel %vm621, 1, 0
        %v2073 = vsel %vm622, 1, 0
        %v2074 = vsel %vm623, 1, 0
        %v2075 = vsel %vm624, 1, 0
        %v2076 = vsel %vm625, 1, 0
        %v2077 = vsel %vm626, 1, 0
        %v2078 = vsel %vm627, 1, 0
        %v2079 = vsel %vm628, 1, 0
        %v2080 = vsel %vm629, 1, 0
        %v2081 = vsel %vm630, 1, 0
        %v2082 = vsel %vm631, 1, 0
        %v2083 = vsel %vm632, 1, 0
        %vm2084 = vcmp.eq.s32.totalorder %v2068, 1
        %vm2085 = vcmp.eq.s32.totalorder %v2069, 1
        %vm2086 = vcmp.eq.s32.totalorder %v2070, 1
        %vm2087 = vcmp.eq.s32.totalorder %v2071, 1
        %vm2088 = vcmp.eq.s32.totalorder %v2072, 1
        %vm2089 = vcmp.eq.s32.totalorder %v2073, 1
        %vm2090 = vcmp.eq.s32.totalorder %v2074, 1
        %vm2091 = vcmp.eq.s32.totalorder %v2075, 1
        %vm2092 = vcmp.eq.s32.totalorder %v2076, 1
        %vm2093 = vcmp.eq.s32.totalorder %v2077, 1
        %vm2094 = vcmp.eq.s32.totalorder %v2078, 1
        %vm2095 = vcmp.eq.s32.totalorder %v2079, 1
        %vm2096 = vcmp.eq.s32.totalorder %v2080, 1
        %vm2097 = vcmp.eq.s32.totalorder %v2081, 1
        %vm2098 = vcmp.eq.s32.totalorder %v2082, 1
        %vm2099 = vcmp.eq.s32.totalorder %v2083, 1
        %vm2100 = vmpackc.low %vm2084, %vm2084
        %vm2101 = vmpackc.low %vm2085, %vm2085
        %vm2102 = vmpackc.low %vm2086, %vm2086
        %vm2103 = vmpackc.low %vm2087, %vm2087
        %vm2104 = vmpackc.low %vm2088, %vm2088
        %vm2105 = vmpackc.low %vm2089, %vm2089
        %vm2106 = vmpackc.low %vm2090, %vm2090
        %vm2107 = vmpackc.low %vm2091, %vm2091
        %vm2108 = vmpackc.low %vm2092, %vm2092
        %vm2109 = vmpackc.low %vm2093, %vm2093
        %vm2110 = vmpackc.low %vm2094, %vm2094
        %vm2111 = vmpackc.low %vm2095, %vm2095
        %vm2112 = vmpackc.low %vm2096, %vm2096
        %vm2113 = vmpackc.low %vm2097, %vm2097
        %vm2114 = vmpackc.low %vm2098, %vm2098
        %vm2115 = vmpackc.low %vm2099, %vm2099
        %v2116 = vsel %vm2100, 65537, 0
        %v2117 = vsel %vm2101, 65537, 0
        %v2118 = vsel %vm2102, 65537, 0
        %v2119 = vsel %vm2103, 65537, 0
        %v2120 = vsel %vm2104, 65537, 0
        %v2121 = vsel %vm2105, 65537, 0
        %v2122 = vsel %vm2106, 65537, 0
        %v2123 = vsel %vm2107, 65537, 0
        %v2124 = vsel %vm2108, 65537, 0
        %v2125 = vsel %vm2109, 65537, 0
        %v2126 = vsel %vm2110, 65537, 0
        %v2127 = vsel %vm2111, 65537, 0
        %v2128 = vsel %vm2112, 65537, 0
        %v2129 = vsel %vm2113, 65537, 0
        %v2130 = vsel %vm2114, 65537, 0
        %v2131 = vsel %vm2115, 65537, 0
        %v2132 = vunpack.c.l.b16 %v2116
        %v2133 = vunpack.c.l.b16 %v2117
        %v2134 = vunpack.c.l.b16 %v2118
        %v2135 = vunpack.c.l.b16 %v2119
        %v2136 = vunpack.c.l.b16 %v2120
        %v2137 = vunpack.c.l.b16 %v2121
        %v2138 = vunpack.c.l.b16 %v2122
        %v2139 = vunpack.c.l.b16 %v2123
        %v2140 = vunpack.c.l.b16 %v2124
        %v2141 = vunpack.c.l.b16 %v2125
        %v2142 = vunpack.c.l.b16 %v2126
        %v2143 = vunpack.c.l.b16 %v2127
        %v2144 = vunpack.c.l.b16 %v2128
        %v2145 = vunpack.c.l.b16 %v2129
        %v2146 = vunpack.c.l.b16 %v2130
        %v2147 = vunpack.c.l.b16 %v2131
        %v2148 = vpack.c.b16 %v2133, %v2132
        %v2149 = vpack.c.b16 %v2135, %v2134
        %v2150 = vpack.c.b16 %v2137, %v2136
        %v2151 = vpack.c.b16 %v2139, %v2138
        %v2152 = vpack.c.b16 %v2141, %v2140
        %v2153 = vpack.c.b16 %v2143, %v2142
        %v2154 = vpack.c.b16 %v2145, %v2144
        %v2155 = vpack.c.b16 %v2147, %v2146
        %vm2156 = vcmp.ne.s16.totalorder %v2148, 0
        %vm2157 = vcmp.ne.s16.totalorder %v2149, 0
        %vm2158 = vcmp.ne.s16.totalorder %v2150, 0
        %vm2159 = vcmp.ne.s16.totalorder %v2151, 0
        %vm2160 = vcmp.ne.s16.totalorder %v2152, 0
        %vm2161 = vcmp.ne.s16.totalorder %v2153, 0
        %vm2162 = vcmp.ne.s16.totalorder %v2154, 0
        %vm2163 = vcmp.ne.s16.totalorder %v2155, 0
        %v2164 = vsel %vm2156, %v2004, 0
        %v2165 = vsel %vm2156, %v2005, 0
        %v2166 = vsel %vm2156, %v2006, 0
        %v2167 = vsel %vm2156, %v2007, 0
        %v2168 = vsel %vm2156, %v2008, 0
        %v2169 = vsel %vm2156, %v2009, 0
        %v2170 = vsel %vm2156, %v2010, 0
        %v2171 = vsel %vm2156, %v2011, 0
        %v2172 = vsel %vm2157, %v2012, 0
        %v2173 = vsel %vm2157, %v2013, 0
        %v2174 = vsel %vm2157, %v2014, 0
        %v2175 = vsel %vm2157, %v2015, 0
        %v2176 = vsel %vm2157, %v2016, 0
        %v2177 = vsel %vm2157, %v2017, 0
        %v2178 = vsel %vm2157, %v2018, 0
        %v2179 = vsel %vm2157, %v2019, 0
        %v2180 = vsel %vm2158, %v2020, 0
        %v2181 = vsel %vm2158, %v2021, 0
        %v2182 = vsel %vm2158, %v2022, 0
        %v2183 = vsel %vm2158, %v2023, 0
        %v2184 = vsel %vm2158, %v2024, 0
        %v2185 = vsel %vm2158, %v2025, 0
        %v2186 = vsel %vm2158, %v2026, 0
        %v2187 = vsel %vm2158, %v2027, 0
        %v2188 = vsel %vm2159, %v2028, 0
        %v2189 = vsel %vm2159, %v2029, 0
        %v2190 = vsel %vm2159, %v2030, 0
        %v2191 = vsel %vm2159, %v2031, 0
        %v2192 = vsel %vm2159, %v2032, 0
        %v2193 = vsel %vm2159, %v2033, 0
        %v2194 = vsel %vm2159, %v2034, 0
        %v2195 = vsel %vm2159, %v2035, 0
        %v2196 = vsel %vm2160, %v2036, 0
        %v2197 = vsel %vm2160, %v2037, 0
        %v2198 = vsel %vm2160, %v2038, 0
        %v2199 = vsel %vm2160, %v2039, 0
        %v2200 = vsel %vm2160, %v2040, 0
        %v2201 = vsel %vm2160, %v2041, 0
        %v2202 = vsel %vm2160, %v2042, 0
        %v2203 = vsel %vm2160, %v2043, 0
        %v2204 = vsel %vm2161, %v2044, 0
        %v2205 = vsel %vm2161, %v2045, 0
        %v2206 = vsel %vm2161, %v2046, 0
        %v2207 = vsel %vm2161, %v2047, 0
        %v2208 = vsel %vm2161, %v2048, 0
        %v2209 = vsel %vm2161, %v2049, 0
        %v2210 = vsel %vm2161, %v2050, 0
        %v2211 = vsel %vm2161, %v2051, 0
        %v2212 = vsel %vm2162, %v2052, 0
        %v2213 = vsel %vm2162, %v2053, 0
        %v2214 = vsel %vm2162, %v2054, 0
        %v2215 = vsel %vm2162, %v2055, 0
        %v2216 = vsel %vm2162, %v2056, 0
        %v2217 = vsel %vm2162, %v2057, 0
        %v2218 = vsel %vm2162, %v2058, 0
        %v2219 = vsel %vm2162, %v2059, 0
        %v2220 = vsel %vm2163, %v2060, 0
        %v2221 = vsel %vm2163, %v2061, 0
        %v2222 = vsel %vm2163, %v2062, 0
        %v2223 = vsel %vm2163, %v2063, 0
        %v2224 = vsel %vm2163, %v2064, 0
        %v2225 = vsel %vm2163, %v2065, 0
        %v2226 = vsel %vm2163, %v2066, 0
        %v2227 = vsel %vm2163, %v2067, 0
        %v2228 = vmax.bf16 %v2164, %v2172
        %v2229 = vmax.bf16 %v2228, %v2180
        %v2230 = vmax.bf16 %v2229, %v2188
        %v2231 = vmax.bf16 %v2230, %v2196
        %v2232 = vmax.bf16 %v2231, %v2204
        %v2233 = vmax.bf16 %v2232, %v2212
        %v2234 = vmax.bf16 %v2233, %v2220
        %v2235 = vunpack.i.l.bf16 %v2234
        %v2236 = vunpack.i.h.bf16 %v2234
        %v2237 = vmax.f32 %v2235, %v2236
        %v2238 = vrot.slane %v2237, 4
        %v2239 = vmax.f32 %v2237, %v2238
        %v2240 = vrot.slane %v2239, 2
        %v2241 = vmax.f32 %v2239, %v2240
        %v2242 = vrot.slane %v2241, 1
        %v2243 = vmax.f32 %v2241, %v2242
        %v2244 = vpack.i.bf16 %v2243, %v2243
        %v2245 = vmax.bf16 %v2165, %v2173
        %v2246 = vmax.bf16 %v2245, %v2181
        %v2247 = vmax.bf16 %v2246, %v2189
        %v2248 = vmax.bf16 %v2247, %v2197
        %v2249 = vmax.bf16 %v2248, %v2205
        %v2250 = vmax.bf16 %v2249, %v2213
        %v2251 = vmax.bf16 %v2250, %v2221
        %v2252 = vunpack.i.l.bf16 %v2251
        %v2253 = vunpack.i.h.bf16 %v2251
        %v2254 = vmax.f32 %v2252, %v2253
        %v2255 = vrot.slane %v2254, 4
        %v2256 = vmax.f32 %v2254, %v2255
        %v2257 = vrot.slane %v2256, 2
        %v2258 = vmax.f32 %v2256, %v2257
        %v2259 = vrot.slane %v2258, 1
        %v2260 = vmax.f32 %v2258, %v2259
        %v2261 = vpack.i.bf16 %v2260, %v2260
        %v2262 = vmax.bf16 %v2166, %v2174
        %v2263 = vmax.bf16 %v2262, %v2182
        %v2264 = vmax.bf16 %v2263, %v2190
        %v2265 = vmax.bf16 %v2264, %v2198
        %v2266 = vmax.bf16 %v2265, %v2206
        %v2267 = vmax.bf16 %v2266, %v2214
        %v2268 = vmax.bf16 %v2267, %v2222
        %v2269 = vunpack.i.l.bf16 %v2268
        %v2270 = vunpack.i.h.bf16 %v2268
        %v2271 = vmax.f32 %v2269, %v2270
        %v2272 = vrot.slane %v2271, 4
        %v2273 = vmax.f32 %v2271, %v2272
        %v2274 = vrot.slane %v2273, 2
        %v2275 = vmax.f32 %v2273, %v2274
        %v2276 = vrot.slane %v2275, 1
        %v2277 = vmax.f32 %v2275, %v2276
        %v2278 = vpack.i.bf16 %v2277, %v2277
        %v2279 = vmax.bf16 %v2167, %v2175
        %v2280 = vmax.bf16 %v2279, %v2183
        %v2281 = vmax.bf16 %v2280, %v2191
        %v2282 = vmax.bf16 %v2281, %v2199
        %v2283 = vmax.bf16 %v2282, %v2207
        %v2284 = vmax.bf16 %v2283, %v2215
        %v2285 = vmax.bf16 %v2284, %v2223
        %v2286 = vunpack.i.l.bf16 %v2285
        %v2287 = vunpack.i.h.bf16 %v2285
        %v2288 = vmax.f32 %v2286, %v2287
        %v2289 = vrot.slane %v2288, 4
        %v2290 = vmax.f32 %v2288, %v2289
        %v2291 = vrot.slane %v2290, 2
        %v2292 = vmax.f32 %v2290, %v2291
        %v2293 = vrot.slane %v2292, 1
        %v2294 = vmax.f32 %v2292, %v2293
        %v2295 = vpack.i.bf16 %v2294, %v2294
        %v2296 = vmax.bf16 %v2168, %v2176
        %v2297 = vmax.bf16 %v2296, %v2184
        %v2298 = vmax.bf16 %v2297, %v2192
        %v2299 = vmax.bf16 %v2298, %v2200
        %v2300 = vmax.bf16 %v2299, %v2208
        %v2301 = vmax.bf16 %v2300, %v2216
        %v2302 = vmax.bf16 %v2301, %v2224
        %v2303 = vunpack.i.l.bf16 %v2302
        %v2304 = vunpack.i.h.bf16 %v2302
        %v2305 = vmax.f32 %v2303, %v2304
        %v2306 = vrot.slane %v2305, 4
        %v2307 = vmax.f32 %v2305, %v2306
        %v2308 = vrot.slane %v2307, 2
        %v2309 = vmax.f32 %v2307, %v2308
        %v2310 = vrot.slane %v2309, 1
        %v2311 = vmax.f32 %v2309, %v2310
        %v2312 = vpack.i.bf16 %v2311, %v2311
        %v2313 = vmax.bf16 %v2169, %v2177
        %v2314 = vmax.bf16 %v2313, %v2185
        %v2315 = vmax.bf16 %v2314, %v2193
        %v2316 = vmax.bf16 %v2315, %v2201
        %v2317 = vmax.bf16 %v2316, %v2209
        %v2318 = vmax.bf16 %v2317, %v2217
        %v2319 = vmax.bf16 %v2318, %v2225
        %v2320 = vunpack.i.l.bf16 %v2319
        %v2321 = vunpack.i.h.bf16 %v2319
        %v2322 = vmax.f32 %v2320, %v2321
        %v2323 = vrot.slane %v2322, 4
        %v2324 = vmax.f32 %v2322, %v2323
        %v2325 = vrot.slane %v2324, 2
        %v2326 = vmax.f32 %v2324, %v2325
        %v2327 = vrot.slane %v2326, 1
        %v2328 = vmax.f32 %v2326, %v2327
        %v2329 = vpack.i.bf16 %v2328, %v2328
        %v2330 = vmax.bf16 %v2170, %v2178
        %v2331 = vmax.bf16 %v2330, %v2186
        %v2332 = vmax.bf16 %v2331, %v2194
        %v2333 = vmax.bf16 %v2332, %v2202
        %v2334 = vmax.bf16 %v2333, %v2210
        %v2335 = vmax.bf16 %v2334, %v2218
        %v2336 = vmax.bf16 %v2335, %v2226
        %v2337 = vunpack.i.l.bf16 %v2336
        %v2338 = vunpack.i.h.bf16 %v2336
        %v2339 = vmax.f32 %v2337, %v2338
        %v2340 = vrot.slane %v2339, 4
        %v2341 = vmax.f32 %v2339, %v2340
        %v2342 = vrot.slane %v2341, 2
        %v2343 = vmax.f32 %v2341, %v2342
        %v2344 = vrot.slane %v2343, 1
        %v2345 = vmax.f32 %v2343, %v2344
        %v2346 = vpack.i.bf16 %v2345, %v2345
        %v2347 = vmax.bf16 %v2171, %v2179
        %v2348 = vmax.bf16 %v2347, %v2187
        %v2349 = vmax.bf16 %v2348, %v2195
        %v2350 = vmax.bf16 %v2349, %v2203
        %v2351 = vmax.bf16 %v2350, %v2211
        %v2352 = vmax.bf16 %v2351, %v2219
        %v2353 = vmax.bf16 %v2352, %v2227
        %v2354 = vunpack.i.l.bf16 %v2353
        %v2355 = vunpack.i.h.bf16 %v2353
        %v2356 = vmax.f32 %v2354, %v2355
        %v2357 = vrot.slane %v2356, 4
        %v2358 = vmax.f32 %v2356, %v2357
        %v2359 = vrot.slane %v2358, 2
        %v2360 = vmax.f32 %v2358, %v2359
        %v2361 = vrot.slane %v2360, 1
        %v2362 = vmax.f32 %v2360, %v2361
        %v2363 = vpack.i.bf16 %v2362, %v2362
        %s2364 = scalar_lea.vmem %s512, 16 [#allocation3]
        %v2365 = vld [vmem:[%s2364] sm:$0xff]
        %v2366 = vld [vmem:[%s2364 + $0x8] sm:$0xff]
        %v2367 = vpack.c.bf16 %v2366, %v2365
        %2368 = vxpose.xlu0.c.b16.start [1/8] %v2367, 128
        %2369 = vxpose.xlu0.c.b16.cont [2/8] 0, 128
        %2370 = vxpose.xlu0.c.b16.cont [3/8] 0, 128
        %2371 = vxpose.xlu0.c.b16.cont [4/8] 0, 128
        %2372 = vxpose.xlu0.c.b16.cont [5/8] 0, 128
        %2373 = vxpose.xlu0.c.b16.cont [6/8] 0, 128
        %2374 = vxpose.xlu0.c.b16.cont [7/8] 0, 128
        %2375 = vxpose.xlu0.c.b16.end [8/8] 0, 128
        %v2376 = vpop.trf.xlu0
        %v2377 = vpop.trf.xlu0
        %v2378 = vpop.trf.xlu0
        %v2379 = vpop.trf.xlu0
        %v2380 = vpop.trf.xlu0
        %v2381 = vpop.trf.xlu0
        %v2382 = vpop.trf.xlu0
        %v2383 = vpop.trf.xlu0
        %v2385 = vsel %vm667, %v2376, 0
        %v2388 = vsel %vm667, %v2377, 0
        %v2391 = vsel %vm667, %v2378, 0
        %v2394 = vsel %vm667, %v2379, 0
        %v2397 = vsel %vm667, %v2380, 0
        %v2400 = vsel %vm667, %v2381, 0
        %v2403 = vsel %vm667, %v2382, 0
        %v2406 = vsel %vm667, %v2383, 0
        %2408 = vmatprep.subr.bf16.mxu0 0
        %2409 = vmatpush1.bf16.msra.mxu0 0
        %2410 = vmatprep.subr.bf16.mxu0 0
        %2411 = vmatpush1.bf16.msra.mxu0 0
        %2412 = vmatprep.subr.bf16.mxu0 0
        %2413 = vmatpush1.bf16.msra.mxu0 0
        %2414 = vmatprep.subr.bf16.mxu0 0
        %2415 = vmatpush1.bf16.msra.mxu0 0
        %2416 = vmatprep.subr.bf16.mxu0 0
        %2417 = vmatpush1.bf16.msra.mxu0 0
        %2418 = vmatprep.subr.bf16.mxu0 0
        %2419 = vmatpush1.bf16.msra.mxu0 0
        %2420 = vmatprep.subr.bf16.mxu0 0
        %2421 = vmatpush1.bf16.msra.mxu0 0
        %2422 = vmatprep.subr.bf16.mxu0 0
        %2423 = vmatpush1.bf16.msra.mxu0 %v665
        %2424 = vmatprep.subr.bf16.mxu0 0
        %2425 = vmatpush2.bf16.msra.mxu0 0
        %2426 = vmatprep.subr.bf16.mxu0 0
        %2427 = vmatpush2.bf16.msra.mxu0 0
        %2428 = vmatprep.subr.bf16.mxu0 0
        %2429 = vmatpush2.bf16.msra.mxu0 0
        %2430 = vmatprep.subr.bf16.mxu0 0
        %2431 = vmatpush2.bf16.msra.mxu0 0
        %2432 = vmatprep.subr.bf16.mxu0 0
        %2433 = vmatpush2.bf16.msra.mxu0 0
        %2434 = vmatprep.subr.bf16.mxu0 0
        %2435 = vmatpush2.bf16.msra.mxu0 0
        %2436 = vmatprep.subr.bf16.mxu0 0
        %2437 = vmatpush2.bf16.msra.mxu0 0
        %2438 = vmatprep.subr.bf16.mxu0 0
        %2439 = vmatpush2.bf16.msra.mxu0 0
        %2440 = vmatprep.mubr.bf16.mxu0 0
        %2441 = vmatmul.mubr.bf16.gmra.mxu0 %v2385
        %v2442 = vpop.f32.mrf.mxu0
        %v2443 = vadd.f32 %v643, %v2442
        %v2444 = vpop.f32.mrf.mxu0
        %v2445 = vpop.f32.mrf.mxu0
        %v2446 = vadd.f32 %v643, %v2445
        %v2447 = vpop.f32.mrf.mxu0
        %2448 = vmatprep.mubr.bf16.mxu0 0
        %2449 = vmatmul.mubr.bf16.gmra.mxu0 %v2388
        %v2450 = vpop.f32.mrf.mxu0
        %v2451 = vadd.f32 %v643, %v2450
        %v2452 = vpop.f32.mrf.mxu0
        %v2453 = vpop.f32.mrf.mxu0
        %v2454 = vadd.f32 %v643, %v2453
        %v2455 = vpop.f32.mrf.mxu0
        %2456 = vmatprep.mubr.bf16.mxu0 0
        %2457 = vmatmul.mubr.bf16.gmra.mxu0 %v2391
        %v2458 = vpop.f32.mrf.mxu0
        %v2459 = vadd.f32 %v643, %v2458
        %v2460 = vpop.f32.mrf.mxu0
        %v2461 = vpop.f32.mrf.mxu0
        %v2462 = vadd.f32 %v643, %v2461
        %v2463 = vpop.f32.mrf.mxu0
        %2464 = vmatprep.mubr.bf16.mxu0 0
        %2465 = vmatmul.mubr.bf16.gmra.mxu0 %v2394
        %v2466 = vpop.f32.mrf.mxu0
        %v2467 = vadd.f32 %v643, %v2466
        %v2468 = vpop.f32.mrf.mxu0
        %v2469 = vpop.f32.mrf.mxu0
        %v2470 = vadd.f32 %v643, %v2469
        %v2471 = vpop.f32.mrf.mxu0
        %2472 = vmatprep.mubr.bf16.mxu0 0
        %2473 = vmatmul.mubr.bf16.gmra.mxu0 %v2397
        %v2474 = vpop.f32.mrf.mxu0
        %v2475 = vadd.f32 %v643, %v2474
        %v2476 = vpop.f32.mrf.mxu0
        %v2477 = vpop.f32.mrf.mxu0
        %v2478 = vadd.f32 %v643, %v2477
        %v2479 = vpop.f32.mrf.mxu0
        %2480 = vmatprep.mubr.bf16.mxu0 0
        %2481 = vmatmul.mubr.bf16.gmra.mxu0 %v2400
        %v2482 = vpop.f32.mrf.mxu0
        %v2483 = vadd.f32 %v643, %v2482
        %v2484 = vpop.f32.mrf.mxu0
        %v2485 = vpop.f32.mrf.mxu0
        %v2486 = vadd.f32 %v643, %v2485
        %v2487 = vpop.f32.mrf.mxu0
        %2488 = vmatprep.mubr.bf16.mxu0 0
        %2489 = vmatmul.mubr.bf16.gmra.mxu0 %v2403
        %v2490 = vpop.f32.mrf.mxu0
        %v2491 = vadd.f32 %v643, %v2490
        %v2492 = vpop.f32.mrf.mxu0
        %v2493 = vpop.f32.mrf.mxu0
        %v2494 = vadd.f32 %v643, %v2493
        %v2495 = vpop.f32.mrf.mxu0
        %2496 = vmatprep.mubr.bf16.mxu0 0
        %2497 = vmatmul.mubr.bf16.gmra.mxu0 %v2406
        %v2498 = vpop.f32.mrf.mxu0
        %v2499 = vadd.f32 %v643, %v2498
        %v2500 = vpop.f32.mrf.mxu0
        %v2501 = vpop.f32.mrf.mxu0
        %v2502 = vadd.f32 %v643, %v2501
        %v2503 = vpop.f32.mrf.mxu0
        %2504 = vdwg.mxu0
        %v2505 = vmax.f32 %v2443, 0.0
        %v2506 = vmax.f32 %v2446, 0.0
        %v2507 = vmax.f32 %v2451, 0.0
        %v2508 = vmax.f32 %v2454, 0.0
        %v2509 = vmax.f32 %v2459, 0.0
        %v2510 = vmax.f32 %v2462, 0.0
        %v2511 = vmax.f32 %v2467, 0.0
        %v2512 = vmax.f32 %v2470, 0.0
        %v2513 = vmax.f32 %v2475, 0.0
        %v2514 = vmax.f32 %v2478, 0.0
        %v2515 = vmax.f32 %v2483, 0.0
        %v2516 = vmax.f32 %v2486, 0.0
        %v2517 = vmax.f32 %v2491, 0.0
        %v2518 = vmax.f32 %v2494, 0.0
        %v2519 = vmax.f32 %v2499, 0.0
        %v2520 = vmax.f32 %v2502, 0.0
        %v2521 = vpack.c.bf16 %v2506, %v2505
        %v2522 = vpack.c.bf16 %v2508, %v2507
        %v2523 = vpack.c.bf16 %v2510, %v2509
        %v2524 = vpack.c.bf16 %v2512, %v2511
        %v2525 = vpack.c.bf16 %v2514, %v2513
        %v2526 = vpack.c.bf16 %v2516, %v2515
        %v2527 = vpack.c.bf16 %v2518, %v2517
        %v2528 = vpack.c.bf16 %v2520, %v2519
        %v2530 = vsel %vm852, %v2521, 0
        %v2533 = vsel %vm852, %v2522, 0
        %v2536 = vsel %vm852, %v2523, 0
        %v2539 = vsel %vm852, %v2524, 0
        %v2542 = vsel %vm852, %v2525, 0
        %v2545 = vsel %vm852, %v2526, 0
        %v2548 = vsel %vm852, %v2527, 0
        %v2551 = vsel %vm852, %v2528, 0
        %2553 = vmatprep.subr.bf16.mxu0 0
        %2554 = vmatpush1.bf16.msra.mxu0 0
        %2555 = vmatprep.subr.bf16.mxu0 0
        %2556 = vmatpush1.bf16.msra.mxu0 0
        %2557 = vmatprep.subr.bf16.mxu0 0
        %2558 = vmatpush1.bf16.msra.mxu0 0
        %2559 = vmatprep.subr.bf16.mxu0 0
        %2560 = vmatpush1.bf16.msra.mxu0 0
        %2561 = vmatprep.subr.bf16.mxu0 0
        %2562 = vmatpush1.bf16.msra.mxu0 %v847
        %2563 = vmatprep.subr.bf16.mxu0 0
        %2564 = vmatpush1.bf16.msra.mxu0 %v846
        %2565 = vmatprep.subr.bf16.mxu0 0
        %2566 = vmatpush1.bf16.msra.mxu0 %v845
        %2567 = vmatprep.subr.bf16.mxu0 0
        %2568 = vmatpush1.bf16.msra.mxu0 %v844
        %2569 = vmatprep.subr.bf16.mxu0 0
        %2570 = vmatpush2.bf16.msra.mxu0 0
        %2571 = vmatprep.subr.bf16.mxu0 0
        %2572 = vmatpush2.bf16.msra.mxu0 0
        %2573 = vmatprep.subr.bf16.mxu0 0
        %2574 = vmatpush2.bf16.msra.mxu0 0
        %2575 = vmatprep.subr.bf16.mxu0 0
        %2576 = vmatpush2.bf16.msra.mxu0 0
        %2577 = vmatprep.subr.bf16.mxu0 0
        %2578 = vmatpush2.bf16.msra.mxu0 0
        %2579 = vmatprep.subr.bf16.mxu0 0
        %2580 = vmatpush2.bf16.msra.mxu0 0
        %2581 = vmatprep.subr.bf16.mxu0 0
        %2582 = vmatpush2.bf16.msra.mxu0 0
        %2583 = vmatprep.subr.bf16.mxu0 0
        %2584 = vmatpush2.bf16.msra.mxu0 0
        %2585 = vmatprep.mubr.bf16.mxu0 0
        %2586 = vmatmul.mubr.bf16.gmra.mxu0 %v2530
        %v2587 = vpop.f32.mrf.mxu0
        %v2588 = vadd.f32 %v826, %v2587
        %v2589 = vpop.f32.mrf.mxu0
        %v2590 = vpop.f32.mrf.mxu0
        %v2591 = vadd.f32 %v826, %v2590
        %v2592 = vpop.f32.mrf.mxu0
        %2593 = vmatprep.mubr.bf16.mxu0 0
        %2594 = vmatmul.mubr.bf16.gmra.mxu0 %v2533
        %v2595 = vpop.f32.mrf.mxu0
        %v2596 = vadd.f32 %v826, %v2595
        %v2597 = vpop.f32.mrf.mxu0
        %v2598 = vpop.f32.mrf.mxu0
        %v2599 = vadd.f32 %v826, %v2598
        %v2600 = vpop.f32.mrf.mxu0
        %2601 = vmatprep.mubr.bf16.mxu0 0
        %2602 = vmatmul.mubr.bf16.gmra.mxu0 %v2536
        %v2603 = vpop.f32.mrf.mxu0
        %v2604 = vadd.f32 %v826, %v2603
        %v2605 = vpop.f32.mrf.mxu0
        %v2606 = vpop.f32.mrf.mxu0
        %v2607 = vadd.f32 %v826, %v2606
        %v2608 = vpop.f32.mrf.mxu0
        %2609 = vmatprep.mubr.bf16.mxu0 0
        %2610 = vmatmul.mubr.bf16.gmra.mxu0 %v2539
        %v2611 = vpop.f32.mrf.mxu0
        %v2612 = vadd.f32 %v826, %v2611
        %v2613 = vpop.f32.mrf.mxu0
        %v2614 = vpop.f32.mrf.mxu0
        %v2615 = vadd.f32 %v826, %v2614
        %v2616 = vpop.f32.mrf.mxu0
        %2617 = vmatprep.mubr.bf16.mxu0 0
        %2618 = vmatmul.mubr.bf16.gmra.mxu0 %v2542
        %v2619 = vpop.f32.mrf.mxu0
        %v2620 = vadd.f32 %v826, %v2619
        %v2621 = vpop.f32.mrf.mxu0
        %v2622 = vpop.f32.mrf.mxu0
        %v2623 = vadd.f32 %v826, %v2622
        %v2624 = vpop.f32.mrf.mxu0
        %2625 = vmatprep.mubr.bf16.mxu0 0
        %2626 = vmatmul.mubr.bf16.gmra.mxu0 %v2545
        %v2627 = vpop.f32.mrf.mxu0
        %v2628 = vadd.f32 %v826, %v2627
        %v2629 = vpop.f32.mrf.mxu0
        %v2630 = vpop.f32.mrf.mxu0
        %v2631 = vadd.f32 %v826, %v2630
        %v2632 = vpop.f32.mrf.mxu0
        %2633 = vmatprep.mubr.bf16.mxu0 0
        %2634 = vmatmul.mubr.bf16.gmra.mxu0 %v2548
        %v2635 = vpop.f32.mrf.mxu0
        %v2636 = vadd.f32 %v826, %v2635
        %v2637 = vpop.f32.mrf.mxu0
        %v2638 = vpop.f32.mrf.mxu0
        %v2639 = vadd.f32 %v826, %v2638
        %v2640 = vpop.f32.mrf.mxu0
        %2641 = vmatprep.mubr.bf16.mxu0 0
        %2642 = vmatmul.mubr.bf16.gmra.mxu0 %v2551
        %v2643 = vpop.f32.mrf.mxu0
        %v2644 = vadd.f32 %v826, %v2643
        %v2645 = vpop.f32.mrf.mxu0
        %v2646 = vpop.f32.mrf.mxu0
        %v2647 = vadd.f32 %v826, %v2646
        %v2648 = vpop.f32.mrf.mxu0
        %2649 = vdwg.mxu0
        %v2650 = vmax.f32 %v2588, 0.0
        %v2651 = vmax.f32 %v2591, 0.0
        %v2652 = vmax.f32 %v2596, 0.0
        %v2653 = vmax.f32 %v2599, 0.0
        %v2654 = vmax.f32 %v2604, 0.0
        %v2655 = vmax.f32 %v2607, 0.0
        %v2656 = vmax.f32 %v2612, 0.0
        %v2657 = vmax.f32 %v2615, 0.0
        %v2658 = vmax.f32 %v2620, 0.0
        %v2659 = vmax.f32 %v2623, 0.0
        %v2660 = vmax.f32 %v2628, 0.0
        %v2661 = vmax.f32 %v2631, 0.0
        %v2662 = vmax.f32 %v2636, 0.0
        %v2663 = vmax.f32 %v2639, 0.0
        %v2664 = vmax.f32 %v2644, 0.0
        %v2665 = vmax.f32 %v2647, 0.0
        %v2666 = vpack.c.bf16 %v2651, %v2650
        %v2667 = vpack.c.bf16 %v2653, %v2652
        %v2668 = vpack.c.bf16 %v2655, %v2654
        %v2669 = vpack.c.bf16 %v2657, %v2656
        %v2670 = vpack.c.bf16 %v2659, %v2658
        %v2671 = vpack.c.bf16 %v2661, %v2660
        %v2672 = vpack.c.bf16 %v2663, %v2662
        %v2673 = vpack.c.bf16 %v2665, %v2664
        %2674 = vmatprep.subr.bf16.mxu0 %v1353
        %2675 = vmatpush1.bf16.msra.mxu0 %v1352
        %2676 = vmatprep.subr.bf16.mxu0 %v1345
        %2677 = vmatpush1.bf16.msra.mxu0 %v1344
        %2678 = vmatprep.subr.bf16.mxu0 %v1337
        %2679 = vmatpush1.bf16.msra.mxu0 %v1336
        %2680 = vmatprep.subr.bf16.mxu0 %v1329
        %2681 = vmatpush1.bf16.msra.mxu0 %v1328
        %2682 = vmatprep.subr.bf16.mxu0 %v1321
        %2683 = vmatpush1.bf16.msra.mxu0 %v1320
        %2684 = vmatprep.subr.bf16.mxu0 %v1313
        %2685 = vmatpush1.bf16.msra.mxu0 %v1312
        %2686 = vmatprep.subr.bf16.mxu0 %v1305
        %2687 = vmatpush1.bf16.msra.mxu0 %v1304
        %2688 = vmatprep.subr.bf16.mxu0 %v1297
        %2689 = vmatpush1.bf16.msra.mxu0 %v1296
        %2690 = vmatprep.subr.bf16.mxu0 0
        %2691 = vmatpush2.bf16.msra.mxu0 0
        %2692 = vmatprep.subr.bf16.mxu0 0
        %2693 = vmatpush2.bf16.msra.mxu0 0
        %2694 = vmatprep.subr.bf16.mxu0 0
        %2695 = vmatpush2.bf16.msra.mxu0 0
        %2696 = vmatprep.subr.bf16.mxu0 0
        %2697 = vmatpush2.bf16.msra.mxu0 0
        %2698 = vmatprep.subr.bf16.mxu0 0
        %2699 = vmatpush2.bf16.msra.mxu0 0
        %2700 = vmatprep.subr.bf16.mxu0 0
        %2701 = vmatpush2.bf16.msra.mxu0 0
        %2702 = vmatprep.subr.bf16.mxu0 0
        %2703 = vmatpush2.bf16.msra.mxu0 0
        %2704 = vmatprep.subr.bf16.mxu0 0
        %2705 = vmatpush2.bf16.msra.mxu0 0
        %2706 = vmatprep.mubr.bf16.mxu0 0
        %2707 = vmatmul.mubr.bf16.gmra.mxu0 %v2666
        %v2708 = vpop.f32.mrf.mxu0
        %v2709 = vadd.f32 %v1067, %v2708
        %v2710 = vpop.f32.mrf.mxu0
        %v2711 = vadd.f32 %v1071, %v2710
        %v2712 = vpop.f32.mrf.mxu0
        %v2713 = vadd.f32 %v1067, %v2712
        %v2714 = vpop.f32.mrf.mxu0
        %v2715 = vadd.f32 %v1071, %v2714
        %2716 = vmatprep.mubr.bf16.mxu0 0
        %2717 = vmatmul.mubr.bf16.gmra.mxu0 %v2667
        %v2718 = vpop.f32.mrf.mxu0
        %v2719 = vadd.f32 %v1067, %v2718
        %v2720 = vpop.f32.mrf.mxu0
        %v2721 = vadd.f32 %v1071, %v2720
        %v2722 = vpop.f32.mrf.mxu0
        %v2723 = vadd.f32 %v1067, %v2722
        %v2724 = vpop.f32.mrf.mxu0
        %v2725 = vadd.f32 %v1071, %v2724
        %2726 = vmatprep.mubr.bf16.mxu0 0
        %2727 = vmatmul.mubr.bf16.gmra.mxu0 %v2668
        %v2728 = vpop.f32.mrf.mxu0
        %v2729 = vadd.f32 %v1067, %v2728
        %v2730 = vpop.f32.mrf.mxu0
        %v2731 = vadd.f32 %v1071, %v2730
        %v2732 = vpop.f32.mrf.mxu0
        %v2733 = vadd.f32 %v1067, %v2732
        %v2734 = vpop.f32.mrf.mxu0
        %v2735 = vadd.f32 %v1071, %v2734
        %2736 = vmatprep.mubr.bf16.mxu0 0
        %2737 = vmatmul.mubr.bf16.gmra.mxu0 %v2669
        %v2738 = vpop.f32.mrf.mxu0
        %v2739 = vadd.f32 %v1067, %v2738
        %v2740 = vpop.f32.mrf.mxu0
        %v2741 = vadd.f32 %v1071, %v2740
        %v2742 = vpop.f32.mrf.mxu0
        %v2743 = vadd.f32 %v1067, %v2742
        %v2744 = vpop.f32.mrf.mxu0
        %v2745 = vadd.f32 %v1071, %v2744
        %2746 = vmatprep.mubr.bf16.mxu0 0
        %2747 = vmatmul.mubr.bf16.gmra.mxu0 %v2670
        %v2748 = vpop.f32.mrf.mxu0
        %v2749 = vadd.f32 %v1067, %v2748
        %v2750 = vpop.f32.mrf.mxu0
        %v2751 = vadd.f32 %v1071, %v2750
        %v2752 = vpop.f32.mrf.mxu0
        %v2753 = vadd.f32 %v1067, %v2752
        %v2754 = vpop.f32.mrf.mxu0
        %v2755 = vadd.f32 %v1071, %v2754
        %2756 = vmatprep.mubr.bf16.mxu0 0
        %2757 = vmatmul.mubr.bf16.gmra.mxu0 %v2671
        %v2758 = vpop.f32.mrf.mxu0
        %v2759 = vadd.f32 %v1067, %v2758
        %v2760 = vpop.f32.mrf.mxu0
        %v2761 = vadd.f32 %v1071, %v2760
        %v2762 = vpop.f32.mrf.mxu0
        %v2763 = vadd.f32 %v1067, %v2762
        %v2764 = vpop.f32.mrf.mxu0
        %v2765 = vadd.f32 %v1071, %v2764
        %2766 = vmatprep.mubr.bf16.mxu0 0
        %2767 = vmatmul.mubr.bf16.gmra.mxu0 %v2672
        %v2768 = vpop.f32.mrf.mxu0
        %v2769 = vadd.f32 %v1067, %v2768
        %v2770 = vpop.f32.mrf.mxu0
        %v2771 = vadd.f32 %v1071, %v2770
        %v2772 = vpop.f32.mrf.mxu0
        %v2773 = vadd.f32 %v1067, %v2772
        %v2774 = vpop.f32.mrf.mxu0
        %v2775 = vadd.f32 %v1071, %v2774
        %2776 = vmatprep.mubr.bf16.mxu0 0
        %2777 = vmatmul.mubr.bf16.gmra.mxu0 %v2673
        %v2778 = vpop.f32.mrf.mxu0
        %v2779 = vadd.f32 %v1067, %v2778
        %v2780 = vpop.f32.mrf.mxu0
        %v2781 = vadd.f32 %v1071, %v2780
        %v2782 = vpop.f32.mrf.mxu0
        %v2783 = vadd.f32 %v1067, %v2782
        %v2784 = vpop.f32.mrf.mxu0
        %v2785 = vadd.f32 %v1071, %v2784
        %2786 = vdwg.mxu0
        %2787 = vmatprep.subr.bf16.mxu0 %v1355
        %2788 = vmatpush1.bf16.msra.mxu0 %v1354
        %2789 = vmatprep.subr.bf16.mxu0 %v1347
        %2790 = vmatpush1.bf16.msra.mxu0 %v1346
        %2791 = vmatprep.subr.bf16.mxu0 %v1339
        %2792 = vmatpush1.bf16.msra.mxu0 %v1338
        %2793 = vmatprep.subr.bf16.mxu0 %v1331
        %2794 = vmatpush1.bf16.msra.mxu0 %v1330
        %2795 = vmatprep.subr.bf16.mxu0 %v1323
        %2796 = vmatpush1.bf16.msra.mxu0 %v1322
        %2797 = vmatprep.subr.bf16.mxu0 %v1315
        %2798 = vmatpush1.bf16.msra.mxu0 %v1314
        %2799 = vmatprep.subr.bf16.mxu0 %v1307
        %2800 = vmatpush1.bf16.msra.mxu0 %v1306
        %2801 = vmatprep.subr.bf16.mxu0 %v1299
        %2802 = vmatpush1.bf16.msra.mxu0 %v1298
        %2803 = vmatprep.subr.bf16.mxu0 0
        %2804 = vmatpush2.bf16.msra.mxu0 0
        %2805 = vmatprep.subr.bf16.mxu0 0
        %2806 = vmatpush2.bf16.msra.mxu0 0
        %2807 = vmatprep.subr.bf16.mxu0 0
        %2808 = vmatpush2.bf16.msra.mxu0 0
        %2809 = vmatprep.subr.bf16.mxu0 0
        %2810 = vmatpush2.bf16.msra.mxu0 0
        %2811 = vmatprep.subr.bf16.mxu0 0
        %2812 = vmatpush2.bf16.msra.mxu0 0
        %2813 = vmatprep.subr.bf16.mxu0 0
        %2814 = vmatpush2.bf16.msra.mxu0 0
        %2815 = vmatprep.subr.bf16.mxu0 0
        %2816 = vmatpush2.bf16.msra.mxu0 0
        %2817 = vmatprep.subr.bf16.mxu0 0
        %2818 = vmatpush2.bf16.msra.mxu0 0
        %2819 = vmatprep.mubr.bf16.mxu0 0
        %2820 = vmatmul.mubr.bf16.gmra.mxu0 %v2666
        %v2821 = vpop.f32.mrf.mxu0
        %v2822 = vadd.f32 %v1075, %v2821
        %v2823 = vpop.f32.mrf.mxu0
        %v2824 = vadd.f32 %v1079, %v2823
        %v2825 = vpop.f32.mrf.mxu0
        %v2826 = vadd.f32 %v1075, %v2825
        %v2827 = vpop.f32.mrf.mxu0
        %v2828 = vadd.f32 %v1079, %v2827
        %2829 = vmatprep.mubr.bf16.mxu0 0
        %2830 = vmatmul.mubr.bf16.gmra.mxu0 %v2667
        %v2831 = vpop.f32.mrf.mxu0
        %v2832 = vadd.f32 %v1075, %v2831
        %v2833 = vpop.f32.mrf.mxu0
        %v2834 = vadd.f32 %v1079, %v2833
        %v2835 = vpop.f32.mrf.mxu0
        %v2836 = vadd.f32 %v1075, %v2835
        %v2837 = vpop.f32.mrf.mxu0
        %v2838 = vadd.f32 %v1079, %v2837
        %2839 = vmatprep.mubr.bf16.mxu0 0
        %2840 = vmatmul.mubr.bf16.gmra.mxu0 %v2668
        %v2841 = vpop.f32.mrf.mxu0
        %v2842 = vadd.f32 %v1075, %v2841
        %v2843 = vpop.f32.mrf.mxu0
        %v2844 = vadd.f32 %v1079, %v2843
        %v2845 = vpop.f32.mrf.mxu0
        %v2846 = vadd.f32 %v1075, %v2845
        %v2847 = vpop.f32.mrf.mxu0
        %v2848 = vadd.f32 %v1079, %v2847
        %2849 = vmatprep.mubr.bf16.mxu0 0
        %2850 = vmatmul.mubr.bf16.gmra.mxu0 %v2669
        %v2851 = vpop.f32.mrf.mxu0
        %v2852 = vadd.f32 %v1075, %v2851
        %v2853 = vpop.f32.mrf.mxu0
        %v2854 = vadd.f32 %v1079, %v2853
        %v2855 = vpop.f32.mrf.mxu0
        %v2856 = vadd.f32 %v1075, %v2855
        %v2857 = vpop.f32.mrf.mxu0
        %v2858 = vadd.f32 %v1079, %v2857
        %2859 = vmatprep.mubr.bf16.mxu0 0
        %2860 = vmatmul.mubr.bf16.gmra.mxu0 %v2670
        %v2861 = vpop.f32.mrf.mxu0
        %v2862 = vadd.f32 %v1075, %v2861
        %v2863 = vpop.f32.mrf.mxu0
        %v2864 = vadd.f32 %v1079, %v2863
        %v2865 = vpop.f32.mrf.mxu0
        %v2866 = vadd.f32 %v1075, %v2865
        %v2867 = vpop.f32.mrf.mxu0
        %v2868 = vadd.f32 %v1079, %v2867
        %2869 = vmatprep.mubr.bf16.mxu0 0
        %2870 = vmatmul.mubr.bf16.gmra.mxu0 %v2671
        %v2871 = vpop.f32.mrf.mxu0
        %v2872 = vadd.f32 %v1075, %v2871
        %v2873 = vpop.f32.mrf.mxu0
        %v2874 = vadd.f32 %v1079, %v2873
        %v2875 = vpop.f32.mrf.mxu0
        %v2876 = vadd.f32 %v1075, %v2875
        %v2877 = vpop.f32.mrf.mxu0
        %v2878 = vadd.f32 %v1079, %v2877
        %2879 = vmatprep.mubr.bf16.mxu0 0
        %2880 = vmatmul.mubr.bf16.gmra.mxu0 %v2672
        %v2881 = vpop.f32.mrf.mxu0
        %v2882 = vadd.f32 %v1075, %v2881
        %v2883 = vpop.f32.mrf.mxu0
        %v2884 = vadd.f32 %v1079, %v2883
        %v2885 = vpop.f32.mrf.mxu0
        %v2886 = vadd.f32 %v1075, %v2885
        %v2887 = vpop.f32.mrf.mxu0
        %v2888 = vadd.f32 %v1079, %v2887
        %2889 = vmatprep.mubr.bf16.mxu0 0
        %2890 = vmatmul.mubr.bf16.gmra.mxu0 %v2673
        %v2891 = vpop.f32.mrf.mxu0
        %v2892 = vadd.f32 %v1075, %v2891
        %v2893 = vpop.f32.mrf.mxu0
        %v2894 = vadd.f32 %v1079, %v2893
        %v2895 = vpop.f32.mrf.mxu0
        %v2896 = vadd.f32 %v1075, %v2895
        %v2897 = vpop.f32.mrf.mxu0
        %v2898 = vadd.f32 %v1079, %v2897
        %2899 = vdwg.mxu0
        %2900 = vmatprep.subr.bf16.mxu0 %v1357
        %2901 = vmatpush1.bf16.msra.mxu0 %v1356
        %2902 = vmatprep.subr.bf16.mxu0 %v1349
        %2903 = vmatpush1.bf16.msra.mxu0 %v1348
        %2904 = vmatprep.subr.bf16.mxu0 %v1341
        %2905 = vmatpush1.bf16.msra.mxu0 %v1340
        %2906 = vmatprep.subr.bf16.mxu0 %v1333
        %2907 = vmatpush1.bf16.msra.mxu0 %v1332
        %2908 = vmatprep.subr.bf16.mxu0 %v1325
        %2909 = vmatpush1.bf16.msra.mxu0 %v1324
        %2910 = vmatprep.subr.bf16.mxu0 %v1317
        %2911 = vmatpush1.bf16.msra.mxu0 %v1316
        %2912 = vmatprep.subr.bf16.mxu0 %v1309
        %2913 = vmatpush1.bf16.msra.mxu0 %v1308
        %2914 = vmatprep.subr.bf16.mxu0 %v1301
        %2915 = vmatpush1.bf16.msra.mxu0 %v1300
        %2916 = vmatprep.subr.bf16.mxu0 0
        %2917 = vmatpush2.bf16.msra.mxu0 0
        %2918 = vmatprep.subr.bf16.mxu0 0
        %2919 = vmatpush2.bf16.msra.mxu0 0
        %2920 = vmatprep.subr.bf16.mxu0 0
        %2921 = vmatpush2.bf16.msra.mxu0 0
        %2922 = vmatprep.subr.bf16.mxu0 0
        %2923 = vmatpush2.bf16.msra.mxu0 0
        %2924 = vmatprep.subr.bf16.mxu0 0
        %2925 = vmatpush2.bf16.msra.mxu0 0
        %2926 = vmatprep.subr.bf16.mxu0 0
        %2927 = vmatpush2.bf16.msra.mxu0 0
        %2928 = vmatprep.subr.bf16.mxu0 0
        %2929 = vmatpush2.bf16.msra.mxu0 0
        %2930 = vmatprep.subr.bf16.mxu0 0
        %2931 = vmatpush2.bf16.msra.mxu0 0
        %2932 = vmatprep.mubr.bf16.mxu0 0
        %2933 = vmatmul.mubr.bf16.gmra.mxu0 %v2666
        %v2934 = vpop.f32.mrf.mxu0
        %v2935 = vadd.f32 %v1083, %v2934
        %v2936 = vpop.f32.mrf.mxu0
        %v2937 = vadd.f32 %v1087, %v2936
        %v2938 = vpop.f32.mrf.mxu0
        %v2939 = vadd.f32 %v1083, %v2938
        %v2940 = vpop.f32.mrf.mxu0
        %v2941 = vadd.f32 %v1087, %v2940
        %2942 = vmatprep.mubr.bf16.mxu0 0
        %2943 = vmatmul.mubr.bf16.gmra.mxu0 %v2667
        %v2944 = vpop.f32.mrf.mxu0
        %v2945 = vadd.f32 %v1083, %v2944
        %v2946 = vpop.f32.mrf.mxu0
        %v2947 = vadd.f32 %v1087, %v2946
        %v2948 = vpop.f32.mrf.mxu0
        %v2949 = vadd.f32 %v1083, %v2948
        %v2950 = vpop.f32.mrf.mxu0
        %v2951 = vadd.f32 %v1087, %v2950
        %2952 = vmatprep.mubr.bf16.mxu0 0
        %2953 = vmatmul.mubr.bf16.gmra.mxu0 %v2668
        %v2954 = vpop.f32.mrf.mxu0
        %v2955 = vadd.f32 %v1083, %v2954
        %v2956 = vpop.f32.mrf.mxu0
        %v2957 = vadd.f32 %v1087, %v2956
        %v2958 = vpop.f32.mrf.mxu0
        %v2959 = vadd.f32 %v1083, %v2958
        %v2960 = vpop.f32.mrf.mxu0
        %v2961 = vadd.f32 %v1087, %v2960
        %2962 = vmatprep.mubr.bf16.mxu0 0
        %2963 = vmatmul.mubr.bf16.gmra.mxu0 %v2669
        %v2964 = vpop.f32.mrf.mxu0
        %v2965 = vadd.f32 %v1083, %v2964
        %v2966 = vpop.f32.mrf.mxu0
        %v2967 = vadd.f32 %v1087, %v2966
        %v2968 = vpop.f32.mrf.mxu0
        %v2969 = vadd.f32 %v1083, %v2968
        %v2970 = vpop.f32.mrf.mxu0
        %v2971 = vadd.f32 %v1087, %v2970
        %2972 = vmatprep.mubr.bf16.mxu0 0
        %2973 = vmatmul.mubr.bf16.gmra.mxu0 %v2670
        %v2974 = vpop.f32.mrf.mxu0
        %v2975 = vadd.f32 %v1083, %v2974
        %v2976 = vpop.f32.mrf.mxu0
        %v2977 = vadd.f32 %v1087, %v2976
        %v2978 = vpop.f32.mrf.mxu0
        %v2979 = vadd.f32 %v1083, %v2978
        %v2980 = vpop.f32.mrf.mxu0
        %v2981 = vadd.f32 %v1087, %v2980
        %2982 = vmatprep.mubr.bf16.mxu0 0
        %2983 = vmatmul.mubr.bf16.gmra.mxu0 %v2671
        %v2984 = vpop.f32.mrf.mxu0
        %v2985 = vadd.f32 %v1083, %v2984
        %v2986 = vpop.f32.mrf.mxu0
        %v2987 = vadd.f32 %v1087, %v2986
        %v2988 = vpop.f32.mrf.mxu0
        %v2989 = vadd.f32 %v1083, %v2988
        %v2990 = vpop.f32.mrf.mxu0
        %v2991 = vadd.f32 %v1087, %v2990
        %2992 = vmatprep.mubr.bf16.mxu0 0
        %2993 = vmatmul.mubr.bf16.gmra.mxu0 %v2672
        %v2994 = vpop.f32.mrf.mxu0
        %v2995 = vadd.f32 %v1083, %v2994
        %v2996 = vpop.f32.mrf.mxu0
        %v2997 = vadd.f32 %v1087, %v2996
        %v2998 = vpop.f32.mrf.mxu0
        %v2999 = vadd.f32 %v1083, %v2998
        %v3000 = vpop.f32.mrf.mxu0
        %v3001 = vadd.f32 %v1087, %v3000
        %3002 = vmatprep.mubr.bf16.mxu0 0
        %3003 = vmatmul.mubr.bf16.gmra.mxu0 %v2673
        %v3004 = vpop.f32.mrf.mxu0
        %v3005 = vadd.f32 %v1083, %v3004
        %v3006 = vpop.f32.mrf.mxu0
        %v3007 = vadd.f32 %v1087, %v3006
        %v3008 = vpop.f32.mrf.mxu0
        %v3009 = vadd.f32 %v1083, %v3008
        %v3010 = vpop.f32.mrf.mxu0
        %v3011 = vadd.f32 %v1087, %v3010
        %3012 = vdwg.mxu0
        %3013 = vmatprep.subr.bf16.mxu0 %v1359
        %3014 = vmatpush1.bf16.msra.mxu0 %v1358
        %3015 = vmatprep.subr.bf16.mxu0 %v1351
        %3016 = vmatpush1.bf16.msra.mxu0 %v1350
        %3017 = vmatprep.subr.bf16.mxu0 %v1343
        %3018 = vmatpush1.bf16.msra.mxu0 %v1342
        %3019 = vmatprep.subr.bf16.mxu0 %v1335
        %3020 = vmatpush1.bf16.msra.mxu0 %v1334
        %3021 = vmatprep.subr.bf16.mxu0 %v1327
        %3022 = vmatpush1.bf16.msra.mxu0 %v1326
        %3023 = vmatprep.subr.bf16.mxu0 %v1319
        %3024 = vmatpush1.bf16.msra.mxu0 %v1318
        %3025 = vmatprep.subr.bf16.mxu0 %v1311
        %3026 = vmatpush1.bf16.msra.mxu0 %v1310
        %3027 = vmatprep.subr.bf16.mxu0 %v1303
        %3028 = vmatpush1.bf16.msra.mxu0 %v1302
        %3029 = vmatprep.subr.bf16.mxu0 0
        %3030 = vmatpush2.bf16.msra.mxu0 0
        %3031 = vmatprep.subr.bf16.mxu0 0
        %3032 = vmatpush2.bf16.msra.mxu0 0
        %3033 = vmatprep.subr.bf16.mxu0 0
        %3034 = vmatpush2.bf16.msra.mxu0 0
        %3035 = vmatprep.subr.bf16.mxu0 0
        %3036 = vmatpush2.bf16.msra.mxu0 0
        %3037 = vmatprep.subr.bf16.mxu0 0
        %3038 = vmatpush2.bf16.msra.mxu0 0
        %3039 = vmatprep.subr.bf16.mxu0 0
        %3040 = vmatpush2.bf16.msra.mxu0 0
        %3041 = vmatprep.subr.bf16.mxu0 0
        %3042 = vmatpush2.bf16.msra.mxu0 0
        %3043 = vmatprep.subr.bf16.mxu0 0
        %3044 = vmatpush2.bf16.msra.mxu0 0
        %3045 = vmatprep.mubr.bf16.mxu0 0
        %3046 = vmatmul.mubr.bf16.gmra.mxu0 %v2666
        %v3047 = vpop.f32.mrf.mxu0
        %v3048 = vadd.f32 %v1091, %v3047
        %v3049 = vpop.f32.mrf.mxu0
        %v3050 = vadd.f32 %v1095, %v3049
        %v3051 = vpop.f32.mrf.mxu0
        %v3052 = vadd.f32 %v1091, %v3051
        %v3053 = vpop.f32.mrf.mxu0
        %v3054 = vadd.f32 %v1095, %v3053
        %3055 = vmatprep.mubr.bf16.mxu0 0
        %3056 = vmatmul.mubr.bf16.gmra.mxu0 %v2667
        %v3057 = vpop.f32.mrf.mxu0
        %v3058 = vadd.f32 %v1091, %v3057
        %v3059 = vpop.f32.mrf.mxu0
        %v3060 = vadd.f32 %v1095, %v3059
        %v3061 = vpop.f32.mrf.mxu0
        %v3062 = vadd.f32 %v1091, %v3061
        %v3063 = vpop.f32.mrf.mxu0
        %v3064 = vadd.f32 %v1095, %v3063
        %3065 = vmatprep.mubr.bf16.mxu0 0
        %3066 = vmatmul.mubr.bf16.gmra.mxu0 %v2668
        %v3067 = vpop.f32.mrf.mxu0
        %v3068 = vadd.f32 %v1091, %v3067
        %v3069 = vpop.f32.mrf.mxu0
        %v3070 = vadd.f32 %v1095, %v3069
        %v3071 = vpop.f32.mrf.mxu0
        %v3072 = vadd.f32 %v1091, %v3071
        %v3073 = vpop.f32.mrf.mxu0
        %v3074 = vadd.f32 %v1095, %v3073
        %3075 = vmatprep.mubr.bf16.mxu0 0
        %3076 = vmatmul.mubr.bf16.gmra.mxu0 %v2669
        %v3077 = vpop.f32.mrf.mxu0
        %v3078 = vadd.f32 %v1091, %v3077
        %v3079 = vpop.f32.mrf.mxu0
        %v3080 = vadd.f32 %v1095, %v3079
        %v3081 = vpop.f32.mrf.mxu0
        %v3082 = vadd.f32 %v1091, %v3081
        %v3083 = vpop.f32.mrf.mxu0
        %v3084 = vadd.f32 %v1095, %v3083
        %3085 = vmatprep.mubr.bf16.mxu0 0
        %3086 = vmatmul.mubr.bf16.gmra.mxu0 %v2670
        %v3087 = vpop.f32.mrf.mxu0
        %v3088 = vadd.f32 %v1091, %v3087
        %v3089 = vpop.f32.mrf.mxu0
        %v3090 = vadd.f32 %v1095, %v3089
        %v3091 = vpop.f32.mrf.mxu0
        %v3092 = vadd.f32 %v1091, %v3091
        %v3093 = vpop.f32.mrf.mxu0
        %v3094 = vadd.f32 %v1095, %v3093
        %3095 = vmatprep.mubr.bf16.mxu0 0
        %3096 = vmatmul.mubr.bf16.gmra.mxu0 %v2671
        %v3097 = vpop.f32.mrf.mxu0
        %v3098 = vadd.f32 %v1091, %v3097
        %v3099 = vpop.f32.mrf.mxu0
        %v3100 = vadd.f32 %v1095, %v3099
        %v3101 = vpop.f32.mrf.mxu0
        %v3102 = vadd.f32 %v1091, %v3101
        %v3103 = vpop.f32.mrf.mxu0
        %v3104 = vadd.f32 %v1095, %v3103
        %3105 = vmatprep.mubr.bf16.mxu0 0
        %3106 = vmatmul.mubr.bf16.gmra.mxu0 %v2672
        %v3107 = vpop.f32.mrf.mxu0
        %v3108 = vadd.f32 %v1091, %v3107
        %v3109 = vpop.f32.mrf.mxu0
        %v3110 = vadd.f32 %v1095, %v3109
        %v3111 = vpop.f32.mrf.mxu0
        %v3112 = vadd.f32 %v1091, %v3111
        %v3113 = vpop.f32.mrf.mxu0
        %v3114 = vadd.f32 %v1095, %v3113
        %3115 = vmatprep.mubr.bf16.mxu0 0
        %3116 = vmatmul.mubr.bf16.gmra.mxu0 %v2673
        %v3117 = vpop.f32.mrf.mxu0
        %v3118 = vadd.f32 %v1091, %v3117
        %v3119 = vpop.f32.mrf.mxu0
        %v3120 = vadd.f32 %v1095, %v3119
        %v3121 = vpop.f32.mrf.mxu0
        %v3122 = vadd.f32 %v1091, %v3121
        %v3123 = vpop.f32.mrf.mxu0
        %v3124 = vadd.f32 %v1095, %v3123
        %3125 = vdwg.mxu0
        %v3126 = vmax.f32 %v2709, 0.0
        %v3127 = vmax.f32 %v2711, 0.0
        %v3128 = vmax.f32 %v2822, 0.0
        %v3129 = vmax.f32 %v2824, 0.0
        %v3130 = vmax.f32 %v2935, 0.0
        %v3131 = vmax.f32 %v2937, 0.0
        %v3132 = vmax.f32 %v3048, 0.0
        %v3133 = vmax.f32 %v3050, 0.0
        %v3134 = vmax.f32 %v2713, 0.0
        %v3135 = vmax.f32 %v2715, 0.0
        %v3136 = vmax.f32 %v2826, 0.0
        %v3137 = vmax.f32 %v2828, 0.0
        %v3138 = vmax.f32 %v2939, 0.0
        %v3139 = vmax.f32 %v2941, 0.0
        %v3140 = vmax.f32 %v3052, 0.0
        %v3141 = vmax.f32 %v3054, 0.0
        %v3142 = vmax.f32 %v2719, 0.0
        %v3143 = vmax.f32 %v2721, 0.0
        %v3144 = vmax.f32 %v2832, 0.0
        %v3145 = vmax.f32 %v2834, 0.0
        %v3146 = vmax.f32 %v2945, 0.0
        %v3147 = vmax.f32 %v2947, 0.0
        %v3148 = vmax.f32 %v3058, 0.0
        %v3149 = vmax.f32 %v3060, 0.0
        %v3150 = vmax.f32 %v2723, 0.0
        %v3151 = vmax.f32 %v2725, 0.0
        %v3152 = vmax.f32 %v2836, 0.0
        %v3153 = vmax.f32 %v2838, 0.0
        %v3154 = vmax.f32 %v2949, 0.0
        %v3155 = vmax.f32 %v2951, 0.0
        %v3156 = vmax.f32 %v3062, 0.0
        %v3157 = vmax.f32 %v3064, 0.0
        %v3158 = vmax.f32 %v2729, 0.0
        %v3159 = vmax.f32 %v2731, 0.0
        %v3160 = vmax.f32 %v2842, 0.0
        %v3161 = vmax.f32 %v2844, 0.0
        %v3162 = vmax.f32 %v2955, 0.0
        %v3163 = vmax.f32 %v2957, 0.0
        %v3164 = vmax.f32 %v3068, 0.0
        %v3165 = vmax.f32 %v3070, 0.0
        %v3166 = vmax.f32 %v2733, 0.0
        %v3167 = vmax.f32 %v2735, 0.0
        %v3168 = vmax.f32 %v2846, 0.0
        %v3169 = vmax.f32 %v2848, 0.0
        %v3170 = vmax.f32 %v2959, 0.0
        %v3171 = vmax.f32 %v2961, 0.0
        %v3172 = vmax.f32 %v3072, 0.0
        %v3173 = vmax.f32 %v3074, 0.0
        %v3174 = vmax.f32 %v2739, 0.0
        %v3175 = vmax.f32 %v2741, 0.0
        %v3176 = vmax.f32 %v2852, 0.0
        %v3177 = vmax.f32 %v2854, 0.0
        %v3178 = vmax.f32 %v2965, 0.0
        %v3179 = vmax.f32 %v2967, 0.0
        %v3180 = vmax.f32 %v3078, 0.0
        %v3181 = vmax.f32 %v3080, 0.0
        %v3182 = vmax.f32 %v2743, 0.0
        %v3183 = vmax.f32 %v2745, 0.0
        %v3184 = vmax.f32 %v2856, 0.0
        %v3185 = vmax.f32 %v2858, 0.0
        %v3186 = vmax.f32 %v2969, 0.0
        %v3187 = vmax.f32 %v2971, 0.0
        %v3188 = vmax.f32 %v3082, 0.0
        %v3189 = vmax.f32 %v3084, 0.0
        %v3190 = vmax.f32 %v2749, 0.0
        %v3191 = vmax.f32 %v2751, 0.0
        %v3192 = vmax.f32 %v2862, 0.0
        %v3193 = vmax.f32 %v2864, 0.0
        %v3194 = vmax.f32 %v2975, 0.0
        %v3195 = vmax.f32 %v2977, 0.0
        %v3196 = vmax.f32 %v3088, 0.0
        %v3197 = vmax.f32 %v3090, 0.0
        %v3198 = vmax.f32 %v2753, 0.0
        %v3199 = vmax.f32 %v2755, 0.0
        %v3200 = vmax.f32 %v2866, 0.0
        %v3201 = vmax.f32 %v2868, 0.0
        %v3202 = vmax.f32 %v2979, 0.0
        %v3203 = vmax.f32 %v2981, 0.0
        %v3204 = vmax.f32 %v3092, 0.0
        %v3205 = vmax.f32 %v3094, 0.0
        %v3206 = vmax.f32 %v2759, 0.0
        %v3207 = vmax.f32 %v2761, 0.0
        %v3208 = vmax.f32 %v2872, 0.0
        %v3209 = vmax.f32 %v2874, 0.0
        %v3210 = vmax.f32 %v2985, 0.0
        %v3211 = vmax.f32 %v2987, 0.0
        %v3212 = vmax.f32 %v3098, 0.0
        %v3213 = vmax.f32 %v3100, 0.0
        %v3214 = vmax.f32 %v2763, 0.0
        %v3215 = vmax.f32 %v2765, 0.0
        %v3216 = vmax.f32 %v2876, 0.0
        %v3217 = vmax.f32 %v2878, 0.0
        %v3218 = vmax.f32 %v2989, 0.0
        %v3219 = vmax.f32 %v2991, 0.0
        %v3220 = vmax.f32 %v3102, 0.0
        %v3221 = vmax.f32 %v3104, 0.0
        %v3222 = vmax.f32 %v2769, 0.0
        %v3223 = vmax.f32 %v2771, 0.0
        %v3224 = vmax.f32 %v2882, 0.0
        %v3225 = vmax.f32 %v2884, 0.0
        %v3226 = vmax.f32 %v2995, 0.0
        %v3227 = vmax.f32 %v2997, 0.0
        %v3228 = vmax.f32 %v3108, 0.0
        %v3229 = vmax.f32 %v3110, 0.0
        %v3230 = vmax.f32 %v2773, 0.0
        %v3231 = vmax.f32 %v2775, 0.0
        %v3232 = vmax.f32 %v2886, 0.0
        %v3233 = vmax.f32 %v2888, 0.0
        %v3234 = vmax.f32 %v2999, 0.0
        %v3235 = vmax.f32 %v3001, 0.0
        %v3236 = vmax.f32 %v3112, 0.0
        %v3237 = vmax.f32 %v3114, 0.0
        %v3238 = vmax.f32 %v2779, 0.0
        %v3239 = vmax.f32 %v2781, 0.0
        %v3240 = vmax.f32 %v2892, 0.0
        %v3241 = vmax.f32 %v2894, 0.0
        %v3242 = vmax.f32 %v3005, 0.0
        %v3243 = vmax.f32 %v3007, 0.0
        %v3244 = vmax.f32 %v3118, 0.0
        %v3245 = vmax.f32 %v3120, 0.0
        %v3246 = vmax.f32 %v2783, 0.0
        %v3247 = vmax.f32 %v2785, 0.0
        %v3248 = vmax.f32 %v2896, 0.0
        %v3249 = vmax.f32 %v2898, 0.0
        %v3250 = vmax.f32 %v3009, 0.0
        %v3251 = vmax.f32 %v3011, 0.0
        %v3252 = vmax.f32 %v3122, 0.0
        %v3253 = vmax.f32 %v3124, 0.0
        %v3254 = vpack.c.bf16 %v3134, %v3126
        %v3255 = vpack.c.bf16 %v3135, %v3127
        %v3256 = vpack.c.bf16 %v3136, %v3128
        %v3257 = vpack.c.bf16 %v3137, %v3129
        %v3258 = vpack.c.bf16 %v3138, %v3130
        %v3259 = vpack.c.bf16 %v3139, %v3131
        %v3260 = vpack.c.bf16 %v3140, %v3132
        %v3261 = vpack.c.bf16 %v3141, %v3133
        %v3262 = vpack.c.bf16 %v3150, %v3142
        %v3263 = vpack.c.bf16 %v3151, %v3143
        %v3264 = vpack.c.bf16 %v3152, %v3144
        %v3265 = vpack.c.bf16 %v3153, %v3145
        %v3266 = vpack.c.bf16 %v3154, %v3146
        %v3267 = vpack.c.bf16 %v3155, %v3147
        %v3268 = vpack.c.bf16 %v3156, %v3148
        %v3269 = vpack.c.bf16 %v3157, %v3149
        %v3270 = vpack.c.bf16 %v3166, %v3158
        %v3271 = vpack.c.bf16 %v3167, %v3159
        %v3272 = vpack.c.bf16 %v3168, %v3160
        %v3273 = vpack.c.bf16 %v3169, %v3161
        %v3274 = vpack.c.bf16 %v3170, %v3162
        %v3275 = vpack.c.bf16 %v3171, %v3163
        %v3276 = vpack.c.bf16 %v3172, %v3164
        %v3277 = vpack.c.bf16 %v3173, %v3165
        %v3278 = vpack.c.bf16 %v3182, %v3174
        %v3279 = vpack.c.bf16 %v3183, %v3175
        %v3280 = vpack.c.bf16 %v3184, %v3176
        %v3281 = vpack.c.bf16 %v3185, %v3177
        %v3282 = vpack.c.bf16 %v3186, %v3178
        %v3283 = vpack.c.bf16 %v3187, %v3179
        %v3284 = vpack.c.bf16 %v3188, %v3180
        %v3285 = vpack.c.bf16 %v3189, %v3181
        %v3286 = vpack.c.bf16 %v3198, %v3190
        %v3287 = vpack.c.bf16 %v3199, %v3191
        %v3288 = vpack.c.bf16 %v3200, %v3192
        %v3289 = vpack.c.bf16 %v3201, %v3193
        %v3290 = vpack.c.bf16 %v3202, %v3194
        %v3291 = vpack.c.bf16 %v3203, %v3195
        %v3292 = vpack.c.bf16 %v3204, %v3196
        %v3293 = vpack.c.bf16 %v3205, %v3197
        %v3294 = vpack.c.bf16 %v3214, %v3206
        %v3295 = vpack.c.bf16 %v3215, %v3207
        %v3296 = vpack.c.bf16 %v3216, %v3208
        %v3297 = vpack.c.bf16 %v3217, %v3209
        %v3298 = vpack.c.bf16 %v3218, %v3210
        %v3299 = vpack.c.bf16 %v3219, %v3211
        %v3300 = vpack.c.bf16 %v3220, %v3212
        %v3301 = vpack.c.bf16 %v3221, %v3213
        %v3302 = vpack.c.bf16 %v3230, %v3222
        %v3303 = vpack.c.bf16 %v3231, %v3223
        %v3304 = vpack.c.bf16 %v3232, %v3224
        %v3305 = vpack.c.bf16 %v3233, %v3225
        %v3306 = vpack.c.bf16 %v3234, %v3226
        %v3307 = vpack.c.bf16 %v3235, %v3227
        %v3308 = vpack.c.bf16 %v3236, %v3228
        %v3309 = vpack.c.bf16 %v3237, %v3229
        %v3310 = vpack.c.bf16 %v3246, %v3238
        %v3311 = vpack.c.bf16 %v3247, %v3239
        %v3312 = vpack.c.bf16 %v3248, %v3240
        %v3313 = vpack.c.bf16 %v3249, %v3241
        %v3314 = vpack.c.bf16 %v3250, %v3242
        %v3315 = vpack.c.bf16 %v3251, %v3243
        %v3316 = vpack.c.bf16 %v3252, %v3244
        %v3317 = vpack.c.bf16 %v3253, %v3245
        %v3318 = vsel %vm2156, %v3254, 0
        %v3319 = vsel %vm2156, %v3255, 0
        %v3320 = vsel %vm2156, %v3256, 0
        %v3321 = vsel %vm2156, %v3257, 0
        %v3322 = vsel %vm2156, %v3258, 0
        %v3323 = vsel %vm2156, %v3259, 0
        %v3324 = vsel %vm2156, %v3260, 0
        %v3325 = vsel %vm2156, %v3261, 0
        %v3326 = vsel %vm2157, %v3262, 0
        %v3327 = vsel %vm2157, %v3263, 0
        %v3328 = vsel %vm2157, %v3264, 0
        %v3329 = vsel %vm2157, %v3265, 0
        %v3330 = vsel %vm2157, %v3266, 0
        %v3331 = vsel %vm2157, %v3267, 0
        %v3332 = vsel %vm2157, %v3268, 0
        %v3333 = vsel %vm2157, %v3269, 0
        %v3334 = vsel %vm2158, %v3270, 0
        %v3335 = vsel %vm2158, %v3271, 0
        %v3336 = vsel %vm2158, %v3272, 0
        %v3337 = vsel %vm2158, %v3273, 0
        %v3338 = vsel %vm2158, %v3274, 0
        %v3339 = vsel %vm2158, %v3275, 0
        %v3340 = vsel %vm2158, %v3276, 0
        %v3341 = vsel %vm2158, %v3277, 0
        %v3342 = vsel %vm2159, %v3278, 0
        %v3343 = vsel %vm2159, %v3279, 0
        %v3344 = vsel %vm2159, %v3280, 0
        %v3345 = vsel %vm2159, %v3281, 0
        %v3346 = vsel %vm2159, %v3282, 0
        %v3347 = vsel %vm2159, %v3283, 0
        %v3348 = vsel %vm2159, %v3284, 0
        %v3349 = vsel %vm2159, %v3285, 0
        %v3350 = vsel %vm2160, %v3286, 0
        %v3351 = vsel %vm2160, %v3287, 0
        %v3352 = vsel %vm2160, %v3288, 0
        %v3353 = vsel %vm2160, %v3289, 0
        %v3354 = vsel %vm2160, %v3290, 0
        %v3355 = vsel %vm2160, %v3291, 0
        %v3356 = vsel %vm2160, %v3292, 0
        %v3357 = vsel %vm2160, %v3293, 0
        %v3358 = vsel %vm2161, %v3294, 0
        %v3359 = vsel %vm2161, %v3295, 0
        %v3360 = vsel %vm2161, %v3296, 0
        %v3361 = vsel %vm2161, %v3297, 0
        %v3362 = vsel %vm2161, %v3298, 0
        %v3363 = vsel %vm2161, %v3299, 0
        %v3364 = vsel %vm2161, %v3300, 0
        %v3365 = vsel %vm2161, %v3301, 0
        %v3366 = vsel %vm2162, %v3302, 0
        %v3367 = vsel %vm2162, %v3303, 0
        %v3368 = vsel %vm2162, %v3304, 0
        %v3369 = vsel %vm2162, %v3305, 0
        %v3370 = vsel %vm2162, %v3306, 0
        %v3371 = vsel %vm2162, %v3307, 0
        %v3372 = vsel %vm2162, %v3308, 0
        %v3373 = vsel %vm2162, %v3309, 0
        %v3374 = vsel %vm2163, %v3310, 0
        %v3375 = vsel %vm2163, %v3311, 0
        %v3376 = vsel %vm2163, %v3312, 0
        %v3377 = vsel %vm2163, %v3313, 0
        %v3378 = vsel %vm2163, %v3314, 0
        %v3379 = vsel %vm2163, %v3315, 0
        %v3380 = vsel %vm2163, %v3316, 0
        %v3381 = vsel %vm2163, %v3317, 0
        %v3382 = vmax.bf16 %v3318, %v3326
        %v3383 = vmax.bf16 %v3382, %v3334
        %v3384 = vmax.bf16 %v3383, %v3342
        %v3385 = vmax.bf16 %v3384, %v3350
        %v3386 = vmax.bf16 %v3385, %v3358
        %v3387 = vmax.bf16 %v3386, %v3366
        %v3388 = vmax.bf16 %v3387, %v3374
        %v3389 = vunpack.i.l.bf16 %v3388
        %v3390 = vunpack.i.h.bf16 %v3388
        %v3391 = vmax.f32 %v3389, %v3390
        %v3392 = vrot.slane %v3391, 4
        %v3393 = vmax.f32 %v3391, %v3392
        %v3394 = vrot.slane %v3393, 2
        %v3395 = vmax.f32 %v3393, %v3394
        %v3396 = vrot.slane %v3395, 1
        %v3397 = vmax.f32 %v3395, %v3396
        %v3398 = vpack.i.bf16 %v3397, %v3397
        %v3399 = vmax.bf16 %v3319, %v3327
        %v3400 = vmax.bf16 %v3399, %v3335
        %v3401 = vmax.bf16 %v3400, %v3343
        %v3402 = vmax.bf16 %v3401, %v3351
        %v3403 = vmax.bf16 %v3402, %v3359
        %v3404 = vmax.bf16 %v3403, %v3367
        %v3405 = vmax.bf16 %v3404, %v3375
        %v3406 = vunpack.i.l.bf16 %v3405
        %v3407 = vunpack.i.h.bf16 %v3405
        %v3408 = vmax.f32 %v3406, %v3407
        %v3409 = vrot.slane %v3408, 4
        %v3410 = vmax.f32 %v3408, %v3409
        %v3411 = vrot.slane %v3410, 2
        %v3412 = vmax.f32 %v3410, %v3411
        %v3413 = vrot.slane %v3412, 1
        %v3414 = vmax.f32 %v3412, %v3413
        %v3415 = vpack.i.bf16 %v3414, %v3414
        %v3416 = vmax.bf16 %v3320, %v3328
        %v3417 = vmax.bf16 %v3416, %v3336
        %v3418 = vmax.bf16 %v3417, %v3344
        %v3419 = vmax.bf16 %v3418, %v3352
        %v3420 = vmax.bf16 %v3419, %v3360
        %v3421 = vmax.bf16 %v3420, %v3368
        %v3422 = vmax.bf16 %v3421, %v3376
        %v3423 = vunpack.i.l.bf16 %v3422
        %v3424 = vunpack.i.h.bf16 %v3422
        %v3425 = vmax.f32 %v3423, %v3424
        %v3426 = vrot.slane %v3425, 4
        %v3427 = vmax.f32 %v3425, %v3426
        %v3428 = vrot.slane %v3427, 2
        %v3429 = vmax.f32 %v3427, %v3428
        %v3430 = vrot.slane %v3429, 1
        %v3431 = vmax.f32 %v3429, %v3430
        %v3432 = vpack.i.bf16 %v3431, %v3431
        %v3433 = vmax.bf16 %v3321, %v3329
        %v3434 = vmax.bf16 %v3433, %v3337
        %v3435 = vmax.bf16 %v3434, %v3345
        %v3436 = vmax.bf16 %v3435, %v3353
        %v3437 = vmax.bf16 %v3436, %v3361
        %v3438 = vmax.bf16 %v3437, %v3369
        %v3439 = vmax.bf16 %v3438, %v3377
        %v3440 = vunpack.i.l.bf16 %v3439
        %v3441 = vunpack.i.h.bf16 %v3439
        %v3442 = vmax.f32 %v3440, %v3441
        %v3443 = vrot.slane %v3442, 4
        %v3444 = vmax.f32 %v3442, %v3443
        %v3445 = vrot.slane %v3444, 2
        %v3446 = vmax.f32 %v3444, %v3445
        %v3447 = vrot.slane %v3446, 1
        %v3448 = vmax.f32 %v3446, %v3447
        %v3449 = vpack.i.bf16 %v3448, %v3448
        %v3450 = vmax.bf16 %v3322, %v3330
        %v3451 = vmax.bf16 %v3450, %v3338
        %v3452 = vmax.bf16 %v3451, %v3346
        %v3453 = vmax.bf16 %v3452, %v3354
        %v3454 = vmax.bf16 %v3453, %v3362
        %v3455 = vmax.bf16 %v3454, %v3370
        %v3456 = vmax.bf16 %v3455, %v3378
        %v3457 = vunpack.i.l.bf16 %v3456
        %v3458 = vunpack.i.h.bf16 %v3456
        %v3459 = vmax.f32 %v3457, %v3458
        %v3460 = vrot.slane %v3459, 4
        %v3461 = vmax.f32 %v3459, %v3460
        %v3462 = vrot.slane %v3461, 2
        %v3463 = vmax.f32 %v3461, %v3462
        %v3464 = vrot.slane %v3463, 1
        %v3465 = vmax.f32 %v3463, %v3464
        %v3466 = vpack.i.bf16 %v3465, %v3465
        %v3467 = vmax.bf16 %v3323, %v3331
        %v3468 = vmax.bf16 %v3467, %v3339
        %v3469 = vmax.bf16 %v3468, %v3347
        %v3470 = vmax.bf16 %v3469, %v3355
        %v3471 = vmax.bf16 %v3470, %v3363
        %v3472 = vmax.bf16 %v3471, %v3371
        %v3473 = vmax.bf16 %v3472, %v3379
        %v3474 = vunpack.i.l.bf16 %v3473
        %v3475 = vunpack.i.h.bf16 %v3473
        %v3476 = vmax.f32 %v3474, %v3475
        %v3477 = vrot.slane %v3476, 4
        %v3478 = vmax.f32 %v3476, %v3477
        %v3479 = vrot.slane %v3478, 2
        %v3480 = vmax.f32 %v3478, %v3479
        %v3481 = vrot.slane %v3480, 1
        %v3482 = vmax.f32 %v3480, %v3481
        %v3483 = vpack.i.bf16 %v3482, %v3482
        %v3484 = vmax.bf16 %v3324, %v3332
        %v3485 = vmax.bf16 %v3484, %v3340
        %v3486 = vmax.bf16 %v3485, %v3348
        %v3487 = vmax.bf16 %v3486, %v3356
        %v3488 = vmax.bf16 %v3487, %v3364
        %v3489 = vmax.bf16 %v3488, %v3372
        %v3490 = vmax.bf16 %v3489, %v3380
        %v3491 = vunpack.i.l.bf16 %v3490
        %v3492 = vunpack.i.h.bf16 %v3490
        %v3493 = vmax.f32 %v3491, %v3492
        %v3494 = vrot.slane %v3493, 4
        %v3495 = vmax.f32 %v3493, %v3494
        %v3496 = vrot.slane %v3495, 2
        %v3497 = vmax.f32 %v3495, %v3496
        %v3498 = vrot.slane %v3497, 1
        %v3499 = vmax.f32 %v3497, %v3498
        %v3500 = vpack.i.bf16 %v3499, %v3499
        %v3501 = vmax.bf16 %v3325, %v3333
        %v3502 = vmax.bf16 %v3501, %v3341
        %v3503 = vmax.bf16 %v3502, %v3349
        %v3504 = vmax.bf16 %v3503, %v3357
        %v3505 = vmax.bf16 %v3504, %v3365
        %v3506 = vmax.bf16 %v3505, %v3373
        %v3507 = vmax.bf16 %v3506, %v3381
        %v3508 = vunpack.i.l.bf16 %v3507
        %v3509 = vunpack.i.h.bf16 %v3507
        %v3510 = vmax.f32 %v3508, %v3509
        %v3511 = vrot.slane %v3510, 4
        %v3512 = vmax.f32 %v3510, %v3511
        %v3513 = vrot.slane %v3512, 2
        %v3514 = vmax.f32 %v3512, %v3513
        %v3515 = vrot.slane %v3514, 1
        %v3516 = vmax.f32 %v3514, %v3515
        %v3517 = vpack.i.bf16 %v3516, %v3516
        %s3518 = scalar_lea.vmem %s512, 32 [#allocation3]
        %v3519 = vld [vmem:[%s3518] sm:$0xff]
        %v3520 = vld [vmem:[%s3518 + $0x8] sm:$0xff]
        %v3521 = vpack.c.bf16 %v3520, %v3519
        %3522 = vxpose.xlu0.c.b16.start [1/8] %v3521, 128
        %3523 = vxpose.xlu0.c.b16.cont [2/8] 0, 128
        %3524 = vxpose.xlu0.c.b16.cont [3/8] 0, 128
        %3525 = vxpose.xlu0.c.b16.cont [4/8] 0, 128
        %3526 = vxpose.xlu0.c.b16.cont [5/8] 0, 128
        %3527 = vxpose.xlu0.c.b16.cont [6/8] 0, 128
        %3528 = vxpose.xlu0.c.b16.cont [7/8] 0, 128
        %3529 = vxpose.xlu0.c.b16.end [8/8] 0, 128
        %v3530 = vpop.trf.xlu0
        %v3531 = vpop.trf.xlu0
        %v3532 = vpop.trf.xlu0
        %v3533 = vpop.trf.xlu0
        %v3534 = vpop.trf.xlu0
        %v3535 = vpop.trf.xlu0
        %v3536 = vpop.trf.xlu0
        %v3537 = vpop.trf.xlu0
        %v3539 = vsel %vm667, %v3530, 0
        %v3542 = vsel %vm667, %v3531, 0
        %v3545 = vsel %vm667, %v3532, 0
        %v3548 = vsel %vm667, %v3533, 0
        %v3551 = vsel %vm667, %v3534, 0
        %v3554 = vsel %vm667, %v3535, 0
        %v3557 = vsel %vm667, %v3536, 0
        %v3560 = vsel %vm667, %v3537, 0
        %3562 = vmatprep.subr.bf16.mxu0 0
        %3563 = vmatpush1.bf16.msra.mxu0 0
        %3564 = vmatprep.subr.bf16.mxu0 0
        %3565 = vmatpush1.bf16.msra.mxu0 0
        %3566 = vmatprep.subr.bf16.mxu0 0
        %3567 = vmatpush1.bf16.msra.mxu0 0
        %3568 = vmatprep.subr.bf16.mxu0 0
        %3569 = vmatpush1.bf16.msra.mxu0 0
        %3570 = vmatprep.subr.bf16.mxu0 0
        %3571 = vmatpush1.bf16.msra.mxu0 0
        %3572 = vmatprep.subr.bf16.mxu0 0
        %3573 = vmatpush1.bf16.msra.mxu0 0
        %3574 = vmatprep.subr.bf16.mxu0 0
        %3575 = vmatpush1.bf16.msra.mxu0 0
        %3576 = vmatprep.subr.bf16.mxu0 0
        %3577 = vmatpush1.bf16.msra.mxu0 %v665
        %3578 = vmatprep.subr.bf16.mxu0 0
        %3579 = vmatpush2.bf16.msra.mxu0 0
        %3580 = vmatprep.subr.bf16.mxu0 0
        %3581 = vmatpush2.bf16.msra.mxu0 0
        %3582 = vmatprep.subr.bf16.mxu0 0
        %3583 = vmatpush2.bf16.msra.mxu0 0
        %3584 = vmatprep.subr.bf16.mxu0 0
        %3585 = vmatpush2.bf16.msra.mxu0 0
        %3586 = vmatprep.subr.bf16.mxu0 0
        %3587 = vmatpush2.bf16.msra.mxu0 0
        %3588 = vmatprep.subr.bf16.mxu0 0
        %3589 = vmatpush2.bf16.msra.mxu0 0
        %3590 = vmatprep.subr.bf16.mxu0 0
        %3591 = vmatpush2.bf16.msra.mxu0 0
        %3592 = vmatprep.subr.bf16.mxu0 0
        %3593 = vmatpush2.bf16.msra.mxu0 0
        %3594 = vmatprep.mubr.bf16.mxu0 0
        %3595 = vmatmul.mubr.bf16.gmra.mxu0 %v3539
        %v3596 = vpop.f32.mrf.mxu0
        %v3597 = vadd.f32 %v643, %v3596
        %v3598 = vpop.f32.mrf.mxu0
        %v3599 = vpop.f32.mrf.mxu0
        %v3600 = vadd.f32 %v643, %v3599
        %v3601 = vpop.f32.mrf.mxu0
        %3602 = vmatprep.mubr.bf16.mxu0 0
        %3603 = vmatmul.mubr.bf16.gmra.mxu0 %v3542
        %v3604 = vpop.f32.mrf.mxu0
        %v3605 = vadd.f32 %v643, %v3604
        %v3606 = vpop.f32.mrf.mxu0
        %v3607 = vpop.f32.mrf.mxu0
        %v3608 = vadd.f32 %v643, %v3607
        %v3609 = vpop.f32.mrf.mxu0
        %3610 = vmatprep.mubr.bf16.mxu0 0
        %3611 = vmatmul.mubr.bf16.gmra.mxu0 %v3545
        %v3612 = vpop.f32.mrf.mxu0
        %v3613 = vadd.f32 %v643, %v3612
        %v3614 = vpop.f32.mrf.mxu0
        %v3615 = vpop.f32.mrf.mxu0
        %v3616 = vadd.f32 %v643, %v3615
        %v3617 = vpop.f32.mrf.mxu0
        %3618 = vmatprep.mubr.bf16.mxu0 0
        %3619 = vmatmul.mubr.bf16.gmra.mxu0 %v3548
        %v3620 = vpop.f32.mrf.mxu0
        %v3621 = vadd.f32 %v643, %v3620
        %v3622 = vpop.f32.mrf.mxu0
        %v3623 = vpop.f32.mrf.mxu0
        %v3624 = vadd.f32 %v643, %v3623
        %v3625 = vpop.f32.mrf.mxu0
        %3626 = vmatprep.mubr.bf16.mxu0 0
        %3627 = vmatmul.mubr.bf16.gmra.mxu0 %v3551
        %v3628 = vpop.f32.mrf.mxu0
        %v3629 = vadd.f32 %v643, %v3628
        %v3630 = vpop.f32.mrf.mxu0
        %v3631 = vpop.f32.mrf.mxu0
        %v3632 = vadd.f32 %v643, %v3631
        %v3633 = vpop.f32.mrf.mxu0
        %3634 = vmatprep.mubr.bf16.mxu0 0
        %3635 = vmatmul.mubr.bf16.gmra.mxu0 %v3554
        %v3636 = vpop.f32.mrf.mxu0
        %v3637 = vadd.f32 %v643, %v3636
        %v3638 = vpop.f32.mrf.mxu0
        %v3639 = vpop.f32.mrf.mxu0
        %v3640 = vadd.f32 %v643, %v3639
        %v3641 = vpop.f32.mrf.mxu0
        %3642 = vmatprep.mubr.bf16.mxu0 0
        %3643 = vmatmul.mubr.bf16.gmra.mxu0 %v3557
        %v3644 = vpop.f32.mrf.mxu0
        %v3645 = vadd.f32 %v643, %v3644
        %v3646 = vpop.f32.mrf.mxu0
        %v3647 = vpop.f32.mrf.mxu0
        %v3648 = vadd.f32 %v643, %v3647
        %v3649 = vpop.f32.mrf.mxu0
        %3650 = vmatprep.mubr.bf16.mxu0 0
        %3651 = vmatmul.mubr.bf16.gmra.mxu0 %v3560
        %v3652 = vpop.f32.mrf.mxu0
        %v3653 = vadd.f32 %v643, %v3652
        %v3654 = vpop.f32.mrf.mxu0
        %v3655 = vpop.f32.mrf.mxu0
        %v3656 = vadd.f32 %v643, %v3655
        %v3657 = vpop.f32.mrf.mxu0
        %3658 = vdwg.mxu0
        %v3659 = vmax.f32 %v3597, 0.0
        %v3660 = vmax.f32 %v3600, 0.0
        %v3661 = vmax.f32 %v3605, 0.0
        %v3662 = vmax.f32 %v3608, 0.0
        %v3663 = vmax.f32 %v3613, 0.0
        %v3664 = vmax.f32 %v3616, 0.0
        %v3665 = vmax.f32 %v3621, 0.0
        %v3666 = vmax.f32 %v3624, 0.0
        %v3667 = vmax.f32 %v3629, 0.0
        %v3668 = vmax.f32 %v3632, 0.0
        %v3669 = vmax.f32 %v3637, 0.0
        %v3670 = vmax.f32 %v3640, 0.0
        %v3671 = vmax.f32 %v3645, 0.0
        %v3672 = vmax.f32 %v3648, 0.0
        %v3673 = vmax.f32 %v3653, 0.0
        %v3674 = vmax.f32 %v3656, 0.0
        %v3675 = vpack.c.bf16 %v3660, %v3659
        %v3676 = vpack.c.bf16 %v3662, %v3661
        %v3677 = vpack.c.bf16 %v3664, %v3663
        %v3678 = vpack.c.bf16 %v3666, %v3665
        %v3679 = vpack.c.bf16 %v3668, %v3667
        %v3680 = vpack.c.bf16 %v3670, %v3669
        %v3681 = vpack.c.bf16 %v3672, %v3671
        %v3682 = vpack.c.bf16 %v3674, %v3673
        %v3684 = vsel %vm852, %v3675, 0
        %v3687 = vsel %vm852, %v3676, 0
        %v3690 = vsel %vm852, %v3677, 0
        %v3693 = vsel %vm852, %v3678, 0
        %v3696 = vsel %vm852, %v3679, 0
        %v3699 = vsel %vm852, %v3680, 0
        %v3702 = vsel %vm852, %v3681, 0
        %v3705 = vsel %vm852, %v3682, 0
        %3707 = vmatprep.subr.bf16.mxu0 0
        %3708 = vmatpush1.bf16.msra.mxu0 0
        %3709 = vmatprep.subr.bf16.mxu0 0
        %3710 = vmatpush1.bf16.msra.mxu0 0
        %3711 = vmatprep.subr.bf16.mxu0 0
        %3712 = vmatpush1.bf16.msra.mxu0 0
        %3713 = vmatprep.subr.bf16.mxu0 0
        %3714 = vmatpush1.bf16.msra.mxu0 0
        %3715 = vmatprep.subr.bf16.mxu0 0
        %3716 = vmatpush1.bf16.msra.mxu0 %v847
        %3717 = vmatprep.subr.bf16.mxu0 0
        %3718 = vmatpush1.bf16.msra.mxu0 %v846
        %3719 = vmatprep.subr.bf16.mxu0 0
        %3720 = vmatpush1.bf16.msra.mxu0 %v845
        %3721 = vmatprep.subr.bf16.mxu0 0
        %3722 = vmatpush1.bf16.msra.mxu0 %v844
        %3723 = vmatprep.subr.bf16.mxu0 0
        %3724 = vmatpush2.bf16.msra.mxu0 0
        %3725 = vmatprep.subr.bf16.mxu0 0
        %3726 = vmatpush2.bf16.msra.mxu0 0
        %3727 = vmatprep.subr.bf16.mxu0 0
        %3728 = vmatpush2.bf16.msra.mxu0 0
        %3729 = vmatprep.subr.bf16.mxu0 0
        %3730 = vmatpush2.bf16.msra.mxu0 0
        %3731 = vmatprep.subr.bf16.mxu0 0
        %3732 = vmatpush2.bf16.msra.mxu0 0
        %3733 = vmatprep.subr.bf16.mxu0 0
        %3734 = vmatpush2.bf16.msra.mxu0 0
        %3735 = vmatprep.subr.bf16.mxu0 0
        %3736 = vmatpush2.bf16.msra.mxu0 0
        %3737 = vmatprep.subr.bf16.mxu0 0
        %3738 = vmatpush2.bf16.msra.mxu0 0
        %3739 = vmatprep.mubr.bf16.mxu0 0
        %3740 = vmatmul.mubr.bf16.gmra.mxu0 %v3684
        %v3741 = vpop.f32.mrf.mxu0
        %v3742 = vadd.f32 %v826, %v3741
        %v3743 = vpop.f32.mrf.mxu0
        %v3744 = vpop.f32.mrf.mxu0
        %v3745 = vadd.f32 %v826, %v3744
        %v3746 = vpop.f32.mrf.mxu0
        %3747 = vmatprep.mubr.bf16.mxu0 0
        %3748 = vmatmul.mubr.bf16.gmra.mxu0 %v3687
        %v3749 = vpop.f32.mrf.mxu0
        %v3750 = vadd.f32 %v826, %v3749
        %v3751 = vpop.f32.mrf.mxu0
        %v3752 = vpop.f32.mrf.mxu0
        %v3753 = vadd.f32 %v826, %v3752
        %v3754 = vpop.f32.mrf.mxu0
        %3755 = vmatprep.mubr.bf16.mxu0 0
        %3756 = vmatmul.mubr.bf16.gmra.mxu0 %v3690
        %v3757 = vpop.f32.mrf.mxu0
        %v3758 = vadd.f32 %v826, %v3757
        %v3759 = vpop.f32.mrf.mxu0
        %v3760 = vpop.f32.mrf.mxu0
        %v3761 = vadd.f32 %v826, %v3760
        %v3762 = vpop.f32.mrf.mxu0
        %3763 = vmatprep.mubr.bf16.mxu0 0
        %3764 = vmatmul.mubr.bf16.gmra.mxu0 %v3693
        %v3765 = vpop.f32.mrf.mxu0
        %v3766 = vadd.f32 %v826, %v3765
        %v3767 = vpop.f32.mrf.mxu0
        %v3768 = vpop.f32.mrf.mxu0
        %v3769 = vadd.f32 %v826, %v3768
        %v3770 = vpop.f32.mrf.mxu0
        %3771 = vmatprep.mubr.bf16.mxu0 0
        %3772 = vmatmul.mubr.bf16.gmra.mxu0 %v3696
        %v3773 = vpop.f32.mrf.mxu0
        %v3774 = vadd.f32 %v826, %v3773
        %v3775 = vpop.f32.mrf.mxu0
        %v3776 = vpop.f32.mrf.mxu0
        %v3777 = vadd.f32 %v826, %v3776
        %v3778 = vpop.f32.mrf.mxu0
        %3779 = vmatprep.mubr.bf16.mxu0 0
        %3780 = vmatmul.mubr.bf16.gmra.mxu0 %v3699
        %v3781 = vpop.f32.mrf.mxu0
        %v3782 = vadd.f32 %v826, %v3781
        %v3783 = vpop.f32.mrf.mxu0
        %v3784 = vpop.f32.mrf.mxu0
        %v3785 = vadd.f32 %v826, %v3784
        %v3786 = vpop.f32.mrf.mxu0
        %3787 = vmatprep.mubr.bf16.mxu0 0
        %3788 = vmatmul.mubr.bf16.gmra.mxu0 %v3702
        %v3789 = vpop.f32.mrf.mxu0
        %v3790 = vadd.f32 %v826, %v3789
        %v3791 = vpop.f32.mrf.mxu0
        %v3792 = vpop.f32.mrf.mxu0
        %v3793 = vadd.f32 %v826, %v3792
        %v3794 = vpop.f32.mrf.mxu0
        %3795 = vmatprep.mubr.bf16.mxu0 0
        %3796 = vmatmul.mubr.bf16.gmra.mxu0 %v3705
        %v3797 = vpop.f32.mrf.mxu0
        %v3798 = vadd.f32 %v826, %v3797
        %v3799 = vpop.f32.mrf.mxu0
        %v3800 = vpop.f32.mrf.mxu0
        %v3801 = vadd.f32 %v826, %v3800
        %v3802 = vpop.f32.mrf.mxu0
        %3803 = vdwg.mxu0
        %v3804 = vmax.f32 %v3742, 0.0
        %v3805 = vmax.f32 %v3745, 0.0
        %v3806 = vmax.f32 %v3750, 0.0
        %v3807 = vmax.f32 %v3753, 0.0
        %v3808 = vmax.f32 %v3758, 0.0
        %v3809 = vmax.f32 %v3761, 0.0
        %v3810 = vmax.f32 %v3766, 0.0
        %v3811 = vmax.f32 %v3769, 0.0
        %v3812 = vmax.f32 %v3774, 0.0
        %v3813 = vmax.f32 %v3777, 0.0
        %v3814 = vmax.f32 %v3782, 0.0
        %v3815 = vmax.f32 %v3785, 0.0
        %v3816 = vmax.f32 %v3790, 0.0
        %v3817 = vmax.f32 %v3793, 0.0
        %v3818 = vmax.f32 %v3798, 0.0
        %v3819 = vmax.f32 %v3801, 0.0
        %v3820 = vpack.c.bf16 %v3805, %v3804
        %v3821 = vpack.c.bf16 %v3807, %v3806
        %v3822 = vpack.c.bf16 %v3809, %v3808
        %v3823 = vpack.c.bf16 %v3811, %v3810
        %v3824 = vpack.c.bf16 %v3813, %v3812
        %v3825 = vpack.c.bf16 %v3815, %v3814
        %v3826 = vpack.c.bf16 %v3817, %v3816
        %v3827 = vpack.c.bf16 %v3819, %v3818
        %3828 = vmatprep.subr.bf16.mxu0 %v1353
        %3829 = vmatpush1.bf16.msra.mxu0 %v1352
        %3830 = vmatprep.subr.bf16.mxu0 %v1345
        %3831 = vmatpush1.bf16.msra.mxu0 %v1344
        %3832 = vmatprep.subr.bf16.mxu0 %v1337
        %3833 = vmatpush1.bf16.msra.mxu0 %v1336
        %3834 = vmatprep.subr.bf16.mxu0 %v1329
        %3835 = vmatpush1.bf16.msra.mxu0 %v1328
        %3836 = vmatprep.subr.bf16.mxu0 %v1321
        %3837 = vmatpush1.bf16.msra.mxu0 %v1320
        %3838 = vmatprep.subr.bf16.mxu0 %v1313
        %3839 = vmatpush1.bf16.msra.mxu0 %v1312
        %3840 = vmatprep.subr.bf16.mxu0 %v1305
        %3841 = vmatpush1.bf16.msra.mxu0 %v1304
        %3842 = vmatprep.subr.bf16.mxu0 %v1297
        %3843 = vmatpush1.bf16.msra.mxu0 %v1296
        %3844 = vmatprep.subr.bf16.mxu0 0
        %3845 = vmatpush2.bf16.msra.mxu0 0
        %3846 = vmatprep.subr.bf16.mxu0 0
        %3847 = vmatpush2.bf16.msra.mxu0 0
        %3848 = vmatprep.subr.bf16.mxu0 0
        %3849 = vmatpush2.bf16.msra.mxu0 0
        %3850 = vmatprep.subr.bf16.mxu0 0
        %3851 = vmatpush2.bf16.msra.mxu0 0
        %3852 = vmatprep.subr.bf16.mxu0 0
        %3853 = vmatpush2.bf16.msra.mxu0 0
        %3854 = vmatprep.subr.bf16.mxu0 0
        %3855 = vmatpush2.bf16.msra.mxu0 0
        %3856 = vmatprep.subr.bf16.mxu0 0
        %3857 = vmatpush2.bf16.msra.mxu0 0
        %3858 = vmatprep.subr.bf16.mxu0 0
        %3859 = vmatpush2.bf16.msra.mxu0 0
        %3860 = vmatprep.mubr.bf16.mxu0 0
        %3861 = vmatmul.mubr.bf16.gmra.mxu0 %v3820
        %v3862 = vpop.f32.mrf.mxu0
        %v3863 = vadd.f32 %v1067, %v3862
        %v3864 = vpop.f32.mrf.mxu0
        %v3865 = vadd.f32 %v1071, %v3864
        %v3866 = vpop.f32.mrf.mxu0
        %v3867 = vadd.f32 %v1067, %v3866
        %v3868 = vpop.f32.mrf.mxu0
        %v3869 = vadd.f32 %v1071, %v3868
        %3870 = vmatprep.mubr.bf16.mxu0 0
        %3871 = vmatmul.mubr.bf16.gmra.mxu0 %v3821
        %v3872 = vpop.f32.mrf.mxu0
        %v3873 = vadd.f32 %v1067, %v3872
        %v3874 = vpop.f32.mrf.mxu0
        %v3875 = vadd.f32 %v1071, %v3874
        %v3876 = vpop.f32.mrf.mxu0
        %v3877 = vadd.f32 %v1067, %v3876
        %v3878 = vpop.f32.mrf.mxu0
        %v3879 = vadd.f32 %v1071, %v3878
        %3880 = vmatprep.mubr.bf16.mxu0 0
        %3881 = vmatmul.mubr.bf16.gmra.mxu0 %v3822
        %v3882 = vpop.f32.mrf.mxu0
        %v3883 = vadd.f32 %v1067, %v3882
        %v3884 = vpop.f32.mrf.mxu0
        %v3885 = vadd.f32 %v1071, %v3884
        %v3886 = vpop.f32.mrf.mxu0
        %v3887 = vadd.f32 %v1067, %v3886
        %v3888 = vpop.f32.mrf.mxu0
        %v3889 = vadd.f32 %v1071, %v3888
        %3890 = vmatprep.mubr.bf16.mxu0 0
        %3891 = vmatmul.mubr.bf16.gmra.mxu0 %v3823
        %v3892 = vpop.f32.mrf.mxu0
        %v3893 = vadd.f32 %v1067, %v3892
        %v3894 = vpop.f32.mrf.mxu0
        %v3895 = vadd.f32 %v1071, %v3894
        %v3896 = vpop.f32.mrf.mxu0
        %v3897 = vadd.f32 %v1067, %v3896
        %v3898 = vpop.f32.mrf.mxu0
        %v3899 = vadd.f32 %v1071, %v3898
        %3900 = vmatprep.mubr.bf16.mxu0 0
        %3901 = vmatmul.mubr.bf16.gmra.mxu0 %v3824
        %v3902 = vpop.f32.mrf.mxu0
        %v3903 = vadd.f32 %v1067, %v3902
        %v3904 = vpop.f32.mrf.mxu0
        %v3905 = vadd.f32 %v1071, %v3904
        %v3906 = vpop.f32.mrf.mxu0
        %v3907 = vadd.f32 %v1067, %v3906
        %v3908 = vpop.f32.mrf.mxu0
        %v3909 = vadd.f32 %v1071, %v3908
        %3910 = vmatprep.mubr.bf16.mxu0 0
        %3911 = vmatmul.mubr.bf16.gmra.mxu0 %v3825
        %v3912 = vpop.f32.mrf.mxu0
        %v3913 = vadd.f32 %v1067, %v3912
        %v3914 = vpop.f32.mrf.mxu0
        %v3915 = vadd.f32 %v1071, %v3914
        %v3916 = vpop.f32.mrf.mxu0
        %v3917 = vadd.f32 %v1067, %v3916
        %v3918 = vpop.f32.mrf.mxu0
        %v3919 = vadd.f32 %v1071, %v3918
        %3920 = vmatprep.mubr.bf16.mxu0 0
        %3921 = vmatmul.mubr.bf16.gmra.mxu0 %v3826
        %v3922 = vpop.f32.mrf.mxu0
        %v3923 = vadd.f32 %v1067, %v3922
        %v3924 = vpop.f32.mrf.mxu0
        %v3925 = vadd.f32 %v1071, %v3924
        %v3926 = vpop.f32.mrf.mxu0
        %v3927 = vadd.f32 %v1067, %v3926
        %v3928 = vpop.f32.mrf.mxu0
        %v3929 = vadd.f32 %v1071, %v3928
        %3930 = vmatprep.mubr.bf16.mxu0 0
        %3931 = vmatmul.mubr.bf16.gmra.mxu0 %v3827
        %v3932 = vpop.f32.mrf.mxu0
        %v3933 = vadd.f32 %v1067, %v3932
        %v3934 = vpop.f32.mrf.mxu0
        %v3935 = vadd.f32 %v1071, %v3934
        %v3936 = vpop.f32.mrf.mxu0
        %v3937 = vadd.f32 %v1067, %v3936
        %v3938 = vpop.f32.mrf.mxu0
        %v3939 = vadd.f32 %v1071, %v3938
        %3940 = vdwg.mxu0
        %3941 = vmatprep.subr.bf16.mxu0 %v1355
        %3942 = vmatpush1.bf16.msra.mxu0 %v1354
        %3943 = vmatprep.subr.bf16.mxu0 %v1347
        %3944 = vmatpush1.bf16.msra.mxu0 %v1346
        %3945 = vmatprep.subr.bf16.mxu0 %v1339
        %3946 = vmatpush1.bf16.msra.mxu0 %v1338
        %3947 = vmatprep.subr.bf16.mxu0 %v1331
        %3948 = vmatpush1.bf16.msra.mxu0 %v1330
        %3949 = vmatprep.subr.bf16.mxu0 %v1323
        %3950 = vmatpush1.bf16.msra.mxu0 %v1322
        %3951 = vmatprep.subr.bf16.mxu0 %v1315
        %3952 = vmatpush1.bf16.msra.mxu0 %v1314
        %3953 = vmatprep.subr.bf16.mxu0 %v1307
        %3954 = vmatpush1.bf16.msra.mxu0 %v1306
        %3955 = vmatprep.subr.bf16.mxu0 %v1299
        %3956 = vmatpush1.bf16.msra.mxu0 %v1298
        %3957 = vmatprep.subr.bf16.mxu0 0
        %3958 = vmatpush2.bf16.msra.mxu0 0
        %3959 = vmatprep.subr.bf16.mxu0 0
        %3960 = vmatpush2.bf16.msra.mxu0 0
        %3961 = vmatprep.subr.bf16.mxu0 0
        %3962 = vmatpush2.bf16.msra.mxu0 0
        %3963 = vmatprep.subr.bf16.mxu0 0
        %3964 = vmatpush2.bf16.msra.mxu0 0
        %3965 = vmatprep.subr.bf16.mxu0 0
        %3966 = vmatpush2.bf16.msra.mxu0 0
        %3967 = vmatprep.subr.bf16.mxu0 0
        %3968 = vmatpush2.bf16.msra.mxu0 0
        %3969 = vmatprep.subr.bf16.mxu0 0
        %3970 = vmatpush2.bf16.msra.mxu0 0
        %3971 = vmatprep.subr.bf16.mxu0 0
        %3972 = vmatpush2.bf16.msra.mxu0 0
        %3973 = vmatprep.mubr.bf16.mxu0 0
        %3974 = vmatmul.mubr.bf16.gmra.mxu0 %v3820
        %v3975 = vpop.f32.mrf.mxu0
        %v3976 = vadd.f32 %v1075, %v3975
        %v3977 = vpop.f32.mrf.mxu0
        %v3978 = vadd.f32 %v1079, %v3977
        %v3979 = vpop.f32.mrf.mxu0
        %v3980 = vadd.f32 %v1075, %v3979
        %v3981 = vpop.f32.mrf.mxu0
        %v3982 = vadd.f32 %v1079, %v3981
        %3983 = vmatprep.mubr.bf16.mxu0 0
        %3984 = vmatmul.mubr.bf16.gmra.mxu0 %v3821
        %v3985 = vpop.f32.mrf.mxu0
        %v3986 = vadd.f32 %v1075, %v3985
        %v3987 = vpop.f32.mrf.mxu0
        %v3988 = vadd.f32 %v1079, %v3987
        %v3989 = vpop.f32.mrf.mxu0
        %v3990 = vadd.f32 %v1075, %v3989
        %v3991 = vpop.f32.mrf.mxu0
        %v3992 = vadd.f32 %v1079, %v3991
        %3993 = vmatprep.mubr.bf16.mxu0 0
        %3994 = vmatmul.mubr.bf16.gmra.mxu0 %v3822
        %v3995 = vpop.f32.mrf.mxu0
        %v3996 = vadd.f32 %v1075, %v3995
        %v3997 = vpop.f32.mrf.mxu0
        %v3998 = vadd.f32 %v1079, %v3997
        %v3999 = vpop.f32.mrf.mxu0
        %v4000 = vadd.f32 %v1075, %v3999
        %v4001 = vpop.f32.mrf.mxu0
        %v4002 = vadd.f32 %v1079, %v4001
        %4003 = vmatprep.mubr.bf16.mxu0 0
        %4004 = vmatmul.mubr.bf16.gmra.mxu0 %v3823
        %v4005 = vpop.f32.mrf.mxu0
        %v4006 = vadd.f32 %v1075, %v4005
        %v4007 = vpop.f32.mrf.mxu0
        %v4008 = vadd.f32 %v1079, %v4007
        %v4009 = vpop.f32.mrf.mxu0
        %v4010 = vadd.f32 %v1075, %v4009
        %v4011 = vpop.f32.mrf.mxu0
        %v4012 = vadd.f32 %v1079, %v4011
        %4013 = vmatprep.mubr.bf16.mxu0 0
        %4014 = vmatmul.mubr.bf16.gmra.mxu0 %v3824
        %v4015 = vpop.f32.mrf.mxu0
        %v4016 = vadd.f32 %v1075, %v4015
        %v4017 = vpop.f32.mrf.mxu0
        %v4018 = vadd.f32 %v1079, %v4017
        %v4019 = vpop.f32.mrf.mxu0
        %v4020 = vadd.f32 %v1075, %v4019
        %v4021 = vpop.f32.mrf.mxu0
        %v4022 = vadd.f32 %v1079, %v4021
        %4023 = vmatprep.mubr.bf16.mxu0 0
        %4024 = vmatmul.mubr.bf16.gmra.mxu0 %v3825
        %v4025 = vpop.f32.mrf.mxu0
        %v4026 = vadd.f32 %v1075, %v4025
        %v4027 = vpop.f32.mrf.mxu0
        %v4028 = vadd.f32 %v1079, %v4027
        %v4029 = vpop.f32.mrf.mxu0
        %v4030 = vadd.f32 %v1075, %v4029
        %v4031 = vpop.f32.mrf.mxu0
        %v4032 = vadd.f32 %v1079, %v4031
        %4033 = vmatprep.mubr.bf16.mxu0 0
        %4034 = vmatmul.mubr.bf16.gmra.mxu0 %v3826
        %v4035 = vpop.f32.mrf.mxu0
        %v4036 = vadd.f32 %v1075, %v4035
        %v4037 = vpop.f32.mrf.mxu0
        %v4038 = vadd.f32 %v1079, %v4037
        %v4039 = vpop.f32.mrf.mxu0
        %v4040 = vadd.f32 %v1075, %v4039
        %v4041 = vpop.f32.mrf.mxu0
        %v4042 = vadd.f32 %v1079, %v4041
        %4043 = vmatprep.mubr.bf16.mxu0 0
        %4044 = vmatmul.mubr.bf16.gmra.mxu0 %v3827
        %v4045 = vpop.f32.mrf.mxu0
        %v4046 = vadd.f32 %v1075, %v4045
        %v4047 = vpop.f32.mrf.mxu0
        %v4048 = vadd.f32 %v1079, %v4047
        %v4049 = vpop.f32.mrf.mxu0
        %v4050 = vadd.f32 %v1075, %v4049
        %v4051 = vpop.f32.mrf.mxu0
        %v4052 = vadd.f32 %v1079, %v4051
        %4053 = vdwg.mxu0
        %4054 = vmatprep.subr.bf16.mxu0 %v1357
        %4055 = vmatpush1.bf16.msra.mxu0 %v1356
        %4056 = vmatprep.subr.bf16.mxu0 %v1349
        %4057 = vmatpush1.bf16.msra.mxu0 %v1348
        %4058 = vmatprep.subr.bf16.mxu0 %v1341
        %4059 = vmatpush1.bf16.msra.mxu0 %v1340
        %4060 = vmatprep.subr.bf16.mxu0 %v1333
        %4061 = vmatpush1.bf16.msra.mxu0 %v1332
        %4062 = vmatprep.subr.bf16.mxu0 %v1325
        %4063 = vmatpush1.bf16.msra.mxu0 %v1324
        %4064 = vmatprep.subr.bf16.mxu0 %v1317
        %4065 = vmatpush1.bf16.msra.mxu0 %v1316
        %4066 = vmatprep.subr.bf16.mxu0 %v1309
        %4067 = vmatpush1.bf16.msra.mxu0 %v1308
        %4068 = vmatprep.subr.bf16.mxu0 %v1301
        %4069 = vmatpush1.bf16.msra.mxu0 %v1300
        %4070 = vmatprep.subr.bf16.mxu0 0
        %4071 = vmatpush2.bf16.msra.mxu0 0
        %4072 = vmatprep.subr.bf16.mxu0 0
        %4073 = vmatpush2.bf16.msra.mxu0 0
        %4074 = vmatprep.subr.bf16.mxu0 0
        %4075 = vmatpush2.bf16.msra.mxu0 0
        %4076 = vmatprep.subr.bf16.mxu0 0
        %4077 = vmatpush2.bf16.msra.mxu0 0
        %4078 = vmatprep.subr.bf16.mxu0 0
        %4079 = vmatpush2.bf16.msra.mxu0 0
        %4080 = vmatprep.subr.bf16.mxu0 0
        %4081 = vmatpush2.bf16.msra.mxu0 0
        %4082 = vmatprep.subr.bf16.mxu0 0
        %4083 = vmatpush2.bf16.msra.mxu0 0
        %4084 = vmatprep.subr.bf16.mxu0 0
        %4085 = vmatpush2.bf16.msra.mxu0 0
        %4086 = vmatprep.mubr.bf16.mxu0 0
        %4087 = vmatmul.mubr.bf16.gmra.mxu0 %v3820
        %v4088 = vpop.f32.mrf.mxu0
        %v4089 = vadd.f32 %v1083, %v4088
        %v4090 = vpop.f32.mrf.mxu0
        %v4091 = vadd.f32 %v1087, %v4090
        %v4092 = vpop.f32.mrf.mxu0
        %v4093 = vadd.f32 %v1083, %v4092
        %v4094 = vpop.f32.mrf.mxu0
        %v4095 = vadd.f32 %v1087, %v4094
        %4096 = vmatprep.mubr.bf16.mxu0 0
        %4097 = vmatmul.mubr.bf16.gmra.mxu0 %v3821
        %v4098 = vpop.f32.mrf.mxu0
        %v4099 = vadd.f32 %v1083, %v4098
        %v4100 = vpop.f32.mrf.mxu0
        %v4101 = vadd.f32 %v1087, %v4100
        %v4102 = vpop.f32.mrf.mxu0
        %v4103 = vadd.f32 %v1083, %v4102
        %v4104 = vpop.f32.mrf.mxu0
        %v4105 = vadd.f32 %v1087, %v4104
        %4106 = vmatprep.mubr.bf16.mxu0 0
        %4107 = vmatmul.mubr.bf16.gmra.mxu0 %v3822
        %v4108 = vpop.f32.mrf.mxu0
        %v4109 = vadd.f32 %v1083, %v4108
        %v4110 = vpop.f32.mrf.mxu0
        %v4111 = vadd.f32 %v1087, %v4110
        %v4112 = vpop.f32.mrf.mxu0
        %v4113 = vadd.f32 %v1083, %v4112
        %v4114 = vpop.f32.mrf.mxu0
        %v4115 = vadd.f32 %v1087, %v4114
        %4116 = vmatprep.mubr.bf16.mxu0 0
        %4117 = vmatmul.mubr.bf16.gmra.mxu0 %v3823
        %v4118 = vpop.f32.mrf.mxu0
        %v4119 = vadd.f32 %v1083, %v4118
        %v4120 = vpop.f32.mrf.mxu0
        %v4121 = vadd.f32 %v1087, %v4120
        %v4122 = vpop.f32.mrf.mxu0
        %v4123 = vadd.f32 %v1083, %v4122
        %v4124 = vpop.f32.mrf.mxu0
        %v4125 = vadd.f32 %v1087, %v4124
        %4126 = vmatprep.mubr.bf16.mxu0 0
        %4127 = vmatmul.mubr.bf16.gmra.mxu0 %v3824
        %v4128 = vpop.f32.mrf.mxu0
        %v4129 = vadd.f32 %v1083, %v4128
        %v4130 = vpop.f32.mrf.mxu0
        %v4131 = vadd.f32 %v1087, %v4130
        %v4132 = vpop.f32.mrf.mxu0
        %v4133 = vadd.f32 %v1083, %v4132
        %v4134 = vpop.f32.mrf.mxu0
        %v4135 = vadd.f32 %v1087, %v4134
        %4136 = vmatprep.mubr.bf16.mxu0 0
        %4137 = vmatmul.mubr.bf16.gmra.mxu0 %v3825
        %v4138 = vpop.f32.mrf.mxu0
        %v4139 = vadd.f32 %v1083, %v4138
        %v4140 = vpop.f32.mrf.mxu0
        %v4141 = vadd.f32 %v1087, %v4140
        %v4142 = vpop.f32.mrf.mxu0
        %v4143 = vadd.f32 %v1083, %v4142
        %v4144 = vpop.f32.mrf.mxu0
        %v4145 = vadd.f32 %v1087, %v4144
        %4146 = vmatprep.mubr.bf16.mxu0 0
        %4147 = vmatmul.mubr.bf16.gmra.mxu0 %v3826
        %v4148 = vpop.f32.mrf.mxu0
        %v4149 = vadd.f32 %v1083, %v4148
        %v4150 = vpop.f32.mrf.mxu0
        %v4151 = vadd.f32 %v1087, %v4150
        %v4152 = vpop.f32.mrf.mxu0
        %v4153 = vadd.f32 %v1083, %v4152
        %v4154 = vpop.f32.mrf.mxu0
        %v4155 = vadd.f32 %v1087, %v4154
        %4156 = vmatprep.mubr.bf16.mxu0 0
        %4157 = vmatmul.mubr.bf16.gmra.mxu0 %v3827
        %v4158 = vpop.f32.mrf.mxu0
        %v4159 = vadd.f32 %v1083, %v4158
        %v4160 = vpop.f32.mrf.mxu0
        %v4161 = vadd.f32 %v1087, %v4160
        %v4162 = vpop.f32.mrf.mxu0
        %v4163 = vadd.f32 %v1083, %v4162
        %v4164 = vpop.f32.mrf.mxu0
        %v4165 = vadd.f32 %v1087, %v4164
        %4166 = vdwg.mxu0
        %4167 = vmatprep.subr.bf16.mxu0 %v1359
        %4168 = vmatpush1.bf16.msra.mxu0 %v1358
        %4169 = vmatprep.subr.bf16.mxu0 %v1351
        %4170 = vmatpush1.bf16.msra.mxu0 %v1350
        %4171 = vmatprep.subr.bf16.mxu0 %v1343
        %4172 = vmatpush1.bf16.msra.mxu0 %v1342
        %4173 = vmatprep.subr.bf16.mxu0 %v1335
        %4174 = vmatpush1.bf16.msra.mxu0 %v1334
        %4175 = vmatprep.subr.bf16.mxu0 %v1327
        %4176 = vmatpush1.bf16.msra.mxu0 %v1326
        %4177 = vmatprep.subr.bf16.mxu0 %v1319
        %4178 = vmatpush1.bf16.msra.mxu0 %v1318
        %4179 = vmatprep.subr.bf16.mxu0 %v1311
        %4180 = vmatpush1.bf16.msra.mxu0 %v1310
        %4181 = vmatprep.subr.bf16.mxu0 %v1303
        %4182 = vmatpush1.bf16.msra.mxu0 %v1302
        %4183 = vmatprep.subr.bf16.mxu0 0
        %4184 = vmatpush2.bf16.msra.mxu0 0
        %4185 = vmatprep.subr.bf16.mxu0 0
        %4186 = vmatpush2.bf16.msra.mxu0 0
        %4187 = vmatprep.subr.bf16.mxu0 0
        %4188 = vmatpush2.bf16.msra.mxu0 0
        %4189 = vmatprep.subr.bf16.mxu0 0
        %4190 = vmatpush2.bf16.msra.mxu0 0
        %4191 = vmatprep.subr.bf16.mxu0 0
        %4192 = vmatpush2.bf16.msra.mxu0 0
        %4193 = vmatprep.subr.bf16.mxu0 0
        %4194 = vmatpush2.bf16.msra.mxu0 0
        %4195 = vmatprep.subr.bf16.mxu0 0
        %4196 = vmatpush2.bf16.msra.mxu0 0
        %4197 = vmatprep.subr.bf16.mxu0 0
        %4198 = vmatpush2.bf16.msra.mxu0 0
        %4199 = vmatprep.mubr.bf16.mxu0 0
        %4200 = vmatmul.mubr.bf16.gmra.mxu0 %v3820
        %v4201 = vpop.f32.mrf.mxu0
        %v4202 = vadd.f32 %v1091, %v4201
        %v4203 = vpop.f32.mrf.mxu0
        %v4204 = vadd.f32 %v1095, %v4203
        %v4205 = vpop.f32.mrf.mxu0
        %v4206 = vadd.f32 %v1091, %v4205
        %v4207 = vpop.f32.mrf.mxu0
        %v4208 = vadd.f32 %v1095, %v4207
        %4209 = vmatprep.mubr.bf16.mxu0 0
        %4210 = vmatmul.mubr.bf16.gmra.mxu0 %v3821
        %v4211 = vpop.f32.mrf.mxu0
        %v4212 = vadd.f32 %v1091, %v4211
        %v4213 = vpop.f32.mrf.mxu0
        %v4214 = vadd.f32 %v1095, %v4213
        %v4215 = vpop.f32.mrf.mxu0
        %v4216 = vadd.f32 %v1091, %v4215
        %v4217 = vpop.f32.mrf.mxu0
        %v4218 = vadd.f32 %v1095, %v4217
        %4219 = vmatprep.mubr.bf16.mxu0 0
        %4220 = vmatmul.mubr.bf16.gmra.mxu0 %v3822
        %v4221 = vpop.f32.mrf.mxu0
        %v4222 = vadd.f32 %v1091, %v4221
        %v4223 = vpop.f32.mrf.mxu0
        %v4224 = vadd.f32 %v1095, %v4223
        %v4225 = vpop.f32.mrf.mxu0
        %v4226 = vadd.f32 %v1091, %v4225
        %v4227 = vpop.f32.mrf.mxu0
        %v4228 = vadd.f32 %v1095, %v4227
        %4229 = vmatprep.mubr.bf16.mxu0 0
        %4230 = vmatmul.mubr.bf16.gmra.mxu0 %v3823
        %v4231 = vpop.f32.mrf.mxu0
        %v4232 = vadd.f32 %v1091, %v4231
        %v4233 = vpop.f32.mrf.mxu0
        %v4234 = vadd.f32 %v1095, %v4233
        %v4235 = vpop.f32.mrf.mxu0
        %v4236 = vadd.f32 %v1091, %v4235
        %v4237 = vpop.f32.mrf.mxu0
        %v4238 = vadd.f32 %v1095, %v4237
        %4239 = vmatprep.mubr.bf16.mxu0 0
        %4240 = vmatmul.mubr.bf16.gmra.mxu0 %v3824
        %v4241 = vpop.f32.mrf.mxu0
        %v4242 = vadd.f32 %v1091, %v4241
        %v4243 = vpop.f32.mrf.mxu0
        %v4244 = vadd.f32 %v1095, %v4243
        %v4245 = vpop.f32.mrf.mxu0
        %v4246 = vadd.f32 %v1091, %v4245
        %v4247 = vpop.f32.mrf.mxu0
        %v4248 = vadd.f32 %v1095, %v4247
        %4249 = vmatprep.mubr.bf16.mxu0 0
        %4250 = vmatmul.mubr.bf16.gmra.mxu0 %v3825
        %v4251 = vpop.f32.mrf.mxu0
        %v4252 = vadd.f32 %v1091, %v4251
        %v4253 = vpop.f32.mrf.mxu0
        %v4254 = vadd.f32 %v1095, %v4253
        %v4255 = vpop.f32.mrf.mxu0
        %v4256 = vadd.f32 %v1091, %v4255
        %v4257 = vpop.f32.mrf.mxu0
        %v4258 = vadd.f32 %v1095, %v4257
        %4259 = vmatprep.mubr.bf16.mxu0 0
        %4260 = vmatmul.mubr.bf16.gmra.mxu0 %v3826
        %v4261 = vpop.f32.mrf.mxu0
        %v4262 = vadd.f32 %v1091, %v4261
        %v4263 = vpop.f32.mrf.mxu0
        %v4264 = vadd.f32 %v1095, %v4263
        %v4265 = vpop.f32.mrf.mxu0
        %v4266 = vadd.f32 %v1091, %v4265
        %v4267 = vpop.f32.mrf.mxu0
        %v4268 = vadd.f32 %v1095, %v4267
        %4269 = vmatprep.mubr.bf16.mxu0 0
        %4270 = vmatmul.mubr.bf16.gmra.mxu0 %v3827
        %v4271 = vpop.f32.mrf.mxu0
        %v4272 = vadd.f32 %v1091, %v4271
        %v4273 = vpop.f32.mrf.mxu0
        %v4274 = vadd.f32 %v1095, %v4273
        %v4275 = vpop.f32.mrf.mxu0
        %v4276 = vadd.f32 %v1091, %v4275
        %v4277 = vpop.f32.mrf.mxu0
        %v4278 = vadd.f32 %v1095, %v4277
        %4279 = vdwg.mxu0
        %v4280 = vmax.f32 %v3863, 0.0
        %v4281 = vmax.f32 %v3865, 0.0
        %v4282 = vmax.f32 %v3976, 0.0
        %v4283 = vmax.f32 %v3978, 0.0
        %v4284 = vmax.f32 %v4089, 0.0
        %v4285 = vmax.f32 %v4091, 0.0
        %v4286 = vmax.f32 %v4202, 0.0
        %v4287 = vmax.f32 %v4204, 0.0
        %v4288 = vmax.f32 %v3867, 0.0
        %v4289 = vmax.f32 %v3869, 0.0
        %v4290 = vmax.f32 %v3980, 0.0
        %v4291 = vmax.f32 %v3982, 0.0
        %v4292 = vmax.f32 %v4093, 0.0
        %v4293 = vmax.f32 %v4095, 0.0
        %v4294 = vmax.f32 %v4206, 0.0
        %v4295 = vmax.f32 %v4208, 0.0
        %v4296 = vmax.f32 %v3873, 0.0
        %v4297 = vmax.f32 %v3875, 0.0
        %v4298 = vmax.f32 %v3986, 0.0
        %v4299 = vmax.f32 %v3988, 0.0
        %v4300 = vmax.f32 %v4099, 0.0
        %v4301 = vmax.f32 %v4101, 0.0
        %v4302 = vmax.f32 %v4212, 0.0
        %v4303 = vmax.f32 %v4214, 0.0
        %v4304 = vmax.f32 %v3877, 0.0
        %v4305 = vmax.f32 %v3879, 0.0
        %v4306 = vmax.f32 %v3990, 0.0
        %v4307 = vmax.f32 %v3992, 0.0
        %v4308 = vmax.f32 %v4103, 0.0
        %v4309 = vmax.f32 %v4105, 0.0
        %v4310 = vmax.f32 %v4216, 0.0
        %v4311 = vmax.f32 %v4218, 0.0
        %v4312 = vmax.f32 %v3883, 0.0
        %v4313 = vmax.f32 %v3885, 0.0
        %v4314 = vmax.f32 %v3996, 0.0
        %v4315 = vmax.f32 %v3998, 0.0
        %v4316 = vmax.f32 %v4109, 0.0
        %v4317 = vmax.f32 %v4111, 0.0
        %v4318 = vmax.f32 %v4222, 0.0
        %v4319 = vmax.f32 %v4224, 0.0
        %v4320 = vmax.f32 %v3887, 0.0
        %v4321 = vmax.f32 %v3889, 0.0
        %v4322 = vmax.f32 %v4000, 0.0
        %v4323 = vmax.f32 %v4002, 0.0
        %v4324 = vmax.f32 %v4113, 0.0
        %v4325 = vmax.f32 %v4115, 0.0
        %v4326 = vmax.f32 %v4226, 0.0
        %v4327 = vmax.f32 %v4228, 0.0
        %v4328 = vmax.f32 %v3893, 0.0
        %v4329 = vmax.f32 %v3895, 0.0
        %v4330 = vmax.f32 %v4006, 0.0
        %v4331 = vmax.f32 %v4008, 0.0
        %v4332 = vmax.f32 %v4119, 0.0
        %v4333 = vmax.f32 %v4121, 0.0
        %v4334 = vmax.f32 %v4232, 0.0
        %v4335 = vmax.f32 %v4234, 0.0
        %v4336 = vmax.f32 %v3897, 0.0
        %v4337 = vmax.f32 %v3899, 0.0
        %v4338 = vmax.f32 %v4010, 0.0
        %v4339 = vmax.f32 %v4012, 0.0
        %v4340 = vmax.f32 %v4123, 0.0
        %v4341 = vmax.f32 %v4125, 0.0
        %v4342 = vmax.f32 %v4236, 0.0
        %v4343 = vmax.f32 %v4238, 0.0
        %v4344 = vmax.f32 %v3903, 0.0
        %v4345 = vmax.f32 %v3905, 0.0
        %v4346 = vmax.f32 %v4016, 0.0
        %v4347 = vmax.f32 %v4018, 0.0
        %v4348 = vmax.f32 %v4129, 0.0
        %v4349 = vmax.f32 %v4131, 0.0
        %v4350 = vmax.f32 %v4242, 0.0
        %v4351 = vmax.f32 %v4244, 0.0
        %v4352 = vmax.f32 %v3907, 0.0
        %v4353 = vmax.f32 %v3909, 0.0
        %v4354 = vmax.f32 %v4020, 0.0
        %v4355 = vmax.f32 %v4022, 0.0
        %v4356 = vmax.f32 %v4133, 0.0
        %v4357 = vmax.f32 %v4135, 0.0
        %v4358 = vmax.f32 %v4246, 0.0
        %v4359 = vmax.f32 %v4248, 0.0
        %v4360 = vmax.f32 %v3913, 0.0
        %v4361 = vmax.f32 %v3915, 0.0
        %v4362 = vmax.f32 %v4026, 0.0
        %v4363 = vmax.f32 %v4028, 0.0
        %v4364 = vmax.f32 %v4139, 0.0
        %v4365 = vmax.f32 %v4141, 0.0
        %v4366 = vmax.f32 %v4252, 0.0
        %v4367 = vmax.f32 %v4254, 0.0
        %v4368 = vmax.f32 %v3917, 0.0
        %v4369 = vmax.f32 %v3919, 0.0
        %v4370 = vmax.f32 %v4030, 0.0
        %v4371 = vmax.f32 %v4032, 0.0
        %v4372 = vmax.f32 %v4143, 0.0
        %v4373 = vmax.f32 %v4145, 0.0
        %v4374 = vmax.f32 %v4256, 0.0
        %v4375 = vmax.f32 %v4258, 0.0
        %v4376 = vmax.f32 %v3923, 0.0
        %v4377 = vmax.f32 %v3925, 0.0
        %v4378 = vmax.f32 %v4036, 0.0
        %v4379 = vmax.f32 %v4038, 0.0
        %v4380 = vmax.f32 %v4149, 0.0
        %v4381 = vmax.f32 %v4151, 0.0
        %v4382 = vmax.f32 %v4262, 0.0
        %v4383 = vmax.f32 %v4264, 0.0
        %v4384 = vmax.f32 %v3927, 0.0
        %v4385 = vmax.f32 %v3929, 0.0
        %v4386 = vmax.f32 %v4040, 0.0
        %v4387 = vmax.f32 %v4042, 0.0
        %v4388 = vmax.f32 %v4153, 0.0
        %v4389 = vmax.f32 %v4155, 0.0
        %v4390 = vmax.f32 %v4266, 0.0
        %v4391 = vmax.f32 %v4268, 0.0
        %v4392 = vmax.f32 %v3933, 0.0
        %v4393 = vmax.f32 %v3935, 0.0
        %v4394 = vmax.f32 %v4046, 0.0
        %v4395 = vmax.f32 %v4048, 0.0
        %v4396 = vmax.f32 %v4159, 0.0
        %v4397 = vmax.f32 %v4161, 0.0
        %v4398 = vmax.f32 %v4272, 0.0
        %v4399 = vmax.f32 %v4274, 0.0
        %v4400 = vmax.f32 %v3937, 0.0
        %v4401 = vmax.f32 %v3939, 0.0
        %v4402 = vmax.f32 %v4050, 0.0
        %v4403 = vmax.f32 %v4052, 0.0
        %v4404 = vmax.f32 %v4163, 0.0
        %v4405 = vmax.f32 %v4165, 0.0
        %v4406 = vmax.f32 %v4276, 0.0
        %v4407 = vmax.f32 %v4278, 0.0
        %v4408 = vpack.c.bf16 %v4288, %v4280
        %v4409 = vpack.c.bf16 %v4289, %v4281
        %v4410 = vpack.c.bf16 %v4290, %v4282
        %v4411 = vpack.c.bf16 %v4291, %v4283
        %v4412 = vpack.c.bf16 %v4292, %v4284
        %v4413 = vpack.c.bf16 %v4293, %v4285
        %v4414 = vpack.c.bf16 %v4294, %v4286
        %v4415 = vpack.c.bf16 %v4295, %v4287
        %v4416 = vpack.c.bf16 %v4304, %v4296
        %v4417 = vpack.c.bf16 %v4305, %v4297
        %v4418 = vpack.c.bf16 %v4306, %v4298
        %v4419 = vpack.c.bf16 %v4307, %v4299
        %v4420 = vpack.c.bf16 %v4308, %v4300
        %v4421 = vpack.c.bf16 %v4309, %v4301
        %v4422 = vpack.c.bf16 %v4310, %v4302
        %v4423 = vpack.c.bf16 %v4311, %v4303
        %v4424 = vpack.c.bf16 %v4320, %v4312
        %v4425 = vpack.c.bf16 %v4321, %v4313
        %v4426 = vpack.c.bf16 %v4322, %v4314
        %v4427 = vpack.c.bf16 %v4323, %v4315
        %v4428 = vpack.c.bf16 %v4324, %v4316
        %v4429 = vpack.c.bf16 %v4325, %v4317
        %v4430 = vpack.c.bf16 %v4326, %v4318
        %v4431 = vpack.c.bf16 %v4327, %v4319
        %v4432 = vpack.c.bf16 %v4336, %v4328
        %v4433 = vpack.c.bf16 %v4337, %v4329
        %v4434 = vpack.c.bf16 %v4338, %v4330
        %v4435 = vpack.c.bf16 %v4339, %v4331
        %v4436 = vpack.c.bf16 %v4340, %v4332
        %v4437 = vpack.c.bf16 %v4341, %v4333
        %v4438 = vpack.c.bf16 %v4342, %v4334
        %v4439 = vpack.c.bf16 %v4343, %v4335
        %v4440 = vpack.c.bf16 %v4352, %v4344
        %v4441 = vpack.c.bf16 %v4353, %v4345
        %v4442 = vpack.c.bf16 %v4354, %v4346
        %v4443 = vpack.c.bf16 %v4355, %v4347
        %v4444 = vpack.c.bf16 %v4356, %v4348
        %v4445 = vpack.c.bf16 %v4357, %v4349
        %v4446 = vpack.c.bf16 %v4358, %v4350
        %v4447 = vpack.c.bf16 %v4359, %v4351
        %v4448 = vpack.c.bf16 %v4368, %v4360
        %v4449 = vpack.c.bf16 %v4369, %v4361
        %v4450 = vpack.c.bf16 %v4370, %v4362
        %v4451 = vpack.c.bf16 %v4371, %v4363
        %v4452 = vpack.c.bf16 %v4372, %v4364
        %v4453 = vpack.c.bf16 %v4373, %v4365
        %v4454 = vpack.c.bf16 %v4374, %v4366
        %v4455 = vpack.c.bf16 %v4375, %v4367
        %v4456 = vpack.c.bf16 %v4384, %v4376
        %v4457 = vpack.c.bf16 %v4385, %v4377
        %v4458 = vpack.c.bf16 %v4386, %v4378
        %v4459 = vpack.c.bf16 %v4387, %v4379
        %v4460 = vpack.c.bf16 %v4388, %v4380
        %v4461 = vpack.c.bf16 %v4389, %v4381
        %v4462 = vpack.c.bf16 %v4390, %v4382
        %v4463 = vpack.c.bf16 %v4391, %v4383
        %v4464 = vpack.c.bf16 %v4400, %v4392
        %v4465 = vpack.c.bf16 %v4401, %v4393
        %v4466 = vpack.c.bf16 %v4402, %v4394
        %v4467 = vpack.c.bf16 %v4403, %v4395
        %v4468 = vpack.c.bf16 %v4404, %v4396
        %v4469 = vpack.c.bf16 %v4405, %v4397
        %v4470 = vpack.c.bf16 %v4406, %v4398
        %v4471 = vpack.c.bf16 %v4407, %v4399
        %v4472 = vsel %vm2156, %v4408, 0
        %v4473 = vsel %vm2156, %v4409, 0
        %v4474 = vsel %vm2156, %v4410, 0
        %v4475 = vsel %vm2156, %v4411, 0
        %v4476 = vsel %vm2156, %v4412, 0
        %v4477 = vsel %vm2156, %v4413, 0
        %v4478 = vsel %vm2156, %v4414, 0
        %v4479 = vsel %vm2156, %v4415, 0
        %v4480 = vsel %vm2157, %v4416, 0
        %v4481 = vsel %vm2157, %v4417, 0
        %v4482 = vsel %vm2157, %v4418, 0
        %v4483 = vsel %vm2157, %v4419, 0
        %v4484 = vsel %vm2157, %v4420, 0
        %v4485 = vsel %vm2157, %v4421, 0
        %v4486 = vsel %vm2157, %v4422, 0
        %v4487 = vsel %vm2157, %v4423, 0
        %v4488 = vsel %vm2158, %v4424, 0
        %v4489 = vsel %vm2158, %v4425, 0
        %v4490 = vsel %vm2158, %v4426, 0
        %v4491 = vsel %vm2158, %v4427, 0
        %v4492 = vsel %vm2158, %v4428, 0
        %v4493 = vsel %vm2158, %v4429, 0
        %v4494 = vsel %vm2158, %v4430, 0
        %v4495 = vsel %vm2158, %v4431, 0
        %v4496 = vsel %vm2159, %v4432, 0
        %v4497 = vsel %vm2159, %v4433, 0
        %v4498 = vsel %vm2159, %v4434, 0
        %v4499 = vsel %vm2159, %v4435, 0
        %v4500 = vsel %vm2159, %v4436, 0
        %v4501 = vsel %vm2159, %v4437, 0
        %v4502 = vsel %vm2159, %v4438, 0
        %v4503 = vsel %vm2159, %v4439, 0
        %v4504 = vsel %vm2160, %v4440, 0
        %v4505 = vsel %vm2160, %v4441, 0
        %v4506 = vsel %vm2160, %v4442, 0
        %v4507 = vsel %vm2160, %v4443, 0
        %v4508 = vsel %vm2160, %v4444, 0
        %v4509 = vsel %vm2160, %v4445, 0
        %v4510 = vsel %vm2160, %v4446, 0
        %v4511 = vsel %vm2160, %v4447, 0
        %v4512 = vsel %vm2161, %v4448, 0
        %v4513 = vsel %vm2161, %v4449, 0
        %v4514 = vsel %vm2161, %v4450, 0
        %v4515 = vsel %vm2161, %v4451, 0
        %v4516 = vsel %vm2161, %v4452, 0
        %v4517 = vsel %vm2161, %v4453, 0
        %v4518 = vsel %vm2161, %v4454, 0
        %v4519 = vsel %vm2161, %v4455, 0
        %v4520 = vsel %vm2162, %v4456, 0
        %v4521 = vsel %vm2162, %v4457, 0
        %v4522 = vsel %vm2162, %v4458, 0
        %v4523 = vsel %vm2162, %v4459, 0
        %v4524 = vsel %vm2162, %v4460, 0
        %v4525 = vsel %vm2162, %v4461, 0
        %v4526 = vsel %vm2162, %v4462, 0
        %v4527 = vsel %vm2162, %v4463, 0
        %v4528 = vsel %vm2163, %v4464, 0
        %v4529 = vsel %vm2163, %v4465, 0
        %v4530 = vsel %vm2163, %v4466, 0
        %v4531 = vsel %vm2163, %v4467, 0
        %v4532 = vsel %vm2163, %v4468, 0
        %v4533 = vsel %vm2163, %v4469, 0
        %v4534 = vsel %vm2163, %v4470, 0
        %v4535 = vsel %vm2163, %v4471, 0
        %v4536 = vmax.bf16 %v4472, %v4480
        %v4537 = vmax.bf16 %v4536, %v4488
        %v4538 = vmax.bf16 %v4537, %v4496
        %v4539 = vmax.bf16 %v4538, %v4504
        %v4540 = vmax.bf16 %v4539, %v4512
        %v4541 = vmax.bf16 %v4540, %v4520
        %v4542 = vmax.bf16 %v4541, %v4528
        %v4543 = vunpack.i.l.bf16 %v4542
        %v4544 = vunpack.i.h.bf16 %v4542
        %v4545 = vmax.f32 %v4543, %v4544
        %v4546 = vrot.slane %v4545, 4
        %v4547 = vmax.f32 %v4545, %v4546
        %v4548 = vrot.slane %v4547, 2
        %v4549 = vmax.f32 %v4547, %v4548
        %v4550 = vrot.slane %v4549, 1
        %v4551 = vmax.f32 %v4549, %v4550
        %v4552 = vpack.i.bf16 %v4551, %v4551
        %v4553 = vmax.bf16 %v4473, %v4481
        %v4554 = vmax.bf16 %v4553, %v4489
        %v4555 = vmax.bf16 %v4554, %v4497
        %v4556 = vmax.bf16 %v4555, %v4505
        %v4557 = vmax.bf16 %v4556, %v4513
        %v4558 = vmax.bf16 %v4557, %v4521
        %v4559 = vmax.bf16 %v4558, %v4529
        %v4560 = vunpack.i.l.bf16 %v4559
        %v4561 = vunpack.i.h.bf16 %v4559
        %v4562 = vmax.f32 %v4560, %v4561
        %v4563 = vrot.slane %v4562, 4
        %v4564 = vmax.f32 %v4562, %v4563
        %v4565 = vrot.slane %v4564, 2
        %v4566 = vmax.f32 %v4564, %v4565
        %v4567 = vrot.slane %v4566, 1
        %v4568 = vmax.f32 %v4566, %v4567
        %v4569 = vpack.i.bf16 %v4568, %v4568
        %v4570 = vmax.bf16 %v4474, %v4482
        %v4571 = vmax.bf16 %v4570, %v4490
        %v4572 = vmax.bf16 %v4571, %v4498
        %v4573 = vmax.bf16 %v4572, %v4506
        %v4574 = vmax.bf16 %v4573, %v4514
        %v4575 = vmax.bf16 %v4574, %v4522
        %v4576 = vmax.bf16 %v4575, %v4530
        %v4577 = vunpack.i.l.bf16 %v4576
        %v4578 = vunpack.i.h.bf16 %v4576
        %v4579 = vmax.f32 %v4577, %v4578
        %v4580 = vrot.slane %v4579, 4
        %v4581 = vmax.f32 %v4579, %v4580
        %v4582 = vrot.slane %v4581, 2
        %v4583 = vmax.f32 %v4581, %v4582
        %v4584 = vrot.slane %v4583, 1
        %v4585 = vmax.f32 %v4583, %v4584
        %v4586 = vpack.i.bf16 %v4585, %v4585
        %v4587 = vmax.bf16 %v4475, %v4483
        %v4588 = vmax.bf16 %v4587, %v4491
        %v4589 = vmax.bf16 %v4588, %v4499
        %v4590 = vmax.bf16 %v4589, %v4507
        %v4591 = vmax.bf16 %v4590, %v4515
        %v4592 = vmax.bf16 %v4591, %v4523
        %v4593 = vmax.bf16 %v4592, %v4531
        %v4594 = vunpack.i.l.bf16 %v4593
        %v4595 = vunpack.i.h.bf16 %v4593
        %v4596 = vmax.f32 %v4594, %v4595
        %v4597 = vrot.slane %v4596, 4
        %v4598 = vmax.f32 %v4596, %v4597
        %v4599 = vrot.slane %v4598, 2
        %v4600 = vmax.f32 %v4598, %v4599
        %v4601 = vrot.slane %v4600, 1
        %v4602 = vmax.f32 %v4600, %v4601
        %v4603 = vpack.i.bf16 %v4602, %v4602
        %v4604 = vmax.bf16 %v4476, %v4484
        %v4605 = vmax.bf16 %v4604, %v4492
        %v4606 = vmax.bf16 %v4605, %v4500
        %v4607 = vmax.bf16 %v4606, %v4508
        %v4608 = vmax.bf16 %v4607, %v4516
        %v4609 = vmax.bf16 %v4608, %v4524
        %v4610 = vmax.bf16 %v4609, %v4532
        %v4611 = vunpack.i.l.bf16 %v4610
        %v4612 = vunpack.i.h.bf16 %v4610
        %v4613 = vmax.f32 %v4611, %v4612
        %v4614 = vrot.slane %v4613, 4
        %v4615 = vmax.f32 %v4613, %v4614
        %v4616 = vrot.slane %v4615, 2
        %v4617 = vmax.f32 %v4615, %v4616
        %v4618 = vrot.slane %v4617, 1
        %v4619 = vmax.f32 %v4617, %v4618
        %v4620 = vpack.i.bf16 %v4619, %v4619
        %v4621 = vmax.bf16 %v4477, %v4485
        %v4622 = vmax.bf16 %v4621, %v4493
        %v4623 = vmax.bf16 %v4622, %v4501
        %v4624 = vmax.bf16 %v4623, %v4509
        %v4625 = vmax.bf16 %v4624, %v4517
        %v4626 = vmax.bf16 %v4625, %v4525
        %v4627 = vmax.bf16 %v4626, %v4533
        %v4628 = vunpack.i.l.bf16 %v4627
        %v4629 = vunpack.i.h.bf16 %v4627
        %v4630 = vmax.f32 %v4628, %v4629
        %v4631 = vrot.slane %v4630, 4
        %v4632 = vmax.f32 %v4630, %v4631
        %v4633 = vrot.slane %v4632, 2
        %v4634 = vmax.f32 %v4632, %v4633
        %v4635 = vrot.slane %v4634, 1
        %v4636 = vmax.f32 %v4634, %v4635
        %v4637 = vpack.i.bf16 %v4636, %v4636
        %v4638 = vmax.bf16 %v4478, %v4486
        %v4639 = vmax.bf16 %v4638, %v4494
        %v4640 = vmax.bf16 %v4639, %v4502
        %v4641 = vmax.bf16 %v4640, %v4510
        %v4642 = vmax.bf16 %v4641, %v4518
        %v4643 = vmax.bf16 %v4642, %v4526
        %v4644 = vmax.bf16 %v4643, %v4534
        %v4645 = vunpack.i.l.bf16 %v4644
        %v4646 = vunpack.i.h.bf16 %v4644
        %v4647 = vmax.f32 %v4645, %v4646
        %v4648 = vrot.slane %v4647, 4
        %v4649 = vmax.f32 %v4647, %v4648
        %v4650 = vrot.slane %v4649, 2
        %v4651 = vmax.f32 %v4649, %v4650
        %v4652 = vrot.slane %v4651, 1
        %v4653 = vmax.f32 %v4651, %v4652
        %v4654 = vpack.i.bf16 %v4653, %v4653
        %v4655 = vmax.bf16 %v4479, %v4487
        %v4656 = vmax.bf16 %v4655, %v4495
        %v4657 = vmax.bf16 %v4656, %v4503
        %v4658 = vmax.bf16 %v4657, %v4511
        %v4659 = vmax.bf16 %v4658, %v4519
        %v4660 = vmax.bf16 %v4659, %v4527
        %v4661 = vmax.bf16 %v4660, %v4535
        %v4662 = vunpack.i.l.bf16 %v4661
        %v4663 = vunpack.i.h.bf16 %v4661
        %v4664 = vmax.f32 %v4662, %v4663
        %v4665 = vrot.slane %v4664, 4
        %v4666 = vmax.f32 %v4664, %v4665
        %v4667 = vrot.slane %v4666, 2
        %v4668 = vmax.f32 %v4666, %v4667
        %v4669 = vrot.slane %v4668, 1
        %v4670 = vmax.f32 %v4668, %v4669
        %v4671 = vpack.i.bf16 %v4670, %v4670
        %s4672 = scalar_lea.vmem %s512, 48 [#allocation3]
        %v4673 = vld [vmem:[%s4672] sm:$0xff]
        %v4674 = vld [vmem:[%s4672 + $0x8] sm:$0xff]
        %v4675 = vpack.c.bf16 %v4674, %v4673
        %4676 = vxpose.xlu0.c.b16.start [1/8] %v4675, 128
        %4677 = vxpose.xlu0.c.b16.cont [2/8] 0, 128
        %4678 = vxpose.xlu0.c.b16.cont [3/8] 0, 128
        %4679 = vxpose.xlu0.c.b16.cont [4/8] 0, 128
        %4680 = vxpose.xlu0.c.b16.cont [5/8] 0, 128
        %4681 = vxpose.xlu0.c.b16.cont [6/8] 0, 128
        %4682 = vxpose.xlu0.c.b16.cont [7/8] 0, 128
        %4683 = vxpose.xlu0.c.b16.end [8/8] 0, 128
        %v4684 = vpop.trf.xlu0
        %v4685 = vpop.trf.xlu0
        %v4686 = vpop.trf.xlu0
        %v4687 = vpop.trf.xlu0
        %v4688 = vpop.trf.xlu0
        %v4689 = vpop.trf.xlu0
        %v4690 = vpop.trf.xlu0
        %v4691 = vpop.trf.xlu0
        %v4693 = vsel %vm667, %v4684, 0
        %v4696 = vsel %vm667, %v4685, 0
        %v4699 = vsel %vm667, %v4686, 0
        %v4702 = vsel %vm667, %v4687, 0
        %v4705 = vsel %vm667, %v4688, 0
        %v4708 = vsel %vm667, %v4689, 0
        %v4711 = vsel %vm667, %v4690, 0
        %v4714 = vsel %vm667, %v4691, 0
        %4716 = vmatprep.subr.bf16.mxu0 0
        %4717 = vmatpush1.bf16.msra.mxu0 0
        %4718 = vmatprep.subr.bf16.mxu0 0
        %4719 = vmatpush1.bf16.msra.mxu0 0
        %4720 = vmatprep.subr.bf16.mxu0 0
        %4721 = vmatpush1.bf16.msra.mxu0 0
        %4722 = vmatprep.subr.bf16.mxu0 0
        %4723 = vmatpush1.bf16.msra.mxu0 0
        %4724 = vmatprep.subr.bf16.mxu0 0
        %4725 = vmatpush1.bf16.msra.mxu0 0
        %4726 = vmatprep.subr.bf16.mxu0 0
        %4727 = vmatpush1.bf16.msra.mxu0 0
        %4728 = vmatprep.subr.bf16.mxu0 0
        %4729 = vmatpush1.bf16.msra.mxu0 0
        %4730 = vmatprep.subr.bf16.mxu0 0
        %4731 = vmatpush1.bf16.msra.mxu0 %v665
        %4732 = vmatprep.subr.bf16.mxu0 0
        %4733 = vmatpush2.bf16.msra.mxu0 0
        %4734 = vmatprep.subr.bf16.mxu0 0
        %4735 = vmatpush2.bf16.msra.mxu0 0
        %4736 = vmatprep.subr.bf16.mxu0 0
        %4737 = vmatpush2.bf16.msra.mxu0 0
        %4738 = vmatprep.subr.bf16.mxu0 0
        %4739 = vmatpush2.bf16.msra.mxu0 0
        %4740 = vmatprep.subr.bf16.mxu0 0
        %4741 = vmatpush2.bf16.msra.mxu0 0
        %4742 = vmatprep.subr.bf16.mxu0 0
        %4743 = vmatpush2.bf16.msra.mxu0 0
        %4744 = vmatprep.subr.bf16.mxu0 0
        %4745 = vmatpush2.bf16.msra.mxu0 0
        %4746 = vmatprep.subr.bf16.mxu0 0
        %4747 = vmatpush2.bf16.msra.mxu0 0
        %4748 = vmatprep.mubr.bf16.mxu0 0
        %4749 = vmatmul.mubr.bf16.gmra.mxu0 %v4693
        %v4750 = vpop.f32.mrf.mxu0
        %v4751 = vadd.f32 %v643, %v4750
        %v4752 = vpop.f32.mrf.mxu0
        %v4753 = vpop.f32.mrf.mxu0
        %v4754 = vadd.f32 %v643, %v4753
        %v4755 = vpop.f32.mrf.mxu0
        %4756 = vmatprep.mubr.bf16.mxu0 0
        %4757 = vmatmul.mubr.bf16.gmra.mxu0 %v4696
        %v4758 = vpop.f32.mrf.mxu0
        %v4759 = vadd.f32 %v643, %v4758
        %v4760 = vpop.f32.mrf.mxu0
        %v4761 = vpop.f32.mrf.mxu0
        %v4762 = vadd.f32 %v643, %v4761
        %v4763 = vpop.f32.mrf.mxu0
        %4764 = vmatprep.mubr.bf16.mxu0 0
        %4765 = vmatmul.mubr.bf16.gmra.mxu0 %v4699
        %v4766 = vpop.f32.mrf.mxu0
        %v4767 = vadd.f32 %v643, %v4766
        %v4768 = vpop.f32.mrf.mxu0
        %v4769 = vpop.f32.mrf.mxu0
        %v4770 = vadd.f32 %v643, %v4769
        %v4771 = vpop.f32.mrf.mxu0
        %4772 = vmatprep.mubr.bf16.mxu0 0
        %4773 = vmatmul.mubr.bf16.gmra.mxu0 %v4702
        %v4774 = vpop.f32.mrf.mxu0
        %v4775 = vadd.f32 %v643, %v4774
        %v4776 = vpop.f32.mrf.mxu0
        %v4777 = vpop.f32.mrf.mxu0
        %v4778 = vadd.f32 %v643, %v4777
        %v4779 = vpop.f32.mrf.mxu0
        %4780 = vmatprep.mubr.bf16.mxu0 0
        %4781 = vmatmul.mubr.bf16.gmra.mxu0 %v4705
        %v4782 = vpop.f32.mrf.mxu0
        %v4783 = vadd.f32 %v643, %v4782
        %v4784 = vpop.f32.mrf.mxu0
        %v4785 = vpop.f32.mrf.mxu0
        %v4786 = vadd.f32 %v643, %v4785
        %v4787 = vpop.f32.mrf.mxu0
        %4788 = vmatprep.mubr.bf16.mxu0 0
        %4789 = vmatmul.mubr.bf16.gmra.mxu0 %v4708
        %v4790 = vpop.f32.mrf.mxu0
        %v4791 = vadd.f32 %v643, %v4790
        %v4792 = vpop.f32.mrf.mxu0
        %v4793 = vpop.f32.mrf.mxu0
        %v4794 = vadd.f32 %v643, %v4793
        %v4795 = vpop.f32.mrf.mxu0
        %4796 = vmatprep.mubr.bf16.mxu0 0
        %4797 = vmatmul.mubr.bf16.gmra.mxu0 %v4711
        %v4798 = vpop.f32.mrf.mxu0
        %v4799 = vadd.f32 %v643, %v4798
        %v4800 = vpop.f32.mrf.mxu0
        %v4801 = vpop.f32.mrf.mxu0
        %v4802 = vadd.f32 %v643, %v4801
        %v4803 = vpop.f32.mrf.mxu0
        %4804 = vmatprep.mubr.bf16.mxu0 0
        %4805 = vmatmul.mubr.bf16.gmra.mxu0 %v4714
        %v4806 = vpop.f32.mrf.mxu0
        %v4807 = vadd.f32 %v643, %v4806
        %v4808 = vpop.f32.mrf.mxu0
        %v4809 = vpop.f32.mrf.mxu0
        %v4810 = vadd.f32 %v643, %v4809
        %v4811 = vpop.f32.mrf.mxu0
        %4812 = vdwg.mxu0
        %v4813 = vmax.f32 %v4751, 0.0
        %v4814 = vmax.f32 %v4754, 0.0
        %v4815 = vmax.f32 %v4759, 0.0
        %v4816 = vmax.f32 %v4762, 0.0
        %v4817 = vmax.f32 %v4767, 0.0
        %v4818 = vmax.f32 %v4770, 0.0
        %v4819 = vmax.f32 %v4775, 0.0
        %v4820 = vmax.f32 %v4778, 0.0
        %v4821 = vmax.f32 %v4783, 0.0
        %v4822 = vmax.f32 %v4786, 0.0
        %v4823 = vmax.f32 %v4791, 0.0
        %v4824 = vmax.f32 %v4794, 0.0
        %v4825 = vmax.f32 %v4799, 0.0
        %v4826 = vmax.f32 %v4802, 0.0
        %v4827 = vmax.f32 %v4807, 0.0
        %v4828 = vmax.f32 %v4810, 0.0
        %v4829 = vpack.c.bf16 %v4814, %v4813
        %v4830 = vpack.c.bf16 %v4816, %v4815
        %v4831 = vpack.c.bf16 %v4818, %v4817
        %v4832 = vpack.c.bf16 %v4820, %v4819
        %v4833 = vpack.c.bf16 %v4822, %v4821
        %v4834 = vpack.c.bf16 %v4824, %v4823
        %v4835 = vpack.c.bf16 %v4826, %v4825
        %v4836 = vpack.c.bf16 %v4828, %v4827
        %v4838 = vsel %vm852, %v4829, 0
        %v4841 = vsel %vm852, %v4830, 0
        %v4844 = vsel %vm852, %v4831, 0
        %v4847 = vsel %vm852, %v4832, 0
        %v4850 = vsel %vm852, %v4833, 0
        %v4853 = vsel %vm852, %v4834, 0
        %v4856 = vsel %vm852, %v4835, 0
        %v4859 = vsel %vm852, %v4836, 0
        %4861 = vmatprep.subr.bf16.mxu0 0
        %4862 = vmatpush1.bf16.msra.mxu0 0
        %4863 = vmatprep.subr.bf16.mxu0 0
        %4864 = vmatpush1.bf16.msra.mxu0 0
        %4865 = vmatprep.subr.bf16.mxu0 0
        %4866 = vmatpush1.bf16.msra.mxu0 0
        %4867 = vmatprep.subr.bf16.mxu0 0
        %4868 = vmatpush1.bf16.msra.mxu0 0
        %4869 = vmatprep.subr.bf16.mxu0 0
        %4870 = vmatpush1.bf16.msra.mxu0 %v847
        %4871 = vmatprep.subr.bf16.mxu0 0
        %4872 = vmatpush1.bf16.msra.mxu0 %v846
        %4873 = vmatprep.subr.bf16.mxu0 0
        %4874 = vmatpush1.bf16.msra.mxu0 %v845
        %4875 = vmatprep.subr.bf16.mxu0 0
        %4876 = vmatpush1.bf16.msra.mxu0 %v844
        %4877 = vmatprep.subr.bf16.mxu0 0
        %4878 = vmatpush2.bf16.msra.mxu0 0
        %4879 = vmatprep.subr.bf16.mxu0 0
        %4880 = vmatpush2.bf16.msra.mxu0 0
        %4881 = vmatprep.subr.bf16.mxu0 0
        %4882 = vmatpush2.bf16.msra.mxu0 0
        %4883 = vmatprep.subr.bf16.mxu0 0
        %4884 = vmatpush2.bf16.msra.mxu0 0
        %4885 = vmatprep.subr.bf16.mxu0 0
        %4886 = vmatpush2.bf16.msra.mxu0 0
        %4887 = vmatprep.subr.bf16.mxu0 0
        %4888 = vmatpush2.bf16.msra.mxu0 0
        %4889 = vmatprep.subr.bf16.mxu0 0
        %4890 = vmatpush2.bf16.msra.mxu0 0
        %4891 = vmatprep.subr.bf16.mxu0 0
        %4892 = vmatpush2.bf16.msra.mxu0 0
        %4893 = vmatprep.mubr.bf16.mxu0 0
        %4894 = vmatmul.mubr.bf16.gmra.mxu0 %v4838
        %v4895 = vpop.f32.mrf.mxu0
        %v4896 = vadd.f32 %v826, %v4895
        %v4897 = vpop.f32.mrf.mxu0
        %v4898 = vpop.f32.mrf.mxu0
        %v4899 = vadd.f32 %v826, %v4898
        %v4900 = vpop.f32.mrf.mxu0
        %4901 = vmatprep.mubr.bf16.mxu0 0
        %4902 = vmatmul.mubr.bf16.gmra.mxu0 %v4841
        %v4903 = vpop.f32.mrf.mxu0
        %v4904 = vadd.f32 %v826, %v4903
        %v4905 = vpop.f32.mrf.mxu0
        %v4906 = vpop.f32.mrf.mxu0
        %v4907 = vadd.f32 %v826, %v4906
        %v4908 = vpop.f32.mrf.mxu0
        %4909 = vmatprep.mubr.bf16.mxu0 0
        %4910 = vmatmul.mubr.bf16.gmra.mxu0 %v4844
        %v4911 = vpop.f32.mrf.mxu0
        %v4912 = vadd.f32 %v826, %v4911
        %v4913 = vpop.f32.mrf.mxu0
        %v4914 = vpop.f32.mrf.mxu0
        %v4915 = vadd.f32 %v826, %v4914
        %v4916 = vpop.f32.mrf.mxu0
        %4917 = vmatprep.mubr.bf16.mxu0 0
        %4918 = vmatmul.mubr.bf16.gmra.mxu0 %v4847
        %v4919 = vpop.f32.mrf.mxu0
        %v4920 = vadd.f32 %v826, %v4919
        %v4921 = vpop.f32.mrf.mxu0
        %v4922 = vpop.f32.mrf.mxu0
        %v4923 = vadd.f32 %v826, %v4922
        %v4924 = vpop.f32.mrf.mxu0
        %4925 = vmatprep.mubr.bf16.mxu0 0
        %4926 = vmatmul.mubr.bf16.gmra.mxu0 %v4850
        %v4927 = vpop.f32.mrf.mxu0
        %v4928 = vadd.f32 %v826, %v4927
        %v4929 = vpop.f32.mrf.mxu0
        %v4930 = vpop.f32.mrf.mxu0
        %v4931 = vadd.f32 %v826, %v4930
        %v4932 = vpop.f32.mrf.mxu0
        %4933 = vmatprep.mubr.bf16.mxu0 0
        %4934 = vmatmul.mubr.bf16.gmra.mxu0 %v4853
        %v4935 = vpop.f32.mrf.mxu0
        %v4936 = vadd.f32 %v826, %v4935
        %v4937 = vpop.f32.mrf.mxu0
        %v4938 = vpop.f32.mrf.mxu0
        %v4939 = vadd.f32 %v826, %v4938
        %v4940 = vpop.f32.mrf.mxu0
        %4941 = vmatprep.mubr.bf16.mxu0 0
        %4942 = vmatmul.mubr.bf16.gmra.mxu0 %v4856
        %v4943 = vpop.f32.mrf.mxu0
        %v4944 = vadd.f32 %v826, %v4943
        %v4945 = vpop.f32.mrf.mxu0
        %v4946 = vpop.f32.mrf.mxu0
        %v4947 = vadd.f32 %v826, %v4946
        %v4948 = vpop.f32.mrf.mxu0
        %4949 = vmatprep.mubr.bf16.mxu0 0
        %4950 = vmatmul.mubr.bf16.gmra.mxu0 %v4859
        %v4951 = vpop.f32.mrf.mxu0
        %v4952 = vadd.f32 %v826, %v4951
        %v4953 = vpop.f32.mrf.mxu0
        %v4954 = vpop.f32.mrf.mxu0
        %v4955 = vadd.f32 %v826, %v4954
        %v4956 = vpop.f32.mrf.mxu0
        %4957 = vdwg.mxu0
        %v4958 = vmax.f32 %v4896, 0.0
        %v4959 = vmax.f32 %v4899, 0.0
        %v4960 = vmax.f32 %v4904, 0.0
        %v4961 = vmax.f32 %v4907, 0.0
        %v4962 = vmax.f32 %v4912, 0.0
        %v4963 = vmax.f32 %v4915, 0.0
        %v4964 = vmax.f32 %v4920, 0.0
        %v4965 = vmax.f32 %v4923, 0.0
        %v4966 = vmax.f32 %v4928, 0.0
        %v4967 = vmax.f32 %v4931, 0.0
        %v4968 = vmax.f32 %v4936, 0.0
        %v4969 = vmax.f32 %v4939, 0.0
        %v4970 = vmax.f32 %v4944, 0.0
        %v4971 = vmax.f32 %v4947, 0.0
        %v4972 = vmax.f32 %v4952, 0.0
        %v4973 = vmax.f32 %v4955, 0.0
        %v4974 = vpack.c.bf16 %v4959, %v4958
        %v4975 = vpack.c.bf16 %v4961, %v4960
        %v4976 = vpack.c.bf16 %v4963, %v4962
        %v4977 = vpack.c.bf16 %v4965, %v4964
        %v4978 = vpack.c.bf16 %v4967, %v4966
        %v4979 = vpack.c.bf16 %v4969, %v4968
        %v4980 = vpack.c.bf16 %v4971, %v4970
        %v4981 = vpack.c.bf16 %v4973, %v4972
        %4982 = vmatprep.subr.bf16.mxu0 %v1353
        %4983 = vmatpush1.bf16.msra.mxu0 %v1352
        %4984 = vmatprep.subr.bf16.mxu0 %v1345
        %4985 = vmatpush1.bf16.msra.mxu0 %v1344
        %4986 = vmatprep.subr.bf16.mxu0 %v1337
        %4987 = vmatpush1.bf16.msra.mxu0 %v1336
        %4988 = vmatprep.subr.bf16.mxu0 %v1329
        %4989 = vmatpush1.bf16.msra.mxu0 %v1328
        %4990 = vmatprep.subr.bf16.mxu0 %v1321
        %4991 = vmatpush1.bf16.msra.mxu0 %v1320
        %4992 = vmatprep.subr.bf16.mxu0 %v1313
        %4993 = vmatpush1.bf16.msra.mxu0 %v1312
        %4994 = vmatprep.subr.bf16.mxu0 %v1305
        %4995 = vmatpush1.bf16.msra.mxu0 %v1304
        %4996 = vmatprep.subr.bf16.mxu0 %v1297
        %4997 = vmatpush1.bf16.msra.mxu0 %v1296
        %4998 = vmatprep.subr.bf16.mxu0 0
        %4999 = vmatpush2.bf16.msra.mxu0 0
        %5000 = vmatprep.subr.bf16.mxu0 0
        %5001 = vmatpush2.bf16.msra.mxu0 0
        %5002 = vmatprep.subr.bf16.mxu0 0
        %5003 = vmatpush2.bf16.msra.mxu0 0
        %5004 = vmatprep.subr.bf16.mxu0 0
        %5005 = vmatpush2.bf16.msra.mxu0 0
        %5006 = vmatprep.subr.bf16.mxu0 0
        %5007 = vmatpush2.bf16.msra.mxu0 0
        %5008 = vmatprep.subr.bf16.mxu0 0
        %5009 = vmatpush2.bf16.msra.mxu0 0
        %5010 = vmatprep.subr.bf16.mxu0 0
        %5011 = vmatpush2.bf16.msra.mxu0 0
        %5012 = vmatprep.subr.bf16.mxu0 0
        %5013 = vmatpush2.bf16.msra.mxu0 0
        %5014 = vmatprep.mubr.bf16.mxu0 0
        %5015 = vmatmul.mubr.bf16.gmra.mxu0 %v4974
        %v5016 = vpop.f32.mrf.mxu0
        %v5017 = vadd.f32 %v1067, %v5016
        %v5018 = vpop.f32.mrf.mxu0
        %v5019 = vadd.f32 %v1071, %v5018
        %v5020 = vpop.f32.mrf.mxu0
        %v5021 = vadd.f32 %v1067, %v5020
        %v5022 = vpop.f32.mrf.mxu0
        %v5023 = vadd.f32 %v1071, %v5022
        %5024 = vmatprep.mubr.bf16.mxu0 0
        %5025 = vmatmul.mubr.bf16.gmra.mxu0 %v4975
        %v5026 = vpop.f32.mrf.mxu0
        %v5027 = vadd.f32 %v1067, %v5026
        %v5028 = vpop.f32.mrf.mxu0
        %v5029 = vadd.f32 %v1071, %v5028
        %v5030 = vpop.f32.mrf.mxu0
        %v5031 = vadd.f32 %v1067, %v5030
        %v5032 = vpop.f32.mrf.mxu0
        %v5033 = vadd.f32 %v1071, %v5032
        %5034 = vmatprep.mubr.bf16.mxu0 0
        %5035 = vmatmul.mubr.bf16.gmra.mxu0 %v4976
        %v5036 = vpop.f32.mrf.mxu0
        %v5037 = vadd.f32 %v1067, %v5036
        %v5038 = vpop.f32.mrf.mxu0
        %v5039 = vadd.f32 %v1071, %v5038
        %v5040 = vpop.f32.mrf.mxu0
        %v5041 = vadd.f32 %v1067, %v5040
        %v5042 = vpop.f32.mrf.mxu0
        %v5043 = vadd.f32 %v1071, %v5042
        %5044 = vmatprep.mubr.bf16.mxu0 0
        %5045 = vmatmul.mubr.bf16.gmra.mxu0 %v4977
        %v5046 = vpop.f32.mrf.mxu0
        %v5047 = vadd.f32 %v1067, %v5046
        %v5048 = vpop.f32.mrf.mxu0
        %v5049 = vadd.f32 %v1071, %v5048
        %v5050 = vpop.f32.mrf.mxu0
        %v5051 = vadd.f32 %v1067, %v5050
        %v5052 = vpop.f32.mrf.mxu0
        %v5053 = vadd.f32 %v1071, %v5052
        %5054 = vmatprep.mubr.bf16.mxu0 0
        %5055 = vmatmul.mubr.bf16.gmra.mxu0 %v4978
        %v5056 = vpop.f32.mrf.mxu0
        %v5057 = vadd.f32 %v1067, %v5056
        %v5058 = vpop.f32.mrf.mxu0
        %v5059 = vadd.f32 %v1071, %v5058
        %v5060 = vpop.f32.mrf.mxu0
        %v5061 = vadd.f32 %v1067, %v5060
        %v5062 = vpop.f32.mrf.mxu0
        %v5063 = vadd.f32 %v1071, %v5062
        %5064 = vmatprep.mubr.bf16.mxu0 0
        %5065 = vmatmul.mubr.bf16.gmra.mxu0 %v4979
        %v5066 = vpop.f32.mrf.mxu0
        %v5067 = vadd.f32 %v1067, %v5066
        %v5068 = vpop.f32.mrf.mxu0
        %v5069 = vadd.f32 %v1071, %v5068
        %v5070 = vpop.f32.mrf.mxu0
        %v5071 = vadd.f32 %v1067, %v5070
        %v5072 = vpop.f32.mrf.mxu0
        %v5073 = vadd.f32 %v1071, %v5072
        %5074 = vmatprep.mubr.bf16.mxu0 0
        %5075 = vmatmul.mubr.bf16.gmra.mxu0 %v4980
        %v5076 = vpop.f32.mrf.mxu0
        %v5077 = vadd.f32 %v1067, %v5076
        %v5078 = vpop.f32.mrf.mxu0
        %v5079 = vadd.f32 %v1071, %v5078
        %v5080 = vpop.f32.mrf.mxu0
        %v5081 = vadd.f32 %v1067, %v5080
        %v5082 = vpop.f32.mrf.mxu0
        %v5083 = vadd.f32 %v1071, %v5082
        %5084 = vmatprep.mubr.bf16.mxu0 0
        %5085 = vmatmul.mubr.bf16.gmra.mxu0 %v4981
        %v5086 = vpop.f32.mrf.mxu0
        %v5087 = vadd.f32 %v1067, %v5086
        %v5088 = vpop.f32.mrf.mxu0
        %v5089 = vadd.f32 %v1071, %v5088
        %v5090 = vpop.f32.mrf.mxu0
        %v5091 = vadd.f32 %v1067, %v5090
        %v5092 = vpop.f32.mrf.mxu0
        %v5093 = vadd.f32 %v1071, %v5092
        %5094 = vdwg.mxu0
        %5095 = vmatprep.subr.bf16.mxu0 %v1355
        %5096 = vmatpush1.bf16.msra.mxu0 %v1354
        %5097 = vmatprep.subr.bf16.mxu0 %v1347
        %5098 = vmatpush1.bf16.msra.mxu0 %v1346
        %5099 = vmatprep.subr.bf16.mxu0 %v1339
        %5100 = vmatpush1.bf16.msra.mxu0 %v1338
        %5101 = vmatprep.subr.bf16.mxu0 %v1331
        %5102 = vmatpush1.bf16.msra.mxu0 %v1330
        %5103 = vmatprep.subr.bf16.mxu0 %v1323
        %5104 = vmatpush1.bf16.msra.mxu0 %v1322
        %5105 = vmatprep.subr.bf16.mxu0 %v1315
        %5106 = vmatpush1.bf16.msra.mxu0 %v1314
        %5107 = vmatprep.subr.bf16.mxu0 %v1307
        %5108 = vmatpush1.bf16.msra.mxu0 %v1306
        %5109 = vmatprep.subr.bf16.mxu0 %v1299
        %5110 = vmatpush1.bf16.msra.mxu0 %v1298
        %5111 = vmatprep.subr.bf16.mxu0 0
        %5112 = vmatpush2.bf16.msra.mxu0 0
        %5113 = vmatprep.subr.bf16.mxu0 0
        %5114 = vmatpush2.bf16.msra.mxu0 0
        %5115 = vmatprep.subr.bf16.mxu0 0
        %5116 = vmatpush2.bf16.msra.mxu0 0
        %5117 = vmatprep.subr.bf16.mxu0 0
        %5118 = vmatpush2.bf16.msra.mxu0 0
        %5119 = vmatprep.subr.bf16.mxu0 0
        %5120 = vmatpush2.bf16.msra.mxu0 0
        %5121 = vmatprep.subr.bf16.mxu0 0
        %5122 = vmatpush2.bf16.msra.mxu0 0
        %5123 = vmatprep.subr.bf16.mxu0 0
        %5124 = vmatpush2.bf16.msra.mxu0 0
        %5125 = vmatprep.subr.bf16.mxu0 0
        %5126 = vmatpush2.bf16.msra.mxu0 0
        %5127 = vmatprep.mubr.bf16.mxu0 0
        %5128 = vmatmul.mubr.bf16.gmra.mxu0 %v4974
        %v5129 = vpop.f32.mrf.mxu0
        %v5130 = vadd.f32 %v1075, %v5129
        %v5131 = vpop.f32.mrf.mxu0
        %v5132 = vadd.f32 %v1079, %v5131
        %v5133 = vpop.f32.mrf.mxu0
        %v5134 = vadd.f32 %v1075, %v5133
        %v5135 = vpop.f32.mrf.mxu0
        %v5136 = vadd.f32 %v1079, %v5135
        %5137 = vmatprep.mubr.bf16.mxu0 0
        %5138 = vmatmul.mubr.bf16.gmra.mxu0 %v4975
        %v5139 = vpop.f32.mrf.mxu0
        %v5140 = vadd.f32 %v1075, %v5139
        %v5141 = vpop.f32.mrf.mxu0
        %v5142 = vadd.f32 %v1079, %v5141
        %v5143 = vpop.f32.mrf.mxu0
        %v5144 = vadd.f32 %v1075, %v5143
        %v5145 = vpop.f32.mrf.mxu0
        %v5146 = vadd.f32 %v1079, %v5145
        %5147 = vmatprep.mubr.bf16.mxu0 0
        %5148 = vmatmul.mubr.bf16.gmra.mxu0 %v4976
        %v5149 = vpop.f32.mrf.mxu0
        %v5150 = vadd.f32 %v1075, %v5149
        %v5151 = vpop.f32.mrf.mxu0
        %v5152 = vadd.f32 %v1079, %v5151
        %v5153 = vpop.f32.mrf.mxu0
        %v5154 = vadd.f32 %v1075, %v5153
        %v5155 = vpop.f32.mrf.mxu0
        %v5156 = vadd.f32 %v1079, %v5155
        %5157 = vmatprep.mubr.bf16.mxu0 0
        %5158 = vmatmul.mubr.bf16.gmra.mxu0 %v4977
        %v5159 = vpop.f32.mrf.mxu0
        %v5160 = vadd.f32 %v1075, %v5159
        %v5161 = vpop.f32.mrf.mxu0
        %v5162 = vadd.f32 %v1079, %v5161
        %v5163 = vpop.f32.mrf.mxu0
        %v5164 = vadd.f32 %v1075, %v5163
        %v5165 = vpop.f32.mrf.mxu0
        %v5166 = vadd.f32 %v1079, %v5165
        %5167 = vmatprep.mubr.bf16.mxu0 0
        %5168 = vmatmul.mubr.bf16.gmra.mxu0 %v4978
        %v5169 = vpop.f32.mrf.mxu0
        %v5170 = vadd.f32 %v1075, %v5169
        %v5171 = vpop.f32.mrf.mxu0
        %v5172 = vadd.f32 %v1079, %v5171
        %v5173 = vpop.f32.mrf.mxu0
        %v5174 = vadd.f32 %v1075, %v5173
        %v5175 = vpop.f32.mrf.mxu0
        %v5176 = vadd.f32 %v1079, %v5175
        %5177 = vmatprep.mubr.bf16.mxu0 0
        %5178 = vmatmul.mubr.bf16.gmra.mxu0 %v4979
        %v5179 = vpop.f32.mrf.mxu0
        %v5180 = vadd.f32 %v1075, %v5179
        %v5181 = vpop.f32.mrf.mxu0
        %v5182 = vadd.f32 %v1079, %v5181
        %v5183 = vpop.f32.mrf.mxu0
        %v5184 = vadd.f32 %v1075, %v5183
        %v5185 = vpop.f32.mrf.mxu0
        %v5186 = vadd.f32 %v1079, %v5185
        %5187 = vmatprep.mubr.bf16.mxu0 0
        %5188 = vmatmul.mubr.bf16.gmra.mxu0 %v4980
        %v5189 = vpop.f32.mrf.mxu0
        %v5190 = vadd.f32 %v1075, %v5189
        %v5191 = vpop.f32.mrf.mxu0
        %v5192 = vadd.f32 %v1079, %v5191
        %v5193 = vpop.f32.mrf.mxu0
        %v5194 = vadd.f32 %v1075, %v5193
        %v5195 = vpop.f32.mrf.mxu0
        %v5196 = vadd.f32 %v1079, %v5195
        %5197 = vmatprep.mubr.bf16.mxu0 0
        %5198 = vmatmul.mubr.bf16.gmra.mxu0 %v4981
        %v5199 = vpop.f32.mrf.mxu0
        %v5200 = vadd.f32 %v1075, %v5199
        %v5201 = vpop.f32.mrf.mxu0
        %v5202 = vadd.f32 %v1079, %v5201
        %v5203 = vpop.f32.mrf.mxu0
        %v5204 = vadd.f32 %v1075, %v5203
        %v5205 = vpop.f32.mrf.mxu0
        %v5206 = vadd.f32 %v1079, %v5205
        %5207 = vdwg.mxu0
        %5208 = vmatprep.subr.bf16.mxu0 %v1357
        %5209 = vmatpush1.bf16.msra.mxu0 %v1356
        %5210 = vmatprep.subr.bf16.mxu0 %v1349
        %5211 = vmatpush1.bf16.msra.mxu0 %v1348
        %5212 = vmatprep.subr.bf16.mxu0 %v1341
        %5213 = vmatpush1.bf16.msra.mxu0 %v1340
        %5214 = vmatprep.subr.bf16.mxu0 %v1333
        %5215 = vmatpush1.bf16.msra.mxu0 %v1332
        %5216 = vmatprep.subr.bf16.mxu0 %v1325
        %5217 = vmatpush1.bf16.msra.mxu0 %v1324
        %5218 = vmatprep.subr.bf16.mxu0 %v1317
        %5219 = vmatpush1.bf16.msra.mxu0 %v1316
        %5220 = vmatprep.subr.bf16.mxu0 %v1309
        %5221 = vmatpush1.bf16.msra.mxu0 %v1308
        %5222 = vmatprep.subr.bf16.mxu0 %v1301
        %5223 = vmatpush1.bf16.msra.mxu0 %v1300
        %5224 = vmatprep.subr.bf16.mxu0 0
        %5225 = vmatpush2.bf16.msra.mxu0 0
        %5226 = vmatprep.subr.bf16.mxu0 0
        %5227 = vmatpush2.bf16.msra.mxu0 0
        %5228 = vmatprep.subr.bf16.mxu0 0
        %5229 = vmatpush2.bf16.msra.mxu0 0
        %5230 = vmatprep.subr.bf16.mxu0 0
        %5231 = vmatpush2.bf16.msra.mxu0 0
        %5232 = vmatprep.subr.bf16.mxu0 0
        %5233 = vmatpush2.bf16.msra.mxu0 0
        %5234 = vmatprep.subr.bf16.mxu0 0
        %5235 = vmatpush2.bf16.msra.mxu0 0
        %5236 = vmatprep.subr.bf16.mxu0 0
        %5237 = vmatpush2.bf16.msra.mxu0 0
        %5238 = vmatprep.subr.bf16.mxu0 0
        %5239 = vmatpush2.bf16.msra.mxu0 0
        %5240 = vmatprep.mubr.bf16.mxu0 0
        %5241 = vmatmul.mubr.bf16.gmra.mxu0 %v4974
        %v5242 = vpop.f32.mrf.mxu0
        %v5243 = vadd.f32 %v1083, %v5242
        %v5244 = vpop.f32.mrf.mxu0
        %v5245 = vadd.f32 %v1087, %v5244
        %v5246 = vpop.f32.mrf.mxu0
        %v5247 = vadd.f32 %v1083, %v5246
        %v5248 = vpop.f32.mrf.mxu0
        %v5249 = vadd.f32 %v1087, %v5248
        %5250 = vmatprep.mubr.bf16.mxu0 0
        %5251 = vmatmul.mubr.bf16.gmra.mxu0 %v4975
        %v5252 = vpop.f32.mrf.mxu0
        %v5253 = vadd.f32 %v1083, %v5252
        %v5254 = vpop.f32.mrf.mxu0
        %v5255 = vadd.f32 %v1087, %v5254
        %v5256 = vpop.f32.mrf.mxu0
        %v5257 = vadd.f32 %v1083, %v5256
        %v5258 = vpop.f32.mrf.mxu0
        %v5259 = vadd.f32 %v1087, %v5258
        %5260 = vmatprep.mubr.bf16.mxu0 0
        %5261 = vmatmul.mubr.bf16.gmra.mxu0 %v4976
        %v5262 = vpop.f32.mrf.mxu0
        %v5263 = vadd.f32 %v1083, %v5262
        %v5264 = vpop.f32.mrf.mxu0
        %v5265 = vadd.f32 %v1087, %v5264
        %v5266 = vpop.f32.mrf.mxu0
        %v5267 = vadd.f32 %v1083, %v5266
        %v5268 = vpop.f32.mrf.mxu0
        %v5269 = vadd.f32 %v1087, %v5268
        %5270 = vmatprep.mubr.bf16.mxu0 0
        %5271 = vmatmul.mubr.bf16.gmra.mxu0 %v4977
        %v5272 = vpop.f32.mrf.mxu0
        %v5273 = vadd.f32 %v1083, %v5272
        %v5274 = vpop.f32.mrf.mxu0
        %v5275 = vadd.f32 %v1087, %v5274
        %v5276 = vpop.f32.mrf.mxu0
        %v5277 = vadd.f32 %v1083, %v5276
        %v5278 = vpop.f32.mrf.mxu0
        %v5279 = vadd.f32 %v1087, %v5278
        %5280 = vmatprep.mubr.bf16.mxu0 0
        %5281 = vmatmul.mubr.bf16.gmra.mxu0 %v4978
        %v5282 = vpop.f32.mrf.mxu0
        %v5283 = vadd.f32 %v1083, %v5282
        %v5284 = vpop.f32.mrf.mxu0
        %v5285 = vadd.f32 %v1087, %v5284
        %v5286 = vpop.f32.mrf.mxu0
        %v5287 = vadd.f32 %v1083, %v5286
        %v5288 = vpop.f32.mrf.mxu0
        %v5289 = vadd.f32 %v1087, %v5288
        %5290 = vmatprep.mubr.bf16.mxu0 0
        %5291 = vmatmul.mubr.bf16.gmra.mxu0 %v4979
        %v5292 = vpop.f32.mrf.mxu0
        %v5293 = vadd.f32 %v1083, %v5292
        %v5294 = vpop.f32.mrf.mxu0
        %v5295 = vadd.f32 %v1087, %v5294
        %v5296 = vpop.f32.mrf.mxu0
        %v5297 = vadd.f32 %v1083, %v5296
        %v5298 = vpop.f32.mrf.mxu0
        %v5299 = vadd.f32 %v1087, %v5298
        %5300 = vmatprep.mubr.bf16.mxu0 0
        %5301 = vmatmul.mubr.bf16.gmra.mxu0 %v4980
        %v5302 = vpop.f32.mrf.mxu0
        %v5303 = vadd.f32 %v1083, %v5302
        %v5304 = vpop.f32.mrf.mxu0
        %v5305 = vadd.f32 %v1087, %v5304
        %v5306 = vpop.f32.mrf.mxu0
        %v5307 = vadd.f32 %v1083, %v5306
        %v5308 = vpop.f32.mrf.mxu0
        %v5309 = vadd.f32 %v1087, %v5308
        %5310 = vmatprep.mubr.bf16.mxu0 0
        %5311 = vmatmul.mubr.bf16.gmra.mxu0 %v4981
        %v5312 = vpop.f32.mrf.mxu0
        %v5313 = vadd.f32 %v1083, %v5312
        %v5314 = vpop.f32.mrf.mxu0
        %v5315 = vadd.f32 %v1087, %v5314
        %v5316 = vpop.f32.mrf.mxu0
        %v5317 = vadd.f32 %v1083, %v5316
        %v5318 = vpop.f32.mrf.mxu0
        %v5319 = vadd.f32 %v1087, %v5318
        %5320 = vdwg.mxu0
        %5321 = vmatprep.subr.bf16.mxu0 %v1359
        %5322 = vmatpush1.bf16.msra.mxu0 %v1358
        %5323 = vmatprep.subr.bf16.mxu0 %v1351
        %5324 = vmatpush1.bf16.msra.mxu0 %v1350
        %5325 = vmatprep.subr.bf16.mxu0 %v1343
        %5326 = vmatpush1.bf16.msra.mxu0 %v1342
        %5327 = vmatprep.subr.bf16.mxu0 %v1335
        %5328 = vmatpush1.bf16.msra.mxu0 %v1334
        %5329 = vmatprep.subr.bf16.mxu0 %v1327
        %5330 = vmatpush1.bf16.msra.mxu0 %v1326
        %5331 = vmatprep.subr.bf16.mxu0 %v1319
        %5332 = vmatpush1.bf16.msra.mxu0 %v1318
        %5333 = vmatprep.subr.bf16.mxu0 %v1311
        %5334 = vmatpush1.bf16.msra.mxu0 %v1310
        %5335 = vmatprep.subr.bf16.mxu0 %v1303
        %5336 = vmatpush1.bf16.msra.mxu0 %v1302
        %5337 = vmatprep.subr.bf16.mxu0 0
        %5338 = vmatpush2.bf16.msra.mxu0 0
        %5339 = vmatprep.subr.bf16.mxu0 0
        %5340 = vmatpush2.bf16.msra.mxu0 0
        %5341 = vmatprep.subr.bf16.mxu0 0
        %5342 = vmatpush2.bf16.msra.mxu0 0
        %5343 = vmatprep.subr.bf16.mxu0 0
        %5344 = vmatpush2.bf16.msra.mxu0 0
        %5345 = vmatprep.subr.bf16.mxu0 0
        %5346 = vmatpush2.bf16.msra.mxu0 0
        %5347 = vmatprep.subr.bf16.mxu0 0
        %5348 = vmatpush2.bf16.msra.mxu0 0
        %5349 = vmatprep.subr.bf16.mxu0 0
        %5350 = vmatpush2.bf16.msra.mxu0 0
        %5351 = vmatprep.subr.bf16.mxu0 0
        %5352 = vmatpush2.bf16.msra.mxu0 0
        %5353 = vmatprep.mubr.bf16.mxu0 0
        %5354 = vmatmul.mubr.bf16.gmra.mxu0 %v4974
        %v5355 = vpop.f32.mrf.mxu0
        %v5356 = vadd.f32 %v1091, %v5355
        %v5357 = vpop.f32.mrf.mxu0
        %v5358 = vadd.f32 %v1095, %v5357
        %v5359 = vpop.f32.mrf.mxu0
        %v5360 = vadd.f32 %v1091, %v5359
        %v5361 = vpop.f32.mrf.mxu0
        %v5362 = vadd.f32 %v1095, %v5361
        %5363 = vmatprep.mubr.bf16.mxu0 0
        %5364 = vmatmul.mubr.bf16.gmra.mxu0 %v4975
        %v5365 = vpop.f32.mrf.mxu0
        %v5366 = vadd.f32 %v1091, %v5365
        %v5367 = vpop.f32.mrf.mxu0
        %v5368 = vadd.f32 %v1095, %v5367
        %v5369 = vpop.f32.mrf.mxu0
        %v5370 = vadd.f32 %v1091, %v5369
        %v5371 = vpop.f32.mrf.mxu0
        %v5372 = vadd.f32 %v1095, %v5371
        %5373 = vmatprep.mubr.bf16.mxu0 0
        %5374 = vmatmul.mubr.bf16.gmra.mxu0 %v4976
        %v5375 = vpop.f32.mrf.mxu0
        %v5376 = vadd.f32 %v1091, %v5375
        %v5377 = vpop.f32.mrf.mxu0
        %v5378 = vadd.f32 %v1095, %v5377
        %v5379 = vpop.f32.mrf.mxu0
        %v5380 = vadd.f32 %v1091, %v5379
        %v5381 = vpop.f32.mrf.mxu0
        %v5382 = vadd.f32 %v1095, %v5381
        %5383 = vmatprep.mubr.bf16.mxu0 0
        %5384 = vmatmul.mubr.bf16.gmra.mxu0 %v4977
        %v5385 = vpop.f32.mrf.mxu0
        %v5386 = vadd.f32 %v1091, %v5385
        %v5387 = vpop.f32.mrf.mxu0
        %v5388 = vadd.f32 %v1095, %v5387
        %v5389 = vpop.f32.mrf.mxu0
        %v5390 = vadd.f32 %v1091, %v5389
        %v5391 = vpop.f32.mrf.mxu0
        %v5392 = vadd.f32 %v1095, %v5391
        %5393 = vmatprep.mubr.bf16.mxu0 0
        %5394 = vmatmul.mubr.bf16.gmra.mxu0 %v4978
        %v5395 = vpop.f32.mrf.mxu0
        %v5396 = vadd.f32 %v1091, %v5395
        %v5397 = vpop.f32.mrf.mxu0
        %v5398 = vadd.f32 %v1095, %v5397
        %v5399 = vpop.f32.mrf.mxu0
        %v5400 = vadd.f32 %v1091, %v5399
        %v5401 = vpop.f32.mrf.mxu0
        %v5402 = vadd.f32 %v1095, %v5401
        %5403 = vmatprep.mubr.bf16.mxu0 0
        %5404 = vmatmul.mubr.bf16.gmra.mxu0 %v4979
        %v5405 = vpop.f32.mrf.mxu0
        %v5406 = vadd.f32 %v1091, %v5405
        %v5407 = vpop.f32.mrf.mxu0
        %v5408 = vadd.f32 %v1095, %v5407
        %v5409 = vpop.f32.mrf.mxu0
        %v5410 = vadd.f32 %v1091, %v5409
        %v5411 = vpop.f32.mrf.mxu0
        %v5412 = vadd.f32 %v1095, %v5411
        %5413 = vmatprep.mubr.bf16.mxu0 0
        %5414 = vmatmul.mubr.bf16.gmra.mxu0 %v4980
        %v5415 = vpop.f32.mrf.mxu0
        %v5416 = vadd.f32 %v1091, %v5415
        %v5417 = vpop.f32.mrf.mxu0
        %v5418 = vadd.f32 %v1095, %v5417
        %v5419 = vpop.f32.mrf.mxu0
        %v5420 = vadd.f32 %v1091, %v5419
        %v5421 = vpop.f32.mrf.mxu0
        %v5422 = vadd.f32 %v1095, %v5421
        %5423 = vmatprep.mubr.bf16.mxu0 0
        %5424 = vmatmul.mubr.bf16.gmra.mxu0 %v4981
        %v5425 = vpop.f32.mrf.mxu0
        %v5426 = vadd.f32 %v1091, %v5425
        %v5427 = vpop.f32.mrf.mxu0
        %v5428 = vadd.f32 %v1095, %v5427
        %v5429 = vpop.f32.mrf.mxu0
        %v5430 = vadd.f32 %v1091, %v5429
        %v5431 = vpop.f32.mrf.mxu0
        %v5432 = vadd.f32 %v1095, %v5431
        %5433 = vdwg.mxu0
        %v5434 = vmax.f32 %v5017, 0.0
        %v5435 = vmax.f32 %v5019, 0.0
        %v5436 = vmax.f32 %v5130, 0.0
        %v5437 = vmax.f32 %v5132, 0.0
        %v5438 = vmax.f32 %v5243, 0.0
        %v5439 = vmax.f32 %v5245, 0.0
        %v5440 = vmax.f32 %v5356, 0.0
        %v5441 = vmax.f32 %v5358, 0.0
        %v5442 = vmax.f32 %v5021, 0.0
        %v5443 = vmax.f32 %v5023, 0.0
        %v5444 = vmax.f32 %v5134, 0.0
        %v5445 = vmax.f32 %v5136, 0.0
        %v5446 = vmax.f32 %v5247, 0.0
        %v5447 = vmax.f32 %v5249, 0.0
        %v5448 = vmax.f32 %v5360, 0.0
        %v5449 = vmax.f32 %v5362, 0.0
        %v5450 = vmax.f32 %v5027, 0.0
        %v5451 = vmax.f32 %v5029, 0.0
        %v5452 = vmax.f32 %v5140, 0.0
        %v5453 = vmax.f32 %v5142, 0.0
        %v5454 = vmax.f32 %v5253, 0.0
        %v5455 = vmax.f32 %v5255, 0.0
        %v5456 = vmax.f32 %v5366, 0.0
        %v5457 = vmax.f32 %v5368, 0.0
        %v5458 = vmax.f32 %v5031, 0.0
        %v5459 = vmax.f32 %v5033, 0.0
        %v5460 = vmax.f32 %v5144, 0.0
        %v5461 = vmax.f32 %v5146, 0.0
        %v5462 = vmax.f32 %v5257, 0.0
        %v5463 = vmax.f32 %v5259, 0.0
        %v5464 = vmax.f32 %v5370, 0.0
        %v5465 = vmax.f32 %v5372, 0.0
        %v5466 = vmax.f32 %v5037, 0.0
        %v5467 = vmax.f32 %v5039, 0.0
        %v5468 = vmax.f32 %v5150, 0.0
        %v5469 = vmax.f32 %v5152, 0.0
        %v5470 = vmax.f32 %v5263, 0.0
        %v5471 = vmax.f32 %v5265, 0.0
        %v5472 = vmax.f32 %v5376, 0.0
        %v5473 = vmax.f32 %v5378, 0.0
        %v5474 = vmax.f32 %v5041, 0.0
        %v5475 = vmax.f32 %v5043, 0.0
        %v5476 = vmax.f32 %v5154, 0.0
        %v5477 = vmax.f32 %v5156, 0.0
        %v5478 = vmax.f32 %v5267, 0.0
        %v5479 = vmax.f32 %v5269, 0.0
        %v5480 = vmax.f32 %v5380, 0.0
        %v5481 = vmax.f32 %v5382, 0.0
        %v5482 = vmax.f32 %v5047, 0.0
        %v5483 = vmax.f32 %v5049, 0.0
        %v5484 = vmax.f32 %v5160, 0.0
        %v5485 = vmax.f32 %v5162, 0.0
        %v5486 = vmax.f32 %v5273, 0.0
        %v5487 = vmax.f32 %v5275, 0.0
        %v5488 = vmax.f32 %v5386, 0.0
        %v5489 = vmax.f32 %v5388, 0.0
        %v5490 = vmax.f32 %v5051, 0.0
        %v5491 = vmax.f32 %v5053, 0.0
        %v5492 = vmax.f32 %v5164, 0.0
        %v5493 = vmax.f32 %v5166, 0.0
        %v5494 = vmax.f32 %v5277, 0.0
        %v5495 = vmax.f32 %v5279, 0.0
        %v5496 = vmax.f32 %v5390, 0.0
        %v5497 = vmax.f32 %v5392, 0.0
        %v5498 = vmax.f32 %v5057, 0.0
        %v5499 = vmax.f32 %v5059, 0.0
        %v5500 = vmax.f32 %v5170, 0.0
        %v5501 = vmax.f32 %v5172, 0.0
        %v5502 = vmax.f32 %v5283, 0.0
        %v5503 = vmax.f32 %v5285, 0.0
        %v5504 = vmax.f32 %v5396, 0.0
        %v5505 = vmax.f32 %v5398, 0.0
        %v5506 = vmax.f32 %v5061, 0.0
        %v5507 = vmax.f32 %v5063, 0.0
        %v5508 = vmax.f32 %v5174, 0.0
        %v5509 = vmax.f32 %v5176, 0.0
        %v5510 = vmax.f32 %v5287, 0.0
        %v5511 = vmax.f32 %v5289, 0.0
        %v5512 = vmax.f32 %v5400, 0.0
        %v5513 = vmax.f32 %v5402, 0.0
        %v5514 = vmax.f32 %v5067, 0.0
        %v5515 = vmax.f32 %v5069, 0.0
        %v5516 = vmax.f32 %v5180, 0.0
        %v5517 = vmax.f32 %v5182, 0.0
        %v5518 = vmax.f32 %v5293, 0.0
        %v5519 = vmax.f32 %v5295, 0.0
        %v5520 = vmax.f32 %v5406, 0.0
        %v5521 = vmax.f32 %v5408, 0.0
        %v5522 = vmax.f32 %v5071, 0.0
        %v5523 = vmax.f32 %v5073, 0.0
        %v5524 = vmax.f32 %v5184, 0.0
        %v5525 = vmax.f32 %v5186, 0.0
        %v5526 = vmax.f32 %v5297, 0.0
        %v5527 = vmax.f32 %v5299, 0.0
        %v5528 = vmax.f32 %v5410, 0.0
        %v5529 = vmax.f32 %v5412, 0.0
        %v5530 = vmax.f32 %v5077, 0.0
        %v5531 = vmax.f32 %v5079, 0.0
        %v5532 = vmax.f32 %v5190, 0.0
        %v5533 = vmax.f32 %v5192, 0.0
        %v5534 = vmax.f32 %v5303, 0.0
        %v5535 = vmax.f32 %v5305, 0.0
        %v5536 = vmax.f32 %v5416, 0.0
        %v5537 = vmax.f32 %v5418, 0.0
        %v5538 = vmax.f32 %v5081, 0.0
        %v5539 = vmax.f32 %v5083, 0.0
        %v5540 = vmax.f32 %v5194, 0.0
        %v5541 = vmax.f32 %v5196, 0.0
        %v5542 = vmax.f32 %v5307, 0.0
        %v5543 = vmax.f32 %v5309, 0.0
        %v5544 = vmax.f32 %v5420, 0.0
        %v5545 = vmax.f32 %v5422, 0.0
        %v5546 = vmax.f32 %v5087, 0.0
        %v5547 = vmax.f32 %v5089, 0.0
        %v5548 = vmax.f32 %v5200, 0.0
        %v5549 = vmax.f32 %v5202, 0.0
        %v5550 = vmax.f32 %v5313, 0.0
        %v5551 = vmax.f32 %v5315, 0.0
        %v5552 = vmax.f32 %v5426, 0.0
        %v5553 = vmax.f32 %v5428, 0.0
        %v5554 = vmax.f32 %v5091, 0.0
        %v5555 = vmax.f32 %v5093, 0.0
        %v5556 = vmax.f32 %v5204, 0.0
        %v5557 = vmax.f32 %v5206, 0.0
        %v5558 = vmax.f32 %v5317, 0.0
        %v5559 = vmax.f32 %v5319, 0.0
        %v5560 = vmax.f32 %v5430, 0.0
        %v5561 = vmax.f32 %v5432, 0.0
        %v5562 = vpack.c.bf16 %v5442, %v5434
        %v5563 = vpack.c.bf16 %v5443, %v5435
        %v5564 = vpack.c.bf16 %v5444, %v5436
        %v5565 = vpack.c.bf16 %v5445, %v5437
        %v5566 = vpack.c.bf16 %v5446, %v5438
        %v5567 = vpack.c.bf16 %v5447, %v5439
        %v5568 = vpack.c.bf16 %v5448, %v5440
        %v5569 = vpack.c.bf16 %v5449, %v5441
        %v5570 = vpack.c.bf16 %v5458, %v5450
        %v5571 = vpack.c.bf16 %v5459, %v5451
        %v5572 = vpack.c.bf16 %v5460, %v5452
        %v5573 = vpack.c.bf16 %v5461, %v5453
        %v5574 = vpack.c.bf16 %v5462, %v5454
        %v5575 = vpack.c.bf16 %v5463, %v5455
        %v5576 = vpack.c.bf16 %v5464, %v5456
        %v5577 = vpack.c.bf16 %v5465, %v5457
        %v5578 = vpack.c.bf16 %v5474, %v5466
        %v5579 = vpack.c.bf16 %v5475, %v5467
        %v5580 = vpack.c.bf16 %v5476, %v5468
        %v5581 = vpack.c.bf16 %v5477, %v5469
        %v5582 = vpack.c.bf16 %v5478, %v5470
        %v5583 = vpack.c.bf16 %v5479, %v5471
        %v5584 = vpack.c.bf16 %v5480, %v5472
        %v5585 = vpack.c.bf16 %v5481, %v5473
        %v5586 = vpack.c.bf16 %v5490, %v5482
        %v5587 = vpack.c.bf16 %v5491, %v5483
        %v5588 = vpack.c.bf16 %v5492, %v5484
        %v5589 = vpack.c.bf16 %v5493, %v5485
        %v5590 = vpack.c.bf16 %v5494, %v5486
        %v5591 = vpack.c.bf16 %v5495, %v5487
        %v5592 = vpack.c.bf16 %v5496, %v5488
        %v5593 = vpack.c.bf16 %v5497, %v5489
        %v5594 = vpack.c.bf16 %v5506, %v5498
        %v5595 = vpack.c.bf16 %v5507, %v5499
        %v5596 = vpack.c.bf16 %v5508, %v5500
        %v5597 = vpack.c.bf16 %v5509, %v5501
        %v5598 = vpack.c.bf16 %v5510, %v5502
        %v5599 = vpack.c.bf16 %v5511, %v5503
        %v5600 = vpack.c.bf16 %v5512, %v5504
        %v5601 = vpack.c.bf16 %v5513, %v5505
        %v5602 = vpack.c.bf16 %v5522, %v5514
        %v5603 = vpack.c.bf16 %v5523, %v5515
        %v5604 = vpack.c.bf16 %v5524, %v5516
        %v5605 = vpack.c.bf16 %v5525, %v5517
        %v5606 = vpack.c.bf16 %v5526, %v5518
        %v5607 = vpack.c.bf16 %v5527, %v5519
        %v5608 = vpack.c.bf16 %v5528, %v5520
        %v5609 = vpack.c.bf16 %v5529, %v5521
        %v5610 = vpack.c.bf16 %v5538, %v5530
        %v5611 = vpack.c.bf16 %v5539, %v5531
        %v5612 = vpack.c.bf16 %v5540, %v5532
        %v5613 = vpack.c.bf16 %v5541, %v5533
        %v5614 = vpack.c.bf16 %v5542, %v5534
        %v5615 = vpack.c.bf16 %v5543, %v5535
        %v5616 = vpack.c.bf16 %v5544, %v5536
        %v5617 = vpack.c.bf16 %v5545, %v5537
        %v5618 = vpack.c.bf16 %v5554, %v5546
        %v5619 = vpack.c.bf16 %v5555, %v5547
        %v5620 = vpack.c.bf16 %v5556, %v5548
        %v5621 = vpack.c.bf16 %v5557, %v5549
        %v5622 = vpack.c.bf16 %v5558, %v5550
        %v5623 = vpack.c.bf16 %v5559, %v5551
        %v5624 = vpack.c.bf16 %v5560, %v5552
        %v5625 = vpack.c.bf16 %v5561, %v5553
        %v5626 = vsel %vm2156, %v5562, 0
        %v5627 = vsel %vm2156, %v5563, 0
        %v5628 = vsel %vm2156, %v5564, 0
        %v5629 = vsel %vm2156, %v5565, 0
        %v5630 = vsel %vm2156, %v5566, 0
        %v5631 = vsel %vm2156, %v5567, 0
        %v5632 = vsel %vm2156, %v5568, 0
        %v5633 = vsel %vm2156, %v5569, 0
        %v5634 = vsel %vm2157, %v5570, 0
        %v5635 = vsel %vm2157, %v5571, 0
        %v5636 = vsel %vm2157, %v5572, 0
        %v5637 = vsel %vm2157, %v5573, 0
        %v5638 = vsel %vm2157, %v5574, 0
        %v5639 = vsel %vm2157, %v5575, 0
        %v5640 = vsel %vm2157, %v5576, 0
        %v5641 = vsel %vm2157, %v5577, 0
        %v5642 = vsel %vm2158, %v5578, 0
        %v5643 = vsel %vm2158, %v5579, 0
        %v5644 = vsel %vm2158, %v5580, 0
        %v5645 = vsel %vm2158, %v5581, 0
        %v5646 = vsel %vm2158, %v5582, 0
        %v5647 = vsel %vm2158, %v5583, 0
        %v5648 = vsel %vm2158, %v5584, 0
        %v5649 = vsel %vm2158, %v5585, 0
        %v5650 = vsel %vm2159, %v5586, 0
        %v5651 = vsel %vm2159, %v5587, 0
        %v5652 = vsel %vm2159, %v5588, 0
        %v5653 = vsel %vm2159, %v5589, 0
        %v5654 = vsel %vm2159, %v5590, 0
        %v5655 = vsel %vm2159, %v5591, 0
        %v5656 = vsel %vm2159, %v5592, 0
        %v5657 = vsel %vm2159, %v5593, 0
        %v5658 = vsel %vm2160, %v5594, 0
        %v5659 = vsel %vm2160, %v5595, 0
        %v5660 = vsel %vm2160, %v5596, 0
        %v5661 = vsel %vm2160, %v5597, 0
        %v5662 = vsel %vm2160, %v5598, 0
        %v5663 = vsel %vm2160, %v5599, 0
        %v5664 = vsel %vm2160, %v5600, 0
        %v5665 = vsel %vm2160, %v5601, 0
        %v5666 = vsel %vm2161, %v5602, 0
        %v5667 = vsel %vm2161, %v5603, 0
        %v5668 = vsel %vm2161, %v5604, 0
        %v5669 = vsel %vm2161, %v5605, 0
        %v5670 = vsel %vm2161, %v5606, 0
        %v5671 = vsel %vm2161, %v5607, 0
        %v5672 = vsel %vm2161, %v5608, 0
        %v5673 = vsel %vm2161, %v5609, 0
        %v5674 = vsel %vm2162, %v5610, 0
        %v5675 = vsel %vm2162, %v5611, 0
        %v5676 = vsel %vm2162, %v5612, 0
        %v5677 = vsel %vm2162, %v5613, 0
        %v5678 = vsel %vm2162, %v5614, 0
        %v5679 = vsel %vm2162, %v5615, 0
        %v5680 = vsel %vm2162, %v5616, 0
        %v5681 = vsel %vm2162, %v5617, 0
        %v5682 = vsel %vm2163, %v5618, 0
        %v5683 = vsel %vm2163, %v5619, 0
        %v5684 = vsel %vm2163, %v5620, 0
        %v5685 = vsel %vm2163, %v5621, 0
        %v5686 = vsel %vm2163, %v5622, 0
        %v5687 = vsel %vm2163, %v5623, 0
        %v5688 = vsel %vm2163, %v5624, 0
        %v5689 = vsel %vm2163, %v5625, 0
        %v5690 = vmax.bf16 %v5626, %v5634
        %v5691 = vmax.bf16 %v5690, %v5642
        %v5692 = vmax.bf16 %v5691, %v5650
        %v5693 = vmax.bf16 %v5692, %v5658
        %v5694 = vmax.bf16 %v5693, %v5666
        %v5695 = vmax.bf16 %v5694, %v5674
        %v5696 = vmax.bf16 %v5695, %v5682
        %v5697 = vunpack.i.l.bf16 %v5696
        %v5698 = vunpack.i.h.bf16 %v5696
        %v5699 = vmax.f32 %v5697, %v5698
        %v5700 = vrot.slane %v5699, 4
        %v5701 = vmax.f32 %v5699, %v5700
        %v5702 = vrot.slane %v5701, 2
        %v5703 = vmax.f32 %v5701, %v5702
        %v5704 = vrot.slane %v5703, 1
        %v5705 = vmax.f32 %v5703, %v5704
        %v5706 = vpack.i.bf16 %v5705, %v5705
        %v5707 = vmax.bf16 %v5627, %v5635
        %v5708 = vmax.bf16 %v5707, %v5643
        %v5709 = vmax.bf16 %v5708, %v5651
        %v5710 = vmax.bf16 %v5709, %v5659
        %v5711 = vmax.bf16 %v5710, %v5667
        %v5712 = vmax.bf16 %v5711, %v5675
        %v5713 = vmax.bf16 %v5712, %v5683
        %v5714 = vunpack.i.l.bf16 %v5713
        %v5715 = vunpack.i.h.bf16 %v5713
        %v5716 = vmax.f32 %v5714, %v5715
        %v5717 = vrot.slane %v5716, 4
        %v5718 = vmax.f32 %v5716, %v5717
        %v5719 = vrot.slane %v5718, 2
        %v5720 = vmax.f32 %v5718, %v5719
        %v5721 = vrot.slane %v5720, 1
        %v5722 = vmax.f32 %v5720, %v5721
        %v5723 = vpack.i.bf16 %v5722, %v5722
        %v5724 = vmax.bf16 %v5628, %v5636
        %v5725 = vmax.bf16 %v5724, %v5644
        %v5726 = vmax.bf16 %v5725, %v5652
        %v5727 = vmax.bf16 %v5726, %v5660
        %v5728 = vmax.bf16 %v5727, %v5668
        %v5729 = vmax.bf16 %v5728, %v5676
        %v5730 = vmax.bf16 %v5729, %v5684
        %v5731 = vunpack.i.l.bf16 %v5730
        %v5732 = vunpack.i.h.bf16 %v5730
        %v5733 = vmax.f32 %v5731, %v5732
        %v5734 = vrot.slane %v5733, 4
        %v5735 = vmax.f32 %v5733, %v5734
        %v5736 = vrot.slane %v5735, 2
        %v5737 = vmax.f32 %v5735, %v5736
        %v5738 = vrot.slane %v5737, 1
        %v5739 = vmax.f32 %v5737, %v5738
        %v5740 = vpack.i.bf16 %v5739, %v5739
        %v5741 = vmax.bf16 %v5629, %v5637
        %v5742 = vmax.bf16 %v5741, %v5645
        %v5743 = vmax.bf16 %v5742, %v5653
        %v5744 = vmax.bf16 %v5743, %v5661
        %v5745 = vmax.bf16 %v5744, %v5669
        %v5746 = vmax.bf16 %v5745, %v5677
        %v5747 = vmax.bf16 %v5746, %v5685
        %v5748 = vunpack.i.l.bf16 %v5747
        %v5749 = vunpack.i.h.bf16 %v5747
        %v5750 = vmax.f32 %v5748, %v5749
        %v5751 = vrot.slane %v5750, 4
        %v5752 = vmax.f32 %v5750, %v5751
        %v5753 = vrot.slane %v5752, 2
        %v5754 = vmax.f32 %v5752, %v5753
        %v5755 = vrot.slane %v5754, 1
        %v5756 = vmax.f32 %v5754, %v5755
        %v5757 = vpack.i.bf16 %v5756, %v5756
        %v5758 = vmax.bf16 %v5630, %v5638
        %v5759 = vmax.bf16 %v5758, %v5646
        %v5760 = vmax.bf16 %v5759, %v5654
        %v5761 = vmax.bf16 %v5760, %v5662
        %v5762 = vmax.bf16 %v5761, %v5670
        %v5763 = vmax.bf16 %v5762, %v5678
        %v5764 = vmax.bf16 %v5763, %v5686
        %v5765 = vunpack.i.l.bf16 %v5764
        %v5766 = vunpack.i.h.bf16 %v5764
        %v5767 = vmax.f32 %v5765, %v5766
        %v5768 = vrot.slane %v5767, 4
        %v5769 = vmax.f32 %v5767, %v5768
        %v5770 = vrot.slane %v5769, 2
        %v5771 = vmax.f32 %v5769, %v5770
        %v5772 = vrot.slane %v5771, 1
        %v5773 = vmax.f32 %v5771, %v5772
        %v5774 = vpack.i.bf16 %v5773, %v5773
        %v5775 = vmax.bf16 %v5631, %v5639
        %v5776 = vmax.bf16 %v5775, %v5647
        %v5777 = vmax.bf16 %v5776, %v5655
        %v5778 = vmax.bf16 %v5777, %v5663
        %v5779 = vmax.bf16 %v5778, %v5671
        %v5780 = vmax.bf16 %v5779, %v5679
        %v5781 = vmax.bf16 %v5780, %v5687
        %v5782 = vunpack.i.l.bf16 %v5781
        %v5783 = vunpack.i.h.bf16 %v5781
        %v5784 = vmax.f32 %v5782, %v5783
        %v5785 = vrot.slane %v5784, 4
        %v5786 = vmax.f32 %v5784, %v5785
        %v5787 = vrot.slane %v5786, 2
        %v5788 = vmax.f32 %v5786, %v5787
        %v5789 = vrot.slane %v5788, 1
        %v5790 = vmax.f32 %v5788, %v5789
        %v5791 = vpack.i.bf16 %v5790, %v5790
        %v5792 = vmax.bf16 %v5632, %v5640
        %v5793 = vmax.bf16 %v5792, %v5648
        %v5794 = vmax.bf16 %v5793, %v5656
        %v5795 = vmax.bf16 %v5794, %v5664
        %v5796 = vmax.bf16 %v5795, %v5672
        %v5797 = vmax.bf16 %v5796, %v5680
        %v5798 = vmax.bf16 %v5797, %v5688
        %v5799 = vunpack.i.l.bf16 %v5798
        %v5800 = vunpack.i.h.bf16 %v5798
        %v5801 = vmax.f32 %v5799, %v5800
        %v5802 = vrot.slane %v5801, 4
        %v5803 = vmax.f32 %v5801, %v5802
        %v5804 = vrot.slane %v5803, 2
        %v5805 = vmax.f32 %v5803, %v5804
        %v5806 = vrot.slane %v5805, 1
        %v5807 = vmax.f32 %v5805, %v5806
        %v5808 = vpack.i.bf16 %v5807, %v5807
        %v5809 = vmax.bf16 %v5633, %v5641
        %v5810 = vmax.bf16 %v5809, %v5649
        %v5811 = vmax.bf16 %v5810, %v5657
        %v5812 = vmax.bf16 %v5811, %v5665
        %v5813 = vmax.bf16 %v5812, %v5673
        %v5814 = vmax.bf16 %v5813, %v5681
        %v5815 = vmax.bf16 %v5814, %v5689
        %v5816 = vunpack.i.l.bf16 %v5815
        %v5817 = vunpack.i.h.bf16 %v5815
        %v5818 = vmax.f32 %v5816, %v5817
        %v5819 = vrot.slane %v5818, 4
        %v5820 = vmax.f32 %v5818, %v5819
        %v5821 = vrot.slane %v5820, 2
        %v5822 = vmax.f32 %v5820, %v5821
        %v5823 = vrot.slane %v5822, 1
        %v5824 = vmax.f32 %v5822, %v5823
        %v5825 = vpack.i.bf16 %v5824, %v5824
        %vm5826 = vcmask 1040384
        %vm5827 = vsmask.f32 256
        %vm5828 = vmand %vm5826, %vm5827
        %v5829 = vsel %vm5828, %v2244, %v3398
        %v5830 = vsel %vm5828, %v2261, %v3415
        %v5831 = vsel %vm5828, %v2278, %v3432
        %v5832 = vsel %vm5828, %v2295, %v3449
        %v5833 = vsel %vm5828, %v2312, %v3466
        %v5834 = vsel %vm5828, %v2329, %v3483
        %v5835 = vsel %vm5828, %v2346, %v3500
        %v5836 = vsel %vm5828, %v2363, %v3517
        %vm5837 = vcmask 1040384
        %v5840 = vsel %vm5837, %v5829, %v4552
        %v5844 = vsel %vm5837, %v5830, %v4569
        %v5848 = vsel %vm5837, %v5831, %v4586
        %v5852 = vsel %vm5837, %v5832, %v4603
        %v5856 = vsel %vm5837, %v5833, %v4620
        %v5860 = vsel %vm5837, %v5834, %v4637
        %v5864 = vsel %vm5837, %v5835, %v4654
        %v5868 = vsel %vm5837, %v5836, %v4671
        %vm5870 = vcmask 1041408
        %vm5871 = vsmask.f32 1280
        %vm5872 = vmand %vm5870, %vm5871
        %v5873 = vsel %vm5872, %v5840, %v5706
        %v5874 = vsel %vm5872, %v5844, %v5723
        %v5875 = vsel %vm5872, %v5848, %v5740
        %v5876 = vsel %vm5872, %v5852, %v5757
        %v5877 = vsel %vm5872, %v5856, %v5774
        %v5878 = vsel %vm5872, %v5860, %v5791
        %v5879 = vsel %vm5872, %v5864, %v5808
        %v5880 = vsel %vm5872, %v5868, %v5825
        %v5881 = vld [vmem:[#allocation2] sm:$0xff]
        %v5882 = vld [vmem:[#allocation2 + $0x8] sm:$0xff]
        %v5891 = vcombine.low %v5873, %v5874
        %v5892 = vcombine.low %v5875, %v5876
        %v5894 = vunpack.c.l.s4 1983009808
        %v5895 = vunpack.c.0.s8 %v5894
        %v5896 = vlaneseq
        %v5897 = vshrl.u32 %v5896, 7
        %v5898 = vsub.s32 %v5895, %v5897
        %v5899 = vrot.slane %v5891, %v5898
        %v5901 = vunpack.c.l.s4 1983009808
        %v5902 = vunpack.c.0.s8 %v5901
        %v5903 = vlaneseq
        %v5904 = vshrl.u32 %v5903, 7
        %v5905 = vsub.s32 %v5902, %v5904
        %v5906 = vrot.slane %v5892, %v5905
        %v5907 = vcombine.low %v5899, %v5906
        %v5908 = vcombine.low %v5877, %v5878
        %v5909 = vcombine.low %v5879, %v5880
        %v5911 = vunpack.c.l.s4 1983009808
        %v5912 = vunpack.c.0.s8 %v5911
        %v5913 = vlaneseq
        %v5914 = vshrl.u32 %v5913, 7
        %v5915 = vsub.s32 %v5912, %v5914
        %v5916 = vrot.slane %v5908, %v5915
        %v5918 = vunpack.c.l.s4 1983009808
        %v5919 = vunpack.c.0.s8 %v5918
        %v5920 = vlaneseq
        %v5921 = vshrl.u32 %v5920, 7
        %v5922 = vsub.s32 %v5919, %v5921
        %v5923 = vrot.slane %v5909, %v5922
        %v5924 = vcombine.low %v5916, %v5923
        %v5927 = vmax.bf16 %v5881, %v5907
        %v5928 = vmax.bf16 %v5882, %v5924
        %5929 = vst [vmem:[#allocation2] sm:$0xff] %v5927
        %5930 = vst [vmem:[#allocation2 + $0x8] sm:$0xff] %v5928
        // Predicated region
        $region113: #{tpu_custom_call.1} parent=71 // pred_check
          %p5931 = pneg %p597
        $region114: #{tpu_custom_call.1} parent=71 // pred_check_branch
          %5933 = sbr.rel (%p5931) target = $region116
        $region115: #{tpu_custom_call.1} parent=71 // pred_region
          %v5934 = vld [vmem:[#allocation2] sm:$0xff]
          %v5935 = vld [vmem:[#allocation2 + $0x8] sm:$0xff]
          %v5936 = vld [vmem:[#allocation14] sm:$0xff]
          %v5937 = vld [vmem:[#allocation14 + $0x8] sm:$0xff]
          %v5938 = vld [vmem:[#allocation14 + $0x10] sm:$0xff]
          %v5939 = vld [vmem:[#allocation14 + $0x18] sm:$0xff]
          %v5940 = vld [vmem:[#allocation14 + $0x20] sm:$0xff]
          %v5941 = vld [vmem:[#allocation14 + $0x28] sm:$0xff]
          %v5942 = vld [vmem:[#allocation14 + $0x30] sm:$0xff]
          %v5943 = vld [vmem:[#allocation14 + $0x38] sm:$0xff]
          %v5944 = vld [vmem:[#allocation14 + $0x40] sm:$0xff]
          %v5945 = vld [vmem:[#allocation14 + $0x48] sm:$0xff]
          %v5946 = vld [vmem:[#allocation14 + $0x50] sm:$0xff]
          %v5947 = vld [vmem:[#allocation14 + $0x58] sm:$0xff]
          %v5948 = vld [vmem:[#allocation14 + $0x60] sm:$0xff]
          %v5949 = vld [vmem:[#allocation14 + $0x68] sm:$0xff]
          %v5950 = vld [vmem:[#allocation14 + $0x70] sm:$0xff]
          %v5951 = vld [vmem:[#allocation14 + $0x78] sm:$0xff]
          %v5952 = vld [vmem:[#allocation14 + $0x80] sm:$0xff]
          %v5953 = vld [vmem:[#allocation14 + $0x88] sm:$0xff]
          %v5954 = vld [vmem:[#allocation14 + $0x90] sm:$0xff]
          %v5955 = vld [vmem:[#allocation14 + $0x98] sm:$0xff]
          %v5956 = vld [vmem:[#allocation14 + $0xa0] sm:$0xff]
          %v5957 = vld [vmem:[#allocation14 + $0xa8] sm:$0xff]
          %v5958 = vld [vmem:[#allocation14 + $0xb0] sm:$0xff]
          %v5959 = vld [vmem:[#allocation14 + $0xb8] sm:$0xff]
          %v5960 = vld [vmem:[#allocation14 + $0xc0] sm:$0xff]
          %v5961 = vld [vmem:[#allocation14 + $0xc8] sm:$0xff]
          %v5962 = vld [vmem:[#allocation14 + $0xd0] sm:$0xff]
          %v5963 = vld [vmem:[#allocation14 + $0xd8] sm:$0xff]
          %v5964 = vld [vmem:[#allocation14 + $0xe0] sm:$0xff]
          %v5965 = vld [vmem:[#allocation14 + $0xe8] sm:$0xff]
          %v5966 = vld [vmem:[#allocation14 + $0xf0] sm:$0xff]
          %v5967 = vld [vmem:[#allocation14 + $0xf8] sm:$0xff]
          %v5968 = vld [vmem:[#allocation14 + $0x100] sm:$0xff]
          %v5969 = vld [vmem:[#allocation14 + $0x108] sm:$0xff]
          %v5970 = vld [vmem:[#allocation14 + $0x110] sm:$0xff]
          %v5971 = vld [vmem:[#allocation14 + $0x118] sm:$0xff]
          %v5972 = vld [vmem:[#allocation14 + $0x120] sm:$0xff]
          %v5973 = vld [vmem:[#allocation14 + $0x128] sm:$0xff]
          %v5974 = vld [vmem:[#allocation14 + $0x130] sm:$0xff]
          %v5975 = vld [vmem:[#allocation14 + $0x138] sm:$0xff]
          %v5976 = vld [vmem:[#allocation14 + $0x140] sm:$0xff]
          %v5977 = vld [vmem:[#allocation14 + $0x148] sm:$0xff]
          %v5978 = vld [vmem:[#allocation14 + $0x150] sm:$0xff]
          %v5979 = vld [vmem:[#allocation14 + $0x158] sm:$0xff]
          %v5980 = vld [vmem:[#allocation14 + $0x160] sm:$0xff]
          %v5981 = vld [vmem:[#allocation14 + $0x168] sm:$0xff]
          %v5982 = vld [vmem:[#allocation14 + $0x170] sm:$0xff]
          %v5983 = vld [vmem:[#allocation14 + $0x178] sm:$0xff]
          %v5984 = vld [vmem:[#allocation14 + $0x180] sm:$0xff]
          %v5985 = vld [vmem:[#allocation14 + $0x188] sm:$0xff]
          %v5986 = vld [vmem:[#allocation14 + $0x190] sm:$0xff]
          %v5987 = vld [vmem:[#allocation14 + $0x198] sm:$0xff]
          %v5988 = vld [vmem:[#allocation14 + $0x1a0] sm:$0xff]
          %v5989 = vld [vmem:[#allocation14 + $0x1a8] sm:$0xff]
          %v5990 = vld [vmem:[#allocation14 + $0x1b0] sm:$0xff]
          %v5991 = vld [vmem:[#allocation14 + $0x1b8] sm:$0xff]
          %v5992 = vld [vmem:[#allocation14 + $0x1c0] sm:$0xff]
          %v5993 = vld [vmem:[#allocation14 + $0x1c8] sm:$0xff]
          %v5994 = vld [vmem:[#allocation14 + $0x1d0] sm:$0xff]
          %v5995 = vld [vmem:[#allocation14 + $0x1d8] sm:$0xff]
          %v5996 = vld [vmem:[#allocation14 + $0x1e0] sm:$0xff]
          %v5997 = vld [vmem:[#allocation14 + $0x1e8] sm:$0xff]
          %v5998 = vld [vmem:[#allocation14 + $0x1f0] sm:$0xff]
          %v5999 = vld [vmem:[#allocation14 + $0x1f8] sm:$0xff]
          %v6000 = vld [vmem:[#allocation14 + $0x200] sm:$0xff]
          %v6001 = vld [vmem:[#allocation14 + $0x208] sm:$0xff]
          %v6002 = vld [vmem:[#allocation14 + $0x210] sm:$0xff]
          %v6003 = vld [vmem:[#allocation14 + $0x218] sm:$0xff]
          %v6004 = vld [vmem:[#allocation14 + $0x220] sm:$0xff]
          %v6005 = vld [vmem:[#allocation14 + $0x228] sm:$0xff]
          %v6006 = vld [vmem:[#allocation14 + $0x230] sm:$0xff]
          %v6007 = vld [vmem:[#allocation14 + $0x238] sm:$0xff]
          %v6008 = vld [vmem:[#allocation14 + $0x240] sm:$0xff]
          %v6009 = vld [vmem:[#allocation14 + $0x248] sm:$0xff]
          %v6010 = vld [vmem:[#allocation14 + $0x250] sm:$0xff]
          %v6011 = vld [vmem:[#allocation14 + $0x258] sm:$0xff]
          %v6012 = vld [vmem:[#allocation14 + $0x260] sm:$0xff]
          %v6013 = vld [vmem:[#allocation14 + $0x268] sm:$0xff]
          %v6014 = vld [vmem:[#allocation14 + $0x270] sm:$0xff]
          %v6015 = vld [vmem:[#allocation14 + $0x278] sm:$0xff]
          %v6016 = vld [vmem:[#allocation14 + $0x280] sm:$0xff]
          %v6017 = vld [vmem:[#allocation14 + $0x288] sm:$0xff]
          %v6018 = vld [vmem:[#allocation14 + $0x290] sm:$0xff]
          %v6019 = vld [vmem:[#allocation14 + $0x298] sm:$0xff]
          %v6020 = vld [vmem:[#allocation14 + $0x2a0] sm:$0xff]
          %v6021 = vld [vmem:[#allocation14 + $0x2a8] sm:$0xff]
          %v6022 = vld [vmem:[#allocation14 + $0x2b0] sm:$0xff]
          %v6023 = vld [vmem:[#allocation14 + $0x2b8] sm:$0xff]
          %v6024 = vld [vmem:[#allocation14 + $0x2c0] sm:$0xff]
          %v6025 = vld [vmem:[#allocation14 + $0x2c8] sm:$0xff]
          %v6026 = vld [vmem:[#allocation14 + $0x2d0] sm:$0xff]
          %v6027 = vld [vmem:[#allocation14 + $0x2d8] sm:$0xff]
          %v6028 = vld [vmem:[#allocation14 + $0x2e0] sm:$0xff]
          %v6029 = vld [vmem:[#allocation14 + $0x2e8] sm:$0xff]
          %v6030 = vld [vmem:[#allocation14 + $0x2f0] sm:$0xff]
          %v6031 = vld [vmem:[#allocation14 + $0x2f8] sm:$0xff]
          %v6032 = vld [vmem:[#allocation14 + $0x300] sm:$0xff]
          %v6033 = vld [vmem:[#allocation14 + $0x308] sm:$0xff]
          %v6034 = vld [vmem:[#allocation14 + $0x310] sm:$0xff]
          %v6035 = vld [vmem:[#allocation14 + $0x318] sm:$0xff]
          %v6036 = vld [vmem:[#allocation14 + $0x320] sm:$0xff]
          %v6037 = vld [vmem:[#allocation14 + $0x328] sm:$0xff]
          %v6038 = vld [vmem:[#allocation14 + $0x330] sm:$0xff]
          %v6039 = vld [vmem:[#allocation14 + $0x338] sm:$0xff]
          %v6040 = vld [vmem:[#allocation14 + $0x340] sm:$0xff]
          %v6041 = vld [vmem:[#allocation14 + $0x348] sm:$0xff]
          %v6042 = vld [vmem:[#allocation14 + $0x350] sm:$0xff]
          %v6043 = vld [vmem:[#allocation14 + $0x358] sm:$0xff]
          %v6044 = vld [vmem:[#allocation14 + $0x360] sm:$0xff]
          %v6045 = vld [vmem:[#allocation14 + $0x368] sm:$0xff]
          %v6046 = vld [vmem:[#allocation14 + $0x370] sm:$0xff]
          %v6047 = vld [vmem:[#allocation14 + $0x378] sm:$0xff]
          %v6048 = vld [vmem:[#allocation14 + $0x380] sm:$0xff]
          %v6049 = vld [vmem:[#allocation14 + $0x388] sm:$0xff]
          %v6050 = vld [vmem:[#allocation14 + $0x390] sm:$0xff]
          %v6051 = vld [vmem:[#allocation14 + $0x398] sm:$0xff]
          %v6052 = vld [vmem:[#allocation14 + $0x3a0] sm:$0xff]
          %v6053 = vld [vmem:[#allocation14 + $0x3a8] sm:$0xff]
          %v6054 = vld [vmem:[#allocation14 + $0x3b0] sm:$0xff]
          %v6055 = vld [vmem:[#allocation14 + $0x3b8] sm:$0xff]
          %v6056 = vld [vmem:[#allocation14 + $0x3c0] sm:$0xff]
          %v6057 = vld [vmem:[#allocation14 + $0x3c8] sm:$0xff]
          %v6058 = vld [vmem:[#allocation14 + $0x3d0] sm:$0xff]
          %v6059 = vld [vmem:[#allocation14 + $0x3d8] sm:$0xff]
          %v6060 = vld [vmem:[#allocation14 + $0x3e0] sm:$0xff]
          %v6061 = vld [vmem:[#allocation14 + $0x3e8] sm:$0xff]
          %v6062 = vld [vmem:[#allocation14 + $0x3f0] sm:$0xff]
          %v6063 = vld [vmem:[#allocation14 + $0x3f8] sm:$0xff]
          %v6064 = vld [vmem:[#allocation14 + $0x400] sm:$0xff]
          %v6065 = vld [vmem:[#allocation14 + $0x408] sm:$0xff]
          %v6066 = vld [vmem:[#allocation14 + $0x410] sm:$0xff]
          %v6067 = vld [vmem:[#allocation14 + $0x418] sm:$0xff]
          %v6068 = vld [vmem:[#allocation14 + $0x420] sm:$0xff]
          %v6069 = vld [vmem:[#allocation14 + $0x428] sm:$0xff]
          %v6070 = vld [vmem:[#allocation14 + $0x430] sm:$0xff]
          %v6071 = vld [vmem:[#allocation14 + $0x438] sm:$0xff]
          %v6072 = vld [vmem:[#allocation14 + $0x440] sm:$0xff]
          %v6073 = vld [vmem:[#allocation14 + $0x448] sm:$0xff]
          %v6074 = vld [vmem:[#allocation14 + $0x450] sm:$0xff]
          %v6075 = vld [vmem:[#allocation14 + $0x458] sm:$0xff]
          %v6076 = vld [vmem:[#allocation14 + $0x460] sm:$0xff]
          %v6077 = vld [vmem:[#allocation14 + $0x468] sm:$0xff]
          %v6078 = vld [vmem:[#allocation14 + $0x470] sm:$0xff]
          %v6079 = vld [vmem:[#allocation14 + $0x478] sm:$0xff]
          %v6080 = vld [vmem:[#allocation14 + $0x480] sm:$0xff]
          %v6081 = vld [vmem:[#allocation14 + $0x488] sm:$0xff]
          %v6082 = vld [vmem:[#allocation14 + $0x490] sm:$0xff]
          %v6083 = vld [vmem:[#allocation14 + $0x498] sm:$0xff]
          %v6084 = vld [vmem:[#allocation14 + $0x4a0] sm:$0xff]
          %v6085 = vld [vmem:[#allocation14 + $0x4a8] sm:$0xff]
          %v6086 = vld [vmem:[#allocation14 + $0x4b0] sm:$0xff]
          %v6087 = vld [vmem:[#allocation14 + $0x4b8] sm:$0xff]
          %v6088 = vld [vmem:[#allocation14 + $0x4c0] sm:$0xff]
          %v6089 = vld [vmem:[#allocation14 + $0x4c8] sm:$0xff]
          %v6090 = vld [vmem:[#allocation14 + $0x4d0] sm:$0xff]
          %v6091 = vld [vmem:[#allocation14 + $0x4d8] sm:$0xff]
          %v6092 = vld [vmem:[#allocation14 + $0x4e0] sm:$0xff]
          %v6093 = vld [vmem:[#allocation14 + $0x4e8] sm:$0xff]
          %v6094 = vld [vmem:[#allocation14 + $0x4f0] sm:$0xff]
          %v6095 = vld [vmem:[#allocation14 + $0x4f8] sm:$0xff]
          %v6096 = vld [vmem:[#allocation14 + $0x500] sm:$0xff]
          %v6097 = vld [vmem:[#allocation14 + $0x508] sm:$0xff]
          %v6098 = vld [vmem:[#allocation14 + $0x510] sm:$0xff]
          %v6099 = vld [vmem:[#allocation14 + $0x518] sm:$0xff]
          %v6100 = vld [vmem:[#allocation14 + $0x520] sm:$0xff]
          %v6101 = vld [vmem:[#allocation14 + $0x528] sm:$0xff]
          %v6102 = vld [vmem:[#allocation14 + $0x530] sm:$0xff]
          %v6103 = vld [vmem:[#allocation14 + $0x538] sm:$0xff]
          %v6104 = vld [vmem:[#allocation14 + $0x540] sm:$0xff]
          %v6105 = vld [vmem:[#allocation14 + $0x548] sm:$0xff]
          %v6106 = vld [vmem:[#allocation14 + $0x550] sm:$0xff]
          %v6107 = vld [vmem:[#allocation14 + $0x558] sm:$0xff]
          %v6108 = vld [vmem:[#allocation14 + $0x560] sm:$0xff]
          %v6109 = vld [vmem:[#allocation14 + $0x568] sm:$0xff]
          %v6110 = vld [vmem:[#allocation14 + $0x570] sm:$0xff]
          %v6111 = vld [vmem:[#allocation14 + $0x578] sm:$0xff]
          %v6112 = vld [vmem:[#allocation14 + $0x580] sm:$0xff]
          %v6113 = vld [vmem:[#allocation14 + $0x588] sm:$0xff]
          %v6114 = vld [vmem:[#allocation14 + $0x590] sm:$0xff]
          %v6115 = vld [vmem:[#allocation14 + $0x598] sm:$0xff]
          %v6116 = vld [vmem:[#allocation14 + $0x5a0] sm:$0xff]
          %v6117 = vld [vmem:[#allocation14 + $0x5a8] sm:$0xff]
          %v6118 = vld [vmem:[#allocation14 + $0x5b0] sm:$0xff]
          %v6119 = vld [vmem:[#allocation14 + $0x5b8] sm:$0xff]
          %v6120 = vld [vmem:[#allocation14 + $0x5c0] sm:$0xff]
          %v6121 = vld [vmem:[#allocation14 + $0x5c8] sm:$0xff]
          %v6122 = vld [vmem:[#allocation14 + $0x5d0] sm:$0xff]
          %v6123 = vld [vmem:[#allocation14 + $0x5d8] sm:$0xff]
          %v6124 = vld [vmem:[#allocation14 + $0x5e0] sm:$0xff]
          %v6125 = vld [vmem:[#allocation14 + $0x5e8] sm:$0xff]
          %v6126 = vld [vmem:[#allocation14 + $0x5f0] sm:$0xff]
          %v6127 = vld [vmem:[#allocation14 + $0x5f8] sm:$0xff]
          %v6128 = vld [vmem:[#allocation14 + $0x600] sm:$0xff]
          %v6129 = vld [vmem:[#allocation14 + $0x608] sm:$0xff]
          %v6130 = vld [vmem:[#allocation14 + $0x610] sm:$0xff]
          %v6131 = vld [vmem:[#allocation14 + $0x618] sm:$0xff]
          %v6132 = vld [vmem:[#allocation14 + $0x620] sm:$0xff]
          %v6133 = vld [vmem:[#allocation14 + $0x628] sm:$0xff]
          %v6134 = vld [vmem:[#allocation14 + $0x630] sm:$0xff]
          %v6135 = vld [vmem:[#allocation14 + $0x638] sm:$0xff]
          %v6136 = vld [vmem:[#allocation14 + $0x640] sm:$0xff]
          %v6137 = vld [vmem:[#allocation14 + $0x648] sm:$0xff]
          %v6138 = vld [vmem:[#allocation14 + $0x650] sm:$0xff]
          %v6139 = vld [vmem:[#allocation14 + $0x658] sm:$0xff]
          %v6140 = vld [vmem:[#allocation14 + $0x660] sm:$0xff]
          %v6141 = vld [vmem:[#allocation14 + $0x668] sm:$0xff]
          %v6142 = vld [vmem:[#allocation14 + $0x670] sm:$0xff]
          %v6143 = vld [vmem:[#allocation14 + $0x678] sm:$0xff]
          %v6144 = vld [vmem:[#allocation14 + $0x680] sm:$0xff]
          %v6145 = vld [vmem:[#allocation14 + $0x688] sm:$0xff]
          %v6146 = vld [vmem:[#allocation14 + $0x690] sm:$0xff]
          %v6147 = vld [vmem:[#allocation14 + $0x698] sm:$0xff]
          %v6148 = vld [vmem:[#allocation14 + $0x6a0] sm:$0xff]
          %v6149 = vld [vmem:[#allocation14 + $0x6a8] sm:$0xff]
          %v6150 = vld [vmem:[#allocation14 + $0x6b0] sm:$0xff]
          %v6151 = vld [vmem:[#allocation14 + $0x6b8] sm:$0xff]
          %v6152 = vld [vmem:[#allocation14 + $0x6c0] sm:$0xff]
          %v6153 = vld [vmem:[#allocation14 + $0x6c8] sm:$0xff]
          %v6154 = vld [vmem:[#allocation14 + $0x6d0] sm:$0xff]
          %v6155 = vld [vmem:[#allocation14 + $0x6d8] sm:$0xff]
          %v6156 = vld [vmem:[#allocation14 + $0x6e0] sm:$0xff]
          %v6157 = vld [vmem:[#allocation14 + $0x6e8] sm:$0xff]
          %v6158 = vld [vmem:[#allocation14 + $0x6f0] sm:$0xff]
          %v6159 = vld [vmem:[#allocation14 + $0x6f8] sm:$0xff]
          %v6160 = vld [vmem:[#allocation14 + $0x700] sm:$0xff]
          %v6161 = vld [vmem:[#allocation14 + $0x708] sm:$0xff]
          %v6162 = vld [vmem:[#allocation14 + $0x710] sm:$0xff]
          %v6163 = vld [vmem:[#allocation14 + $0x718] sm:$0xff]
          %v6164 = vld [vmem:[#allocation14 + $0x720] sm:$0xff]
          %v6165 = vld [vmem:[#allocation14 + $0x728] sm:$0xff]
          %v6166 = vld [vmem:[#allocation14 + $0x730] sm:$0xff]
          %v6167 = vld [vmem:[#allocation14 + $0x738] sm:$0xff]
          %v6168 = vld [vmem:[#allocation14 + $0x740] sm:$0xff]
          %v6169 = vld [vmem:[#allocation14 + $0x748] sm:$0xff]
          %v6170 = vld [vmem:[#allocation14 + $0x750] sm:$0xff]
          %v6171 = vld [vmem:[#allocation14 + $0x758] sm:$0xff]
          %v6172 = vld [vmem:[#allocation14 + $0x760] sm:$0xff]
          %v6173 = vld [vmem:[#allocation14 + $0x768] sm:$0xff]
          %v6174 = vld [vmem:[#allocation14 + $0x770] sm:$0xff]
          %v6175 = vld [vmem:[#allocation14 + $0x778] sm:$0xff]
          %v6176 = vld [vmem:[#allocation14 + $0x780] sm:$0xff]
          %v6177 = vld [vmem:[#allocation14 + $0x788] sm:$0xff]
          %v6178 = vld [vmem:[#allocation14 + $0x790] sm:$0xff]
          %v6179 = vld [vmem:[#allocation14 + $0x798] sm:$0xff]
          %v6180 = vld [vmem:[#allocation14 + $0x7a0] sm:$0xff]
          %v6181 = vld [vmem:[#allocation14 + $0x7a8] sm:$0xff]
          %v6182 = vld [vmem:[#allocation14 + $0x7b0] sm:$0xff]
          %v6183 = vld [vmem:[#allocation14 + $0x7b8] sm:$0xff]
          %v6184 = vld [vmem:[#allocation14 + $0x7c0] sm:$0xff]
          %v6185 = vld [vmem:[#allocation14 + $0x7c8] sm:$0xff]
          %v6186 = vld [vmem:[#allocation14 + $0x7d0] sm:$0xff]
          %v6187 = vld [vmem:[#allocation14 + $0x7d8] sm:$0xff]
          %v6188 = vld [vmem:[#allocation14 + $0x7e0] sm:$0xff]
          %v6189 = vld [vmem:[#allocation14 + $0x7e8] sm:$0xff]
          %v6190 = vld [vmem:[#allocation14 + $0x7f0] sm:$0xff]
          %v6191 = vld [vmem:[#allocation14 + $0x7f8] sm:$0xff]
          %v6192 = vld [vmem:[%s8] sm:$0xf]
          %v6194 = vlaneseq
          %v6195 = vshrl.u32 %v6194, 7
          %v6196 = vsub.s32 0, %v6195
          %v6197 = vrot.slane %v6192, %v6196
          %v6198 = vlaneseq
          %v6199 = vshrl.u32 %v6198, 7
          %v6200 = vsub.s32 1, %v6199
          %v6201 = vrot.slane %v6192, %v6200
          %v6202 = vlaneseq
          %v6203 = vshrl.u32 %v6202, 7
          %v6204 = vsub.s32 2, %v6203
          %v6205 = vrot.slane %v6192, %v6204
          %v6206 = vlaneseq
          %v6207 = vshrl.u32 %v6206, 7
          %v6208 = vsub.s32 3, %v6207
          %v6209 = vrot.slane %v6192, %v6208
          %v6216 = vcombine.high %v5934, %v5934
          %v6218 = vunpack.c.l.s4 1983009808
          %v6219 = vunpack.c.0.s8 %v6218
          %v6220 = vlaneseq
          %v6221 = vshrl.u32 %v6220, 7
          %v6222 = vsub.s32 %v6219, %v6221
          %v6223 = vrot.slane %v5934, %v6222
          %v6225 = vunpack.c.l.s4 1983009808
          %v6226 = vunpack.c.0.s8 %v6225
          %v6227 = vlaneseq
          %v6228 = vshrl.u32 %v6227, 7
          %v6229 = vsub.s32 %v6226, %v6228
          %v6230 = vrot.slane %v6216, %v6229
          %v6231 = vcombine.high %v6223, %v6223
          %v6232 = vcombine.high %v6230, %v6230
          %v6233 = vcombine.high %v5935, %v5935
          %v6235 = vunpack.c.l.s4 1983009808
          %v6236 = vunpack.c.0.s8 %v6235
          %v6237 = vlaneseq
          %v6238 = vshrl.u32 %v6237, 7
          %v6239 = vsub.s32 %v6236, %v6238
          %v6240 = vrot.slane %v5935, %v6239
          %v6242 = vunpack.c.l.s4 1983009808
          %v6243 = vunpack.c.0.s8 %v6242
          %v6244 = vlaneseq
          %v6245 = vshrl.u32 %v6244, 7
          %v6246 = vsub.s32 %v6243, %v6245
          %v6247 = vrot.slane %v6233, %v6246
          %v6248 = vcombine.high %v6240, %v6240
          %v6249 = vcombine.high %v6247, %v6247
          %v6514 = vunpack.c.l.b16 %v5936
          %v6515 = vunpack.c.h.b16 %v5936
          %v6516 = vunpack.c.l.b16 %v5937
          %v6517 = vunpack.c.h.b16 %v5937
          %v6518 = vunpack.c.l.b16 %v5938
          %v6519 = vunpack.c.h.b16 %v5938
          %v6520 = vunpack.c.l.b16 %v5939
          %v6521 = vunpack.c.h.b16 %v5939
          %v6522 = vunpack.c.l.b16 %v5940
          %v6523 = vunpack.c.h.b16 %v5940
          %v6524 = vunpack.c.l.b16 %v5941
          %v6525 = vunpack.c.h.b16 %v5941
          %v6526 = vunpack.c.l.b16 %v5942
          %v6527 = vunpack.c.h.b16 %v5942
          %v6528 = vunpack.c.l.b16 %v5943
          %v6529 = vunpack.c.h.b16 %v5943
          %v6530 = vunpack.c.l.b16 %v5944
          %v6531 = vunpack.c.h.b16 %v5944
          %v6532 = vunpack.c.l.b16 %v5945
          %v6533 = vunpack.c.h.b16 %v5945
          %v6534 = vunpack.c.l.b16 %v5946
          %v6535 = vunpack.c.h.b16 %v5946
          %v6536 = vunpack.c.l.b16 %v5947
          %v6537 = vunpack.c.h.b16 %v5947
          %v6538 = vunpack.c.l.b16 %v5948
          %v6539 = vunpack.c.h.b16 %v5948
          %v6540 = vunpack.c.l.b16 %v5949
          %v6541 = vunpack.c.h.b16 %v5949
          %v6542 = vunpack.c.l.b16 %v5950
          %v6543 = vunpack.c.h.b16 %v5950
          %v6544 = vunpack.c.l.b16 %v5951
          %v6545 = vunpack.c.h.b16 %v5951
          %v6546 = vunpack.c.l.b16 %v5952
          %v6547 = vunpack.c.h.b16 %v5952
          %v6548 = vunpack.c.l.b16 %v5953
          %v6549 = vunpack.c.h.b16 %v5953
          %v6550 = vunpack.c.l.b16 %v5954
          %v6551 = vunpack.c.h.b16 %v5954
          %v6552 = vunpack.c.l.b16 %v5955
          %v6553 = vunpack.c.h.b16 %v5955
          %v6554 = vunpack.c.l.b16 %v5956
          %v6555 = vunpack.c.h.b16 %v5956
          %v6556 = vunpack.c.l.b16 %v5957
          %v6557 = vunpack.c.h.b16 %v5957
          %v6558 = vunpack.c.l.b16 %v5958
          %v6559 = vunpack.c.h.b16 %v5958
          %v6560 = vunpack.c.l.b16 %v5959
          %v6561 = vunpack.c.h.b16 %v5959
          %v6562 = vunpack.c.l.b16 %v5960
          %v6563 = vunpack.c.h.b16 %v5960
          %v6564 = vunpack.c.l.b16 %v5961
          %v6565 = vunpack.c.h.b16 %v5961
          %v6566 = vunpack.c.l.b16 %v5962
          %v6567 = vunpack.c.h.b16 %v5962
          %v6568 = vunpack.c.l.b16 %v5963
          %v6569 = vunpack.c.h.b16 %v5963
          %v6570 = vunpack.c.l.b16 %v5964
          %v6571 = vunpack.c.h.b16 %v5964
          %v6572 = vunpack.c.l.b16 %v5965
          %v6573 = vunpack.c.h.b16 %v5965
          %v6574 = vunpack.c.l.b16 %v5966
          %v6575 = vunpack.c.h.b16 %v5966
          %v6576 = vunpack.c.l.b16 %v5967
          %v6577 = vunpack.c.h.b16 %v5967
          %v6578 = vunpack.c.l.b16 %v5968
          %v6579 = vunpack.c.h.b16 %v5968
          %v6580 = vunpack.c.l.b16 %v5969
          %v6581 = vunpack.c.h.b16 %v5969
          %v6582 = vunpack.c.l.b16 %v5970
          %v6583 = vunpack.c.h.b16 %v5970
          %v6584 = vunpack.c.l.b16 %v5971
          %v6585 = vunpack.c.h.b16 %v5971
          %v6586 = vunpack.c.l.b16 %v5972
          %v6587 = vunpack.c.h.b16 %v5972
          %v6588 = vunpack.c.l.b16 %v5973
          %v6589 = vunpack.c.h.b16 %v5973
          %v6590 = vunpack.c.l.b16 %v5974
          %v6591 = vunpack.c.h.b16 %v5974
          %v6592 = vunpack.c.l.b16 %v5975
          %v6593 = vunpack.c.h.b16 %v5975
          %v6594 = vunpack.c.l.b16 %v5976
          %v6595 = vunpack.c.h.b16 %v5976
          %v6596 = vunpack.c.l.b16 %v5977
          %v6597 = vunpack.c.h.b16 %v5977
          %v6598 = vunpack.c.l.b16 %v5978
          %v6599 = vunpack.c.h.b16 %v5978
          %v6600 = vunpack.c.l.b16 %v5979
          %v6601 = vunpack.c.h.b16 %v5979
          %v6602 = vunpack.c.l.b16 %v5980
          %v6603 = vunpack.c.h.b16 %v5980
          %v6604 = vunpack.c.l.b16 %v5981
          %v6605 = vunpack.c.h.b16 %v5981
          %v6606 = vunpack.c.l.b16 %v5982
          %v6607 = vunpack.c.h.b16 %v5982
          %v6608 = vunpack.c.l.b16 %v5983
          %v6609 = vunpack.c.h.b16 %v5983
          %v6610 = vunpack.c.l.b16 %v5984
          %v6611 = vunpack.c.h.b16 %v5984
          %v6612 = vunpack.c.l.b16 %v5985
          %v6613 = vunpack.c.h.b16 %v5985
          %v6614 = vunpack.c.l.b16 %v5986
          %v6615 = vunpack.c.h.b16 %v5986
          %v6616 = vunpack.c.l.b16 %v5987
          %v6617 = vunpack.c.h.b16 %v5987
          %v6618 = vunpack.c.l.b16 %v5988
          %v6619 = vunpack.c.h.b16 %v5988
          %v6620 = vunpack.c.l.b16 %v5989
          %v6621 = vunpack.c.h.b16 %v5989
          %v6622 = vunpack.c.l.b16 %v5990
          %v6623 = vunpack.c.h.b16 %v5990
          %v6624 = vunpack.c.l.b16 %v5991
          %v6625 = vunpack.c.h.b16 %v5991
          %v6626 = vunpack.c.l.b16 %v5992
          %v6627 = vunpack.c.h.b16 %v5992
          %v6628 = vunpack.c.l.b16 %v5993
          %v6629 = vunpack.c.h.b16 %v5993
          %v6630 = vunpack.c.l.b16 %v5994
          %v6631 = vunpack.c.h.b16 %v5994
          %v6632 = vunpack.c.l.b16 %v5995
          %v6633 = vunpack.c.h.b16 %v5995
          %v6634 = vunpack.c.l.b16 %v5996
          %v6635 = vunpack.c.h.b16 %v5996
          %v6636 = vunpack.c.l.b16 %v5997
          %v6637 = vunpack.c.h.b16 %v5997
          %v6638 = vunpack.c.l.b16 %v5998
          %v6639 = vunpack.c.h.b16 %v5998
          %v6640 = vunpack.c.l.b16 %v5999
          %v6641 = vunpack.c.h.b16 %v5999
          %v6642 = vunpack.c.l.b16 %v6000
          %v6643 = vunpack.c.h.b16 %v6000
          %v6644 = vunpack.c.l.b16 %v6001
          %v6645 = vunpack.c.h.b16 %v6001
          %v6646 = vunpack.c.l.b16 %v6002
          %v6647 = vunpack.c.h.b16 %v6002
          %v6648 = vunpack.c.l.b16 %v6003
          %v6649 = vunpack.c.h.b16 %v6003
          %v6650 = vunpack.c.l.b16 %v6004
          %v6651 = vunpack.c.h.b16 %v6004
          %v6652 = vunpack.c.l.b16 %v6005
          %v6653 = vunpack.c.h.b16 %v6005
          %v6654 = vunpack.c.l.b16 %v6006
          %v6655 = vunpack.c.h.b16 %v6006
          %v6656 = vunpack.c.l.b16 %v6007
          %v6657 = vunpack.c.h.b16 %v6007
          %v6658 = vunpack.c.l.b16 %v6008
          %v6659 = vunpack.c.h.b16 %v6008
          %v6660 = vunpack.c.l.b16 %v6009
          %v6661 = vunpack.c.h.b16 %v6009
          %v6662 = vunpack.c.l.b16 %v6010
          %v6663 = vunpack.c.h.b16 %v6010
          %v6664 = vunpack.c.l.b16 %v6011
          %v6665 = vunpack.c.h.b16 %v6011
          %v6666 = vunpack.c.l.b16 %v6012
          %v6667 = vunpack.c.h.b16 %v6012
          %v6668 = vunpack.c.l.b16 %v6013
          %v6669 = vunpack.c.h.b16 %v6013
          %v6670 = vunpack.c.l.b16 %v6014
          %v6671 = vunpack.c.h.b16 %v6014
          %v6672 = vunpack.c.l.b16 %v6015
          %v6673 = vunpack.c.h.b16 %v6015
          %v6674 = vunpack.c.l.b16 %v6016
          %v6675 = vunpack.c.h.b16 %v6016
          %v6676 = vunpack.c.l.b16 %v6017
          %v6677 = vunpack.c.h.b16 %v6017
          %v6678 = vunpack.c.l.b16 %v6018
          %v6679 = vunpack.c.h.b16 %v6018
          %v6680 = vunpack.c.l.b16 %v6019
          %v6681 = vunpack.c.h.b16 %v6019
          %v6682 = vunpack.c.l.b16 %v6020
          %v6683 = vunpack.c.h.b16 %v6020
          %v6684 = vunpack.c.l.b16 %v6021
          %v6685 = vunpack.c.h.b16 %v6021
          %v6686 = vunpack.c.l.b16 %v6022
          %v6687 = vunpack.c.h.b16 %v6022
          %v6688 = vunpack.c.l.b16 %v6023
          %v6689 = vunpack.c.h.b16 %v6023
          %v6690 = vunpack.c.l.b16 %v6024
          %v6691 = vunpack.c.h.b16 %v6024
          %v6692 = vunpack.c.l.b16 %v6025
          %v6693 = vunpack.c.h.b16 %v6025
          %v6694 = vunpack.c.l.b16 %v6026
          %v6695 = vunpack.c.h.b16 %v6026
          %v6696 = vunpack.c.l.b16 %v6027
          %v6697 = vunpack.c.h.b16 %v6027
          %v6698 = vunpack.c.l.b16 %v6028
          %v6699 = vunpack.c.h.b16 %v6028
          %v6700 = vunpack.c.l.b16 %v6029
          %v6701 = vunpack.c.h.b16 %v6029
          %v6702 = vunpack.c.l.b16 %v6030
          %v6703 = vunpack.c.h.b16 %v6030
          %v6704 = vunpack.c.l.b16 %v6031
          %v6705 = vunpack.c.h.b16 %v6031
          %v6706 = vunpack.c.l.b16 %v6032
          %v6707 = vunpack.c.h.b16 %v6032
          %v6708 = vunpack.c.l.b16 %v6033
          %v6709 = vunpack.c.h.b16 %v6033
          %v6710 = vunpack.c.l.b16 %v6034
          %v6711 = vunpack.c.h.b16 %v6034
          %v6712 = vunpack.c.l.b16 %v6035
          %v6713 = vunpack.c.h.b16 %v6035
          %v6714 = vunpack.c.l.b16 %v6036
          %v6715 = vunpack.c.h.b16 %v6036
          %v6716 = vunpack.c.l.b16 %v6037
          %v6717 = vunpack.c.h.b16 %v6037
          %v6718 = vunpack.c.l.b16 %v6038
          %v6719 = vunpack.c.h.b16 %v6038
          %v6720 = vunpack.c.l.b16 %v6039
          %v6721 = vunpack.c.h.b16 %v6039
          %v6722 = vunpack.c.l.b16 %v6040
          %v6723 = vunpack.c.h.b16 %v6040
          %v6724 = vunpack.c.l.b16 %v6041
          %v6725 = vunpack.c.h.b16 %v6041
          %v6726 = vunpack.c.l.b16 %v6042
          %v6727 = vunpack.c.h.b16 %v6042
          %v6728 = vunpack.c.l.b16 %v6043
          %v6729 = vunpack.c.h.b16 %v6043
          %v6730 = vunpack.c.l.b16 %v6044
          %v6731 = vunpack.c.h.b16 %v6044
          %v6732 = vunpack.c.l.b16 %v6045
          %v6733 = vunpack.c.h.b16 %v6045
          %v6734 = vunpack.c.l.b16 %v6046
          %v6735 = vunpack.c.h.b16 %v6046
          %v6736 = vunpack.c.l.b16 %v6047
          %v6737 = vunpack.c.h.b16 %v6047
          %v6738 = vunpack.c.l.b16 %v6048
          %v6739 = vunpack.c.h.b16 %v6048
          %v6740 = vunpack.c.l.b16 %v6049
          %v6741 = vunpack.c.h.b16 %v6049
          %v6742 = vunpack.c.l.b16 %v6050
          %v6743 = vunpack.c.h.b16 %v6050
          %v6744 = vunpack.c.l.b16 %v6051
          %v6745 = vunpack.c.h.b16 %v6051
          %v6746 = vunpack.c.l.b16 %v6052
          %v6747 = vunpack.c.h.b16 %v6052
          %v6748 = vunpack.c.l.b16 %v6053
          %v6749 = vunpack.c.h.b16 %v6053
          %v6750 = vunpack.c.l.b16 %v6054
          %v6751 = vunpack.c.h.b16 %v6054
          %v6752 = vunpack.c.l.b16 %v6055
          %v6753 = vunpack.c.h.b16 %v6055
          %v6754 = vunpack.c.l.b16 %v6056
          %v6755 = vunpack.c.h.b16 %v6056
          %v6756 = vunpack.c.l.b16 %v6057
          %v6757 = vunpack.c.h.b16 %v6057
          %v6758 = vunpack.c.l.b16 %v6058
          %v6759 = vunpack.c.h.b16 %v6058
          %v6760 = vunpack.c.l.b16 %v6059
          %v6761 = vunpack.c.h.b16 %v6059
          %v6762 = vunpack.c.l.b16 %v6060
          %v6763 = vunpack.c.h.b16 %v6060
          %v6764 = vunpack.c.l.b16 %v6061
          %v6765 = vunpack.c.h.b16 %v6061
          %v6766 = vunpack.c.l.b16 %v6062
          %v6767 = vunpack.c.h.b16 %v6062
          %v6768 = vunpack.c.l.b16 %v6063
          %v6769 = vunpack.c.h.b16 %v6063
          %v6770 = vunpack.c.l.b16 %v6064
          %v6771 = vunpack.c.h.b16 %v6064
          %v6772 = vunpack.c.l.b16 %v6065
          %v6773 = vunpack.c.h.b16 %v6065
          %v6774 = vunpack.c.l.b16 %v6066
          %v6775 = vunpack.c.h.b16 %v6066
          %v6776 = vunpack.c.l.b16 %v6067
          %v6777 = vunpack.c.h.b16 %v6067
          %v6778 = vunpack.c.l.b16 %v6068
          %v6779 = vunpack.c.h.b16 %v6068
          %v6780 = vunpack.c.l.b16 %v6069
          %v6781 = vunpack.c.h.b16 %v6069
          %v6782 = vunpack.c.l.b16 %v6070
          %v6783 = vunpack.c.h.b16 %v6070
          %v6784 = vunpack.c.l.b16 %v6071
          %v6785 = vunpack.c.h.b16 %v6071
          %v6786 = vunpack.c.l.b16 %v6072
          %v6787 = vunpack.c.h.b16 %v6072
          %v6788 = vunpack.c.l.b16 %v6073
          %v6789 = vunpack.c.h.b16 %v6073
          %v6790 = vunpack.c.l.b16 %v6074
          %v6791 = vunpack.c.h.b16 %v6074
          %v6792 = vunpack.c.l.b16 %v6075
          %v6793 = vunpack.c.h.b16 %v6075
          %v6794 = vunpack.c.l.b16 %v6076
          %v6795 = vunpack.c.h.b16 %v6076
          %v6796 = vunpack.c.l.b16 %v6077
          %v6797 = vunpack.c.h.b16 %v6077
          %v6798 = vunpack.c.l.b16 %v6078
          %v6799 = vunpack.c.h.b16 %v6078
          %v6800 = vunpack.c.l.b16 %v6079
          %v6801 = vunpack.c.h.b16 %v6079
          %v6802 = vunpack.c.l.b16 %v6080
          %v6803 = vunpack.c.h.b16 %v6080
          %v6804 = vunpack.c.l.b16 %v6081
          %v6805 = vunpack.c.h.b16 %v6081
          %v6806 = vunpack.c.l.b16 %v6082
          %v6807 = vunpack.c.h.b16 %v6082
          %v6808 = vunpack.c.l.b16 %v6083
          %v6809 = vunpack.c.h.b16 %v6083
          %v6810 = vunpack.c.l.b16 %v6084
          %v6811 = vunpack.c.h.b16 %v6084
          %v6812 = vunpack.c.l.b16 %v6085
          %v6813 = vunpack.c.h.b16 %v6085
          %v6814 = vunpack.c.l.b16 %v6086
          %v6815 = vunpack.c.h.b16 %v6086
          %v6816 = vunpack.c.l.b16 %v6087
          %v6817 = vunpack.c.h.b16 %v6087
          %v6818 = vunpack.c.l.b16 %v6088
          %v6819 = vunpack.c.h.b16 %v6088
          %v6820 = vunpack.c.l.b16 %v6089
          %v6821 = vunpack.c.h.b16 %v6089
          %v6822 = vunpack.c.l.b16 %v6090
          %v6823 = vunpack.c.h.b16 %v6090
          %v6824 = vunpack.c.l.b16 %v6091
          %v6825 = vunpack.c.h.b16 %v6091
          %v6826 = vunpack.c.l.b16 %v6092
          %v6827 = vunpack.c.h.b16 %v6092
          %v6828 = vunpack.c.l.b16 %v6093
          %v6829 = vunpack.c.h.b16 %v6093
          %v6830 = vunpack.c.l.b16 %v6094
          %v6831 = vunpack.c.h.b16 %v6094
          %v6832 = vunpack.c.l.b16 %v6095
          %v6833 = vunpack.c.h.b16 %v6095
          %v6834 = vunpack.c.l.b16 %v6096
          %v6835 = vunpack.c.h.b16 %v6096
          %v6836 = vunpack.c.l.b16 %v6097
          %v6837 = vunpack.c.h.b16 %v6097
          %v6838 = vunpack.c.l.b16 %v6098
          %v6839 = vunpack.c.h.b16 %v6098
          %v6840 = vunpack.c.l.b16 %v6099
          %v6841 = vunpack.c.h.b16 %v6099
          %v6842 = vunpack.c.l.b16 %v6100
          %v6843 = vunpack.c.h.b16 %v6100
          %v6844 = vunpack.c.l.b16 %v6101
          %v6845 = vunpack.c.h.b16 %v6101
          %v6846 = vunpack.c.l.b16 %v6102
          %v6847 = vunpack.c.h.b16 %v6102
          %v6848 = vunpack.c.l.b16 %v6103
          %v6849 = vunpack.c.h.b16 %v6103
          %v6850 = vunpack.c.l.b16 %v6104
          %v6851 = vunpack.c.h.b16 %v6104
          %v6852 = vunpack.c.l.b16 %v6105
          %v6853 = vunpack.c.h.b16 %v6105
          %v6854 = vunpack.c.l.b16 %v6106
          %v6855 = vunpack.c.h.b16 %v6106
          %v6856 = vunpack.c.l.b16 %v6107
          %v6857 = vunpack.c.h.b16 %v6107
          %v6858 = vunpack.c.l.b16 %v6108
          %v6859 = vunpack.c.h.b16 %v6108
          %v6860 = vunpack.c.l.b16 %v6109
          %v6861 = vunpack.c.h.b16 %v6109
          %v6862 = vunpack.c.l.b16 %v6110
          %v6863 = vunpack.c.h.b16 %v6110
          %v6864 = vunpack.c.l.b16 %v6111
          %v6865 = vunpack.c.h.b16 %v6111
          %v6866 = vunpack.c.l.b16 %v6112
          %v6867 = vunpack.c.h.b16 %v6112
          %v6868 = vunpack.c.l.b16 %v6113
          %v6869 = vunpack.c.h.b16 %v6113
          %v6870 = vunpack.c.l.b16 %v6114
          %v6871 = vunpack.c.h.b16 %v6114
          %v6872 = vunpack.c.l.b16 %v6115
          %v6873 = vunpack.c.h.b16 %v6115
          %v6874 = vunpack.c.l.b16 %v6116
          %v6875 = vunpack.c.h.b16 %v6116
          %v6876 = vunpack.c.l.b16 %v6117
          %v6877 = vunpack.c.h.b16 %v6117
          %v6878 = vunpack.c.l.b16 %v6118
          %v6879 = vunpack.c.h.b16 %v6118
          %v6880 = vunpack.c.l.b16 %v6119
          %v6881 = vunpack.c.h.b16 %v6119
          %v6882 = vunpack.c.l.b16 %v6120
          %v6883 = vunpack.c.h.b16 %v6120
          %v6884 = vunpack.c.l.b16 %v6121
          %v6885 = vunpack.c.h.b16 %v6121
          %v6886 = vunpack.c.l.b16 %v6122
          %v6887 = vunpack.c.h.b16 %v6122
          %v6888 = vunpack.c.l.b16 %v6123
          %v6889 = vunpack.c.h.b16 %v6123
          %v6890 = vunpack.c.l.b16 %v6124
          %v6891 = vunpack.c.h.b16 %v6124
          %v6892 = vunpack.c.l.b16 %v6125
          %v6893 = vunpack.c.h.b16 %v6125
          %v6894 = vunpack.c.l.b16 %v6126
          %v6895 = vunpack.c.h.b16 %v6126
          %v6896 = vunpack.c.l.b16 %v6127
          %v6897 = vunpack.c.h.b16 %v6127
          %v6898 = vunpack.c.l.b16 %v6128
          %v6899 = vunpack.c.h.b16 %v6128
          %v6900 = vunpack.c.l.b16 %v6129
          %v6901 = vunpack.c.h.b16 %v6129
          %v6902 = vunpack.c.l.b16 %v6130
          %v6903 = vunpack.c.h.b16 %v6130
          %v6904 = vunpack.c.l.b16 %v6131
          %v6905 = vunpack.c.h.b16 %v6131
          %v6906 = vunpack.c.l.b16 %v6132
          %v6907 = vunpack.c.h.b16 %v6132
          %v6908 = vunpack.c.l.b16 %v6133
          %v6909 = vunpack.c.h.b16 %v6133
          %v6910 = vunpack.c.l.b16 %v6134
          %v6911 = vunpack.c.h.b16 %v6134
          %v6912 = vunpack.c.l.b16 %v6135
          %v6913 = vunpack.c.h.b16 %v6135
          %v6914 = vunpack.c.l.b16 %v6136
          %v6915 = vunpack.c.h.b16 %v6136
          %v6916 = vunpack.c.l.b16 %v6137
          %v6917 = vunpack.c.h.b16 %v6137
          %v6918 = vunpack.c.l.b16 %v6138
          %v6919 = vunpack.c.h.b16 %v6138
          %v6920 = vunpack.c.l.b16 %v6139
          %v6921 = vunpack.c.h.b16 %v6139
          %v6922 = vunpack.c.l.b16 %v6140
          %v6923 = vunpack.c.h.b16 %v6140
          %v6924 = vunpack.c.l.b16 %v6141
          %v6925 = vunpack.c.h.b16 %v6141
          %v6926 = vunpack.c.l.b16 %v6142
          %v6927 = vunpack.c.h.b16 %v6142
          %v6928 = vunpack.c.l.b16 %v6143
          %v6929 = vunpack.c.h.b16 %v6143
          %v6930 = vunpack.c.l.b16 %v6144
          %v6931 = vunpack.c.h.b16 %v6144
          %v6932 = vunpack.c.l.b16 %v6145
          %v6933 = vunpack.c.h.b16 %v6145
          %v6934 = vunpack.c.l.b16 %v6146
          %v6935 = vunpack.c.h.b16 %v6146
          %v6936 = vunpack.c.l.b16 %v6147
          %v6937 = vunpack.c.h.b16 %v6147
          %v6938 = vunpack.c.l.b16 %v6148
          %v6939 = vunpack.c.h.b16 %v6148
          %v6940 = vunpack.c.l.b16 %v6149
          %v6941 = vunpack.c.h.b16 %v6149
          %v6942 = vunpack.c.l.b16 %v6150
          %v6943 = vunpack.c.h.b16 %v6150
          %v6944 = vunpack.c.l.b16 %v6151
          %v6945 = vunpack.c.h.b16 %v6151
          %v6946 = vunpack.c.l.b16 %v6152
          %v6947 = vunpack.c.h.b16 %v6152
          %v6948 = vunpack.c.l.b16 %v6153
          %v6949 = vunpack.c.h.b16 %v6153
          %v6950 = vunpack.c.l.b16 %v6154
          %v6951 = vunpack.c.h.b16 %v6154
          %v6952 = vunpack.c.l.b16 %v6155
          %v6953 = vunpack.c.h.b16 %v6155
          %v6954 = vunpack.c.l.b16 %v6156
          %v6955 = vunpack.c.h.b16 %v6156
          %v6956 = vunpack.c.l.b16 %v6157
          %v6957 = vunpack.c.h.b16 %v6157
          %v6958 = vunpack.c.l.b16 %v6158
          %v6959 = vunpack.c.h.b16 %v6158
          %v6960 = vunpack.c.l.b16 %v6159
          %v6961 = vunpack.c.h.b16 %v6159
          %v6962 = vunpack.c.l.b16 %v6160
          %v6963 = vunpack.c.h.b16 %v6160
          %v6964 = vunpack.c.l.b16 %v6161
          %v6965 = vunpack.c.h.b16 %v6161
          %v6966 = vunpack.c.l.b16 %v6162
          %v6967 = vunpack.c.h.b16 %v6162
          %v6968 = vunpack.c.l.b16 %v6163
          %v6969 = vunpack.c.h.b16 %v6163
          %v6970 = vunpack.c.l.b16 %v6164
          %v6971 = vunpack.c.h.b16 %v6164
          %v6972 = vunpack.c.l.b16 %v6165
          %v6973 = vunpack.c.h.b16 %v6165
          %v6974 = vunpack.c.l.b16 %v6166
          %v6975 = vunpack.c.h.b16 %v6166
          %v6976 = vunpack.c.l.b16 %v6167
          %v6977 = vunpack.c.h.b16 %v6167
          %v6978 = vunpack.c.l.b16 %v6168
          %v6979 = vunpack.c.h.b16 %v6168
          %v6980 = vunpack.c.l.b16 %v6169
          %v6981 = vunpack.c.h.b16 %v6169
          %v6982 = vunpack.c.l.b16 %v6170
          %v6983 = vunpack.c.h.b16 %v6170
          %v6984 = vunpack.c.l.b16 %v6171
          %v6985 = vunpack.c.h.b16 %v6171
          %v6986 = vunpack.c.l.b16 %v6172
          %v6987 = vunpack.c.h.b16 %v6172
          %v6988 = vunpack.c.l.b16 %v6173
          %v6989 = vunpack.c.h.b16 %v6173
          %v6990 = vunpack.c.l.b16 %v6174
          %v6991 = vunpack.c.h.b16 %v6174
          %v6992 = vunpack.c.l.b16 %v6175
          %v6993 = vunpack.c.h.b16 %v6175
          %v6994 = vunpack.c.l.b16 %v6176
          %v6995 = vunpack.c.h.b16 %v6176
          %v6996 = vunpack.c.l.b16 %v6177
          %v6997 = vunpack.c.h.b16 %v6177
          %v6998 = vunpack.c.l.b16 %v6178
          %v6999 = vunpack.c.h.b16 %v6178
          %v7000 = vunpack.c.l.b16 %v6179
          %v7001 = vunpack.c.h.b16 %v6179
          %v7002 = vunpack.c.l.b16 %v6180
          %v7003 = vunpack.c.h.b16 %v6180
          %v7004 = vunpack.c.l.b16 %v6181
          %v7005 = vunpack.c.h.b16 %v6181
          %v7006 = vunpack.c.l.b16 %v6182
          %v7007 = vunpack.c.h.b16 %v6182
          %v7008 = vunpack.c.l.b16 %v6183
          %v7009 = vunpack.c.h.b16 %v6183
          %v7010 = vunpack.c.l.b16 %v6184
          %v7011 = vunpack.c.h.b16 %v6184
          %v7012 = vunpack.c.l.b16 %v6185
          %v7013 = vunpack.c.h.b16 %v6185
          %v7014 = vunpack.c.l.b16 %v6186
          %v7015 = vunpack.c.h.b16 %v6186
          %v7016 = vunpack.c.l.b16 %v6187
          %v7017 = vunpack.c.h.b16 %v6187
          %v7018 = vunpack.c.l.b16 %v6188
          %v7019 = vunpack.c.h.b16 %v6188
          %v7020 = vunpack.c.l.b16 %v6189
          %v7021 = vunpack.c.h.b16 %v6189
          %v7022 = vunpack.c.l.b16 %v6190
          %v7023 = vunpack.c.h.b16 %v6190
          %v7024 = vunpack.c.l.b16 %v6191
          %v7025 = vunpack.c.h.b16 %v6191
          %v7026 = vpack.c.b16 %v6518, %v6514
          %v7027 = vpack.c.b16 %v6519, %v6515
          %v7028 = vpack.c.b16 %v6520, %v6516
          %v7029 = vpack.c.b16 %v6521, %v6517
          %v7030 = vpack.c.b16 %v6526, %v6522
          %v7031 = vpack.c.b16 %v6527, %v6523
          %v7032 = vpack.c.b16 %v6528, %v6524
          %v7033 = vpack.c.b16 %v6529, %v6525
          %v7034 = vpack.c.b16 %v6534, %v6530
          %v7035 = vpack.c.b16 %v6535, %v6531
          %v7036 = vpack.c.b16 %v6536, %v6532
          %v7037 = vpack.c.b16 %v6537, %v6533
          %v7038 = vpack.c.b16 %v6542, %v6538
          %v7039 = vpack.c.b16 %v6543, %v6539
          %v7040 = vpack.c.b16 %v6544, %v6540
          %v7041 = vpack.c.b16 %v6545, %v6541
          %v7042 = vpack.c.b16 %v6550, %v6546
          %v7043 = vpack.c.b16 %v6551, %v6547
          %v7044 = vpack.c.b16 %v6552, %v6548
          %v7045 = vpack.c.b16 %v6553, %v6549
          %v7046 = vpack.c.b16 %v6558, %v6554
          %v7047 = vpack.c.b16 %v6559, %v6555
          %v7048 = vpack.c.b16 %v6560, %v6556
          %v7049 = vpack.c.b16 %v6561, %v6557
          %v7050 = vpack.c.b16 %v6566, %v6562
          %v7051 = vpack.c.b16 %v6567, %v6563
          %v7052 = vpack.c.b16 %v6568, %v6564
          %v7053 = vpack.c.b16 %v6569, %v6565
          %v7054 = vpack.c.b16 %v6574, %v6570
          %v7055 = vpack.c.b16 %v6575, %v6571
          %v7056 = vpack.c.b16 %v6576, %v6572
          %v7057 = vpack.c.b16 %v6577, %v6573
          %v7058 = vpack.c.b16 %v6582, %v6578
          %v7059 = vpack.c.b16 %v6583, %v6579
          %v7060 = vpack.c.b16 %v6584, %v6580
          %v7061 = vpack.c.b16 %v6585, %v6581
          %v7062 = vpack.c.b16 %v6590, %v6586
          %v7063 = vpack.c.b16 %v6591, %v6587
          %v7064 = vpack.c.b16 %v6592, %v6588
          %v7065 = vpack.c.b16 %v6593, %v6589
          %v7066 = vpack.c.b16 %v6598, %v6594
          %v7067 = vpack.c.b16 %v6599, %v6595
          %v7068 = vpack.c.b16 %v6600, %v6596
          %v7069 = vpack.c.b16 %v6601, %v6597
          %v7070 = vpack.c.b16 %v6606, %v6602
          %v7071 = vpack.c.b16 %v6607, %v6603
          %v7072 = vpack.c.b16 %v6608, %v6604
          %v7073 = vpack.c.b16 %v6609, %v6605
          %v7074 = vpack.c.b16 %v6614, %v6610
          %v7075 = vpack.c.b16 %v6615, %v6611
          %v7076 = vpack.c.b16 %v6616, %v6612
          %v7077 = vpack.c.b16 %v6617, %v6613
          %v7078 = vpack.c.b16 %v6622, %v6618
          %v7079 = vpack.c.b16 %v6623, %v6619
          %v7080 = vpack.c.b16 %v6624, %v6620
          %v7081 = vpack.c.b16 %v6625, %v6621
          %v7082 = vpack.c.b16 %v6630, %v6626
          %v7083 = vpack.c.b16 %v6631, %v6627
          %v7084 = vpack.c.b16 %v6632, %v6628
          %v7085 = vpack.c.b16 %v6633, %v6629
          %v7086 = vpack.c.b16 %v6638, %v6634
          %v7087 = vpack.c.b16 %v6639, %v6635
          %v7088 = vpack.c.b16 %v6640, %v6636
          %v7089 = vpack.c.b16 %v6641, %v6637
          %v7090 = vpack.c.b16 %v6646, %v6642
          %v7091 = vpack.c.b16 %v6647, %v6643
          %v7092 = vpack.c.b16 %v6648, %v6644
          %v7093 = vpack.c.b16 %v6649, %v6645
          %v7094 = vpack.c.b16 %v6654, %v6650
          %v7095 = vpack.c.b16 %v6655, %v6651
          %v7096 = vpack.c.b16 %v6656, %v6652
          %v7097 = vpack.c.b16 %v6657, %v6653
          %v7098 = vpack.c.b16 %v6662, %v6658
          %v7099 = vpack.c.b16 %v6663, %v6659
          %v7100 = vpack.c.b16 %v6664, %v6660
          %v7101 = vpack.c.b16 %v6665, %v6661
          %v7102 = vpack.c.b16 %v6670, %v6666
          %v7103 = vpack.c.b16 %v6671, %v6667
          %v7104 = vpack.c.b16 %v6672, %v6668
          %v7105 = vpack.c.b16 %v6673, %v6669
          %v7106 = vpack.c.b16 %v6678, %v6674
          %v7107 = vpack.c.b16 %v6679, %v6675
          %v7108 = vpack.c.b16 %v6680, %v6676
          %v7109 = vpack.c.b16 %v6681, %v6677
          %v7110 = vpack.c.b16 %v6686, %v6682
          %v7111 = vpack.c.b16 %v6687, %v6683
          %v7112 = vpack.c.b16 %v6688, %v6684
          %v7113 = vpack.c.b16 %v6689, %v6685
          %v7114 = vpack.c.b16 %v6694, %v6690
          %v7115 = vpack.c.b16 %v6695, %v6691
          %v7116 = vpack.c.b16 %v6696, %v6692
          %v7117 = vpack.c.b16 %v6697, %v6693
          %v7118 = vpack.c.b16 %v6702, %v6698
          %v7119 = vpack.c.b16 %v6703, %v6699
          %v7120 = vpack.c.b16 %v6704, %v6700
          %v7121 = vpack.c.b16 %v6705, %v6701
          %v7122 = vpack.c.b16 %v6710, %v6706
          %v7123 = vpack.c.b16 %v6711, %v6707
          %v7124 = vpack.c.b16 %v6712, %v6708
          %v7125 = vpack.c.b16 %v6713, %v6709
          %v7126 = vpack.c.b16 %v6718, %v6714
          %v7127 = vpack.c.b16 %v6719, %v6715
          %v7128 = vpack.c.b16 %v6720, %v6716
          %v7129 = vpack.c.b16 %v6721, %v6717
          %v7130 = vpack.c.b16 %v6726, %v6722
          %v7131 = vpack.c.b16 %v6727, %v6723
          %v7132 = vpack.c.b16 %v6728, %v6724
          %v7133 = vpack.c.b16 %v6729, %v6725
          %v7134 = vpack.c.b16 %v6734, %v6730
          %v7135 = vpack.c.b16 %v6735, %v6731
          %v7136 = vpack.c.b16 %v6736, %v6732
          %v7137 = vpack.c.b16 %v6737, %v6733
          %v7138 = vpack.c.b16 %v6742, %v6738
          %v7139 = vpack.c.b16 %v6743, %v6739
          %v7140 = vpack.c.b16 %v6744, %v6740
          %v7141 = vpack.c.b16 %v6745, %v6741
          %v7142 = vpack.c.b16 %v6750, %v6746
          %v7143 = vpack.c.b16 %v6751, %v6747
          %v7144 = vpack.c.b16 %v6752, %v6748
          %v7145 = vpack.c.b16 %v6753, %v6749
          %v7146 = vpack.c.b16 %v6758, %v6754
          %v7147 = vpack.c.b16 %v6759, %v6755
          %v7148 = vpack.c.b16 %v6760, %v6756
          %v7149 = vpack.c.b16 %v6761, %v6757
          %v7150 = vpack.c.b16 %v6766, %v6762
          %v7151 = vpack.c.b16 %v6767, %v6763
          %v7152 = vpack.c.b16 %v6768, %v6764
          %v7153 = vpack.c.b16 %v6769, %v6765
          %v7154 = vpack.c.b16 %v6774, %v6770
          %v7155 = vpack.c.b16 %v6775, %v6771
          %v7156 = vpack.c.b16 %v6776, %v6772
          %v7157 = vpack.c.b16 %v6777, %v6773
          %v7158 = vpack.c.b16 %v6782, %v6778
          %v7159 = vpack.c.b16 %v6783, %v6779
          %v7160 = vpack.c.b16 %v6784, %v6780
          %v7161 = vpack.c.b16 %v6785, %v6781
          %v7162 = vpack.c.b16 %v6790, %v6786
          %v7163 = vpack.c.b16 %v6791, %v6787
          %v7164 = vpack.c.b16 %v6792, %v6788
          %v7165 = vpack.c.b16 %v6793, %v6789
          %v7166 = vpack.c.b16 %v6798, %v6794
          %v7167 = vpack.c.b16 %v6799, %v6795
          %v7168 = vpack.c.b16 %v6800, %v6796
          %v7169 = vpack.c.b16 %v6801, %v6797
          %v7170 = vpack.c.b16 %v6806, %v6802
          %v7171 = vpack.c.b16 %v6807, %v6803
          %v7172 = vpack.c.b16 %v6808, %v6804
          %v7173 = vpack.c.b16 %v6809, %v6805
          %v7174 = vpack.c.b16 %v6814, %v6810
          %v7175 = vpack.c.b16 %v6815, %v6811
          %v7176 = vpack.c.b16 %v6816, %v6812
          %v7177 = vpack.c.b16 %v6817, %v6813
          %v7178 = vpack.c.b16 %v6822, %v6818
          %v7179 = vpack.c.b16 %v6823, %v6819
          %v7180 = vpack.c.b16 %v6824, %v6820
          %v7181 = vpack.c.b16 %v6825, %v6821
          %v7182 = vpack.c.b16 %v6830, %v6826
          %v7183 = vpack.c.b16 %v6831, %v6827
          %v7184 = vpack.c.b16 %v6832, %v6828
          %v7185 = vpack.c.b16 %v6833, %v6829
          %v7186 = vpack.c.b16 %v6838, %v6834
          %v7187 = vpack.c.b16 %v6839, %v6835
          %v7188 = vpack.c.b16 %v6840, %v6836
          %v7189 = vpack.c.b16 %v6841, %v6837
          %v7190 = vpack.c.b16 %v6846, %v6842
          %v7191 = vpack.c.b16 %v6847, %v6843
          %v7192 = vpack.c.b16 %v6848, %v6844
          %v7193 = vpack.c.b16 %v6849, %v6845
          %v7194 = vpack.c.b16 %v6854, %v6850
          %v7195 = vpack.c.b16 %v6855, %v6851
          %v7196 = vpack.c.b16 %v6856, %v6852
          %v7197 = vpack.c.b16 %v6857, %v6853
          %v7198 = vpack.c.b16 %v6862, %v6858
          %v7199 = vpack.c.b16 %v6863, %v6859
          %v7200 = vpack.c.b16 %v6864, %v6860
          %v7201 = vpack.c.b16 %v6865, %v6861
          %v7202 = vpack.c.b16 %v6870, %v6866
          %v7203 = vpack.c.b16 %v6871, %v6867
          %v7204 = vpack.c.b16 %v6872, %v6868
          %v7205 = vpack.c.b16 %v6873, %v6869
          %v7206 = vpack.c.b16 %v6878, %v6874
          %v7207 = vpack.c.b16 %v6879, %v6875
          %v7208 = vpack.c.b16 %v6880, %v6876
          %v7209 = vpack.c.b16 %v6881, %v6877
          %v7210 = vpack.c.b16 %v6886, %v6882
          %v7211 = vpack.c.b16 %v6887, %v6883
          %v7212 = vpack.c.b16 %v6888, %v6884
          %v7213 = vpack.c.b16 %v6889, %v6885
          %v7214 = vpack.c.b16 %v6894, %v6890
          %v7215 = vpack.c.b16 %v6895, %v6891
          %v7216 = vpack.c.b16 %v6896, %v6892
          %v7217 = vpack.c.b16 %v6897, %v6893
          %v7218 = vpack.c.b16 %v6902, %v6898
          %v7219 = vpack.c.b16 %v6903, %v6899
          %v7220 = vpack.c.b16 %v6904, %v6900
          %v7221 = vpack.c.b16 %v6905, %v6901
          %v7222 = vpack.c.b16 %v6910, %v6906
          %v7223 = vpack.c.b16 %v6911, %v6907
          %v7224 = vpack.c.b16 %v6912, %v6908
          %v7225 = vpack.c.b16 %v6913, %v6909
          %v7226 = vpack.c.b16 %v6918, %v6914
          %v7227 = vpack.c.b16 %v6919, %v6915
          %v7228 = vpack.c.b16 %v6920, %v6916
          %v7229 = vpack.c.b16 %v6921, %v6917
          %v7230 = vpack.c.b16 %v6926, %v6922
          %v7231 = vpack.c.b16 %v6927, %v6923
          %v7232 = vpack.c.b16 %v6928, %v6924
          %v7233 = vpack.c.b16 %v6929, %v6925
          %v7234 = vpack.c.b16 %v6934, %v6930
          %v7235 = vpack.c.b16 %v6935, %v6931
          %v7236 = vpack.c.b16 %v6936, %v6932
          %v7237 = vpack.c.b16 %v6937, %v6933
          %v7238 = vpack.c.b16 %v6942, %v6938
          %v7239 = vpack.c.b16 %v6943, %v6939
          %v7240 = vpack.c.b16 %v6944, %v6940
          %v7241 = vpack.c.b16 %v6945, %v6941
          %v7242 = vpack.c.b16 %v6950, %v6946
          %v7243 = vpack.c.b16 %v6951, %v6947
          %v7244 = vpack.c.b16 %v6952, %v6948
          %v7245 = vpack.c.b16 %v6953, %v6949
          %v7246 = vpack.c.b16 %v6958, %v6954
          %v7247 = vpack.c.b16 %v6959, %v6955
          %v7248 = vpack.c.b16 %v6960, %v6956
          %v7249 = vpack.c.b16 %v6961, %v6957
          %v7250 = vpack.c.b16 %v6966, %v6962
          %v7251 = vpack.c.b16 %v6967, %v6963
          %v7252 = vpack.c.b16 %v6968, %v6964
          %v7253 = vpack.c.b16 %v6969, %v6965
          %v7254 = vpack.c.b16 %v6974, %v6970
          %v7255 = vpack.c.b16 %v6975, %v6971
          %v7256 = vpack.c.b16 %v6976, %v6972
          %v7257 = vpack.c.b16 %v6977, %v6973
          %v7258 = vpack.c.b16 %v6982, %v6978
          %v7259 = vpack.c.b16 %v6983, %v6979
          %v7260 = vpack.c.b16 %v6984, %v6980
          %v7261 = vpack.c.b16 %v6985, %v6981
          %v7262 = vpack.c.b16 %v6990, %v6986
          %v7263 = vpack.c.b16 %v6991, %v6987
          %v7264 = vpack.c.b16 %v6992, %v6988
          %v7265 = vpack.c.b16 %v6993, %v6989
          %v7266 = vpack.c.b16 %v6998, %v6994
          %v7267 = vpack.c.b16 %v6999, %v6995
          %v7268 = vpack.c.b16 %v7000, %v6996
          %v7269 = vpack.c.b16 %v7001, %v6997
          %v7270 = vpack.c.b16 %v7006, %v7002
          %v7271 = vpack.c.b16 %v7007, %v7003
          %v7272 = vpack.c.b16 %v7008, %v7004
          %v7273 = vpack.c.b16 %v7009, %v7005
          %v7274 = vpack.c.b16 %v7014, %v7010
          %v7275 = vpack.c.b16 %v7015, %v7011
          %v7276 = vpack.c.b16 %v7016, %v7012
          %v7277 = vpack.c.b16 %v7017, %v7013
          %v7278 = vpack.c.b16 %v7022, %v7018
          %v7279 = vpack.c.b16 %v7023, %v7019
          %v7280 = vpack.c.b16 %v7024, %v7020
          %v7281 = vpack.c.b16 %v7025, %v7021
          %7538 = vmatprep.subr.bf16.mxu0 %v7055
          %7539 = vmatpush1.bf16.msra.mxu0 %v7054
          %7540 = vmatprep.subr.bf16.mxu0 %v7051
          %7541 = vmatpush1.bf16.msra.mxu0 %v7050
          %7542 = vmatprep.subr.bf16.mxu0 %v7047
          %7543 = vmatpush1.bf16.msra.mxu0 %v7046
          %7544 = vmatprep.subr.bf16.mxu0 %v7043
          %7545 = vmatpush1.bf16.msra.mxu0 %v7042
          %7546 = vmatprep.subr.bf16.mxu0 %v7039
          %7547 = vmatpush1.bf16.msra.mxu0 %v7038
          %7548 = vmatprep.subr.bf16.mxu0 %v7035
          %7549 = vmatpush1.bf16.msra.mxu0 %v7034
          %7550 = vmatprep.subr.bf16.mxu0 %v7031
          %7551 = vmatpush1.bf16.msra.mxu0 %v7030
          %7552 = vmatprep.subr.bf16.mxu0 %v7027
          %7553 = vmatpush1.bf16.msra.mxu0 %v7026
          %7554 = vmatprep.subr.bf16.mxu0 %v7087
          %7555 = vmatpush2.bf16.msra.mxu0 %v7086
          %7556 = vmatprep.subr.bf16.mxu0 %v7083
          %7557 = vmatpush2.bf16.msra.mxu0 %v7082
          %7558 = vmatprep.subr.bf16.mxu0 %v7079
          %7559 = vmatpush2.bf16.msra.mxu0 %v7078
          %7560 = vmatprep.subr.bf16.mxu0 %v7075
          %7561 = vmatpush2.bf16.msra.mxu0 %v7074
          %7562 = vmatprep.subr.bf16.mxu0 %v7071
          %7563 = vmatpush2.bf16.msra.mxu0 %v7070
          %7564 = vmatprep.subr.bf16.mxu0 %v7067
          %7565 = vmatpush2.bf16.msra.mxu0 %v7066
          %7566 = vmatprep.subr.bf16.mxu0 %v7063
          %7567 = vmatpush2.bf16.msra.mxu0 %v7062
          %7568 = vmatprep.subr.bf16.mxu0 %v7059
          %7569 = vmatpush2.bf16.msra.mxu0 %v7058
          %7570 = vmatprep.mubr.bf16.mxu0 %v6231
          %7571 = vmatmul.mubr.bf16.gmra.mxu0 %v6223
          %v7572 = vpop.f32.mrf.mxu0
          %v7573 = vadd.f32 %v6197, %v7572
          %v7574 = vpop.f32.mrf.mxu0
          %v7575 = vadd.f32 %v6201, %v7574
          %v7576 = vpop.f32.mrf.mxu0
          %v7577 = vpop.f32.mrf.mxu0
          %7578 = vdwg.mxu0
          %7579 = vmatprep.subr.bf16.mxu0 %v7119
          %7580 = vmatpush1.bf16.msra.mxu0 %v7118
          %7581 = vmatprep.subr.bf16.mxu0 %v7115
          %7582 = vmatpush1.bf16.msra.mxu0 %v7114
          %7583 = vmatprep.subr.bf16.mxu0 %v7111
          %7584 = vmatpush1.bf16.msra.mxu0 %v7110
          %7585 = vmatprep.subr.bf16.mxu0 %v7107
          %7586 = vmatpush1.bf16.msra.mxu0 %v7106
          %7587 = vmatprep.subr.bf16.mxu0 %v7103
          %7588 = vmatpush1.bf16.msra.mxu0 %v7102
          %7589 = vmatprep.subr.bf16.mxu0 %v7099
          %7590 = vmatpush1.bf16.msra.mxu0 %v7098
          %7591 = vmatprep.subr.bf16.mxu0 %v7095
          %7592 = vmatpush1.bf16.msra.mxu0 %v7094
          %7593 = vmatprep.subr.bf16.mxu0 %v7091
          %7594 = vmatpush1.bf16.msra.mxu0 %v7090
          %7595 = vmatprep.subr.bf16.mxu0 %v7151
          %7596 = vmatpush2.bf16.msra.mxu0 %v7150
          %7597 = vmatprep.subr.bf16.mxu0 %v7147
          %7598 = vmatpush2.bf16.msra.mxu0 %v7146
          %7599 = vmatprep.subr.bf16.mxu0 %v7143
          %7600 = vmatpush2.bf16.msra.mxu0 %v7142
          %7601 = vmatprep.subr.bf16.mxu0 %v7139
          %7602 = vmatpush2.bf16.msra.mxu0 %v7138
          %7603 = vmatprep.subr.bf16.mxu0 %v7135
          %7604 = vmatpush2.bf16.msra.mxu0 %v7134
          %7605 = vmatprep.subr.bf16.mxu0 %v7131
          %7606 = vmatpush2.bf16.msra.mxu0 %v7130
          %7607 = vmatprep.subr.bf16.mxu0 %v7127
          %7608 = vmatpush2.bf16.msra.mxu0 %v7126
          %7609 = vmatprep.subr.bf16.mxu0 %v7123
          %7610 = vmatpush2.bf16.msra.mxu0 %v7122
          %7611 = vmatprep.mubr.bf16.mxu0 %v6232
          %7612 = vmatmul.mubr.bf16.gmra.mxu0 %v6230
          %v7613 = vpop.f32.mrf.mxu0
          %v7614 = vadd.f32 %v7573, %v7613
          %v7615 = vpop.f32.mrf.mxu0
          %v7616 = vadd.f32 %v7575, %v7615
          %v7617 = vpop.f32.mrf.mxu0
          %v7618 = vpop.f32.mrf.mxu0
          %7619 = vdwg.mxu0
          %7620 = vmatprep.subr.bf16.mxu0 %v7183
          %7621 = vmatpush1.bf16.msra.mxu0 %v7182
          %7622 = vmatprep.subr.bf16.mxu0 %v7179
          %7623 = vmatpush1.bf16.msra.mxu0 %v7178
          %7624 = vmatprep.subr.bf16.mxu0 %v7175
          %7625 = vmatpush1.bf16.msra.mxu0 %v7174
          %7626 = vmatprep.subr.bf16.mxu0 %v7171
          %7627 = vmatpush1.bf16.msra.mxu0 %v7170
          %7628 = vmatprep.subr.bf16.mxu0 %v7167
          %7629 = vmatpush1.bf16.msra.mxu0 %v7166
          %7630 = vmatprep.subr.bf16.mxu0 %v7163
          %7631 = vmatpush1.bf16.msra.mxu0 %v7162
          %7632 = vmatprep.subr.bf16.mxu0 %v7159
          %7633 = vmatpush1.bf16.msra.mxu0 %v7158
          %7634 = vmatprep.subr.bf16.mxu0 %v7155
          %7635 = vmatpush1.bf16.msra.mxu0 %v7154
          %7636 = vmatprep.subr.bf16.mxu0 %v7215
          %7637 = vmatpush2.bf16.msra.mxu0 %v7214
          %7638 = vmatprep.subr.bf16.mxu0 %v7211
          %7639 = vmatpush2.bf16.msra.mxu0 %v7210
          %7640 = vmatprep.subr.bf16.mxu0 %v7207
          %7641 = vmatpush2.bf16.msra.mxu0 %v7206
          %7642 = vmatprep.subr.bf16.mxu0 %v7203
          %7643 = vmatpush2.bf16.msra.mxu0 %v7202
          %7644 = vmatprep.subr.bf16.mxu0 %v7199
          %7645 = vmatpush2.bf16.msra.mxu0 %v7198
          %7646 = vmatprep.subr.bf16.mxu0 %v7195
          %7647 = vmatpush2.bf16.msra.mxu0 %v7194
          %7648 = vmatprep.subr.bf16.mxu0 %v7191
          %7649 = vmatpush2.bf16.msra.mxu0 %v7190
          %7650 = vmatprep.subr.bf16.mxu0 %v7187
          %7651 = vmatpush2.bf16.msra.mxu0 %v7186
          %7652 = vmatprep.mubr.bf16.mxu0 %v6248
          %7653 = vmatmul.mubr.bf16.gmra.mxu0 %v6240
          %v7654 = vpop.f32.mrf.mxu0
          %v7655 = vadd.f32 %v7614, %v7654
          %v7656 = vpop.f32.mrf.mxu0
          %v7657 = vadd.f32 %v7616, %v7656
          %v7658 = vpop.f32.mrf.mxu0
          %v7659 = vpop.f32.mrf.mxu0
          %7660 = vdwg.mxu0
          %7661 = vmatprep.subr.bf16.mxu0 %v7247
          %7662 = vmatpush1.bf16.msra.mxu0 %v7246
          %7663 = vmatprep.subr.bf16.mxu0 %v7243
          %7664 = vmatpush1.bf16.msra.mxu0 %v7242
          %7665 = vmatprep.subr.bf16.mxu0 %v7239
          %7666 = vmatpush1.bf16.msra.mxu0 %v7238
          %7667 = vmatprep.subr.bf16.mxu0 %v7235
          %7668 = vmatpush1.bf16.msra.mxu0 %v7234
          %7669 = vmatprep.subr.bf16.mxu0 %v7231
          %7670 = vmatpush1.bf16.msra.mxu0 %v7230
          %7671 = vmatprep.subr.bf16.mxu0 %v7227
          %7672 = vmatpush1.bf16.msra.mxu0 %v7226
          %7673 = vmatprep.subr.bf16.mxu0 %v7223
          %7674 = vmatpush1.bf16.msra.mxu0 %v7222
          %7675 = vmatprep.subr.bf16.mxu0 %v7219
          %7676 = vmatpush1.bf16.msra.mxu0 %v7218
          %7677 = vmatprep.subr.bf16.mxu0 %v7279
          %7678 = vmatpush2.bf16.msra.mxu0 %v7278
          %7679 = vmatprep.subr.bf16.mxu0 %v7275
          %7680 = vmatpush2.bf16.msra.mxu0 %v7274
          %7681 = vmatprep.subr.bf16.mxu0 %v7271
          %7682 = vmatpush2.bf16.msra.mxu0 %v7270
          %7683 = vmatprep.subr.bf16.mxu0 %v7267
          %7684 = vmatpush2.bf16.msra.mxu0 %v7266
          %7685 = vmatprep.subr.bf16.mxu0 %v7263
          %7686 = vmatpush2.bf16.msra.mxu0 %v7262
          %7687 = vmatprep.subr.bf16.mxu0 %v7259
          %7688 = vmatpush2.bf16.msra.mxu0 %v7258
          %7689 = vmatprep.subr.bf16.mxu0 %v7255
          %7690 = vmatpush2.bf16.msra.mxu0 %v7254
          %7691 = vmatprep.subr.bf16.mxu0 %v7251
          %7692 = vmatpush2.bf16.msra.mxu0 %v7250
          %7693 = vmatprep.mubr.bf16.mxu0 %v6249
          %7694 = vmatmul.mubr.bf16.gmra.mxu0 %v6247
          %v7695 = vpop.f32.mrf.mxu0
          %v7696 = vadd.f32 %v7655, %v7695
          %v7697 = vpop.f32.mrf.mxu0
          %v7698 = vadd.f32 %v7657, %v7697
          %v7699 = vpop.f32.mrf.mxu0
          %v7700 = vpop.f32.mrf.mxu0
          %7701 = vdwg.mxu0
          %7702 = vmatprep.subr.bf16.mxu0 %v7057
          %7703 = vmatpush1.bf16.msra.mxu0 %v7056
          %7704 = vmatprep.subr.bf16.mxu0 %v7053
          %7705 = vmatpush1.bf16.msra.mxu0 %v7052
          %7706 = vmatprep.subr.bf16.mxu0 %v7049
          %7707 = vmatpush1.bf16.msra.mxu0 %v7048
          %7708 = vmatprep.subr.bf16.mxu0 %v7045
          %7709 = vmatpush1.bf16.msra.mxu0 %v7044
          %7710 = vmatprep.subr.bf16.mxu0 %v7041
          %7711 = vmatpush1.bf16.msra.mxu0 %v7040
          %7712 = vmatprep.subr.bf16.mxu0 %v7037
          %7713 = vmatpush1.bf16.msra.mxu0 %v7036
          %7714 = vmatprep.subr.bf16.mxu0 %v7033
          %7715 = vmatpush1.bf16.msra.mxu0 %v7032
          %7716 = vmatprep.subr.bf16.mxu0 %v7029
          %7717 = vmatpush1.bf16.msra.mxu0 %v7028
          %7718 = vmatprep.subr.bf16.mxu0 %v7089
          %7719 = vmatpush2.bf16.msra.mxu0 %v7088
          %7720 = vmatprep.subr.bf16.mxu0 %v7085
          %7721 = vmatpush2.bf16.msra.mxu0 %v7084
          %7722 = vmatprep.subr.bf16.mxu0 %v7081
          %7723 = vmatpush2.bf16.msra.mxu0 %v7080
          %7724 = vmatprep.subr.bf16.mxu0 %v7077
          %7725 = vmatpush2.bf16.msra.mxu0 %v7076
          %7726 = vmatprep.subr.bf16.mxu0 %v7073
          %7727 = vmatpush2.bf16.msra.mxu0 %v7072
          %7728 = vmatprep.subr.bf16.mxu0 %v7069
          %7729 = vmatpush2.bf16.msra.mxu0 %v7068
          %7730 = vmatprep.subr.bf16.mxu0 %v7065
          %7731 = vmatpush2.bf16.msra.mxu0 %v7064
          %7732 = vmatprep.subr.bf16.mxu0 %v7061
          %7733 = vmatpush2.bf16.msra.mxu0 %v7060
          %7734 = vmatprep.mubr.bf16.mxu0 %v6231
          %7735 = vmatmul.mubr.bf16.gmra.mxu0 %v6223
          %v7736 = vpop.f32.mrf.mxu0
          %v7737 = vadd.f32 %v6205, %v7736
          %v7738 = vpop.f32.mrf.mxu0
          %v7739 = vadd.f32 %v6209, %v7738
          %v7740 = vpop.f32.mrf.mxu0
          %v7741 = vpop.f32.mrf.mxu0
          %7742 = vdwg.mxu0
          %7743 = vmatprep.subr.bf16.mxu0 %v7121
          %7744 = vmatpush1.bf16.msra.mxu0 %v7120
          %7745 = vmatprep.subr.bf16.mxu0 %v7117
          %7746 = vmatpush1.bf16.msra.mxu0 %v7116
          %7747 = vmatprep.subr.bf16.mxu0 %v7113
          %7748 = vmatpush1.bf16.msra.mxu0 %v7112
          %7749 = vmatprep.subr.bf16.mxu0 %v7109
          %7750 = vmatpush1.bf16.msra.mxu0 %v7108
          %7751 = vmatprep.subr.bf16.mxu0 %v7105
          %7752 = vmatpush1.bf16.msra.mxu0 %v7104
          %7753 = vmatprep.subr.bf16.mxu0 %v7101
          %7754 = vmatpush1.bf16.msra.mxu0 %v7100
          %7755 = vmatprep.subr.bf16.mxu0 %v7097
          %7756 = vmatpush1.bf16.msra.mxu0 %v7096
          %7757 = vmatprep.subr.bf16.mxu0 %v7093
          %7758 = vmatpush1.bf16.msra.mxu0 %v7092
          %7759 = vmatprep.subr.bf16.mxu0 %v7153
          %7760 = vmatpush2.bf16.msra.mxu0 %v7152
          %7761 = vmatprep.subr.bf16.mxu0 %v7149
          %7762 = vmatpush2.bf16.msra.mxu0 %v7148
          %7763 = vmatprep.subr.bf16.mxu0 %v7145
          %7764 = vmatpush2.bf16.msra.mxu0 %v7144
          %7765 = vmatprep.subr.bf16.mxu0 %v7141
          %7766 = vmatpush2.bf16.msra.mxu0 %v7140
          %7767 = vmatprep.subr.bf16.mxu0 %v7137
          %7768 = vmatpush2.bf16.msra.mxu0 %v7136
          %7769 = vmatprep.subr.bf16.mxu0 %v7133
          %7770 = vmatpush2.bf16.msra.mxu0 %v7132
          %7771 = vmatprep.subr.bf16.mxu0 %v7129
          %7772 = vmatpush2.bf16.msra.mxu0 %v7128
          %7773 = vmatprep.subr.bf16.mxu0 %v7125
          %7774 = vmatpush2.bf16.msra.mxu0 %v7124
          %7775 = vmatprep.mubr.bf16.mxu0 %v6232
          %7776 = vmatmul.mubr.bf16.gmra.mxu0 %v6230
          %v7777 = vpop.f32.mrf.mxu0
          %v7778 = vadd.f32 %v7737, %v7777
          %v7779 = vpop.f32.mrf.mxu0
          %v7780 = vadd.f32 %v7739, %v7779
          %v7781 = vpop.f32.mrf.mxu0
          %v7782 = vpop.f32.mrf.mxu0
          %7783 = vdwg.mxu0
          %7784 = vmatprep.subr.bf16.mxu0 %v7185
          %7785 = vmatpush1.bf16.msra.mxu0 %v7184
          %7786 = vmatprep.subr.bf16.mxu0 %v7181
          %7787 = vmatpush1.bf16.msra.mxu0 %v7180
          %7788 = vmatprep.subr.bf16.mxu0 %v7177
          %7789 = vmatpush1.bf16.msra.mxu0 %v7176
          %7790 = vmatprep.subr.bf16.mxu0 %v7173
          %7791 = vmatpush1.bf16.msra.mxu0 %v7172
          %7792 = vmatprep.subr.bf16.mxu0 %v7169
          %7793 = vmatpush1.bf16.msra.mxu0 %v7168
          %7794 = vmatprep.subr.bf16.mxu0 %v7165
          %7795 = vmatpush1.bf16.msra.mxu0 %v7164
          %7796 = vmatprep.subr.bf16.mxu0 %v7161
          %7797 = vmatpush1.bf16.msra.mxu0 %v7160
          %7798 = vmatprep.subr.bf16.mxu0 %v7157
          %7799 = vmatpush1.bf16.msra.mxu0 %v7156
          %7800 = vmatprep.subr.bf16.mxu0 %v7217
          %7801 = vmatpush2.bf16.msra.mxu0 %v7216
          %7802 = vmatprep.subr.bf16.mxu0 %v7213
          %7803 = vmatpush2.bf16.msra.mxu0 %v7212
          %7804 = vmatprep.subr.bf16.mxu0 %v7209
          %7805 = vmatpush2.bf16.msra.mxu0 %v7208
          %7806 = vmatprep.subr.bf16.mxu0 %v7205
          %7807 = vmatpush2.bf16.msra.mxu0 %v7204
          %7808 = vmatprep.subr.bf16.mxu0 %v7201
          %7809 = vmatpush2.bf16.msra.mxu0 %v7200
          %7810 = vmatprep.subr.bf16.mxu0 %v7197
          %7811 = vmatpush2.bf16.msra.mxu0 %v7196
          %7812 = vmatprep.subr.bf16.mxu0 %v7193
          %7813 = vmatpush2.bf16.msra.mxu0 %v7192
          %7814 = vmatprep.subr.bf16.mxu0 %v7189
          %7815 = vmatpush2.bf16.msra.mxu0 %v7188
          %7816 = vmatprep.mubr.bf16.mxu0 %v6248
          %7817 = vmatmul.mubr.bf16.gmra.mxu0 %v6240
          %v7818 = vpop.f32.mrf.mxu0
          %v7819 = vadd.f32 %v7778, %v7818
          %v7820 = vpop.f32.mrf.mxu0
          %v7821 = vadd.f32 %v7780, %v7820
          %v7822 = vpop.f32.mrf.mxu0
          %v7823 = vpop.f32.mrf.mxu0
          %7824 = vdwg.mxu0
          %7825 = vmatprep.subr.bf16.mxu0 %v7249
          %7826 = vmatpush1.bf16.msra.mxu0 %v7248
          %7827 = vmatprep.subr.bf16.mxu0 %v7245
          %7828 = vmatpush1.bf16.msra.mxu0 %v7244
          %7829 = vmatprep.subr.bf16.mxu0 %v7241
          %7830 = vmatpush1.bf16.msra.mxu0 %v7240
          %7831 = vmatprep.subr.bf16.mxu0 %v7237
          %7832 = vmatpush1.bf16.msra.mxu0 %v7236
          %7833 = vmatprep.subr.bf16.mxu0 %v7233
          %7834 = vmatpush1.bf16.msra.mxu0 %v7232
          %7835 = vmatprep.subr.bf16.mxu0 %v7229
          %7836 = vmatpush1.bf16.msra.mxu0 %v7228
          %7837 = vmatprep.subr.bf16.mxu0 %v7225
          %7838 = vmatpush1.bf16.msra.mxu0 %v7224
          %7839 = vmatprep.subr.bf16.mxu0 %v7221
          %7840 = vmatpush1.bf16.msra.mxu0 %v7220
          %7841 = vmatprep.subr.bf16.mxu0 %v7281
          %7842 = vmatpush2.bf16.msra.mxu0 %v7280
          %7843 = vmatprep.subr.bf16.mxu0 %v7277
          %7844 = vmatpush2.bf16.msra.mxu0 %v7276
          %7845 = vmatprep.subr.bf16.mxu0 %v7273
          %7846 = vmatpush2.bf16.msra.mxu0 %v7272
          %7847 = vmatprep.subr.bf16.mxu0 %v7269
          %7848 = vmatpush2.bf16.msra.mxu0 %v7268
          %7849 = vmatprep.subr.bf16.mxu0 %v7265
          %7850 = vmatpush2.bf16.msra.mxu0 %v7264
          %7851 = vmatprep.subr.bf16.mxu0 %v7261
          %7852 = vmatpush2.bf16.msra.mxu0 %v7260
          %7853 = vmatprep.subr.bf16.mxu0 %v7257
          %7854 = vmatpush2.bf16.msra.mxu0 %v7256
          %7855 = vmatprep.subr.bf16.mxu0 %v7253
          %7856 = vmatpush2.bf16.msra.mxu0 %v7252
          %7857 = vmatprep.mubr.bf16.mxu0 %v6249
          %7858 = vmatmul.mubr.bf16.gmra.mxu0 %v6247
          %v7859 = vpop.f32.mrf.mxu0
          %v7860 = vadd.f32 %v7819, %v7859
          %v7861 = vpop.f32.mrf.mxu0
          %v7862 = vadd.f32 %v7821, %v7861
          %v7863 = vpop.f32.mrf.mxu0
          %v7864 = vpop.f32.mrf.mxu0
          %7865 = vdwg.mxu0
          %v7866 = vmax.f32 %v7696, 0.0
          %v7867 = vmax.f32 %v7698, 0.0
          %v7868 = vmax.f32 %v7860, 0.0
          %v7869 = vmax.f32 %v7862, 0.0
          %v7870 = vpack.c.bf16 %v7866, %v7866
          %v7871 = vpack.c.bf16 %v7867, %v7867
          %v7872 = vpack.c.bf16 %v7868, %v7868
          %v7873 = vpack.c.bf16 %v7869, %v7869
          %v7874 = vld [vmem:[#allocation15] sm:$0xff]
          %v7875 = vld [vmem:[#allocation15 + $0x8] sm:$0xff]
          %v7876 = vld [vmem:[#allocation15 + $0x10] sm:$0xff]
          %v7877 = vld [vmem:[#allocation15 + $0x18] sm:$0xff]
          %v7878 = vld [vmem:[#allocation15 + $0x20] sm:$0xff]
          %v7879 = vld [vmem:[#allocation15 + $0x28] sm:$0xff]
          %v7880 = vld [vmem:[#allocation15 + $0x30] sm:$0xff]
          %v7881 = vld [vmem:[#allocation15 + $0x38] sm:$0xff]
          %v7882 = vld [vmem:[#allocation15 + $0x40] sm:$0xff]
          %v7883 = vld [vmem:[#allocation15 + $0x48] sm:$0xff]
          %v7884 = vld [vmem:[#allocation15 + $0x50] sm:$0xff]
          %v7885 = vld [vmem:[#allocation15 + $0x58] sm:$0xff]
          %v7886 = vld [vmem:[#allocation15 + $0x60] sm:$0xff]
          %v7887 = vld [vmem:[#allocation15 + $0x68] sm:$0xff]
          %v7888 = vld [vmem:[#allocation15 + $0x70] sm:$0xff]
          %v7889 = vld [vmem:[#allocation15 + $0x78] sm:$0xff]
          %v7890 = vld [vmem:[#allocation15 + $0x80] sm:$0xff]
          %v7891 = vld [vmem:[#allocation15 + $0x88] sm:$0xff]
          %v7892 = vld [vmem:[#allocation15 + $0x90] sm:$0xff]
          %v7893 = vld [vmem:[#allocation15 + $0x98] sm:$0xff]
          %v7894 = vld [vmem:[#allocation15 + $0xa0] sm:$0xff]
          %v7895 = vld [vmem:[#allocation15 + $0xa8] sm:$0xff]
          %v7896 = vld [vmem:[#allocation15 + $0xb0] sm:$0xff]
          %v7897 = vld [vmem:[#allocation15 + $0xb8] sm:$0xff]
          %v7898 = vld [vmem:[#allocation15 + $0xc0] sm:$0xff]
          %v7899 = vld [vmem:[#allocation15 + $0xc8] sm:$0xff]
          %v7900 = vld [vmem:[#allocation15 + $0xd0] sm:$0xff]
          %v7901 = vld [vmem:[#allocation15 + $0xd8] sm:$0xff]
          %v7902 = vld [vmem:[#allocation15 + $0xe0] sm:$0xff]
          %v7903 = vld [vmem:[#allocation15 + $0xe8] sm:$0xff]
          %v7904 = vld [vmem:[#allocation15 + $0xf0] sm:$0xff]
          %v7905 = vld [vmem:[#allocation15 + $0xf8] sm:$0xff]
          %v7906 = vld [vmem:[#allocation15 + $0x100] sm:$0xff]
          %v7907 = vld [vmem:[#allocation15 + $0x108] sm:$0xff]
          %v7908 = vld [vmem:[#allocation15 + $0x110] sm:$0xff]
          %v7909 = vld [vmem:[#allocation15 + $0x118] sm:$0xff]
          %v7910 = vld [vmem:[#allocation15 + $0x120] sm:$0xff]
          %v7911 = vld [vmem:[#allocation15 + $0x128] sm:$0xff]
          %v7912 = vld [vmem:[#allocation15 + $0x130] sm:$0xff]
          %v7913 = vld [vmem:[#allocation15 + $0x138] sm:$0xff]
          %v7914 = vld [vmem:[#allocation15 + $0x140] sm:$0xff]
          %v7915 = vld [vmem:[#allocation15 + $0x148] sm:$0xff]
          %v7916 = vld [vmem:[#allocation15 + $0x150] sm:$0xff]
          %v7917 = vld [vmem:[#allocation15 + $0x158] sm:$0xff]
          %v7918 = vld [vmem:[#allocation15 + $0x160] sm:$0xff]
          %v7919 = vld [vmem:[#allocation15 + $0x168] sm:$0xff]
          %v7920 = vld [vmem:[#allocation15 + $0x170] sm:$0xff]
          %v7921 = vld [vmem:[#allocation15 + $0x178] sm:$0xff]
          %v7922 = vld [vmem:[#allocation15 + $0x180] sm:$0xff]
          %v7923 = vld [vmem:[#allocation15 + $0x188] sm:$0xff]
          %v7924 = vld [vmem:[#allocation15 + $0x190] sm:$0xff]
          %v7925 = vld [vmem:[#allocation15 + $0x198] sm:$0xff]
          %v7926 = vld [vmem:[#allocation15 + $0x1a0] sm:$0xff]
          %v7927 = vld [vmem:[#allocation15 + $0x1a8] sm:$0xff]
          %v7928 = vld [vmem:[#allocation15 + $0x1b0] sm:$0xff]
          %v7929 = vld [vmem:[#allocation15 + $0x1b8] sm:$0xff]
          %v7930 = vld [vmem:[#allocation15 + $0x1c0] sm:$0xff]
          %v7931 = vld [vmem:[#allocation15 + $0x1c8] sm:$0xff]
          %v7932 = vld [vmem:[#allocation15 + $0x1d0] sm:$0xff]
          %v7933 = vld [vmem:[#allocation15 + $0x1d8] sm:$0xff]
          %v7934 = vld [vmem:[#allocation15 + $0x1e0] sm:$0xff]
          %v7935 = vld [vmem:[#allocation15 + $0x1e8] sm:$0xff]
          %v7936 = vld [vmem:[#allocation15 + $0x1f0] sm:$0xff]
          %v7937 = vld [vmem:[#allocation15 + $0x1f8] sm:$0xff]
          %v7938 = vld [vmem:[%s10] sm:$0x3]
          %v7940 = vlaneseq
          %v7941 = vshrl.u32 %v7940, 7
          %v7942 = vsub.s32 0, %v7941
          %v7943 = vrot.slane %v7938, %v7942
          %v7944 = vlaneseq
          %v7945 = vshrl.u32 %v7944, 7
          %v7946 = vsub.s32 1, %v7945
          %v7947 = vrot.slane %v7938, %v7946
          %v8014 = vunpack.c.l.b16 %v7874
          %v8015 = vunpack.c.h.b16 %v7874
          %v8016 = vunpack.c.l.b16 %v7875
          %v8017 = vunpack.c.h.b16 %v7875
          %v8018 = vunpack.c.l.b16 %v7876
          %v8019 = vunpack.c.h.b16 %v7876
          %v8020 = vunpack.c.l.b16 %v7877
          %v8021 = vunpack.c.h.b16 %v7877
          %v8022 = vunpack.c.l.b16 %v7878
          %v8023 = vunpack.c.h.b16 %v7878
          %v8024 = vunpack.c.l.b16 %v7879
          %v8025 = vunpack.c.h.b16 %v7879
          %v8026 = vunpack.c.l.b16 %v7880
          %v8027 = vunpack.c.h.b16 %v7880
          %v8028 = vunpack.c.l.b16 %v7881
          %v8029 = vunpack.c.h.b16 %v7881
          %v8030 = vunpack.c.l.b16 %v7882
          %v8031 = vunpack.c.h.b16 %v7882
          %v8032 = vunpack.c.l.b16 %v7883
          %v8033 = vunpack.c.h.b16 %v7883
          %v8034 = vunpack.c.l.b16 %v7884
          %v8035 = vunpack.c.h.b16 %v7884
          %v8036 = vunpack.c.l.b16 %v7885
          %v8037 = vunpack.c.h.b16 %v7885
          %v8038 = vunpack.c.l.b16 %v7886
          %v8039 = vunpack.c.h.b16 %v7886
          %v8040 = vunpack.c.l.b16 %v7887
          %v8041 = vunpack.c.h.b16 %v7887
          %v8042 = vunpack.c.l.b16 %v7888
          %v8043 = vunpack.c.h.b16 %v7888
          %v8044 = vunpack.c.l.b16 %v7889
          %v8045 = vunpack.c.h.b16 %v7889
          %v8046 = vunpack.c.l.b16 %v7890
          %v8047 = vunpack.c.h.b16 %v7890
          %v8048 = vunpack.c.l.b16 %v7891
          %v8049 = vunpack.c.h.b16 %v7891
          %v8050 = vunpack.c.l.b16 %v7892
          %v8051 = vunpack.c.h.b16 %v7892
          %v8052 = vunpack.c.l.b16 %v7893
          %v8053 = vunpack.c.h.b16 %v7893
          %v8054 = vunpack.c.l.b16 %v7894
          %v8055 = vunpack.c.h.b16 %v7894
          %v8056 = vunpack.c.l.b16 %v7895
          %v8057 = vunpack.c.h.b16 %v7895
          %v8058 = vunpack.c.l.b16 %v7896
          %v8059 = vunpack.c.h.b16 %v7896
          %v8060 = vunpack.c.l.b16 %v7897
          %v8061 = vunpack.c.h.b16 %v7897
          %v8062 = vunpack.c.l.b16 %v7898
          %v8063 = vunpack.c.h.b16 %v7898
          %v8064 = vunpack.c.l.b16 %v7899
          %v8065 = vunpack.c.h.b16 %v7899
          %v8066 = vunpack.c.l.b16 %v7900
          %v8067 = vunpack.c.h.b16 %v7900
          %v8068 = vunpack.c.l.b16 %v7901
          %v8069 = vunpack.c.h.b16 %v7901
          %v8070 = vunpack.c.l.b16 %v7902
          %v8071 = vunpack.c.h.b16 %v7902
          %v8072 = vunpack.c.l.b16 %v7903
          %v8073 = vunpack.c.h.b16 %v7903
          %v8074 = vunpack.c.l.b16 %v7904
          %v8075 = vunpack.c.h.b16 %v7904
          %v8076 = vunpack.c.l.b16 %v7905
          %v8077 = vunpack.c.h.b16 %v7905
          %v8078 = vunpack.c.l.b16 %v7906
          %v8079 = vunpack.c.h.b16 %v7906
          %v8080 = vunpack.c.l.b16 %v7907
          %v8081 = vunpack.c.h.b16 %v7907
          %v8082 = vunpack.c.l.b16 %v7908
          %v8083 = vunpack.c.h.b16 %v7908
          %v8084 = vunpack.c.l.b16 %v7909
          %v8085 = vunpack.c.h.b16 %v7909
          %v8086 = vunpack.c.l.b16 %v7910
          %v8087 = vunpack.c.h.b16 %v7910
          %v8088 = vunpack.c.l.b16 %v7911
          %v8089 = vunpack.c.h.b16 %v7911
          %v8090 = vunpack.c.l.b16 %v7912
          %v8091 = vunpack.c.h.b16 %v7912
          %v8092 = vunpack.c.l.b16 %v7913
          %v8093 = vunpack.c.h.b16 %v7913
          %v8094 = vunpack.c.l.b16 %v7914
          %v8095 = vunpack.c.h.b16 %v7914
          %v8096 = vunpack.c.l.b16 %v7915
          %v8097 = vunpack.c.h.b16 %v7915
          %v8098 = vunpack.c.l.b16 %v7916
          %v8099 = vunpack.c.h.b16 %v7916
          %v8100 = vunpack.c.l.b16 %v7917
          %v8101 = vunpack.c.h.b16 %v7917
          %v8102 = vunpack.c.l.b16 %v7918
          %v8103 = vunpack.c.h.b16 %v7918
          %v8104 = vunpack.c.l.b16 %v7919
          %v8105 = vunpack.c.h.b16 %v7919
          %v8106 = vunpack.c.l.b16 %v7920
          %v8107 = vunpack.c.h.b16 %v7920
          %v8108 = vunpack.c.l.b16 %v7921
          %v8109 = vunpack.c.h.b16 %v7921
          %v8110 = vunpack.c.l.b16 %v7922
          %v8111 = vunpack.c.h.b16 %v7922
          %v8112 = vunpack.c.l.b16 %v7923
          %v8113 = vunpack.c.h.b16 %v7923
          %v8114 = vunpack.c.l.b16 %v7924
          %v8115 = vunpack.c.h.b16 %v7924
          %v8116 = vunpack.c.l.b16 %v7925
          %v8117 = vunpack.c.h.b16 %v7925
          %v8118 = vunpack.c.l.b16 %v7926
          %v8119 = vunpack.c.h.b16 %v7926
          %v8120 = vunpack.c.l.b16 %v7927
          %v8121 = vunpack.c.h.b16 %v7927
          %v8122 = vunpack.c.l.b16 %v7928
          %v8123 = vunpack.c.h.b16 %v7928
          %v8124 = vunpack.c.l.b16 %v7929
          %v8125 = vunpack.c.h.b16 %v7929
          %v8126 = vunpack.c.l.b16 %v7930
          %v8127 = vunpack.c.h.b16 %v7930
          %v8128 = vunpack.c.l.b16 %v7931
          %v8129 = vunpack.c.h.b16 %v7931
          %v8130 = vunpack.c.l.b16 %v7932
          %v8131 = vunpack.c.h.b16 %v7932
          %v8132 = vunpack.c.l.b16 %v7933
          %v8133 = vunpack.c.h.b16 %v7933
          %v8134 = vunpack.c.l.b16 %v7934
          %v8135 = vunpack.c.h.b16 %v7934
          %v8136 = vunpack.c.l.b16 %v7935
          %v8137 = vunpack.c.h.b16 %v7935
          %v8138 = vunpack.c.l.b16 %v7936
          %v8139 = vunpack.c.h.b16 %v7936
          %v8140 = vunpack.c.l.b16 %v7937
          %v8141 = vunpack.c.h.b16 %v7937
          %v8142 = vpack.c.b16 %v8016, %v8014
          %v8143 = vpack.c.b16 %v8017, %v8015
          %v8144 = vpack.c.b16 %v8020, %v8018
          %v8145 = vpack.c.b16 %v8021, %v8019
          %v8146 = vpack.c.b16 %v8024, %v8022
          %v8147 = vpack.c.b16 %v8025, %v8023
          %v8148 = vpack.c.b16 %v8028, %v8026
          %v8149 = vpack.c.b16 %v8029, %v8027
          %v8150 = vpack.c.b16 %v8032, %v8030
          %v8151 = vpack.c.b16 %v8033, %v8031
          %v8152 = vpack.c.b16 %v8036, %v8034
          %v8153 = vpack.c.b16 %v8037, %v8035
          %v8154 = vpack.c.b16 %v8040, %v8038
          %v8155 = vpack.c.b16 %v8041, %v8039
          %v8156 = vpack.c.b16 %v8044, %v8042
          %v8157 = vpack.c.b16 %v8045, %v8043
          %v8158 = vpack.c.b16 %v8048, %v8046
          %v8159 = vpack.c.b16 %v8049, %v8047
          %v8160 = vpack.c.b16 %v8052, %v8050
          %v8161 = vpack.c.b16 %v8053, %v8051
          %v8162 = vpack.c.b16 %v8056, %v8054
          %v8163 = vpack.c.b16 %v8057, %v8055
          %v8164 = vpack.c.b16 %v8060, %v8058
          %v8165 = vpack.c.b16 %v8061, %v8059
          %v8166 = vpack.c.b16 %v8064, %v8062
          %v8167 = vpack.c.b16 %v8065, %v8063
          %v8168 = vpack.c.b16 %v8068, %v8066
          %v8169 = vpack.c.b16 %v8069, %v8067
          %v8170 = vpack.c.b16 %v8072, %v8070
          %v8171 = vpack.c.b16 %v8073, %v8071
          %v8172 = vpack.c.b16 %v8076, %v8074
          %v8173 = vpack.c.b16 %v8077, %v8075
          %v8174 = vpack.c.b16 %v8080, %v8078
          %v8175 = vpack.c.b16 %v8081, %v8079
          %v8176 = vpack.c.b16 %v8084, %v8082
          %v8177 = vpack.c.b16 %v8085, %v8083
          %v8178 = vpack.c.b16 %v8088, %v8086
          %v8179 = vpack.c.b16 %v8089, %v8087
          %v8180 = vpack.c.b16 %v8092, %v8090
          %v8181 = vpack.c.b16 %v8093, %v8091
          %v8182 = vpack.c.b16 %v8096, %v8094
          %v8183 = vpack.c.b16 %v8097, %v8095
          %v8184 = vpack.c.b16 %v8100, %v8098
          %v8185 = vpack.c.b16 %v8101, %v8099
          %v8186 = vpack.c.b16 %v8104, %v8102
          %v8187 = vpack.c.b16 %v8105, %v8103
          %v8188 = vpack.c.b16 %v8108, %v8106
          %v8189 = vpack.c.b16 %v8109, %v8107
          %v8190 = vpack.c.b16 %v8112, %v8110
          %v8191 = vpack.c.b16 %v8113, %v8111
          %v8192 = vpack.c.b16 %v8116, %v8114
          %v8193 = vpack.c.b16 %v8117, %v8115
          %v8194 = vpack.c.b16 %v8120, %v8118
          %v8195 = vpack.c.b16 %v8121, %v8119
          %v8196 = vpack.c.b16 %v8124, %v8122
          %v8197 = vpack.c.b16 %v8125, %v8123
          %v8198 = vpack.c.b16 %v8128, %v8126
          %v8199 = vpack.c.b16 %v8129, %v8127
          %v8200 = vpack.c.b16 %v8132, %v8130
          %v8201 = vpack.c.b16 %v8133, %v8131
          %v8202 = vpack.c.b16 %v8136, %v8134
          %v8203 = vpack.c.b16 %v8137, %v8135
          %v8204 = vpack.c.b16 %v8140, %v8138
          %v8205 = vpack.c.b16 %v8141, %v8139
          %8270 = vmatprep.subr.bf16.mxu0 %v8157
          %8271 = vmatpush1.bf16.msra.mxu0 %v8156
          %8272 = vmatprep.subr.bf16.mxu0 %v8155
          %8273 = vmatpush1.bf16.msra.mxu0 %v8154
          %8274 = vmatprep.subr.bf16.mxu0 %v8153
          %8275 = vmatpush1.bf16.msra.mxu0 %v8152
          %8276 = vmatprep.subr.bf16.mxu0 %v8151
          %8277 = vmatpush1.bf16.msra.mxu0 %v8150
          %8278 = vmatprep.subr.bf16.mxu0 %v8149
          %8279 = vmatpush1.bf16.msra.mxu0 %v8148
          %8280 = vmatprep.subr.bf16.mxu0 %v8147
          %8281 = vmatpush1.bf16.msra.mxu0 %v8146
          %8282 = vmatprep.subr.bf16.mxu0 %v8145
          %8283 = vmatpush1.bf16.msra.mxu0 %v8144
          %8284 = vmatprep.subr.bf16.mxu0 %v8143
          %8285 = vmatpush1.bf16.msra.mxu0 %v8142
          %8286 = vmatprep.subr.bf16.mxu0 %v8173
          %8287 = vmatpush2.bf16.msra.mxu0 %v8172
          %8288 = vmatprep.subr.bf16.mxu0 %v8171
          %8289 = vmatpush2.bf16.msra.mxu0 %v8170
          %8290 = vmatprep.subr.bf16.mxu0 %v8169
          %8291 = vmatpush2.bf16.msra.mxu0 %v8168
          %8292 = vmatprep.subr.bf16.mxu0 %v8167
          %8293 = vmatpush2.bf16.msra.mxu0 %v8166
          %8294 = vmatprep.subr.bf16.mxu0 %v8165
          %8295 = vmatpush2.bf16.msra.mxu0 %v8164
          %8296 = vmatprep.subr.bf16.mxu0 %v8163
          %8297 = vmatpush2.bf16.msra.mxu0 %v8162
          %8298 = vmatprep.subr.bf16.mxu0 %v8161
          %8299 = vmatpush2.bf16.msra.mxu0 %v8160
          %8300 = vmatprep.subr.bf16.mxu0 %v8159
          %8301 = vmatpush2.bf16.msra.mxu0 %v8158
          %8302 = vmatprep.mubr.bf16.mxu0 %v7871
          %8303 = vmatmul.mubr.bf16.gmra.mxu0 %v7870
          %v8304 = vpop.f32.mrf.mxu0
          %v8305 = vadd.f32 %v7943, %v8304
          %v8306 = vpop.f32.mrf.mxu0
          %v8307 = vadd.f32 %v7947, %v8306
          %v8308 = vpop.f32.mrf.mxu0
          %v8309 = vpop.f32.mrf.mxu0
          %8310 = vdwg.mxu0
          %8311 = vmatprep.subr.bf16.mxu0 %v8189
          %8312 = vmatpush1.bf16.msra.mxu0 %v8188
          %8313 = vmatprep.subr.bf16.mxu0 %v8187
          %8314 = vmatpush1.bf16.msra.mxu0 %v8186
          %8315 = vmatprep.subr.bf16.mxu0 %v8185
          %8316 = vmatpush1.bf16.msra.mxu0 %v8184
          %8317 = vmatprep.subr.bf16.mxu0 %v8183
          %8318 = vmatpush1.bf16.msra.mxu0 %v8182
          %8319 = vmatprep.subr.bf16.mxu0 %v8181
          %8320 = vmatpush1.bf16.msra.mxu0 %v8180
          %8321 = vmatprep.subr.bf16.mxu0 %v8179
          %8322 = vmatpush1.bf16.msra.mxu0 %v8178
          %8323 = vmatprep.subr.bf16.mxu0 %v8177
          %8324 = vmatpush1.bf16.msra.mxu0 %v8176
          %8325 = vmatprep.subr.bf16.mxu0 %v8175
          %8326 = vmatpush1.bf16.msra.mxu0 %v8174
          %8327 = vmatprep.subr.bf16.mxu0 %v8205
          %8328 = vmatpush2.bf16.msra.mxu0 %v8204
          %8329 = vmatprep.subr.bf16.mxu0 %v8203
          %8330 = vmatpush2.bf16.msra.mxu0 %v8202
          %8331 = vmatprep.subr.bf16.mxu0 %v8201
          %8332 = vmatpush2.bf16.msra.mxu0 %v8200
          %8333 = vmatprep.subr.bf16.mxu0 %v8199
          %8334 = vmatpush2.bf16.msra.mxu0 %v8198
          %8335 = vmatprep.subr.bf16.mxu0 %v8197
          %8336 = vmatpush2.bf16.msra.mxu0 %v8196
          %8337 = vmatprep.subr.bf16.mxu0 %v8195
          %8338 = vmatpush2.bf16.msra.mxu0 %v8194
          %8339 = vmatprep.subr.bf16.mxu0 %v8193
          %8340 = vmatpush2.bf16.msra.mxu0 %v8192
          %8341 = vmatprep.subr.bf16.mxu0 %v8191
          %8342 = vmatpush2.bf16.msra.mxu0 %v8190
          %8343 = vmatprep.mubr.bf16.mxu0 %v7873
          %8344 = vmatmul.mubr.bf16.gmra.mxu0 %v7872
          %v8345 = vpop.f32.mrf.mxu0
          %v8346 = vadd.f32 %v8305, %v8345
          %v8347 = vpop.f32.mrf.mxu0
          %v8348 = vadd.f32 %v8307, %v8347
          %v8349 = vpop.f32.mrf.mxu0
          %v8350 = vpop.f32.mrf.mxu0
          %8351 = vdwg.mxu0
          %v8352 = vmax.f32 %v8346, 0.0
          %v8353 = vmax.f32 %v8348, 0.0
          %v8354 = vpack.c.bf16 %v8352, %v8352
          %v8355 = vpack.c.bf16 %v8353, %v8353
          %v8356 = vld [vmem:[#allocation17] sm:$0xff]
          %v8357 = vld [vmem:[#allocation17 + $0x8] sm:$0xff]
          %v8358 = vld [vmem:[#allocation17 + $0x10] sm:$0xff]
          %v8359 = vld [vmem:[#allocation17 + $0x18] sm:$0xff]
          %v8360 = vld [vmem:[#allocation17 + $0x20] sm:$0xff]
          %v8361 = vld [vmem:[#allocation17 + $0x28] sm:$0xff]
          %v8362 = vld [vmem:[#allocation17 + $0x30] sm:$0xff]
          %v8363 = vld [vmem:[#allocation17 + $0x38] sm:$0xff]
          %v8364 = vld [vmem:[#allocation17 + $0x40] sm:$0xff]
          %v8365 = vld [vmem:[#allocation17 + $0x48] sm:$0xff]
          %v8366 = vld [vmem:[#allocation17 + $0x50] sm:$0xff]
          %v8367 = vld [vmem:[#allocation17 + $0x58] sm:$0xff]
          %v8368 = vld [vmem:[#allocation17 + $0x60] sm:$0xff]
          %v8369 = vld [vmem:[#allocation17 + $0x68] sm:$0xff]
          %v8370 = vld [vmem:[#allocation17 + $0x70] sm:$0xff]
          %v8371 = vld [vmem:[#allocation17 + $0x78] sm:$0xff]
          %v8372 = vld [vmem:[#allocation17 + $0x80] sm:$0xff]
          %v8373 = vld [vmem:[#allocation17 + $0x88] sm:$0xff]
          %v8374 = vld [vmem:[#allocation17 + $0x90] sm:$0xff]
          %v8375 = vld [vmem:[#allocation17 + $0x98] sm:$0xff]
          %v8376 = vld [vmem:[#allocation17 + $0xa0] sm:$0xff]
          %v8377 = vld [vmem:[#allocation17 + $0xa8] sm:$0xff]
          %v8378 = vld [vmem:[#allocation17 + $0xb0] sm:$0xff]
          %v8379 = vld [vmem:[#allocation17 + $0xb8] sm:$0xff]
          %v8380 = vld [vmem:[#allocation17 + $0xc0] sm:$0xff]
          %v8381 = vld [vmem:[#allocation17 + $0xc8] sm:$0xff]
          %v8382 = vld [vmem:[#allocation17 + $0xd0] sm:$0xff]
          %v8383 = vld [vmem:[#allocation17 + $0xd8] sm:$0xff]
          %v8384 = vld [vmem:[#allocation17 + $0xe0] sm:$0xff]
          %v8385 = vld [vmem:[#allocation17 + $0xe8] sm:$0xff]
          %v8386 = vld [vmem:[#allocation17 + $0xf0] sm:$0xff]
          %v8387 = vld [vmem:[#allocation17 + $0xf8] sm:$0xff]
          %v8388 = vld [vmem:[%s12] sm:$0x3]
          %v8390 = vlaneseq
          %v8391 = vshrl.u32 %v8390, 7
          %v8392 = vsub.s32 0, %v8391
          %v8393 = vrot.slane %v8388, %v8392
          %v8394 = vlaneseq
          %v8395 = vshrl.u32 %v8394, 7
          %v8396 = vsub.s32 1, %v8395
          %v8397 = vrot.slane %v8388, %v8396
          %v8432 = vunpack.c.l.b16 %v8356
          %v8433 = vunpack.c.h.b16 %v8356
          %v8434 = vunpack.c.l.b16 %v8357
          %v8435 = vunpack.c.h.b16 %v8357
          %v8436 = vunpack.c.l.b16 %v8358
          %v8437 = vunpack.c.h.b16 %v8358
          %v8438 = vunpack.c.l.b16 %v8359
          %v8439 = vunpack.c.h.b16 %v8359
          %v8440 = vunpack.c.l.b16 %v8360
          %v8441 = vunpack.c.h.b16 %v8360
          %v8442 = vunpack.c.l.b16 %v8361
          %v8443 = vunpack.c.h.b16 %v8361
          %v8444 = vunpack.c.l.b16 %v8362
          %v8445 = vunpack.c.h.b16 %v8362
          %v8446 = vunpack.c.l.b16 %v8363
          %v8447 = vunpack.c.h.b16 %v8363
          %v8448 = vunpack.c.l.b16 %v8364
          %v8449 = vunpack.c.h.b16 %v8364
          %v8450 = vunpack.c.l.b16 %v8365
          %v8451 = vunpack.c.h.b16 %v8365
          %v8452 = vunpack.c.l.b16 %v8366
          %v8453 = vunpack.c.h.b16 %v8366
          %v8454 = vunpack.c.l.b16 %v8367
          %v8455 = vunpack.c.h.b16 %v8367
          %v8456 = vunpack.c.l.b16 %v8368
          %v8457 = vunpack.c.h.b16 %v8368
          %v8458 = vunpack.c.l.b16 %v8369
          %v8459 = vunpack.c.h.b16 %v8369
          %v8460 = vunpack.c.l.b16 %v8370
          %v8461 = vunpack.c.h.b16 %v8370
          %v8462 = vunpack.c.l.b16 %v8371
          %v8463 = vunpack.c.h.b16 %v8371
          %v8464 = vunpack.c.l.b16 %v8372
          %v8465 = vunpack.c.h.b16 %v8372
          %v8466 = vunpack.c.l.b16 %v8373
          %v8467 = vunpack.c.h.b16 %v8373
          %v8468 = vunpack.c.l.b16 %v8374
          %v8469 = vunpack.c.h.b16 %v8374
          %v8470 = vunpack.c.l.b16 %v8375
          %v8471 = vunpack.c.h.b16 %v8375
          %v8472 = vunpack.c.l.b16 %v8376
          %v8473 = vunpack.c.h.b16 %v8376
          %v8474 = vunpack.c.l.b16 %v8377
          %v8475 = vunpack.c.h.b16 %v8377
          %v8476 = vunpack.c.l.b16 %v8378
          %v8477 = vunpack.c.h.b16 %v8378
          %v8478 = vunpack.c.l.b16 %v8379
          %v8479 = vunpack.c.h.b16 %v8379
          %v8480 = vunpack.c.l.b16 %v8380
          %v8481 = vunpack.c.h.b16 %v8380
          %v8482 = vunpack.c.l.b16 %v8381
          %v8483 = vunpack.c.h.b16 %v8381
          %v8484 = vunpack.c.l.b16 %v8382
          %v8485 = vunpack.c.h.b16 %v8382
          %v8486 = vunpack.c.l.b16 %v8383
          %v8487 = vunpack.c.h.b16 %v8383
          %v8488 = vunpack.c.l.b16 %v8384
          %v8489 = vunpack.c.h.b16 %v8384
          %v8490 = vunpack.c.l.b16 %v8385
          %v8491 = vunpack.c.h.b16 %v8385
          %v8492 = vunpack.c.l.b16 %v8386
          %v8493 = vunpack.c.h.b16 %v8386
          %v8494 = vunpack.c.l.b16 %v8387
          %v8495 = vunpack.c.h.b16 %v8387
          %v8496 = vpack.c.b16 %v8434, %v8432
          %v8497 = vpack.c.b16 %v8435, %v8433
          %v8498 = vpack.c.b16 %v8438, %v8436
          %v8499 = vpack.c.b16 %v8439, %v8437
          %v8500 = vpack.c.b16 %v8442, %v8440
          %v8501 = vpack.c.b16 %v8443, %v8441
          %v8502 = vpack.c.b16 %v8446, %v8444
          %v8503 = vpack.c.b16 %v8447, %v8445
          %v8504 = vpack.c.b16 %v8450, %v8448
          %v8505 = vpack.c.b16 %v8451, %v8449
          %v8506 = vpack.c.b16 %v8454, %v8452
          %v8507 = vpack.c.b16 %v8455, %v8453
          %v8508 = vpack.c.b16 %v8458, %v8456
          %v8509 = vpack.c.b16 %v8459, %v8457
          %v8510 = vpack.c.b16 %v8462, %v8460
          %v8511 = vpack.c.b16 %v8463, %v8461
          %v8512 = vpack.c.b16 %v8466, %v8464
          %v8513 = vpack.c.b16 %v8467, %v8465
          %v8514 = vpack.c.b16 %v8470, %v8468
          %v8515 = vpack.c.b16 %v8471, %v8469
          %v8516 = vpack.c.b16 %v8474, %v8472
          %v8517 = vpack.c.b16 %v8475, %v8473
          %v8518 = vpack.c.b16 %v8478, %v8476
          %v8519 = vpack.c.b16 %v8479, %v8477
          %v8520 = vpack.c.b16 %v8482, %v8480
          %v8521 = vpack.c.b16 %v8483, %v8481
          %v8522 = vpack.c.b16 %v8486, %v8484
          %v8523 = vpack.c.b16 %v8487, %v8485
          %v8524 = vpack.c.b16 %v8490, %v8488
          %v8525 = vpack.c.b16 %v8491, %v8489
          %v8526 = vpack.c.b16 %v8494, %v8492
          %v8527 = vpack.c.b16 %v8495, %v8493
          %8560 = vmatprep.subr.bf16.mxu0 %v8511
          %8561 = vmatpush1.bf16.msra.mxu0 %v8510
          %8562 = vmatprep.subr.bf16.mxu0 %v8509
          %8563 = vmatpush1.bf16.msra.mxu0 %v8508
          %8564 = vmatprep.subr.bf16.mxu0 %v8507
          %8565 = vmatpush1.bf16.msra.mxu0 %v8506
          %8566 = vmatprep.subr.bf16.mxu0 %v8505
          %8567 = vmatpush1.bf16.msra.mxu0 %v8504
          %8568 = vmatprep.subr.bf16.mxu0 %v8503
          %8569 = vmatpush1.bf16.msra.mxu0 %v8502
          %8570 = vmatprep.subr.bf16.mxu0 %v8501
          %8571 = vmatpush1.bf16.msra.mxu0 %v8500
          %8572 = vmatprep.subr.bf16.mxu0 %v8499
          %8573 = vmatpush1.bf16.msra.mxu0 %v8498
          %8574 = vmatprep.subr.bf16.mxu0 %v8497
          %8575 = vmatpush1.bf16.msra.mxu0 %v8496
          %8576 = vmatprep.subr.bf16.mxu0 %v8527
          %8577 = vmatpush2.bf16.msra.mxu0 %v8526
          %8578 = vmatprep.subr.bf16.mxu0 %v8525
          %8579 = vmatpush2.bf16.msra.mxu0 %v8524
          %8580 = vmatprep.subr.bf16.mxu0 %v8523
          %8581 = vmatpush2.bf16.msra.mxu0 %v8522
          %8582 = vmatprep.subr.bf16.mxu0 %v8521
          %8583 = vmatpush2.bf16.msra.mxu0 %v8520
          %8584 = vmatprep.subr.bf16.mxu0 %v8519
          %8585 = vmatpush2.bf16.msra.mxu0 %v8518
          %8586 = vmatprep.subr.bf16.mxu0 %v8517
          %8587 = vmatpush2.bf16.msra.mxu0 %v8516
          %8588 = vmatprep.subr.bf16.mxu0 %v8515
          %8589 = vmatpush2.bf16.msra.mxu0 %v8514
          %8590 = vmatprep.subr.bf16.mxu0 %v8513
          %8591 = vmatpush2.bf16.msra.mxu0 %v8512
          %8592 = vmatprep.mubr.bf16.mxu0 %v8355
          %8593 = vmatmul.mubr.bf16.gmra.mxu0 %v8354
          %v8594 = vpop.f32.mrf.mxu0
          %v8595 = vadd.f32 %v8393, %v8594
          %v8596 = vpop.f32.mrf.mxu0
          %v8597 = vadd.f32 %v8397, %v8596
          %v8598 = vpop.f32.mrf.mxu0
          %v8599 = vpop.f32.mrf.mxu0
          %8600 = vdwg.mxu0
          %v8603 = vcombine.low %v8595, %v8597
          %8605 = vst [vmem:[%s586] sm:$0xff] %v8603
        $region116: #{tpu_custom_call.1} parent=71 // pred_fallthru
          _
        %s8606 = sand.u32 %s334, 1
        %s8607 = scalar_lea.sflag [#allocation5], %s8606
        %s8608 = sand.u32 %s334, 1
        %s8609 = smul.addr %s8608, 8
        %s8610 = scalar_lea.vmem [#allocation18], %s8609
        // Predicated region
        $region117: #{tpu_custom_call.1} parent=71 // pred_check
          %p8611 = pneg %p344
        $region118: #{tpu_custom_call.1} parent=71 // pred_check_branch
          %8613 = sbr.rel (%p8611) target = $region120
        $region119: #{tpu_custom_call.1} parent=71 // pred_region
          %s8615 = ssub.s32 128, 128
          %8616 = vsyncadd %s8607, %s8615
          %s8617 = smul.addr %s38, 2
          %s8618 = smul.addr %s8617, 64
          %s8619 = scalar_lea.hbm %s13, %s8618
          %s8621 = sshll.u32 %s8610, 4
          %s8622 = int_to_ptr.vmem [resolvable:$true] %s8621
          %8624 = dma.vmem_to_hbm [thread:$0]  %s8622, 128, %s8619, %s8607
        $region120: #{tpu_custom_call.1} parent=71 // pred_fallthru
          _
      $region72: #{tpu_custom_call.1} parent=5 // pred_fallthru
        _
      %p8625 = scmp.le.s32.totalorder 2, %s29
      // Predicated region
      $region121: #{tpu_custom_call.1} parent=5 // pred_check
        %p8626 = pneg %p8625
      $region122: #{tpu_custom_call.1} parent=5 // pred_check_branch
        %8628 = sbr.rel (%p8626) target = $region124
      $region123: #{tpu_custom_call.1} parent=5 // pred_region
        %s8629 = ssub.s32 %s29, 2
        // Predicated region
        $region125: #{tpu_custom_call.1} parent=123 // pred_check
          %p8630 = pneg %p350
        $region126: #{tpu_custom_call.1} parent=123 // pred_check_branch
          %8632 = sbr.rel (%p8630) target = $region128
        $region127: #{tpu_custom_call.1} parent=123 // pred_region
          %s8633 = sand.u32 %s335, 1
          %s8634 = scalar_lea.sflag [#allocation5], %s8633
          %s8635 = sand.u32 %s335, 1
          %s8636 = smul.addr %s8635, 8
          %s8637 = scalar_lea.vmem [#allocation18], %s8636
          %8638 = dma.done %s8634, 128
        $region128: #{tpu_custom_call.1} parent=123 // pred_fallthru
          _
      $region124: #{tpu_custom_call.1} parent=5 // pred_fallthru
        _
    $region6: #{tpu_custom_call.1} parent=1 // loop_footer
      %s33 = sadd.s32 1, %s29
    $region7: #{tpu_custom_call.1} parent=1 // loop_footer_branch
      %28 = sbr.rel target = $region3
    $region8: #{tpu_custom_call.1} parent=1 // loop_exit
      _
    %8639 = vsyncpa [#allocation4], 1
    %s8640 = scalar_lea.sflag [#allocation4], 1
    %8641 = vsyncpa %s8640, 1
    %8642 = vsyncpa [#allocation7], 1
    %8643 = vsyncpa [#allocation10], 1
    %8644 = vsyncpa [#allocation13], 1
    %8645 = vsyncpa [#allocation16], 1
    %8646 = vsyncpa [#allocation5], 1
    %s8647 = scalar_lea.sflag [#allocation5], 1
    %8648 = vsyncpa %s8647, 1

</llo_original>
